<compile_context>
chip_gen: v7x
topology: tpu7x:2x2x1
jax: 0.10.0
libtpu: 0.0.40
codegen_flags: <defaults>
</compile_context>

<pallas_src>
import math

import numpy as np

import jax
import jax.numpy as jnp
from jax import lax
from jax.experimental import pallas as pl
from jax.experimental.pallas import tpu as pltpu


# ----------------------------------------------------------------------------
# Wrapper-side weight / constant packing.
# ----------------------------------------------------------------------------
def _banded_weights(wt, width):
    """PyTorch (Cout, Cin, 3, 3, 3) -> (9, (W+2)*Cin, W*Cout) banded matrices.

    For each (kd, kh) tap the W convolution is folded into the contraction as
    a banded (Toeplitz-over-W) matrix, so the MXU output width is W*Cout
    (lane-dense) instead of Cout:
        B[kd*3+kh, g*Cin + ci, w_out*Cout + co] = wt[co, ci, kd, kh, kw]
    where lane group g holds input w = w_out + kw - 1 under the
    "W-halos-at-the-end" layout (groups 0..W-1 = real w, groups W and W+1 are
    the two zero halo groups).
    """
    cout, cin = wt.shape[0], wt.shape[1]
    sel = np.zeros((3, width + 2, width), np.float32)          # (kw, g, w_out)
    for kw in range(3):
        for wo in range(width):
            wi = wo + kw - 1
            g = wi if 0 <= wi < width else (width if wi < 0 else width + 1)
            sel[kw, g, wo] = 1.0
    band = jnp.einsum("xgw,oidhx->dhgiwo", jnp.asarray(sel), wt)
    band = band.reshape(9, (width + 2) * cin, width * cout)
    # bf16 MXU operands; f32 accumulation in the kernel preserves accuracy.
    return band.astype(jnp.bfloat16)


def _group_mean_matrix(width, channels, dhw):
    """(W*C, W*C) matrix G with G[a, b] = [a % C == b % C] / (D*H*W).

    Right-multiplying a per-lane row-sum (1, W*C) by G collapses the W lane
    groups into per-channel means and broadcasts them back to every lane with
    one tiny MXU matmul.
    """
    lane = np.arange(width * channels)
    g = lane[:, None] % channels == lane[None, :] % channels
    return jnp.asarray(g.astype(np.float32) / float(dhw))


# ----------------------------------------------------------------------------
# Fused forward: conv1 -> IN -> GELU -> conv2 -> IN -> GELU, one sample/step.
# ----------------------------------------------------------------------------
def double_conv_forward(x_ncdhw, params):
    # x_ncdhw: (N, Cin, D, H, W)  -- same layout as the PyTorch module.
    N, Cin, D, H, W = x_ncdhw.shape
    Cmid = params["w1"].shape[0]
    Cout = params["w2"].shape[0]

    L1 = (W + 2) * Cin           # lanes of a padded conv1 input row
    L2 = (W + 2) * Cmid          # lanes of a padded conv2 input row
    N1 = W * Cmid                # lanes of a conv1 output row
    N2 = W * Cout                # lanes of a conv2 output row
    DH = D * H
    DHW = D * H * W

    b1 = _banded_weights(params["w1"], W)      # (9, L1, N1) bf16
    b2 = _banded_weights(params["w2"], W)      # (9, L2, N2) bf16
    g1 = _group_mean_matrix(W, Cmid, DHW)      # (N1, N1) f32
    g2 = _group_mean_matrix(W, Cout, DHW)      # (N2, N2) f32

    # Layout plumbing (cheap XLA ops): channels-last, pad D/H symmetrically,
    # append the two zero W-halo groups at the end of the lane axis, and fold
    # (W+2, Cin) into one lane-dense last dim.  This removes the conv1 padded
    # scratch and all conv1 in-kernel padding copies.
    x_cl = jnp.transpose(x_ncdhw, (0, 2, 3, 4, 1))             # (N, D, H, W, Cin)
    x_cl = jnp.pad(x_cl, ((0, 0), (1, 1), (1, 1), (0, 2), (0, 0)))
    x_pad = x_cl.reshape(N, D + 2, H + 2, L1)                  # (N, D+2, H+2, L1)

    inv_sqrt2 = 0.7071067811865476

    def kernel(x_ref, b1_ref, b2_ref, g1_ref, g2_ref, o_ref, xp2_ref):
        # x_ref  : (1, D+2, H+2, L1)   pre-padded sample (lane-dense rows)
        # b1_ref : (9, L1, N1) bf16    conv1 banded weights, one per (kd, kh)
        # b2_ref : (9, L2, N2) bf16    conv2 banded weights
        # g1_ref : (N1, N1) f32        IN group-mean matrix, conv1
        # g2_ref : (N2, N2) f32        IN group-mean matrix, conv2
        # o_ref  : (1, DH, N2)         lane-dense output slab
        # xp2_ref: VMEM (D+2, H+2, L2) padded conv2 input (scratch)

        def conv_in_gelu(load_tap, b_ref, g_ref, n_out):
            # 9 banded MXU matmuls, f32 accumulation.
            acc = jnp.zeros((DH, n_out), jnp.float32)
            for kd in range(3):
                for kh in range(3):
                    lhs = load_tap(kd, kh)                     # (DH, L) f32
                    acc = acc + jnp.dot(
                        lhs.astype(jnp.bfloat16),
                        b_ref[kd * 3 + kh],
                        preferred_element_type=jnp.float32)

            # InstanceNorm3d (affine=False, eps=1e-5, biased variance).
            # Row sums per lane, then one (1, n)x(n, n) MXU matmul collapses
            # the W lane groups to per-channel stats broadcast back per-lane.
            s1 = jnp.sum(acc, axis=0, keepdims=True)           # (1, n_out)
            s2 = jnp.sum(acc * acc, axis=0, keepdims=True)     # (1, n_out)
            mean = jnp.dot(s1, g_ref[...], preferred_element_type=jnp.float32)
            mean_sq = jnp.dot(s2, g_ref[...], preferred_element_type=jnp.float32)
            # Clamp: single-pass E[x^2]-E[x]^2 can go slightly negative in f32.
            var = jnp.maximum(mean_sq - mean * mean, 0.0)
            y = (acc - mean) * lax.rsqrt(var + 1e-5)
            # Exact erf GELU (matches nn.GELU() default).  A tanh-approx GELU
            # would move this to the EUP at ~1e-3 deviation if acceptable.
            return 0.5 * y * (1.0 + lax.erf(y * inv_sqrt2))

        # ---- conv block 1: taps come straight from the pre-padded input ----
        def tap1(kd, kh):
            return x_ref[0, kd:kd + D, kh:kh + H, :].reshape(DH, L1)

        y1 = conv_in_gelu(tap1, b1_ref, g1_ref, N1)            # (DH, W*Cmid)

        # ---- conv block 2: intermediate stays in VMEM (no HBM round trip) --
        # Zero only the halo regions; the interior is fully overwritten every
        # grid step, so no full-scratch memset.  The W halo lane groups sit at
        # the end of the lane axis so the interior store is lane-aligned.
        xp2_ref[0:1] = jnp.zeros((1, H + 2, L2), jnp.float32)
        xp2_ref[D + 1:D + 2] = jnp.zeros((1, H + 2, L2), jnp.float32)
        xp2_ref[1:D + 1, 0:1, :] = jnp.zeros((D, 1, L2), jnp.float32)
        xp2_ref[1:D + 1, H + 1:H + 2, :] = jnp.zeros((D, 1, L2), jnp.float32)
        xp2_ref[1:D + 1, 1:H + 1, N1:] = jnp.zeros((D, H, 2 * Cmid), jnp.float32)
        xp2_ref[1:D + 1, 1:H + 1, 0:N1] = y1.reshape(D, H, N1)

        def tap2(kd, kh):
            return xp2_ref[kd:kd + D, kh:kh + H, :].reshape(DH, L2)

        y2 = conv_in_gelu(tap2, b2_ref, g2_ref, N2)            # (DH, W*Cout)

        # Lane-dense store: N2 = W*Cout (=128 here) -> unmasked full-lane vst.
        o_ref[0] = y2.astype(o_ref.dtype)

    y = pl.pallas_call(
        kernel,
        out_shape=jax.ShapeDtypeStruct((N, DH, N2), jnp.float32),
        grid=(N,),
        in_specs=[
            pl.BlockSpec((1, D + 2, H + 2, L1), lambda n: (n, 0, 0, 0)),
            pl.BlockSpec((9, L1, N1), lambda n: (0, 0, 0)),
            pl.BlockSpec((9, L2, N2), lambda n: (0, 0, 0)),
            pl.BlockSpec((N1, N1), lambda n: (0, 0)),
            pl.BlockSpec((N2, N2), lambda n: (0, 0)),
        ],
        out_specs=pl.BlockSpec((1, DH, N2), lambda n: (n, 0, 0)),
        scratch_shapes=[pltpu.VMEM((D + 2, H + 2, L2), jnp.float32)],
        compiler_params=pltpu.CompilerParams(
            dimension_semantics=("parallel",),       # N>=2 feeds both v7x TCs
            vmem_limit_bytes=32 * 1024 * 1024),
    )(x_pad, b1, b2, g1, g2)

    # Undo the lane packing: (N, D*H, W*Cout) -> (N, D, H, W, Cout) -> NCDHW.
    y = y.reshape(N, D, H, W, Cout)
    return jnp.transpose(y, (0, 4, 1, 2, 3))


def init_double_conv_params(key, in_channels, out_channels, mid_channels=None):
    if mid_channels is None:
        mid_channels = out_channels
    k1, k2 = jax.random.split(key)
    s1 = 1.0 / math.sqrt(in_channels * 27)
    s2 = 1.0 / math.sqrt(mid_channels * 27)
    # Conv3d biases are intentionally omitted: InstanceNorm3d(affine=False)
    # subtracts the per-channel mean right after each conv, so the bias is
    # exactly cancelled in the forward pass.
    return {
        "w1": jax.random.uniform(k1, (mid_channels, in_channels, 3, 3, 3),
                                 jnp.float32, -1.0, 1.0) * s1,
        "w2": jax.random.uniform(k2, (out_channels, mid_channels, 3, 3, 3),
                                 jnp.float32, -1.0, 1.0) * s2,
    }


# ----------------------------------------------------------------------------
# Pure-JAX reference (for correctness validation only).
# ----------------------------------------------------------------------------
def _reference_double_conv(x, w1, w2, *, bf16_operands=True):
    """Reference DoubleConv.  With bf16_operands=True the conv operands are
    rounded to bf16 (same precision as the kernel's MXU operands) so the
    comparison isolates structural errors from expected bf16 rounding."""
    def maybe_cast(a):
        return a.astype(jnp.bfloat16).astype(jnp.float32) if bf16_operands else a

    def block(h, w):
        y = lax.conv_general_dilated(
            maybe_cast(h), maybe_cast(w), window_strides=(1, 1, 1),
            padding=[(1, 1)] * 3,
            dimension_numbers=("NCDHW", "OIDHW", "NCDHW"),
            precision=lax.Precision.HIGHEST)
        mean = jnp.mean(y, axis=(2, 3, 4), keepdims=True)
        var = jnp.var(y, axis=(2, 3, 4), keepdims=True)
        y = (y - mean) * lax.rsqrt(var + 1e-5)
        return 0.5 * y * (1.0 + lax.erf(y * 0.7071067811865476))

    return block(block(x, w1), w2)


if __name__ == "__main__":
    key = jax.random.PRNGKey(0)
    kx, kp = jax.random.split(key)

    N, Cin, Cout, D, H, W = 2, 4, 8, 16, 16, 16

    x = jax.random.normal(kx, (N, Cin, D, H, W), jnp.float32)  # PyTorch NCDHW
    params = init_double_conv_params(kp, Cin, Cout)

    out = jax.jit(double_conv_forward)(x, params)
    out = jax.block_until_ready(out)

    assert out.shape == (N, Cout, D, H, W), out.shape
    assert bool(jnp.all(jnp.isfinite(out)))

    ref = _reference_double_conv(x, params["w1"], params["w2"],
                                 bf16_operands=True)
    err = float(jnp.max(jnp.abs(out - ref)))
    assert err < 1e-2, f"max abs error vs reference = {err}"

    print("KERNEL_OK")
</pallas_src>

<mosaic_0001>
module attributes {stable_mosaic.version = 11 : i64} {
  func.func @kernel(%arg0: i32, %arg1: memref<1x18x18x72xf32, #tpu.memory_space<vmem>>, %arg2: memref<9x72x128xbf16, #tpu.memory_space<vmem>>, %arg3: memref<9x144x128xbf16, #tpu.memory_space<vmem>>, %arg4: memref<128x128xf32, #tpu.memory_space<vmem>>, %arg5: memref<128x128xf32, #tpu.memory_space<vmem>>, %arg6: memref<1x256x128xf32, #tpu.memory_space<vmem>>, %arg7: memref<18x18x144xf32, #tpu.memory_space<vmem>>) attributes {dimension_semantics = [#tpu.dimension_semantics<parallel>], iteration_bounds = array<i64: 2>, scalar_prefetch = 0 : i64, scratch_operands = 1 : i64, tpu.core_type = #tpu.core_type<tc>, window_params = [{transform_indices = @transform_0, window_bounds = array<i64: 1, 18, 18, 72>}, {pipeline_mode = #tpu.pipeline_mode<synchronous>, transform_indices = @transform_1, window_bounds = array<i64: 9, 72, 128>}, {pipeline_mode = #tpu.pipeline_mode<synchronous>, transform_indices = @transform_2, window_bounds = array<i64: 9, 144, 128>}, {pipeline_mode = #tpu.pipeline_mode<synchronous>, transform_indices = @transform_3, window_bounds = array<i64: 128, 128>}, {pipeline_mode = #tpu.pipeline_mode<synchronous>, transform_indices = @transform_4, window_bounds = array<i64: 128, 128>}, {transform_indices = @transform_5, window_bounds = array<i64: 1, 256, 128>}]} {
    %cst = arith.constant 0.000000e+00 : f32
    %0 = vector.broadcast %cst : f32 to vector<256x128xf32>
    %c0 = arith.constant 0 : index
    %c0_0 = arith.constant 0 : index
    %c0_1 = arith.constant 0 : index
    %c0_2 = arith.constant 0 : index
    %1 = vector.load %arg1[%c0, %c0_0, %c0_1, %c0_2] : memref<1x18x18x72xf32, #tpu.memory_space<vmem>>, vector<1x16x16x72xf32>
    %2 = vector.shape_cast %1 : vector<1x16x16x72xf32> to vector<16x16x72xf32>
    %3 = vector.shape_cast %2 : vector<16x16x72xf32> to vector<256x72xf32>
    %4 = arith.truncf %3 : vector<256x72xf32> to vector<256x72xbf16>
    %c0_3 = arith.constant 0 : index
    %c0_4 = arith.constant 0 : index
    %c0_5 = arith.constant 0 : index
    %5 = vector.load %arg2[%c0_3, %c0_4, %c0_5] : memref<9x72x128xbf16, #tpu.memory_space<vmem>>, vector<1x72x128xbf16>
    %6 = vector.shape_cast %5 : vector<1x72x128xbf16> to vector<72x128xbf16>
    %cst_6 = arith.constant dense<0.000000e+00> : vector<256x128xf32>
    %7 = tpu.matmul %4, %6, %cst_6 {dimension_numbers = #tpu.dot_dimension_numbers<[1], [0], [0], [1], [0, 0, 1, 1], [], []>} : vector<256x72xbf16>, vector<72x128xbf16>, vector<256x128xf32> -> vector<256x128xf32>
    %8 = arith.addf %0, %7 : vector<256x128xf32>
    %c0_7 = arith.constant 0 : index
    %c0_8 = arith.constant 0 : index
    %c1 = arith.constant 1 : index
    %c0_9 = arith.constant 0 : index
    %9 = vector.load %arg1[%c0_7, %c0_8, %c1, %c0_9] : memref<1x18x18x72xf32, #tpu.memory_space<vmem>>, vector<1x16x16x72xf32>
    %10 = vector.shape_cast %9 : vector<1x16x16x72xf32> to vector<16x16x72xf32>
    %11 = vector.shape_cast %10 : vector<16x16x72xf32> to vector<256x72xf32>
    %12 = arith.truncf %11 : vector<256x72xf32> to vector<256x72xbf16>
    %c1_10 = arith.constant 1 : index
    %c0_11 = arith.constant 0 : index
    %c0_12 = arith.constant 0 : index
    %13 = vector.load %arg2[%c1_10, %c0_11, %c0_12] : memref<9x72x128xbf16, #tpu.memory_space<vmem>>, vector<1x72x128xbf16>
    %14 = vector.shape_cast %13 : vector<1x72x128xbf16> to vector<72x128xbf16>
    %cst_13 = arith.constant dense<0.000000e+00> : vector<256x128xf32>
    %15 = tpu.matmul %12, %14, %cst_13 {dimension_numbers = #tpu.dot_dimension_numbers<[1], [0], [0], [1], [0, 0, 1, 1], [], []>} : vector<256x72xbf16>, vector<72x128xbf16>, vector<256x128xf32> -> vector<256x128xf32>
    %16 = arith.addf %8, %15 : vector<256x128xf32>
    %c0_14 = arith.constant 0 : index
    %c0_15 = arith.constant 0 : index
    %c2 = arith.constant 2 : index
    %c0_16 = arith.constant 0 : index
    %17 = vector.load %arg1[%c0_14, %c0_15, %c2, %c0_16] : memref<1x18x18x72xf32, #tpu.memory_space<vmem>>, vector<1x16x16x72xf32>
    %18 = vector.shape_cast %17 : vector<1x16x16x72xf32> to vector<16x16x72xf32>
    %19 = vector.shape_cast %18 : vector<16x16x72xf32> to vector<256x72xf32>
    %20 = arith.truncf %19 : vector<256x72xf32> to vector<256x72xbf16>
    %c2_17 = arith.constant 2 : index
    %c0_18 = arith.constant 0 : index
    %c0_19 = arith.constant 0 : index
    %21 = vector.load %arg2[%c2_17, %c0_18, %c0_19] : memref<9x72x128xbf16, #tpu.memory_space<vmem>>, vector<1x72x128xbf16>
    %22 = vector.shape_cast %21 : vector<1x72x128xbf16> to vector<72x128xbf16>
    %cst_20 = arith.constant dense<0.000000e+00> : vector<256x128xf32>
    %23 = tpu.matmul %20, %22, %cst_20 {dimension_numbers = #tpu.dot_dimension_numbers<[1], [0], [0], [1], [0, 0, 1, 1], [], []>} : vector<256x72xbf16>, vector<72x128xbf16>, vector<256x128xf32> -> vector<256x128xf32>
    %24 = arith.addf %16, %23 : vector<256x128xf32>
    %c0_21 = arith.constant 0 : index
    %c1_22 = arith.constant 1 : index
    %c0_23 = arith.constant 0 : index
    %c0_24 = arith.constant 0 : index
    %25 = vector.load %arg1[%c0_21, %c1_22, %c0_23, %c0_24] : memref<1x18x18x72xf32, #tpu.memory_space<vmem>>, vector<1x16x16x72xf32>
    %26 = vector.shape_cast %25 : vector<1x16x16x72xf32> to vector<16x16x72xf32>
    %27 = vector.shape_cast %26 : vector<16x16x72xf32> to vector<256x72xf32>
    %28 = arith.truncf %27 : vector<256x72xf32> to vector<256x72xbf16>
    %c3 = arith.constant 3 : index
    %c0_25 = arith.constant 0 : index
    %c0_26 = arith.constant 0 : index
    %29 = vector.load %arg2[%c3, %c0_25, %c0_26] : memref<9x72x128xbf16, #tpu.memory_space<vmem>>, vector<1x72x128xbf16>
    %30 = vector.shape_cast %29 : vector<1x72x128xbf16> to vector<72x128xbf16>
    %cst_27 = arith.constant dense<0.000000e+00> : vector<256x128xf32>
    %31 = tpu.matmul %28, %30, %cst_27 {dimension_numbers = #tpu.dot_dimension_numbers<[1], [0], [0], [1], [0, 0, 1, 1], [], []>} : vector<256x72xbf16>, vector<72x128xbf16>, vector<256x128xf32> -> vector<256x128xf32>
    %32 = arith.addf %24, %31 : vector<256x128xf32>
    %c0_28 = arith.constant 0 : index
    %c1_29 = arith.constant 1 : index
    %c1_30 = arith.constant 1 : index
    %c0_31 = arith.constant 0 : index
    %33 = vector.load %arg1[%c0_28, %c1_29, %c1_30, %c0_31] : memref<1x18x18x72xf32, #tpu.memory_space<vmem>>, vector<1x16x16x72xf32>
    %34 = vector.shape_cast %33 : vector<1x16x16x72xf32> to vector<16x16x72xf32>
    %35 = vector.shape_cast %34 : vector<16x16x72xf32> to vector<256x72xf32>
    %36 = arith.truncf %35 : vector<256x72xf32> to vector<256x72xbf16>
    %c4 = arith.constant 4 : index
    %c0_32 = arith.constant 0 : index
    %c0_33 = arith.constant 0 : index
    %37 = vector.load %arg2[%c4, %c0_32, %c0_33] : memref<9x72x128xbf16, #tpu.memory_space<vmem>>, vector<1x72x128xbf16>
    %38 = vector.shape_cast %37 : vector<1x72x128xbf16> to vector<72x128xbf16>
    %cst_34 = arith.constant dense<0.000000e+00> : vector<256x128xf32>
    %39 = tpu.matmul %36, %38, %cst_34 {dimension_numbers = #tpu.dot_dimension_numbers<[1], [0], [0], [1], [0, 0, 1, 1], [], []>} : vector<256x72xbf16>, vector<72x128xbf16>, vector<256x128xf32> -> vector<256x128xf32>
    %40 = arith.addf %32, %39 : vector<256x128xf32>
    %c0_35 = arith.constant 0 : index
    %c1_36 = arith.constant 1 : index
    %c2_37 = arith.constant 2 : index
    %c0_38 = arith.constant 0 : index
    %41 = vector.load %arg1[%c0_35, %c1_36, %c2_37, %c0_38] : memref<1x18x18x72xf32, #tpu.memory_space<vmem>>, vector<1x16x16x72xf32>
    %42 = vector.shape_cast %41 : vector<1x16x16x72xf32> to vector<16x16x72xf32>
    %43 = vector.shape_cast %42 : vector<16x16x72xf32> to vector<256x72xf32>
    %44 = arith.truncf %43 : vector<256x72xf32> to vector<256x72xbf16>
    %c5 = arith.constant 5 : index
    %c0_39 = arith.constant 0 : index
    %c0_40 = arith.constant 0 : index
    %45 = vector.load %arg2[%c5, %c0_39, %c0_40] : memref<9x72x128xbf16, #tpu.memory_space<vmem>>, vector<1x72x128xbf16>
    %46 = vector.shape_cast %45 : vector<1x72x128xbf16> to vector<72x128xbf16>
    %cst_41 = arith.constant dense<0.000000e+00> : vector<256x128xf32>
    %47 = tpu.matmul %44, %46, %cst_41 {dimension_numbers = #tpu.dot_dimension_numbers<[1], [0], [0], [1], [0, 0, 1, 1], [], []>} : vector<256x72xbf16>, vector<72x128xbf16>, vector<256x128xf32> -> vector<256x128xf32>
    %48 = arith.addf %40, %47 : vector<256x128xf32>
    %c0_42 = arith.constant 0 : index
    %c2_43 = arith.constant 2 : index
    %c0_44 = arith.constant 0 : index
    %c0_45 = arith.constant 0 : index
    %49 = vector.load %arg1[%c0_42, %c2_43, %c0_44, %c0_45] : memref<1x18x18x72xf32, #tpu.memory_space<vmem>>, vector<1x16x16x72xf32>
    %50 = vector.shape_cast %49 : vector<1x16x16x72xf32> to vector<16x16x72xf32>
    %51 = vector.shape_cast %50 : vector<16x16x72xf32> to vector<256x72xf32>
    %52 = arith.truncf %51 : vector<256x72xf32> to vector<256x72xbf16>
    %c6 = arith.constant 6 : index
    %c0_46 = arith.constant 0 : index
    %c0_47 = arith.constant 0 : index
    %53 = vector.load %arg2[%c6, %c0_46, %c0_47] : memref<9x72x128xbf16, #tpu.memory_space<vmem>>, vector<1x72x128xbf16>
    %54 = vector.shape_cast %53 : vector<1x72x128xbf16> to vector<72x128xbf16>
    %cst_48 = arith.constant dense<0.000000e+00> : vector<256x128xf32>
    %55 = tpu.matmul %52, %54, %cst_48 {dimension_numbers = #tpu.dot_dimension_numbers<[1], [0], [0], [1], [0, 0, 1, 1], [], []>} : vector<256x72xbf16>, vector<72x128xbf16>, vector<256x128xf32> -> vector<256x128xf32>
    %56 = arith.addf %48, %55 : vector<256x128xf32>
    %c0_49 = arith.constant 0 : index
    %c2_50 = arith.constant 2 : index
    %c1_51 = arith.constant 1 : index
    %c0_52 = arith.constant 0 : index
    %57 = vector.load %arg1[%c0_49, %c2_50, %c1_51, %c0_52] : memref<1x18x18x72xf32, #tpu.memory_space<vmem>>, vector<1x16x16x72xf32>
    %58 = vector.shape_cast %57 : vector<1x16x16x72xf32> to vector<16x16x72xf32>
    %59 = vector.shape_cast %58 : vector<16x16x72xf32> to vector<256x72xf32>
    %60 = arith.truncf %59 : vector<256x72xf32> to vector<256x72xbf16>
    %c7 = arith.constant 7 : index
    %c0_53 = arith.constant 0 : index
    %c0_54 = arith.constant 0 : index
    %61 = vector.load %arg2[%c7, %c0_53, %c0_54] : memref<9x72x128xbf16, #tpu.memory_space<vmem>>, vector<1x72x128xbf16>
    %62 = vector.shape_cast %61 : vector<1x72x128xbf16> to vector<72x128xbf16>
    %cst_55 = arith.constant dense<0.000000e+00> : vector<256x128xf32>
    %63 = tpu.matmul %60, %62, %cst_55 {dimension_numbers = #tpu.dot_dimension_numbers<[1], [0], [0], [1], [0, 0, 1, 1], [], []>} : vector<256x72xbf16>, vector<72x128xbf16>, vector<256x128xf32> -> vector<256x128xf32>
    %64 = arith.addf %56, %63 : vector<256x128xf32>
    %c0_56 = arith.constant 0 : index
    %c2_57 = arith.constant 2 : index
    %c2_58 = arith.constant 2 : index
    %c0_59 = arith.constant 0 : index
    %65 = vector.load %arg1[%c0_56, %c2_57, %c2_58, %c0_59] : memref<1x18x18x72xf32, #tpu.memory_space<vmem>>, vector<1x16x16x72xf32>
    %66 = vector.shape_cast %65 : vector<1x16x16x72xf32> to vector<16x16x72xf32>
    %67 = vector.shape_cast %66 : vector<16x16x72xf32> to vector<256x72xf32>
    %68 = arith.truncf %67 : vector<256x72xf32> to vector<256x72xbf16>
    %c8 = arith.constant 8 : index
    %c0_60 = arith.constant 0 : index
    %c0_61 = arith.constant 0 : index
    %69 = vector.load %arg2[%c8, %c0_60, %c0_61] : memref<9x72x128xbf16, #tpu.memory_space<vmem>>, vector<1x72x128xbf16>
    %70 = vector.shape_cast %69 : vector<1x72x128xbf16> to vector<72x128xbf16>
    %cst_62 = arith.constant dense<0.000000e+00> : vector<256x128xf32>
    %71 = tpu.matmul %68, %70, %cst_62 {dimension_numbers = #tpu.dot_dimension_numbers<[1], [0], [0], [1], [0, 0, 1, 1], [], []>} : vector<256x72xbf16>, vector<72x128xbf16>, vector<256x128xf32> -> vector<256x128xf32>
    %72 = arith.addf %64, %71 : vector<256x128xf32>
    %cst_63 = arith.constant dense<0.000000e+00> : vector<128xf32>
    %73 = vector.multi_reduction <add>, %72, %cst_63 [0] : vector<256x128xf32> to vector<128xf32>
    %74 = vector.shape_cast %73 : vector<128xf32> to vector<1x128xf32>
    %75 = arith.mulf %72, %72 : vector<256x128xf32>
    %cst_64 = arith.constant dense<0.000000e+00> : vector<128xf32>
    %76 = vector.multi_reduction <add>, %75, %cst_64 [0] : vector<256x128xf32> to vector<128xf32>
    %77 = vector.shape_cast %76 : vector<128xf32> to vector<1x128xf32>
    %c0_65 = arith.constant 0 : index
    %c0_66 = arith.constant 0 : index
    %78 = vector.load %arg4[%c0_65, %c0_66] : memref<128x128xf32, #tpu.memory_space<vmem>>, vector<128x128xf32>
    %cst_67 = arith.constant dense<0.000000e+00> : vector<1x128xf32>
    %79 = tpu.matmul %74, %78, %cst_67 {dimension_numbers = #tpu.dot_dimension_numbers<[1], [0], [0], [1], [0, 0, 1, 1], [], []>} : vector<1x128xf32>, vector<128x128xf32>, vector<1x128xf32> -> vector<1x128xf32>
    %c0_68 = arith.constant 0 : index
    %c0_69 = arith.constant 0 : index
    %80 = vector.load %arg4[%c0_68, %c0_69] : memref<128x128xf32, #tpu.memory_space<vmem>>, vector<128x128xf32>
    %cst_70 = arith.constant dense<0.000000e+00> : vector<1x128xf32>
    %81 = tpu.matmul %77, %80, %cst_70 {dimension_numbers = #tpu.dot_dimension_numbers<[1], [0], [0], [1], [0, 0, 1, 1], [], []>} : vector<1x128xf32>, vector<128x128xf32>, vector<1x128xf32> -> vector<1x128xf32>
    %82 = arith.mulf %79, %79 : vector<1x128xf32>
    %83 = arith.subf %81, %82 : vector<1x128xf32>
    %cst_71 = arith.constant 0.000000e+00 : f32
    %84 = vector.broadcast %cst_71 : f32 to vector<1x128xf32>
    %85 = arith.maximumf %83, %84 : vector<1x128xf32>
    %86 = vector.broadcast %79 : vector<1x128xf32> to vector<256x128xf32>
    %87 = arith.subf %72, %86 : vector<256x128xf32>
    %cst_72 = arith.constant 9.99999974E-6 : f32
    %88 = vector.broadcast %cst_72 : f32 to vector<1x128xf32>
    %89 = arith.addf %85, %88 : vector<1x128xf32>
    %90 = math.rsqrt %89 : vector<1x128xf32>
    %91 = vector.broadcast %90 : vector<1x128xf32> to vector<256x128xf32>
    %92 = arith.mulf %87, %91 : vector<256x128xf32>
    %cst_73 = arith.constant 5.000000e-01 : f32
    %93 = vector.broadcast %cst_73 : f32 to vector<256x128xf32>
    %94 = arith.mulf %93, %92 : vector<256x128xf32>
    %cst_74 = arith.constant 0.707106769 : f32
    %95 = vector.broadcast %cst_74 : f32 to vector<256x128xf32>
    %96 = arith.mulf %92, %95 : vector<256x128xf32>
    %97 = math.erf %96 : vector<256x128xf32>
    %cst_75 = arith.constant 1.000000e+00 : f32
    %98 = vector.broadcast %cst_75 : f32 to vector<256x128xf32>
    %99 = arith.addf %98, %97 : vector<256x128xf32>
    %100 = arith.mulf %94, %99 : vector<256x128xf32>
    %cst_76 = arith.constant 0.000000e+00 : f32
    %101 = vector.broadcast %cst_76 : f32 to vector<1x18x144xf32>
    %c0_77 = arith.constant 0 : index
    %c0_78 = arith.constant 0 : index
    %c0_79 = arith.constant 0 : index
    %102 = vector.load %arg7[%c0_77, %c0_78, %c0_79] : memref<18x18x144xf32, #tpu.memory_space<vmem>>, vector<1x18x144xf32>
    tpu.vector_store %arg7[%c0_77, %c0_78, %c0_79], %101 {strides = array<i32>} : memref<18x18x144xf32, #tpu.memory_space<vmem>>, vector<1x18x144xf32>,
    %cst_80 = arith.constant 0.000000e+00 : f32
    %103 = vector.broadcast %cst_80 : f32 to vector<1x18x144xf32>
    %c17 = arith.constant 17 : index
    %c0_81 = arith.constant 0 : index
    %c0_82 = arith.constant 0 : index
    %104 = vector.load %arg7[%c17, %c0_81, %c0_82] : memref<18x18x144xf32, #tpu.memory_space<vmem>>, vector<1x18x144xf32>
    tpu.vector_store %arg7[%c17, %c0_81, %c0_82], %103 {strides = array<i32>} : memref<18x18x144xf32, #tpu.memory_space<vmem>>, vector<1x18x144xf32>,
    %cst_83 = arith.constant 0.000000e+00 : f32
    %105 = vector.broadcast %cst_83 : f32 to vector<16x1x144xf32>
    %c1_84 = arith.constant 1 : index
    %c0_85 = arith.constant 0 : index
    %c0_86 = arith.constant 0 : index
    %106 = vector.load %arg7[%c1_84, %c0_85, %c0_86] : memref<18x18x144xf32, #tpu.memory_space<vmem>>, vector<16x1x144xf32>
    tpu.vector_store %arg7[%c1_84, %c0_85, %c0_86], %105 {strides = array<i32>} : memref<18x18x144xf32, #tpu.memory_space<vmem>>, vector<16x1x144xf32>,
    %cst_87 = arith.constant 0.000000e+00 : f32
    %107 = vector.broadcast %cst_87 : f32 to vector<16x1x144xf32>
    %c1_88 = arith.constant 1 : index
    %c17_89 = arith.constant 17 : index
    %c0_90 = arith.constant 0 : index
    %108 = vector.load %arg7[%c1_88, %c17_89, %c0_90] : memref<18x18x144xf32, #tpu.memory_space<vmem>>, vector<16x1x144xf32>
    tpu.vector_store %arg7[%c1_88, %c17_89, %c0_90], %107 {strides = array<i32>} : memref<18x18x144xf32, #tpu.memory_space<vmem>>, vector<16x1x144xf32>,
    %cst_91 = arith.constant 0.000000e+00 : f32
    %109 = vector.broadcast %cst_91 : f32 to vector<16x16x16xf32>
    %c1_92 = arith.constant 1 : index
    %c1_93 = arith.constant 1 : index
    %c128 = arith.constant 128 : index
    %110 = vector.load %arg7[%c1_92, %c1_93, %c128] : memref<18x18x144xf32, #tpu.memory_space<vmem>>, vector<16x16x16xf32>
    tpu.vector_store %arg7[%c1_92, %c1_93, %c128], %109 {strides = array<i32>} : memref<18x18x144xf32, #tpu.memory_space<vmem>>, vector<16x16x16xf32>,
    %111 = vector.shape_cast %100 : vector<256x128xf32> to vector<16x16x128xf32>
    %c1_94 = arith.constant 1 : index
    %c1_95 = arith.constant 1 : index
    %c0_96 = arith.constant 0 : index
    %112 = vector.load %arg7[%c1_94, %c1_95, %c0_96] : memref<18x18x144xf32, #tpu.memory_space<vmem>>, vector<16x16x128xf32>
    tpu.vector_store %arg7[%c1_94, %c1_95, %c0_96], %111 {strides = array<i32>} : memref<18x18x144xf32, #tpu.memory_space<vmem>>, vector<16x16x128xf32>,
    %cst_97 = arith.constant 0.000000e+00 : f32
    %113 = vector.broadcast %cst_97 : f32 to vector<256x128xf32>
    %c0_98 = arith.constant 0 : index
    %c0_99 = arith.constant 0 : index
    %c0_100 = arith.constant 0 : index
    %114 = vector.load %arg7[%c0_98, %c0_99, %c0_100] : memref<18x18x144xf32, #tpu.memory_space<vmem>>, vector<16x16x144xf32>
    %115 = vector.shape_cast %114 : vector<16x16x144xf32> to vector<256x144xf32>
    %116 = arith.truncf %115 : vector<256x144xf32> to vector<256x144xbf16>
    %c0_101 = arith.constant 0 : index
    %c0_102 = arith.constant 0 : index
    %c0_103 = arith.constant 0 : index
    %117 = vector.load %arg3[%c0_101, %c0_102, %c0_103] : memref<9x144x128xbf16, #tpu.memory_space<vmem>>, vector<1x144x128xbf16>
    %118 = vector.shape_cast %117 : vector<1x144x128xbf16> to vector<144x128xbf16>
    %cst_104 = arith.constant dense<0.000000e+00> : vector<256x128xf32>
    %119 = tpu.matmul %116, %118, %cst_104 {dimension_numbers = #tpu.dot_dimension_numbers<[1], [0], [0], [1], [0, 0, 1, 1], [], []>} : vector<256x144xbf16>, vector<144x128xbf16>, vector<256x128xf32> -> vector<256x128xf32>
    %120 = arith.addf %113, %119 : vector<256x128xf32>
    %c0_105 = arith.constant 0 : index
    %c1_106 = arith.constant 1 : index
    %c0_107 = arith.constant 0 : index
    %121 = vector.load %arg7[%c0_105, %c1_106, %c0_107] : memref<18x18x144xf32, #tpu.memory_space<vmem>>, vector<16x16x144xf32>
    %122 = vector.shape_cast %121 : vector<16x16x144xf32> to vector<256x144xf32>
    %123 = arith.truncf %122 : vector<256x144xf32> to vector<256x144xbf16>
    %c1_108 = arith.constant 1 : index
    %c0_109 = arith.constant 0 : index
    %c0_110 = arith.constant 0 : index
    %124 = vector.load %arg3[%c1_108, %c0_109, %c0_110] : memref<9x144x128xbf16, #tpu.memory_space<vmem>>, vector<1x144x128xbf16>
    %125 = vector.shape_cast %124 : vector<1x144x128xbf16> to vector<144x128xbf16>
    %cst_111 = arith.constant dense<0.000000e+00> : vector<256x128xf32>
    %126 = tpu.matmul %123, %125, %cst_111 {dimension_numbers = #tpu.dot_dimension_numbers<[1], [0], [0], [1], [0, 0, 1, 1], [], []>} : vector<256x144xbf16>, vector<144x128xbf16>, vector<256x128xf32> -> vector<256x128xf32>
    %127 = arith.addf %120, %126 : vector<256x128xf32>
    %c0_112 = arith.constant 0 : index
    %c2_113 = arith.constant 2 : index
    %c0_114 = arith.constant 0 : index
    %128 = vector.load %arg7[%c0_112, %c2_113, %c0_114] : memref<18x18x144xf32, #tpu.memory_space<vmem>>, vector<16x16x144xf32>
    %129 = vector.shape_cast %128 : vector<16x16x144xf32> to vector<256x144xf32>
    %130 = arith.truncf %129 : vector<256x144xf32> to vector<256x144xbf16>
    %c2_115 = arith.constant 2 : index
    %c0_116 = arith.constant 0 : index
    %c0_117 = arith.constant 0 : index
    %131 = vector.load %arg3[%c2_115, %c0_116, %c0_117] : memref<9x144x128xbf16, #tpu.memory_space<vmem>>, vector<1x144x128xbf16>
    %132 = vector.shape_cast %131 : vector<1x144x128xbf16> to vector<144x128xbf16>
    %cst_118 = arith.constant dense<0.000000e+00> : vector<256x128xf32>
    %133 = tpu.matmul %130, %132, %cst_118 {dimension_numbers = #tpu.dot_dimension_numbers<[1], [0], [0], [1], [0, 0, 1, 1], [], []>} : vector<256x144xbf16>, vector<144x128xbf16>, vector<256x128xf32> -> vector<256x128xf32>
    %134 = arith.addf %127, %133 : vector<256x128xf32>
    %c1_119 = arith.constant 1 : index
    %c0_120 = arith.constant 0 : index
    %c0_121 = arith.constant 0 : index
    %135 = vector.load %arg7[%c1_119, %c0_120, %c0_121] : memref<18x18x144xf32, #tpu.memory_space<vmem>>, vector<16x16x144xf32>
    %136 = vector.shape_cast %135 : vector<16x16x144xf32> to vector<256x144xf32>
    %137 = arith.truncf %136 : vector<256x144xf32> to vector<256x144xbf16>
    %c3_122 = arith.constant 3 : index
    %c0_123 = arith.constant 0 : index
    %c0_124 = arith.constant 0 : index
    %138 = vector.load %arg3[%c3_122, %c0_123, %c0_124] : memref<9x144x128xbf16, #tpu.memory_space<vmem>>, vector<1x144x128xbf16>
    %139 = vector.shape_cast %138 : vector<1x144x128xbf16> to vector<144x128xbf16>
    %cst_125 = arith.constant dense<0.000000e+00> : vector<256x128xf32>
    %140 = tpu.matmul %137, %139, %cst_125 {dimension_numbers = #tpu.dot_dimension_numbers<[1], [0], [0], [1], [0, 0, 1, 1], [], []>} : vector<256x144xbf16>, vector<144x128xbf16>, vector<256x128xf32> -> vector<256x128xf32>
    %141 = arith.addf %134, %140 : vector<256x128xf32>
    %c1_126 = arith.constant 1 : index
    %c1_127 = arith.constant 1 : index
    %c0_128 = arith.constant 0 : index
    %142 = vector.load %arg7[%c1_126, %c1_127, %c0_128] : memref<18x18x144xf32, #tpu.memory_space<vmem>>, vector<16x16x144xf32>
    %143 = vector.shape_cast %142 : vector<16x16x144xf32> to vector<256x144xf32>
    %144 = arith.truncf %143 : vector<256x144xf32> to vector<256x144xbf16>
    %c4_129 = arith.constant 4 : index
    %c0_130 = arith.constant 0 : index
    %c0_131 = arith.constant 0 : index
    %145 = vector.load %arg3[%c4_129, %c0_130, %c0_131] : memref<9x144x128xbf16, #tpu.memory_space<vmem>>, vector<1x144x128xbf16>
    %146 = vector.shape_cast %145 : vector<1x144x128xbf16> to vector<144x128xbf16>
    %cst_132 = arith.constant dense<0.000000e+00> : vector<256x128xf32>
    %147 = tpu.matmul %144, %146, %cst_132 {dimension_numbers = #tpu.dot_dimension_numbers<[1], [0], [0], [1], [0, 0, 1, 1], [], []>} : vector<256x144xbf16>, vector<144x128xbf16>, vector<256x128xf32> -> vector<256x128xf32>
    %148 = arith.addf %141, %147 : vector<256x128xf32>
    %c1_133 = arith.constant 1 : index
    %c2_134 = arith.constant 2 : index
    %c0_135 = arith.constant 0 : index
    %149 = vector.load %arg7[%c1_133, %c2_134, %c0_135] : memref<18x18x144xf32, #tpu.memory_space<vmem>>, vector<16x16x144xf32>
    %150 = vector.shape_cast %149 : vector<16x16x144xf32> to vector<256x144xf32>
    %151 = arith.truncf %150 : vector<256x144xf32> to vector<256x144xbf16>
    %c5_136 = arith.constant 5 : index
    %c0_137 = arith.constant 0 : index
    %c0_138 = arith.constant 0 : index
    %152 = vector.load %arg3[%c5_136, %c0_137, %c0_138] : memref<9x144x128xbf16, #tpu.memory_space<vmem>>, vector<1x144x128xbf16>
    %153 = vector.shape_cast %152 : vector<1x144x128xbf16> to vector<144x128xbf16>
    %cst_139 = arith.constant dense<0.000000e+00> : vector<256x128xf32>
    %154 = tpu.matmul %151, %153, %cst_139 {dimension_numbers = #tpu.dot_dimension_numbers<[1], [0], [0], [1], [0, 0, 1, 1], [], []>} : vector<256x144xbf16>, vector<144x128xbf16>, vector<256x128xf32> -> vector<256x128xf32>
    %155 = arith.addf %148, %154 : vector<256x128xf32>
    %c2_140 = arith.constant 2 : index
    %c0_141 = arith.constant 0 : index
    %c0_142 = arith.constant 0 : index
    %156 = vector.load %arg7[%c2_140, %c0_141, %c0_142] : memref<18x18x144xf32, #tpu.memory_space<vmem>>, vector<16x16x144xf32>
    %157 = vector.shape_cast %156 : vector<16x16x144xf32> to vector<256x144xf32>
    %158 = arith.truncf %157 : vector<256x144xf32> to vector<256x144xbf16>
    %c6_143 = arith.constant 6 : index
    %c0_144 = arith.constant 0 : index
    %c0_145 = arith.constant 0 : index
    %159 = vector.load %arg3[%c6_143, %c0_144, %c0_145] : memref<9x144x128xbf16, #tpu.memory_space<vmem>>, vector<1x144x128xbf16>
    %160 = vector.shape_cast %159 : vector<1x144x128xbf16> to vector<144x128xbf16>
    %cst_146 = arith.constant dense<0.000000e+00> : vector<256x128xf32>
    %161 = tpu.matmul %158, %160, %cst_146 {dimension_numbers = #tpu.dot_dimension_numbers<[1], [0], [0], [1], [0, 0, 1, 1], [], []>} : vector<256x144xbf16>, vector<144x128xbf16>, vector<256x128xf32> -> vector<256x128xf32>
    %162 = arith.addf %155, %161 : vector<256x128xf32>
    %c2_147 = arith.constant 2 : index
    %c1_148 = arith.constant 1 : index
    %c0_149 = arith.constant 0 : index
    %163 = vector.load %arg7[%c2_147, %c1_148, %c0_149] : memref<18x18x144xf32, #tpu.memory_space<vmem>>, vector<16x16x144xf32>
    %164 = vector.shape_cast %163 : vector<16x16x144xf32> to vector<256x144xf32>
    %165 = arith.truncf %164 : vector<256x144xf32> to vector<256x144xbf16>
    %c7_150 = arith.constant 7 : index
    %c0_151 = arith.constant 0 : index
    %c0_152 = arith.constant 0 : index
    %166 = vector.load %arg3[%c7_150, %c0_151, %c0_152] : memref<9x144x128xbf16, #tpu.memory_space<vmem>>, vector<1x144x128xbf16>
    %167 = vector.shape_cast %166 : vector<1x144x128xbf16> to vector<144x128xbf16>
    %cst_153 = arith.constant dense<0.000000e+00> : vector<256x128xf32>
    %168 = tpu.matmul %165, %167, %cst_153 {dimension_numbers = #tpu.dot_dimension_numbers<[1], [0], [0], [1], [0, 0, 1, 1], [], []>} : vector<256x144xbf16>, vector<144x128xbf16>, vector<256x128xf32> -> vector<256x128xf32>
    %169 = arith.addf %162, %168 : vector<256x128xf32>
    %c2_154 = arith.constant 2 : index
    %c2_155 = arith.constant 2 : index
    %c0_156 = arith.constant 0 : index
    %170 = vector.load %arg7[%c2_154, %c2_155, %c0_156] : memref<18x18x144xf32, #tpu.memory_space<vmem>>, vector<16x16x144xf32>
    %171 = vector.shape_cast %170 : vector<16x16x144xf32> to vector<256x144xf32>
    %172 = arith.truncf %171 : vector<256x144xf32> to vector<256x144xbf16>
    %c8_157 = arith.constant 8 : index
    %c0_158 = arith.constant 0 : index
    %c0_159 = arith.constant 0 : index
    %173 = vector.load %arg3[%c8_157, %c0_158, %c0_159] : memref<9x144x128xbf16, #tpu.memory_space<vmem>>, vector<1x144x128xbf16>
    %174 = vector.shape_cast %173 : vector<1x144x128xbf16> to vector<144x128xbf16>
    %cst_160 = arith.constant dense<0.000000e+00> : vector<256x128xf32>
    %175 = tpu.matmul %172, %174, %cst_160 {dimension_numbers = #tpu.dot_dimension_numbers<[1], [0], [0], [1], [0, 0, 1, 1], [], []>} : vector<256x144xbf16>, vector<144x128xbf16>, vector<256x128xf32> -> vector<256x128xf32>
    %176 = arith.addf %169, %175 : vector<256x128xf32>
    %cst_161 = arith.constant dense<0.000000e+00> : vector<128xf32>
    %177 = vector.multi_reduction <add>, %176, %cst_161 [0] : vector<256x128xf32> to vector<128xf32>
    %178 = vector.shape_cast %177 : vector<128xf32> to vector<1x128xf32>
    %179 = arith.mulf %176, %176 : vector<256x128xf32>
    %cst_162 = arith.constant dense<0.000000e+00> : vector<128xf32>
    %180 = vector.multi_reduction <add>, %179, %cst_162 [0] : vector<256x128xf32> to vector<128xf32>
    %181 = vector.shape_cast %180 : vector<128xf32> to vector<1x128xf32>
    %c0_163 = arith.constant 0 : index
    %c0_164 = arith.constant 0 : index
    %182 = vector.load %arg5[%c0_163, %c0_164] : memref<128x128xf32, #tpu.memory_space<vmem>>, vector<128x128xf32>
    %cst_165 = arith.constant dense<0.000000e+00> : vector<1x128xf32>
    %183 = tpu.matmul %178, %182, %cst_165 {dimension_numbers = #tpu.dot_dimension_numbers<[1], [0], [0], [1], [0, 0, 1, 1], [], []>} : vector<1x128xf32>, vector<128x128xf32>, vector<1x128xf32> -> vector<1x128xf32>
    %c0_166 = arith.constant 0 : index
    %c0_167 = arith.constant 0 : index
    %184 = vector.load %arg5[%c0_166, %c0_167] : memref<128x128xf32, #tpu.memory_space<vmem>>, vector<128x128xf32>
    %cst_168 = arith.constant dense<0.000000e+00> : vector<1x128xf32>
    %185 = tpu.matmul %181, %184, %cst_168 {dimension_numbers = #tpu.dot_dimension_numbers<[1], [0], [0], [1], [0, 0, 1, 1], [], []>} : vector<1x128xf32>, vector<128x128xf32>, vector<1x128xf32> -> vector<1x128xf32>
    %186 = arith.mulf %183, %183 : vector<1x128xf32>
    %187 = arith.subf %185, %186 : vector<1x128xf32>
    %cst_169 = arith.constant 0.000000e+00 : f32
    %188 = vector.broadcast %cst_169 : f32 to vector<1x128xf32>
    %189 = arith.maximumf %187, %188 : vector<1x128xf32>
    %190 = vector.broadcast %183 : vector<1x128xf32> to vector<256x128xf32>
    %191 = arith.subf %176, %190 : vector<256x128xf32>
    %cst_170 = arith.constant 9.99999974E-6 : f32
    %192 = vector.broadcast %cst_170 : f32 to vector<1x128xf32>
    %193 = arith.addf %189, %192 : vector<1x128xf32>
    %194 = math.rsqrt %193 : vector<1x128xf32>
    %195 = vector.broadcast %194 : vector<1x128xf32> to vector<256x128xf32>
    %196 = arith.mulf %191, %195 : vector<256x128xf32>
    %cst_171 = arith.constant 5.000000e-01 : f32
    %197 = vector.broadcast %cst_171 : f32 to vector<256x128xf32>
    %198 = arith.mulf %197, %196 : vector<256x128xf32>
    %cst_172 = arith.constant 0.707106769 : f32
    %199 = vector.broadcast %cst_172 : f32 to vector<256x128xf32>
    %200 = arith.mulf %196, %199 : vector<256x128xf32>
    %201 = math.erf %200 : vector<256x128xf32>
    %cst_173 = arith.constant 1.000000e+00 : f32
    %202 = vector.broadcast %cst_173 : f32 to vector<256x128xf32>
    %203 = arith.addf %202, %201 : vector<256x128xf32>
    %204 = arith.mulf %198, %203 : vector<256x128xf32>
    %c0_174 = arith.constant 0 : index
    %c0_175 = arith.constant 0 : index
    %c0_176 = arith.constant 0 : index
    %205 = vector.load %arg6[%c0_174, %c0_175, %c0_176] : memref<1x256x128xf32, #tpu.memory_space<vmem>>, vector<1x256x128xf32>
    %206 = vector.shape_cast %205 : vector<1x256x128xf32> to vector<256x128xf32>
    %207 = vector.shape_cast %204 : vector<256x128xf32> to vector<1x256x128xf32>
    tpu.vector_store %arg6[%c0_174, %c0_175, %c0_176], %207 {strides = array<i32>} : memref<1x256x128xf32, #tpu.memory_space<vmem>>, vector<1x256x128xf32>,
    return
  }
  func.func @transform_0(%arg0: i32) -> (i32, i32, i32, i32) {
    %c0_i32 = arith.constant 0 : i32
    %c0_i32_0 = arith.constant 0 : i32
    %c0_i32_1 = arith.constant 0 : i32
    %c0_i32_2 = arith.constant 0 : i32
    return %arg0, %c0_i32, %c0_i32_0, %c0_i32_1 : i32, i32, i32, i32
  }
  func.func @transform_1(%arg0: i32) -> (i32, i32, i32) {
    %c0_i32 = arith.constant 0 : i32
    %c0_i32_0 = arith.constant 0 : i32
    %c0_i32_1 = arith.constant 0 : i32
    %c0_i32_2 = arith.constant 0 : i32
    return %c0_i32, %c0_i32_0, %c0_i32_1 : i32, i32, i32
  }
  func.func @transform_2(%arg0: i32) -> (i32, i32, i32) {
    %c0_i32 = arith.constant 0 : i32
    %c0_i32_0 = arith.constant 0 : i32
    %c0_i32_1 = arith.constant 0 : i32
    %c0_i32_2 = arith.constant 0 : i32
    return %c0_i32, %c0_i32_0, %c0_i32_1 : i32, i32, i32
  }
  func.func @transform_3(%arg0: i32) -> (i32, i32) {
    %c0_i32 = arith.constant 0 : i32
    %c0_i32_0 = arith.constant 0 : i32
    %c0_i32_1 = arith.constant 0 : i32
    return %c0_i32, %c0_i32_0 : i32, i32
  }
  func.func @transform_4(%arg0: i32) -> (i32, i32) {
    %c0_i32 = arith.constant 0 : i32
    %c0_i32_0 = arith.constant 0 : i32
    %c0_i32_1 = arith.constant 0 : i32
    return %c0_i32, %c0_i32_0 : i32, i32
  }
  func.func @transform_5(%arg0: i32) -> (i32, i32, i32) {
    %c0_i32 = arith.constant 0 : i32
    %c0_i32_0 = arith.constant 0 : i32
    %c0_i32_1 = arith.constant 0 : i32
    return %arg0, %c0_i32, %c0_i32_0 : i32, i32, i32
  }
}

</mosaic_0001>

<llo_original>
// kernel: double_conv_forward.1
$region0: #{double_conv_forward.1}
  #allocation0 [shape = 'u32[]', space=smem, size = 0x4, offset = 0x4, fixed_abs, tag = 'smem constant byte address 0x4 - core index']
  #allocation1 [shape = 'u32[144,128]{1,0:T(1,128)}', space=vmem, size = 0x12000, scoped, tag = 'internal scratch']
  #allocation2 [shape = 'f32[18,18,144]{2,1,0:T(8,128)}', space=vmem, size = 0x6c000, scoped, tag = 'scratch operand']
  %s0 = inlined_call_operand.vmem [shape: f32[2,18,18,72], index: 0, kind: input, shape index: {}]
  %s1 = inlined_call_operand.vmem [shape: bf16[9,72,128], index: 1, kind: input, shape index: {}]
  %s2 = inlined_call_operand.vmem [shape: bf16[9,144,128], index: 2, kind: input, shape index: {}]
  %s3 = inlined_call_operand.vmem [shape: f32[128,128], index: 3, kind: input, shape index: {}, may-alias: {3,4}]
  %s4 = inlined_call_operand.vmem [shape: f32[128,128], index: 4, kind: input, shape index: {}, may-alias: {3,4}]
  %s5 = inlined_call_operand.vmem [shape: f32[2,256,128], index: 5, kind: output, shape index: {}]
  %s6 = sld [smem:[#allocation0]]
  $region53: #{double_conv_forward.1} parent=0
    _
  %s8 = ssub.s32 1, %s6
  %s9 = scalar_select 0, %s8, %s6
  loop: start=0, step=1, limit=4
  $region2: #{double_conv_forward.1} parent=0 // loop_pre_header
    _
  $region3: #{double_conv_forward.1} parent=0 // loop_header
    %s11 = sphi 0, %s15
    %p12 = scmp.ge.s32.totalorder %s11, 4
    %s21 = sphi 0, %s23
    %s24 = sphi 0, %s21
    %s25 = sphi 0, %s24
    %s41 = sphi 0, %s25
    %s45 = sphi 0, %s45
    %s47 = sphi 0, %s45
    %s48 = sphi 0, %s47
    %s62 = sphi 0, %s48
    %s66 = sphi 0, %s66
    %s68 = sphi 0, %s66
    %s69 = sphi 0, %s68
    %s83 = sphi 0, %s69
    %s87 = sphi 0, %s87
    %s89 = sphi 0, %s87
    %s90 = sphi 0, %s89
    %s104 = sphi 0, %s90
    %s108 = sphi 0, %s108
    %s110 = sphi 0, %s108
    %s111 = sphi 0, %s110
    %s125 = sphi 0, %s111
    %s131 = sphi 0, %s133
    %s134 = sphi 0, %s131
    %s135 = sphi 0, %s134
    %s151 = sphi 0, %s135
  $region4: #{double_conv_forward.1} parent=0 // loop_header_branch
    %14 = sbr.rel (%p12) target = $region8
  $region5: #{double_conv_forward.1} parent=0 // loop_body
    %s16 = ssub.s32 %s11, 1
    %s17 = ssub.s32 %s11, 2
    %s18 = sadd.s32 %s11, 1
    %s19 = ssub.s32 %s11, %s18
    %p20 = scmp.eq.s32.totalorder %s19, 0
    %s22 = sadd.s32 %s21, 1
    %s23 = scalar_select %p20, %s21, %s22
    %p26 = pneg %p20
    %p27 = scmp.eq.s32.totalorder %s11, 1
    %p28 = por %p26, %p27
    %p29 = scmp.ne.s32.totalorder %s21, %s24
    %p30 = scmp.eq.s32.totalorder %s11, 0
    %p31 = por %p29, %p30
    %p32 = scmp.ne.s32.totalorder %s21, %s24
    %p33 = scmp.eq.s32.totalorder %s16, 1
    %p34 = por %p32, %p33
    %p35 = scmp.ne.s32.totalorder %s24, %s25
    %p36 = scmp.eq.s32.totalorder %s16, 0
    %p37 = por %p35, %p36
    %p38 = scmp.ne.s32.totalorder %s24, %s25
    %p39 = scmp.eq.s32.totalorder %s17, 1
    %p40 = por %p38, %p39
    %p42 = scmp.ne.s32.totalorder %s25, %s41
    %p43 = scmp.eq.s32.totalorder %s17, 0
    %p44 = por %p42, %p43
    %s46 = sadd.s32 %s45, 1
    %p49 = scmp.eq.s32.totalorder %s11, 1
    %p50 = scmp.ne.s32.totalorder %s45, %s47
    %p51 = scmp.eq.s32.totalorder %s11, 0
    %p52 = por %p50, %p51
    %p53 = scmp.ne.s32.totalorder %s45, %s47
    %p54 = scmp.eq.s32.totalorder %s16, 1
    %p55 = por %p53, %p54
    %p56 = scmp.ne.s32.totalorder %s47, %s48
    %p57 = scmp.eq.s32.totalorder %s16, 0
    %p58 = por %p56, %p57
    %p59 = scmp.ne.s32.totalorder %s47, %s48
    %p60 = scmp.eq.s32.totalorder %s17, 1
    %p61 = por %p59, %p60
    %p63 = scmp.ne.s32.totalorder %s48, %s62
    %p64 = scmp.eq.s32.totalorder %s17, 0
    %p65 = por %p63, %p64
    %s67 = sadd.s32 %s66, 1
    %p70 = scmp.eq.s32.totalorder %s11, 1
    %p71 = scmp.ne.s32.totalorder %s66, %s68
    %p72 = scmp.eq.s32.totalorder %s11, 0
    %p73 = por %p71, %p72
    %p74 = scmp.ne.s32.totalorder %s66, %s68
    %p75 = scmp.eq.s32.totalorder %s16, 1
    %p76 = por %p74, %p75
    %p77 = scmp.ne.s32.totalorder %s68, %s69
    %p78 = scmp.eq.s32.totalorder %s16, 0
    %p79 = por %p77, %p78
    %p80 = scmp.ne.s32.totalorder %s68, %s69
    %p81 = scmp.eq.s32.totalorder %s17, 1
    %p82 = por %p80, %p81
    %p84 = scmp.ne.s32.totalorder %s69, %s83
    %p85 = scmp.eq.s32.totalorder %s17, 0
    %p86 = por %p84, %p85
    %s88 = sadd.s32 %s87, 1
    %p91 = scmp.eq.s32.totalorder %s11, 1
    %p92 = scmp.ne.s32.totalorder %s87, %s89
    %p93 = scmp.eq.s32.totalorder %s11, 0
    %p94 = por %p92, %p93
    %p95 = scmp.ne.s32.totalorder %s87, %s89
    %p96 = scmp.eq.s32.totalorder %s16, 1
    %p97 = por %p95, %p96
    %p98 = scmp.ne.s32.totalorder %s89, %s90
    %p99 = scmp.eq.s32.totalorder %s16, 0
    %p100 = por %p98, %p99
    %p101 = scmp.ne.s32.totalorder %s89, %s90
    %p102 = scmp.eq.s32.totalorder %s17, 1
    %p103 = por %p101, %p102
    %p105 = scmp.ne.s32.totalorder %s90, %s104
    %p106 = scmp.eq.s32.totalorder %s17, 0
    %p107 = por %p105, %p106
    %s109 = sadd.s32 %s108, 1
    %p112 = scmp.eq.s32.totalorder %s11, 1
    %p113 = scmp.ne.s32.totalorder %s108, %s110
    %p114 = scmp.eq.s32.totalorder %s11, 0
    %p115 = por %p113, %p114
    %p116 = scmp.ne.s32.totalorder %s108, %s110
    %p117 = scmp.eq.s32.totalorder %s16, 1
    %p118 = por %p116, %p117
    %p119 = scmp.ne.s32.totalorder %s110, %s111
    %p120 = scmp.eq.s32.totalorder %s16, 0
    %p121 = por %p119, %p120
    %p122 = scmp.ne.s32.totalorder %s110, %s111
    %p123 = scmp.eq.s32.totalorder %s17, 1
    %p124 = por %p122, %p123
    %p126 = scmp.ne.s32.totalorder %s111, %s125
    %p127 = scmp.eq.s32.totalorder %s17, 0
    %p128 = por %p126, %p127
    %s129 = ssub.s32 %s11, %s18
    %p130 = scmp.eq.s32.totalorder %s129, 0
    %s132 = sadd.s32 %s131, 1
    %s133 = scalar_select %p130, %s131, %s132
    %p136 = pneg %p130
    %p137 = scmp.eq.s32.totalorder %s11, 1
    %p138 = por %p136, %p137
    %p139 = scmp.ne.s32.totalorder %s131, %s134
    %p140 = scmp.eq.s32.totalorder %s11, 0
    %p141 = por %p139, %p140
    %p142 = scmp.ne.s32.totalorder %s131, %s134
    %p143 = scmp.eq.s32.totalorder %s16, 1
    %p144 = por %p142, %p143
    %p145 = scmp.ne.s32.totalorder %s134, %s135
    %p146 = scmp.eq.s32.totalorder %s16, 0
    %p147 = por %p145, %p146
    %p148 = scmp.ne.s32.totalorder %s134, %s135
    %p149 = scmp.eq.s32.totalorder %s17, 1
    %p150 = por %p148, %p149
    %p152 = scmp.ne.s32.totalorder %s135, %s151
    %p153 = scmp.eq.s32.totalorder %s17, 0
    %p154 = por %p152, %p153
    %p155 = scmp.le.s32.totalorder 1, %s11
    %p156 = scmp.lt.s32.totalorder %s11, 3
    %p157 = pnand %p155, %p156
    %p158 = pneg %p157
    // Predicated region
    $region9: #{double_conv_forward.1} parent=5 // pred_check
      _
    $region10: #{double_conv_forward.1} parent=5 // pred_check_branch
      %160 = sbr.rel (%p157) target = $region12
    $region11: #{double_conv_forward.1} parent=5 // pred_region
      %s161 = ssub.s32 %s11, 1
      // Predicated region
      $region13: #{double_conv_forward.1} parent=11 // pred_check
        %p162 = pneg %p58
      $region14: #{double_conv_forward.1} parent=11 // pred_check_branch
        %164 = sbr.rel (%p162) target = $region16
      $region15: #{double_conv_forward.1} parent=11 // pred_region
        _
      $region16: #{double_conv_forward.1} parent=11 // pred_fallthru
        _
      // Predicated region
      $region17: #{double_conv_forward.1} parent=11 // pred_check
        %p165 = pneg %p79
      $region18: #{double_conv_forward.1} parent=11 // pred_check_branch
        %167 = sbr.rel (%p165) target = $region20
      $region19: #{double_conv_forward.1} parent=11 // pred_region
        _
      $region20: #{double_conv_forward.1} parent=11 // pred_fallthru
        _
      // Predicated region
      $region21: #{double_conv_forward.1} parent=11 // pred_check
        %p168 = pneg %p100
      $region22: #{double_conv_forward.1} parent=11 // pred_check_branch
        %170 = sbr.rel (%p168) target = $region24
      $region23: #{double_conv_forward.1} parent=11 // pred_region
        _
      $region24: #{double_conv_forward.1} parent=11 // pred_fallthru
        _
      // Predicated region
      $region25: #{double_conv_forward.1} parent=11 // pred_check
        %p171 = pneg %p121
      $region26: #{double_conv_forward.1} parent=11 // pred_check_branch
        %173 = sbr.rel (%p171) target = $region28
      $region27: #{double_conv_forward.1} parent=11 // pred_region
        _
      $region28: #{double_conv_forward.1} parent=11 // pred_fallthru
        _
    $region12: #{double_conv_forward.1} parent=5 // pred_fallthru
      _
    %p174 = scmp.lt.s32.totalorder %s11, 2
    // Predicated region
    $region29: #{double_conv_forward.1} parent=5 // pred_check
      %p175 = pneg %p174
    $region30: #{double_conv_forward.1} parent=5 // pred_check_branch
      %177 = sbr.rel (%p175) target = $region32
    $region31: #{double_conv_forward.1} parent=5 // pred_region
      // Predicated region
      $region33: #{double_conv_forward.1} parent=31 // pred_check
        %p178 = pneg %p31
      $region34: #{double_conv_forward.1} parent=31 // pred_check_branch
        %180 = sbr.rel (%p178) target = $region36
      $region35: #{double_conv_forward.1} parent=31 // pred_region
        %p181 = scmp.lt.s32.totalorder %s11, 1
        %s182 = scalar_select %p181, %s11, 1
        %s183 = smul.addr %s182, 54
        %s184 = smul.addr %s183, 8
        %s185 = scalar_lea.vmem %s0, %s184
      $region36: #{double_conv_forward.1} parent=31 // pred_fallthru
        _
    $region32: #{double_conv_forward.1} parent=5 // pred_fallthru
      _
    %p186 = scmp.le.s32.totalorder 1, %s11
    %p187 = scmp.lt.s32.totalorder %s11, 3
    %p188 = pnand %p186, %p187
    %p189 = pneg %p188
    // Predicated region
    $region37: #{double_conv_forward.1} parent=5 // pred_check
      _
    $region38: #{double_conv_forward.1} parent=5 // pred_check_branch
      %191 = sbr.rel (%p188) target = $region40
    $region39: #{double_conv_forward.1} parent=5 // pred_region
      %s192 = ssub.s32 %s11, 1
      %p193 = scmp.lt.s32.totalorder %s16, 1
      %s194 = scalar_select %p193, %s16, 1
      %s195 = smul.addr %s194, 54
      %s196 = smul.addr %s195, 8
      %s197 = scalar_lea.vmem %s0, %s196
      %p198 = pneg %p37
      %p199 = pneg %p34
      %p200 = pneg %p58
      %p201 = pneg %p55
      %p202 = pneg %p79
      %p203 = pneg %p76
      %p204 = pneg %p100
      %p205 = pneg %p97
      %p206 = pneg %p121
      %p207 = pneg %p118
      %p208 = pneg %p147
      %p209 = pneg %p144
      %p210 = scmp.lt.s32.totalorder %s16, 1
      %s211 = scalar_select %p210, %s16, 1
      %s212 = smul.addr %s211, 32
      %s213 = smul.addr %s212, 8
      %s214 = scalar_lea.vmem %s5, %s213
      %p215 = scmp.lt.s32.totalorder %s16, 1
      %s216 = scalar_select %p215, %s16, 1
      %s217 = smul.addr %s216, 54
      %s218 = smul.addr %s217, 8
      %s219 = scalar_lea.vmem %s0, %s218
      %p220 = scmp.lt.s32.totalorder %s16, 1
      %s221 = scalar_select %p220, %s16, 1
      %s222 = smul.addr %s221, 32
      %s223 = smul.addr %s222, 8
      %s224 = scalar_lea.vmem %s5, %s223
      %v226 = vld [vmem:[%s219] sm:$0xff]
      %v227 = vld [vmem:[%s219 + $0x8] sm:$0xff]
      %v228 = vld [vmem:[%s219 + $0x18] sm:$0xff]
      %v229 = vld [vmem:[%s219 + $0x20] sm:$0xff]
      %v230 = vld [vmem:[%s219 + $0x30] sm:$0xff]
      %v231 = vld [vmem:[%s219 + $0x38] sm:$0xff]
      %v232 = vld [vmem:[%s219 + $0x48] sm:$0xff]
      %v233 = vld [vmem:[%s219 + $0x50] sm:$0xff]
      %v234 = vld [vmem:[%s219 + $0x60] sm:$0xff]
      %v235 = vld [vmem:[%s219 + $0x68] sm:$0xff]
      %v236 = vld [vmem:[%s219 + $0x78] sm:$0xff]
      %v237 = vld [vmem:[%s219 + $0x80] sm:$0xff]
      %v238 = vld [vmem:[%s219 + $0x90] sm:$0xff]
      %v239 = vld [vmem:[%s219 + $0x98] sm:$0xff]
      %v240 = vld [vmem:[%s219 + $0xa8] sm:$0xff]
      %v241 = vld [vmem:[%s219 + $0xb0] sm:$0xff]
      %v242 = vld [vmem:[%s219 + $0xc0] sm:$0xff]
      %v243 = vld [vmem:[%s219 + $0xc8] sm:$0xff]
      %v244 = vld [vmem:[%s219 + $0xd8] sm:$0xff]
      %v245 = vld [vmem:[%s219 + $0xe0] sm:$0xff]
      %v246 = vld [vmem:[%s219 + $0xf0] sm:$0xff]
      %v247 = vld [vmem:[%s219 + $0xf8] sm:$0xff]
      %v248 = vld [vmem:[%s219 + $0x108] sm:$0xff]
      %v249 = vld [vmem:[%s219 + $0x110] sm:$0xff]
      %v250 = vld [vmem:[%s219 + $0x120] sm:$0xff]
      %v251 = vld [vmem:[%s219 + $0x128] sm:$0xff]
      %v252 = vld [vmem:[%s219 + $0x138] sm:$0xff]
      %v253 = vld [vmem:[%s219 + $0x140] sm:$0xff]
      %v254 = vld [vmem:[%s219 + $0x150] sm:$0xff]
      %v255 = vld [vmem:[%s219 + $0x158] sm:$0xff]
      %v256 = vld [vmem:[%s219 + $0x168] sm:$0xff]
      %v257 = vld [vmem:[%s219 + $0x170] sm:$0xff]
      %v258 = vpack.c.bf16 %v227, %v226
      %v259 = vpack.c.bf16 %v229, %v228
      %v260 = vpack.c.bf16 %v231, %v230
      %v261 = vpack.c.bf16 %v233, %v232
      %v262 = vpack.c.bf16 %v235, %v234
      %v263 = vpack.c.bf16 %v237, %v236
      %v264 = vpack.c.bf16 %v239, %v238
      %v265 = vpack.c.bf16 %v241, %v240
      %v266 = vpack.c.bf16 %v243, %v242
      %v267 = vpack.c.bf16 %v245, %v244
      %v268 = vpack.c.bf16 %v247, %v246
      %v269 = vpack.c.bf16 %v249, %v248
      %v270 = vpack.c.bf16 %v251, %v250
      %v271 = vpack.c.bf16 %v253, %v252
      %v272 = vpack.c.bf16 %v255, %v254
      %v273 = vpack.c.bf16 %v257, %v256
      %v274 = vld [vmem:[%s1] sm:$0xf]
      %v275 = vld [vmem:[%s1 + $0x4] sm:$0xf]
      %v276 = vld [vmem:[%s1 + $0x8] sm:$0xf]
      %v277 = vld [vmem:[%s1 + $0xc] sm:$0xf]
      %v278 = vld [vmem:[%s1 + $0x10] sm:$0xf]
      %v279 = vld [vmem:[%s1 + $0x14] sm:$0xf]
      %v280 = vld [vmem:[%s1 + $0x18] sm:$0xf]
      %v281 = vld [vmem:[%s1 + $0x1c] sm:$0xf]
      %v282 = vld [vmem:[%s1 + $0x20] sm:$0xf]
      %v283 = vld [vmem:[%s219 + $0x1] sm:$0xff]
      %v284 = vld [vmem:[%s219 + $0x9] sm:$0xff]
      %v285 = vld [vmem:[%s219 + $0x19] sm:$0xff]
      %v286 = vld [vmem:[%s219 + $0x21] sm:$0xff]
      %v287 = vld [vmem:[%s219 + $0x31] sm:$0xff]
      %v288 = vld [vmem:[%s219 + $0x39] sm:$0xff]
      %v289 = vld [vmem:[%s219 + $0x49] sm:$0xff]
      %v290 = vld [vmem:[%s219 + $0x51] sm:$0xff]
      %v291 = vld [vmem:[%s219 + $0x61] sm:$0xff]
      %v292 = vld [vmem:[%s219 + $0x69] sm:$0xff]
      %v293 = vld [vmem:[%s219 + $0x79] sm:$0xff]
      %v294 = vld [vmem:[%s219 + $0x81] sm:$0xff]
      %v295 = vld [vmem:[%s219 + $0x91] sm:$0xff]
      %v296 = vld [vmem:[%s219 + $0x99] sm:$0xff]
      %v297 = vld [vmem:[%s219 + $0xa9] sm:$0xff]
      %v298 = vld [vmem:[%s219 + $0xb1] sm:$0xff]
      %v299 = vld [vmem:[%s219 + $0xc1] sm:$0xff]
      %v300 = vld [vmem:[%s219 + $0xc9] sm:$0xff]
      %v301 = vld [vmem:[%s219 + $0xd9] sm:$0xff]
      %v302 = vld [vmem:[%s219 + $0xe1] sm:$0xff]
      %v303 = vld [vmem:[%s219 + $0xf1] sm:$0xff]
      %v304 = vld [vmem:[%s219 + $0xf9] sm:$0xff]
      %v305 = vld [vmem:[%s219 + $0x109] sm:$0xff]
      %v306 = vld [vmem:[%s219 + $0x111] sm:$0xff]
      %v307 = vld [vmem:[%s219 + $0x121] sm:$0xff]
      %v308 = vld [vmem:[%s219 + $0x129] sm:$0xff]
      %v309 = vld [vmem:[%s219 + $0x139] sm:$0xff]
      %v310 = vld [vmem:[%s219 + $0x141] sm:$0xff]
      %v311 = vld [vmem:[%s219 + $0x151] sm:$0xff]
      %v312 = vld [vmem:[%s219 + $0x159] sm:$0xff]
      %v313 = vld [vmem:[%s219 + $0x169] sm:$0xff]
      %v314 = vld [vmem:[%s219 + $0x171] sm:$0xff]
      %v315 = vpack.c.bf16 %v284, %v283
      %v316 = vpack.c.bf16 %v286, %v285
      %v317 = vpack.c.bf16 %v288, %v287
      %v318 = vpack.c.bf16 %v290, %v289
      %v319 = vpack.c.bf16 %v292, %v291
      %v320 = vpack.c.bf16 %v294, %v293
      %v321 = vpack.c.bf16 %v296, %v295
      %v322 = vpack.c.bf16 %v298, %v297
      %v323 = vpack.c.bf16 %v300, %v299
      %v324 = vpack.c.bf16 %v302, %v301
      %v325 = vpack.c.bf16 %v304, %v303
      %v326 = vpack.c.bf16 %v306, %v305
      %v327 = vpack.c.bf16 %v308, %v307
      %v328 = vpack.c.bf16 %v310, %v309
      %v329 = vpack.c.bf16 %v312, %v311
      %v330 = vpack.c.bf16 %v314, %v313
      %s331 = scalar_lea.vmem %s1, 36
      %v332 = vld [vmem:[%s331] sm:$0xf]
      %v333 = vld [vmem:[%s331 + $0x4] sm:$0xf]
      %v334 = vld [vmem:[%s331 + $0x8] sm:$0xf]
      %v335 = vld [vmem:[%s331 + $0xc] sm:$0xf]
      %v336 = vld [vmem:[%s331 + $0x10] sm:$0xf]
      %v337 = vld [vmem:[%s331 + $0x14] sm:$0xf]
      %v338 = vld [vmem:[%s331 + $0x18] sm:$0xf]
      %v339 = vld [vmem:[%s331 + $0x1c] sm:$0xf]
      %v340 = vld [vmem:[%s331 + $0x20] sm:$0xf]
      %v350 = vunpack.c.l.b16 %v332
      %v351 = vunpack.c.l.b16 %v333
      %v352 = vunpack.c.l.b16 %v334
      %v353 = vunpack.c.l.b16 %v335
      %v354 = vunpack.c.l.b16 %v336
      %v355 = vunpack.c.l.b16 %v337
      %v356 = vunpack.c.l.b16 %v338
      %v357 = vunpack.c.l.b16 %v339
      %v358 = vunpack.c.l.b16 %v340
      %v359 = vpack.c.b16 %v351, %v350
      %v360 = vpack.c.b16 %v353, %v352
      %v361 = vpack.c.b16 %v355, %v354
      %v362 = vpack.c.b16 %v357, %v356
      %v363 = vpack.c.b16 %v358, %v358
      %vm368 = vcmask 588800
      %v370 = vsel %vm368, %v315, 0
      %v373 = vsel %vm368, %v316, 0
      %v376 = vsel %vm368, %v317, 0
      %v379 = vsel %vm368, %v318, 0
      %v382 = vsel %vm368, %v319, 0
      %v385 = vsel %vm368, %v320, 0
      %v388 = vsel %vm368, %v321, 0
      %v391 = vsel %vm368, %v322, 0
      %v394 = vsel %vm368, %v323, 0
      %v397 = vsel %vm368, %v324, 0
      %v400 = vsel %vm368, %v325, 0
      %v403 = vsel %vm368, %v326, 0
      %v406 = vsel %vm368, %v327, 0
      %v409 = vsel %vm368, %v328, 0
      %v412 = vsel %vm368, %v329, 0
      %v415 = vsel %vm368, %v330, 0
      %vm417 = vcmask 1043456
      %v419 = vsel %vm417, %v363, 0
      %421 = vmatprep.subr.bf16.mxu0 0
      %422 = vmatpush1.bf16.msra.mxu0 %v359
      %423 = vmatprep.subr.bf16.mxu0 0
      %424 = vmatpush1.bf16.msra.mxu0 %v360
      %425 = vmatprep.subr.bf16.mxu0 0
      %426 = vmatpush1.bf16.msra.mxu0 %v361
      %427 = vmatprep.subr.bf16.mxu0 0
      %428 = vmatpush1.bf16.msra.mxu0 %v362
      %429 = vmatprep.subr.bf16.mxu0 0
      %430 = vmatpush1.bf16.msra.mxu0 %v419
      %431 = vmatprep.subr.bf16.mxu0 0
      %432 = vmatpush1.bf16.msra.mxu0 0
      %433 = vmatprep.subr.bf16.mxu0 0
      %434 = vmatpush1.bf16.msra.mxu0 0
      %435 = vmatprep.subr.bf16.mxu0 0
      %436 = vmatpush1.bf16.msra.mxu0 0
      %437 = vmatprep.subr.bf16.mxu0 0
      %438 = vmatpush1.bf16.msra.mxu0 0
      %439 = vmatprep.subr.bf16.mxu0 0
      %440 = vmatpush1.bf16.msra.mxu0 0
      %441 = vmatprep.subr.bf16.mxu0 0
      %442 = vmatpush1.bf16.msra.mxu0 0
      %443 = vmatprep.subr.bf16.mxu0 0
      %444 = vmatpush1.bf16.msra.mxu0 0
      %445 = vmatprep.subr.bf16.mxu0 0
      %446 = vmatpush1.bf16.msra.mxu0 0
      %447 = vmatprep.subr.bf16.mxu0 0
      %448 = vmatpush1.bf16.msra.mxu0 0
      %449 = vmatprep.subr.bf16.mxu0 0
      %450 = vmatpush1.bf16.msra.mxu0 0
      %451 = vmatprep.subr.bf16.mxu0 0
      %452 = vmatpush1.bf16.msra.mxu0 0
      %453 = vmatprep.mubr.bf16.mxu0 0
      %454 = vmatmul.mubr.bf16.gmra.mrb[0].mxu0 %v370
      %v455 = vpop.f32.mrb[0].mxu0
      %v456 = vadd.f32 0.0, %v455
      %v457 = vpop.f32.mrb[0].mxu0
      %v458 = vpop.f32.mrb[0].mxu0
      %v459 = vadd.f32 0.0, %v458
      %v460 = vpop.f32.mrb[0].mxu0
      %461 = vmatprep.mubr.bf16.mxu0 0
      %462 = vmatmul.mubr.bf16.gmra.mrb[0].mxu0 %v373
      %v463 = vpop.f32.mrb[0].mxu0
      %v464 = vadd.f32 0.0, %v463
      %v465 = vpop.f32.mrb[0].mxu0
      %v466 = vpop.f32.mrb[0].mxu0
      %v467 = vadd.f32 0.0, %v466
      %v468 = vpop.f32.mrb[0].mxu0
      %469 = vmatprep.mubr.bf16.mxu0 0
      %470 = vmatmul.mubr.bf16.gmra.mrb[0].mxu0 %v376
      %v471 = vpop.f32.mrb[0].mxu0
      %v472 = vadd.f32 0.0, %v471
      %v473 = vpop.f32.mrb[0].mxu0
      %v474 = vpop.f32.mrb[0].mxu0
      %v475 = vadd.f32 0.0, %v474
      %v476 = vpop.f32.mrb[0].mxu0
      %477 = vmatprep.mubr.bf16.mxu0 0
      %478 = vmatmul.mubr.bf16.gmra.mrb[0].mxu0 %v379
      %v479 = vpop.f32.mrb[0].mxu0
      %v480 = vadd.f32 0.0, %v479
      %v481 = vpop.f32.mrb[0].mxu0
      %v482 = vpop.f32.mrb[0].mxu0
      %v483 = vadd.f32 0.0, %v482
      %v484 = vpop.f32.mrb[0].mxu0
      %485 = vmatprep.mubr.bf16.mxu0 0
      %486 = vmatmul.mubr.bf16.gmra.mrb[0].mxu0 %v382
      %v487 = vpop.f32.mrb[0].mxu0
      %v488 = vadd.f32 0.0, %v487
      %v489 = vpop.f32.mrb[0].mxu0
      %v490 = vpop.f32.mrb[0].mxu0
      %v491 = vadd.f32 0.0, %v490
      %v492 = vpop.f32.mrb[0].mxu0
      %493 = vmatprep.mubr.bf16.mxu0 0
      %494 = vmatmul.mubr.bf16.gmra.mrb[0].mxu0 %v385
      %v495 = vpop.f32.mrb[0].mxu0
      %v496 = vadd.f32 0.0, %v495
      %v497 = vpop.f32.mrb[0].mxu0
      %v498 = vpop.f32.mrb[0].mxu0
      %v499 = vadd.f32 0.0, %v498
      %v500 = vpop.f32.mrb[0].mxu0
      %501 = vmatprep.mubr.bf16.mxu0 0
      %502 = vmatmul.mubr.bf16.gmra.mrb[0].mxu0 %v388
      %v503 = vpop.f32.mrb[0].mxu0
      %v504 = vadd.f32 0.0, %v503
      %v505 = vpop.f32.mrb[0].mxu0
      %v506 = vpop.f32.mrb[0].mxu0
      %v507 = vadd.f32 0.0, %v506
      %v508 = vpop.f32.mrb[0].mxu0
      %509 = vmatprep.mubr.bf16.mxu0 0
      %510 = vmatmul.mubr.bf16.gmra.mrb[0].mxu0 %v391
      %v511 = vpop.f32.mrb[0].mxu0
      %v512 = vadd.f32 0.0, %v511
      %v513 = vpop.f32.mrb[0].mxu0
      %v514 = vpop.f32.mrb[0].mxu0
      %v515 = vadd.f32 0.0, %v514
      %v516 = vpop.f32.mrb[0].mxu0
      %517 = vmatprep.mubr.bf16.mxu0 0
      %518 = vmatmul.mubr.bf16.gmra.mrb[0].mxu0 %v394
      %v519 = vpop.f32.mrb[0].mxu0
      %v520 = vadd.f32 0.0, %v519
      %v521 = vpop.f32.mrb[0].mxu0
      %v522 = vpop.f32.mrb[0].mxu0
      %v523 = vadd.f32 0.0, %v522
      %v524 = vpop.f32.mrb[0].mxu0
      %525 = vmatprep.mubr.bf16.mxu0 0
      %526 = vmatmul.mubr.bf16.gmra.mrb[0].mxu0 %v397
      %v527 = vpop.f32.mrb[0].mxu0
      %v528 = vadd.f32 0.0, %v527
      %v529 = vpop.f32.mrb[0].mxu0
      %v530 = vpop.f32.mrb[0].mxu0
      %v531 = vadd.f32 0.0, %v530
      %v532 = vpop.f32.mrb[0].mxu0
      %533 = vmatprep.mubr.bf16.mxu0 0
      %534 = vmatmul.mubr.bf16.gmra.mrb[0].mxu0 %v400
      %v535 = vpop.f32.mrb[0].mxu0
      %v536 = vadd.f32 0.0, %v535
      %v537 = vpop.f32.mrb[0].mxu0
      %v538 = vpop.f32.mrb[0].mxu0
      %v539 = vadd.f32 0.0, %v538
      %v540 = vpop.f32.mrb[0].mxu0
      %541 = vmatprep.mubr.bf16.mxu0 0
      %542 = vmatmul.mubr.bf16.gmra.mrb[0].mxu0 %v403
      %v543 = vpop.f32.mrb[0].mxu0
      %v544 = vadd.f32 0.0, %v543
      %v545 = vpop.f32.mrb[0].mxu0
      %v546 = vpop.f32.mrb[0].mxu0
      %v547 = vadd.f32 0.0, %v546
      %v548 = vpop.f32.mrb[0].mxu0
      %549 = vmatprep.mubr.bf16.mxu0 0
      %550 = vmatmul.mubr.bf16.gmra.mrb[0].mxu0 %v406
      %v551 = vpop.f32.mrb[0].mxu0
      %v552 = vadd.f32 0.0, %v551
      %v553 = vpop.f32.mrb[0].mxu0
      %v554 = vpop.f32.mrb[0].mxu0
      %v555 = vadd.f32 0.0, %v554
      %v556 = vpop.f32.mrb[0].mxu0
      %557 = vmatprep.mubr.bf16.mxu0 0
      %558 = vmatmul.mubr.bf16.gmra.mrb[0].mxu0 %v409
      %v559 = vpop.f32.mrb[0].mxu0
      %v560 = vadd.f32 0.0, %v559
      %v561 = vpop.f32.mrb[0].mxu0
      %v562 = vpop.f32.mrb[0].mxu0
      %v563 = vadd.f32 0.0, %v562
      %v564 = vpop.f32.mrb[0].mxu0
      %565 = vmatprep.mubr.bf16.mxu0 0
      %566 = vmatmul.mubr.bf16.gmra.mrb[0].mxu0 %v412
      %v567 = vpop.f32.mrb[0].mxu0
      %v568 = vadd.f32 0.0, %v567
      %v569 = vpop.f32.mrb[0].mxu0
      %v570 = vpop.f32.mrb[0].mxu0
      %v571 = vadd.f32 0.0, %v570
      %v572 = vpop.f32.mrb[0].mxu0
      %573 = vmatprep.mubr.bf16.mxu0 0
      %574 = vmatmul.mubr.bf16.gmra.mrb[0].mxu0 %v415
      %v575 = vpop.f32.mrb[0].mxu0
      %v576 = vadd.f32 0.0, %v575
      %v577 = vpop.f32.mrb[0].mxu0
      %v578 = vpop.f32.mrb[0].mxu0
      %v579 = vadd.f32 0.0, %v578
      %v580 = vpop.f32.mrb[0].mxu0
      %581 = vdwg.mxu0
      %v591 = vunpack.c.l.b16 %v274
      %v592 = vunpack.c.l.b16 %v275
      %v593 = vunpack.c.l.b16 %v276
      %v594 = vunpack.c.l.b16 %v277
      %v595 = vunpack.c.l.b16 %v278
      %v596 = vunpack.c.l.b16 %v279
      %v597 = vunpack.c.l.b16 %v280
      %v598 = vunpack.c.l.b16 %v281
      %v599 = vunpack.c.l.b16 %v282
      %v600 = vpack.c.b16 %v592, %v591
      %v601 = vpack.c.b16 %v594, %v593
      %v602 = vpack.c.b16 %v596, %v595
      %v603 = vpack.c.b16 %v598, %v597
      %v604 = vpack.c.b16 %v599, %v599
      %v610 = vsel %vm368, %v258, 0
      %v613 = vsel %vm368, %v259, 0
      %v616 = vsel %vm368, %v260, 0
      %v619 = vsel %vm368, %v261, 0
      %v622 = vsel %vm368, %v262, 0
      %v625 = vsel %vm368, %v263, 0
      %v628 = vsel %vm368, %v264, 0
      %v631 = vsel %vm368, %v265, 0
      %v634 = vsel %vm368, %v266, 0
      %v637 = vsel %vm368, %v267, 0
      %v640 = vsel %vm368, %v268, 0
      %v643 = vsel %vm368, %v269, 0
      %v646 = vsel %vm368, %v270, 0
      %v649 = vsel %vm368, %v271, 0
      %v652 = vsel %vm368, %v272, 0
      %v655 = vsel %vm368, %v273, 0
      %v658 = vsel %vm417, %v604, 0
      %660 = vmatprep.subr.bf16.mxu0 0
      %661 = vmatpush1.bf16.msra.mxu0 %v600
      %662 = vmatprep.subr.bf16.mxu0 0
      %663 = vmatpush1.bf16.msra.mxu0 %v601
      %664 = vmatprep.subr.bf16.mxu0 0
      %665 = vmatpush1.bf16.msra.mxu0 %v602
      %666 = vmatprep.subr.bf16.mxu0 0
      %667 = vmatpush1.bf16.msra.mxu0 %v603
      %668 = vmatprep.subr.bf16.mxu0 0
      %669 = vmatpush1.bf16.msra.mxu0 %v658
      %670 = vmatprep.subr.bf16.mxu0 0
      %671 = vmatpush1.bf16.msra.mxu0 0
      %672 = vmatprep.subr.bf16.mxu0 0
      %673 = vmatpush1.bf16.msra.mxu0 0
      %674 = vmatprep.subr.bf16.mxu0 0
      %675 = vmatpush1.bf16.msra.mxu0 0
      %676 = vmatprep.subr.bf16.mxu0 0
      %677 = vmatpush1.bf16.msra.mxu0 0
      %678 = vmatprep.subr.bf16.mxu0 0
      %679 = vmatpush1.bf16.msra.mxu0 0
      %680 = vmatprep.subr.bf16.mxu0 0
      %681 = vmatpush1.bf16.msra.mxu0 0
      %682 = vmatprep.subr.bf16.mxu0 0
      %683 = vmatpush1.bf16.msra.mxu0 0
      %684 = vmatprep.subr.bf16.mxu0 0
      %685 = vmatpush1.bf16.msra.mxu0 0
      %686 = vmatprep.subr.bf16.mxu0 0
      %687 = vmatpush1.bf16.msra.mxu0 0
      %688 = vmatprep.subr.bf16.mxu0 0
      %689 = vmatpush1.bf16.msra.mxu0 0
      %690 = vmatprep.subr.bf16.mxu0 0
      %691 = vmatpush1.bf16.msra.mxu0 0
      %692 = vmatprep.mubr.bf16.mxu0 0
      %693 = vmatmul.mubr.bf16.gmra.mrb[0].mxu0 %v610
      %v694 = vpop.f32.mrb[0].mxu0
      %v695 = vadd.f32 %v456, %v694
      %v696 = vpop.f32.mrb[0].mxu0
      %v697 = vpop.f32.mrb[0].mxu0
      %v698 = vadd.f32 %v459, %v697
      %v699 = vpop.f32.mrb[0].mxu0
      %700 = vmatprep.mubr.bf16.mxu0 0
      %701 = vmatmul.mubr.bf16.gmra.mrb[0].mxu0 %v613
      %v702 = vpop.f32.mrb[0].mxu0
      %v703 = vadd.f32 %v464, %v702
      %v704 = vpop.f32.mrb[0].mxu0
      %v705 = vpop.f32.mrb[0].mxu0
      %v706 = vadd.f32 %v467, %v705
      %v707 = vpop.f32.mrb[0].mxu0
      %708 = vmatprep.mubr.bf16.mxu0 0
      %709 = vmatmul.mubr.bf16.gmra.mrb[0].mxu0 %v616
      %v710 = vpop.f32.mrb[0].mxu0
      %v711 = vadd.f32 %v472, %v710
      %v712 = vpop.f32.mrb[0].mxu0
      %v713 = vpop.f32.mrb[0].mxu0
      %v714 = vadd.f32 %v475, %v713
      %v715 = vpop.f32.mrb[0].mxu0
      %716 = vmatprep.mubr.bf16.mxu0 0
      %717 = vmatmul.mubr.bf16.gmra.mrb[0].mxu0 %v619
      %v718 = vpop.f32.mrb[0].mxu0
      %v719 = vadd.f32 %v480, %v718
      %v720 = vpop.f32.mrb[0].mxu0
      %v721 = vpop.f32.mrb[0].mxu0
      %v722 = vadd.f32 %v483, %v721
      %v723 = vpop.f32.mrb[0].mxu0
      %724 = vmatprep.mubr.bf16.mxu0 0
      %725 = vmatmul.mubr.bf16.gmra.mrb[0].mxu0 %v622
      %v726 = vpop.f32.mrb[0].mxu0
      %v727 = vadd.f32 %v488, %v726
      %v728 = vpop.f32.mrb[0].mxu0
      %v729 = vpop.f32.mrb[0].mxu0
      %v730 = vadd.f32 %v491, %v729
      %v731 = vpop.f32.mrb[0].mxu0
      %732 = vmatprep.mubr.bf16.mxu0 0
      %733 = vmatmul.mubr.bf16.gmra.mrb[0].mxu0 %v625
      %v734 = vpop.f32.mrb[0].mxu0
      %v735 = vadd.f32 %v496, %v734
      %v736 = vpop.f32.mrb[0].mxu0
      %v737 = vpop.f32.mrb[0].mxu0
      %v738 = vadd.f32 %v499, %v737
      %v739 = vpop.f32.mrb[0].mxu0
      %740 = vmatprep.mubr.bf16.mxu0 0
      %741 = vmatmul.mubr.bf16.gmra.mrb[0].mxu0 %v628
      %v742 = vpop.f32.mrb[0].mxu0
      %v743 = vadd.f32 %v504, %v742
      %v744 = vpop.f32.mrb[0].mxu0
      %v745 = vpop.f32.mrb[0].mxu0
      %v746 = vadd.f32 %v507, %v745
      %v747 = vpop.f32.mrb[0].mxu0
      %748 = vmatprep.mubr.bf16.mxu0 0
      %749 = vmatmul.mubr.bf16.gmra.mrb[0].mxu0 %v631
      %v750 = vpop.f32.mrb[0].mxu0
      %v751 = vadd.f32 %v512, %v750
      %v752 = vpop.f32.mrb[0].mxu0
      %v753 = vpop.f32.mrb[0].mxu0
      %v754 = vadd.f32 %v515, %v753
      %v755 = vpop.f32.mrb[0].mxu0
      %756 = vmatprep.mubr.bf16.mxu0 0
      %757 = vmatmul.mubr.bf16.gmra.mrb[0].mxu0 %v634
      %v758 = vpop.f32.mrb[0].mxu0
      %v759 = vadd.f32 %v520, %v758
      %v760 = vpop.f32.mrb[0].mxu0
      %v761 = vpop.f32.mrb[0].mxu0
      %v762 = vadd.f32 %v523, %v761
      %v763 = vpop.f32.mrb[0].mxu0
      %764 = vmatprep.mubr.bf16.mxu0 0
      %765 = vmatmul.mubr.bf16.gmra.mrb[0].mxu0 %v637
      %v766 = vpop.f32.mrb[0].mxu0
      %v767 = vadd.f32 %v528, %v766
      %v768 = vpop.f32.mrb[0].mxu0
      %v769 = vpop.f32.mrb[0].mxu0
      %v770 = vadd.f32 %v531, %v769
      %v771 = vpop.f32.mrb[0].mxu0
      %772 = vmatprep.mubr.bf16.mxu0 0
      %773 = vmatmul.mubr.bf16.gmra.mrb[0].mxu0 %v640
      %v774 = vpop.f32.mrb[0].mxu0
      %v775 = vadd.f32 %v536, %v774
      %v776 = vpop.f32.mrb[0].mxu0
      %v777 = vpop.f32.mrb[0].mxu0
      %v778 = vadd.f32 %v539, %v777
      %v779 = vpop.f32.mrb[0].mxu0
      %780 = vmatprep.mubr.bf16.mxu0 0
      %781 = vmatmul.mubr.bf16.gmra.mrb[0].mxu0 %v643
      %v782 = vpop.f32.mrb[0].mxu0
      %v783 = vadd.f32 %v544, %v782
      %v784 = vpop.f32.mrb[0].mxu0
      %v785 = vpop.f32.mrb[0].mxu0
      %v786 = vadd.f32 %v547, %v785
      %v787 = vpop.f32.mrb[0].mxu0
      %788 = vmatprep.mubr.bf16.mxu0 0
      %789 = vmatmul.mubr.bf16.gmra.mrb[0].mxu0 %v646
      %v790 = vpop.f32.mrb[0].mxu0
      %v791 = vadd.f32 %v552, %v790
      %v792 = vpop.f32.mrb[0].mxu0
      %v793 = vpop.f32.mrb[0].mxu0
      %v794 = vadd.f32 %v555, %v793
      %v795 = vpop.f32.mrb[0].mxu0
      %796 = vmatprep.mubr.bf16.mxu0 0
      %797 = vmatmul.mubr.bf16.gmra.mrb[0].mxu0 %v649
      %v798 = vpop.f32.mrb[0].mxu0
      %v799 = vadd.f32 %v560, %v798
      %v800 = vpop.f32.mrb[0].mxu0
      %v801 = vpop.f32.mrb[0].mxu0
      %v802 = vadd.f32 %v563, %v801
      %v803 = vpop.f32.mrb[0].mxu0
      %804 = vmatprep.mubr.bf16.mxu0 0
      %805 = vmatmul.mubr.bf16.gmra.mrb[0].mxu0 %v652
      %v806 = vpop.f32.mrb[0].mxu0
      %v807 = vadd.f32 %v568, %v806
      %v808 = vpop.f32.mrb[0].mxu0
      %v809 = vpop.f32.mrb[0].mxu0
      %v810 = vadd.f32 %v571, %v809
      %v811 = vpop.f32.mrb[0].mxu0
      %812 = vmatprep.mubr.bf16.mxu0 0
      %813 = vmatmul.mubr.bf16.gmra.mrb[0].mxu0 %v655
      %v814 = vpop.f32.mrb[0].mxu0
      %v815 = vadd.f32 %v576, %v814
      %v816 = vpop.f32.mrb[0].mxu0
      %v817 = vpop.f32.mrb[0].mxu0
      %v818 = vadd.f32 %v579, %v817
      %v819 = vpop.f32.mrb[0].mxu0
      %820 = vdwg.mxu0
      %v821 = vld [vmem:[%s219 + $0x2] sm:$0xff]
      %v822 = vld [vmem:[%s219 + $0xa] sm:$0xff]
      %v823 = vld [vmem:[%s219 + $0x1a] sm:$0xff]
      %v824 = vld [vmem:[%s219 + $0x22] sm:$0xff]
      %v825 = vld [vmem:[%s219 + $0x32] sm:$0xff]
      %v826 = vld [vmem:[%s219 + $0x3a] sm:$0xff]
      %v827 = vld [vmem:[%s219 + $0x4a] sm:$0xff]
      %v828 = vld [vmem:[%s219 + $0x52] sm:$0xff]
      %v829 = vld [vmem:[%s219 + $0x62] sm:$0xff]
      %v830 = vld [vmem:[%s219 + $0x6a] sm:$0xff]
      %v831 = vld [vmem:[%s219 + $0x7a] sm:$0xff]
      %v832 = vld [vmem:[%s219 + $0x82] sm:$0xff]
      %v833 = vld [vmem:[%s219 + $0x92] sm:$0xff]
      %v834 = vld [vmem:[%s219 + $0x9a] sm:$0xff]
      %v835 = vld [vmem:[%s219 + $0xaa] sm:$0xff]
      %v836 = vld [vmem:[%s219 + $0xb2] sm:$0xff]
      %v837 = vld [vmem:[%s219 + $0xc2] sm:$0xff]
      %v838 = vld [vmem:[%s219 + $0xca] sm:$0xff]
      %v839 = vld [vmem:[%s219 + $0xda] sm:$0xff]
      %v840 = vld [vmem:[%s219 + $0xe2] sm:$0xff]
      %v841 = vld [vmem:[%s219 + $0xf2] sm:$0xff]
      %v842 = vld [vmem:[%s219 + $0xfa] sm:$0xff]
      %v843 = vld [vmem:[%s219 + $0x10a] sm:$0xff]
      %v844 = vld [vmem:[%s219 + $0x112] sm:$0xff]
      %v845 = vld [vmem:[%s219 + $0x122] sm:$0xff]
      %v846 = vld [vmem:[%s219 + $0x12a] sm:$0xff]
      %v847 = vld [vmem:[%s219 + $0x13a] sm:$0xff]
      %v848 = vld [vmem:[%s219 + $0x142] sm:$0xff]
      %v849 = vld [vmem:[%s219 + $0x152] sm:$0xff]
      %v850 = vld [vmem:[%s219 + $0x15a] sm:$0xff]
      %v851 = vld [vmem:[%s219 + $0x16a] sm:$0xff]
      %v852 = vld [vmem:[%s219 + $0x172] sm:$0xff]
      %v853 = vpack.c.bf16 %v822, %v821
      %v854 = vpack.c.bf16 %v824, %v823
      %v855 = vpack.c.bf16 %v826, %v825
      %v856 = vpack.c.bf16 %v828, %v827
      %v857 = vpack.c.bf16 %v830, %v829
      %v858 = vpack.c.bf16 %v832, %v831
      %v859 = vpack.c.bf16 %v834, %v833
      %v860 = vpack.c.bf16 %v836, %v835
      %v861 = vpack.c.bf16 %v838, %v837
      %v862 = vpack.c.bf16 %v840, %v839
      %v863 = vpack.c.bf16 %v842, %v841
      %v864 = vpack.c.bf16 %v844, %v843
      %v865 = vpack.c.bf16 %v846, %v845
      %v866 = vpack.c.bf16 %v848, %v847
      %v867 = vpack.c.bf16 %v850, %v849
      %v868 = vpack.c.bf16 %v852, %v851
      %s869 = scalar_lea.vmem %s1, 72
      %v870 = vld [vmem:[%s869] sm:$0xf]
      %v871 = vld [vmem:[%s869 + $0x4] sm:$0xf]
      %v872 = vld [vmem:[%s869 + $0x8] sm:$0xf]
      %v873 = vld [vmem:[%s869 + $0xc] sm:$0xf]
      %v874 = vld [vmem:[%s869 + $0x10] sm:$0xf]
      %v875 = vld [vmem:[%s869 + $0x14] sm:$0xf]
      %v876 = vld [vmem:[%s869 + $0x18] sm:$0xf]
      %v877 = vld [vmem:[%s869 + $0x1c] sm:$0xf]
      %v878 = vld [vmem:[%s869 + $0x20] sm:$0xf]
      %v888 = vunpack.c.l.b16 %v870
      %v889 = vunpack.c.l.b16 %v871
      %v890 = vunpack.c.l.b16 %v872
      %v891 = vunpack.c.l.b16 %v873
      %v892 = vunpack.c.l.b16 %v874
      %v893 = vunpack.c.l.b16 %v875
      %v894 = vunpack.c.l.b16 %v876
      %v895 = vunpack.c.l.b16 %v877
      %v896 = vunpack.c.l.b16 %v878
      %v897 = vpack.c.b16 %v889, %v888
      %v898 = vpack.c.b16 %v891, %v890
      %v899 = vpack.c.b16 %v893, %v892
      %v900 = vpack.c.b16 %v895, %v894
      %v901 = vpack.c.b16 %v896, %v896
      %v907 = vsel %vm368, %v853, 0
      %v910 = vsel %vm368, %v854, 0
      %v913 = vsel %vm368, %v855, 0
      %v916 = vsel %vm368, %v856, 0
      %v919 = vsel %vm368, %v857, 0
      %v922 = vsel %vm368, %v858, 0
      %v925 = vsel %vm368, %v859, 0
      %v928 = vsel %vm368, %v860, 0
      %v931 = vsel %vm368, %v861, 0
      %v934 = vsel %vm368, %v862, 0
      %v937 = vsel %vm368, %v863, 0
      %v940 = vsel %vm368, %v864, 0
      %v943 = vsel %vm368, %v865, 0
      %v946 = vsel %vm368, %v866, 0
      %v949 = vsel %vm368, %v867, 0
      %v952 = vsel %vm368, %v868, 0
      %v955 = vsel %vm417, %v901, 0
      %957 = vmatprep.subr.bf16.mxu0 0
      %958 = vmatpush1.bf16.msra.mxu0 %v897
      %959 = vmatprep.subr.bf16.mxu0 0
      %960 = vmatpush1.bf16.msra.mxu0 %v898
      %961 = vmatprep.subr.bf16.mxu0 0
      %962 = vmatpush1.bf16.msra.mxu0 %v899
      %963 = vmatprep.subr.bf16.mxu0 0
      %964 = vmatpush1.bf16.msra.mxu0 %v900
      %965 = vmatprep.subr.bf16.mxu0 0
      %966 = vmatpush1.bf16.msra.mxu0 %v955
      %967 = vmatprep.subr.bf16.mxu0 0
      %968 = vmatpush1.bf16.msra.mxu0 0
      %969 = vmatprep.subr.bf16.mxu0 0
      %970 = vmatpush1.bf16.msra.mxu0 0
      %971 = vmatprep.subr.bf16.mxu0 0
      %972 = vmatpush1.bf16.msra.mxu0 0
      %973 = vmatprep.subr.bf16.mxu0 0
      %974 = vmatpush1.bf16.msra.mxu0 0
      %975 = vmatprep.subr.bf16.mxu0 0
      %976 = vmatpush1.bf16.msra.mxu0 0
      %977 = vmatprep.subr.bf16.mxu0 0
      %978 = vmatpush1.bf16.msra.mxu0 0
      %979 = vmatprep.subr.bf16.mxu0 0
      %980 = vmatpush1.bf16.msra.mxu0 0
      %981 = vmatprep.subr.bf16.mxu0 0
      %982 = vmatpush1.bf16.msra.mxu0 0
      %983 = vmatprep.subr.bf16.mxu0 0
      %984 = vmatpush1.bf16.msra.mxu0 0
      %985 = vmatprep.subr.bf16.mxu0 0
      %986 = vmatpush1.bf16.msra.mxu0 0
      %987 = vmatprep.subr.bf16.mxu0 0
      %988 = vmatpush1.bf16.msra.mxu0 0
      %989 = vmatprep.mubr.bf16.mxu0 0
      %990 = vmatmul.mubr.bf16.gmra.mrb[0].mxu0 %v907
      %v991 = vpop.f32.mrb[0].mxu0
      %v992 = vadd.f32 0.0, %v991
      %v993 = vpop.f32.mrb[0].mxu0
      %v994 = vpop.f32.mrb[0].mxu0
      %v995 = vadd.f32 0.0, %v994
      %v996 = vpop.f32.mrb[0].mxu0
      %997 = vmatprep.mubr.bf16.mxu0 0
      %998 = vmatmul.mubr.bf16.gmra.mrb[0].mxu0 %v910
      %v999 = vpop.f32.mrb[0].mxu0
      %v1000 = vadd.f32 0.0, %v999
      %v1001 = vpop.f32.mrb[0].mxu0
      %v1002 = vpop.f32.mrb[0].mxu0
      %v1003 = vadd.f32 0.0, %v1002
      %v1004 = vpop.f32.mrb[0].mxu0
      %1005 = vmatprep.mubr.bf16.mxu0 0
      %1006 = vmatmul.mubr.bf16.gmra.mrb[0].mxu0 %v913
      %v1007 = vpop.f32.mrb[0].mxu0
      %v1008 = vadd.f32 0.0, %v1007
      %v1009 = vpop.f32.mrb[0].mxu0
      %v1010 = vpop.f32.mrb[0].mxu0
      %v1011 = vadd.f32 0.0, %v1010
      %v1012 = vpop.f32.mrb[0].mxu0
      %1013 = vmatprep.mubr.bf16.mxu0 0
      %1014 = vmatmul.mubr.bf16.gmra.mrb[0].mxu0 %v916
      %v1015 = vpop.f32.mrb[0].mxu0
      %v1016 = vadd.f32 0.0, %v1015
      %v1017 = vpop.f32.mrb[0].mxu0
      %v1018 = vpop.f32.mrb[0].mxu0
      %v1019 = vadd.f32 0.0, %v1018
      %v1020 = vpop.f32.mrb[0].mxu0
      %1021 = vmatprep.mubr.bf16.mxu0 0
      %1022 = vmatmul.mubr.bf16.gmra.mrb[0].mxu0 %v919
      %v1023 = vpop.f32.mrb[0].mxu0
      %v1024 = vadd.f32 0.0, %v1023
      %v1025 = vpop.f32.mrb[0].mxu0
      %v1026 = vpop.f32.mrb[0].mxu0
      %v1027 = vadd.f32 0.0, %v1026
      %v1028 = vpop.f32.mrb[0].mxu0
      %1029 = vmatprep.mubr.bf16.mxu0 0
      %1030 = vmatmul.mubr.bf16.gmra.mrb[0].mxu0 %v922
      %v1031 = vpop.f32.mrb[0].mxu0
      %v1032 = vadd.f32 0.0, %v1031
      %v1033 = vpop.f32.mrb[0].mxu0
      %v1034 = vpop.f32.mrb[0].mxu0
      %v1035 = vadd.f32 0.0, %v1034
      %v1036 = vpop.f32.mrb[0].mxu0
      %1037 = vmatprep.mubr.bf16.mxu0 0
      %1038 = vmatmul.mubr.bf16.gmra.mrb[0].mxu0 %v925
      %v1039 = vpop.f32.mrb[0].mxu0
      %v1040 = vadd.f32 0.0, %v1039
      %v1041 = vpop.f32.mrb[0].mxu0
      %v1042 = vpop.f32.mrb[0].mxu0
      %v1043 = vadd.f32 0.0, %v1042
      %v1044 = vpop.f32.mrb[0].mxu0
      %1045 = vmatprep.mubr.bf16.mxu0 0
      %1046 = vmatmul.mubr.bf16.gmra.mrb[0].mxu0 %v928
      %v1047 = vpop.f32.mrb[0].mxu0
      %v1048 = vadd.f32 0.0, %v1047
      %v1049 = vpop.f32.mrb[0].mxu0
      %v1050 = vpop.f32.mrb[0].mxu0
      %v1051 = vadd.f32 0.0, %v1050
      %v1052 = vpop.f32.mrb[0].mxu0
      %1053 = vmatprep.mubr.bf16.mxu0 0
      %1054 = vmatmul.mubr.bf16.gmra.mrb[0].mxu0 %v931
      %v1055 = vpop.f32.mrb[0].mxu0
      %v1056 = vadd.f32 0.0, %v1055
      %v1057 = vpop.f32.mrb[0].mxu0
      %v1058 = vpop.f32.mrb[0].mxu0
      %v1059 = vadd.f32 0.0, %v1058
      %v1060 = vpop.f32.mrb[0].mxu0
      %1061 = vmatprep.mubr.bf16.mxu0 0
      %1062 = vmatmul.mubr.bf16.gmra.mrb[0].mxu0 %v934
      %v1063 = vpop.f32.mrb[0].mxu0
      %v1064 = vadd.f32 0.0, %v1063
      %v1065 = vpop.f32.mrb[0].mxu0
      %v1066 = vpop.f32.mrb[0].mxu0
      %v1067 = vadd.f32 0.0, %v1066
      %v1068 = vpop.f32.mrb[0].mxu0
      %1069 = vmatprep.mubr.bf16.mxu0 0
      %1070 = vmatmul.mubr.bf16.gmra.mrb[0].mxu0 %v937
      %v1071 = vpop.f32.mrb[0].mxu0
      %v1072 = vadd.f32 0.0, %v1071
      %v1073 = vpop.f32.mrb[0].mxu0
      %v1074 = vpop.f32.mrb[0].mxu0
      %v1075 = vadd.f32 0.0, %v1074
      %v1076 = vpop.f32.mrb[0].mxu0
      %1077 = vmatprep.mubr.bf16.mxu0 0
      %1078 = vmatmul.mubr.bf16.gmra.mrb[0].mxu0 %v940
      %v1079 = vpop.f32.mrb[0].mxu0
      %v1080 = vadd.f32 0.0, %v1079
      %v1081 = vpop.f32.mrb[0].mxu0
      %v1082 = vpop.f32.mrb[0].mxu0
      %v1083 = vadd.f32 0.0, %v1082
      %v1084 = vpop.f32.mrb[0].mxu0
      %1085 = vmatprep.mubr.bf16.mxu0 0
      %1086 = vmatmul.mubr.bf16.gmra.mrb[0].mxu0 %v943
      %v1087 = vpop.f32.mrb[0].mxu0
      %v1088 = vadd.f32 0.0, %v1087
      %v1089 = vpop.f32.mrb[0].mxu0
      %v1090 = vpop.f32.mrb[0].mxu0
      %v1091 = vadd.f32 0.0, %v1090
      %v1092 = vpop.f32.mrb[0].mxu0
      %1093 = vmatprep.mubr.bf16.mxu0 0
      %1094 = vmatmul.mubr.bf16.gmra.mrb[0].mxu0 %v946
      %v1095 = vpop.f32.mrb[0].mxu0
      %v1096 = vadd.f32 0.0, %v1095
      %v1097 = vpop.f32.mrb[0].mxu0
      %v1098 = vpop.f32.mrb[0].mxu0
      %v1099 = vadd.f32 0.0, %v1098
      %v1100 = vpop.f32.mrb[0].mxu0
      %1101 = vmatprep.mubr.bf16.mxu0 0
      %1102 = vmatmul.mubr.bf16.gmra.mrb[0].mxu0 %v949
      %v1103 = vpop.f32.mrb[0].mxu0
      %v1104 = vadd.f32 0.0, %v1103
      %v1105 = vpop.f32.mrb[0].mxu0
      %v1106 = vpop.f32.mrb[0].mxu0
      %v1107 = vadd.f32 0.0, %v1106
      %v1108 = vpop.f32.mrb[0].mxu0
      %1109 = vmatprep.mubr.bf16.mxu0 0
      %1110 = vmatmul.mubr.bf16.gmra.mrb[0].mxu0 %v952
      %v1111 = vpop.f32.mrb[0].mxu0
      %v1112 = vadd.f32 0.0, %v1111
      %v1113 = vpop.f32.mrb[0].mxu0
      %v1114 = vpop.f32.mrb[0].mxu0
      %v1115 = vadd.f32 0.0, %v1114
      %v1116 = vpop.f32.mrb[0].mxu0
      %1117 = vdwg.mxu0
      %v1118 = vadd.f32 %v695, %v992
      %v1119 = vadd.f32 %v698, %v995
      %v1120 = vadd.f32 %v703, %v1000
      %v1121 = vadd.f32 %v706, %v1003
      %v1122 = vadd.f32 %v711, %v1008
      %v1123 = vadd.f32 %v714, %v1011
      %v1124 = vadd.f32 %v719, %v1016
      %v1125 = vadd.f32 %v722, %v1019
      %v1126 = vadd.f32 %v727, %v1024
      %v1127 = vadd.f32 %v730, %v1027
      %v1128 = vadd.f32 %v735, %v1032
      %v1129 = vadd.f32 %v738, %v1035
      %v1130 = vadd.f32 %v743, %v1040
      %v1131 = vadd.f32 %v746, %v1043
      %v1132 = vadd.f32 %v751, %v1048
      %v1133 = vadd.f32 %v754, %v1051
      %v1134 = vadd.f32 %v759, %v1056
      %v1135 = vadd.f32 %v762, %v1059
      %v1136 = vadd.f32 %v767, %v1064
      %v1137 = vadd.f32 %v770, %v1067
      %v1138 = vadd.f32 %v775, %v1072
      %v1139 = vadd.f32 %v778, %v1075
      %v1140 = vadd.f32 %v783, %v1080
      %v1141 = vadd.f32 %v786, %v1083
      %v1142 = vadd.f32 %v791, %v1088
      %v1143 = vadd.f32 %v794, %v1091
      %v1144 = vadd.f32 %v799, %v1096
      %v1145 = vadd.f32 %v802, %v1099
      %v1146 = vadd.f32 %v807, %v1104
      %v1147 = vadd.f32 %v810, %v1107
      %v1148 = vadd.f32 %v815, %v1112
      %v1149 = vadd.f32 %v818, %v1115
      %s1150 = scalar_lea.vmem %s219, 24
      %v1151 = vld [vmem:[%s1150] sm:$0xff]
      %v1152 = vld [vmem:[%s1150 + $0x8] sm:$0xff]
      %v1153 = vld [vmem:[%s1150 + $0x18] sm:$0xff]
      %v1154 = vld [vmem:[%s1150 + $0x20] sm:$0xff]
      %v1155 = vld [vmem:[%s1150 + $0x30] sm:$0xff]
      %v1156 = vld [vmem:[%s1150 + $0x38] sm:$0xff]
      %v1157 = vld [vmem:[%s1150 + $0x48] sm:$0xff]
      %v1158 = vld [vmem:[%s1150 + $0x50] sm:$0xff]
      %v1159 = vld [vmem:[%s1150 + $0x60] sm:$0xff]
      %v1160 = vld [vmem:[%s1150 + $0x68] sm:$0xff]
      %v1161 = vld [vmem:[%s1150 + $0x78] sm:$0xff]
      %v1162 = vld [vmem:[%s1150 + $0x80] sm:$0xff]
      %v1163 = vld [vmem:[%s1150 + $0x90] sm:$0xff]
      %v1164 = vld [vmem:[%s1150 + $0x98] sm:$0xff]
      %v1165 = vld [vmem:[%s1150 + $0xa8] sm:$0xff]
      %v1166 = vld [vmem:[%s1150 + $0xb0] sm:$0xff]
      %v1167 = vld [vmem:[%s1150 + $0xc0] sm:$0xff]
      %v1168 = vld [vmem:[%s1150 + $0xc8] sm:$0xff]
      %v1169 = vld [vmem:[%s1150 + $0xd8] sm:$0xff]
      %v1170 = vld [vmem:[%s1150 + $0xe0] sm:$0xff]
      %v1171 = vld [vmem:[%s1150 + $0xf0] sm:$0xff]
      %v1172 = vld [vmem:[%s1150 + $0xf8] sm:$0xff]
      %v1173 = vld [vmem:[%s1150 + $0x108] sm:$0xff]
      %v1174 = vld [vmem:[%s1150 + $0x110] sm:$0xff]
      %v1175 = vld [vmem:[%s1150 + $0x120] sm:$0xff]
      %v1176 = vld [vmem:[%s1150 + $0x128] sm:$0xff]
      %v1177 = vld [vmem:[%s1150 + $0x138] sm:$0xff]
      %v1178 = vld [vmem:[%s1150 + $0x140] sm:$0xff]
      %v1179 = vld [vmem:[%s1150 + $0x150] sm:$0xff]
      %v1180 = vld [vmem:[%s1150 + $0x158] sm:$0xff]
      %v1181 = vld [vmem:[%s1150 + $0x168] sm:$0xff]
      %v1182 = vld [vmem:[%s1150 + $0x170] sm:$0xff]
      %v1183 = vpack.c.bf16 %v1152, %v1151
      %v1184 = vpack.c.bf16 %v1154, %v1153
      %v1185 = vpack.c.bf16 %v1156, %v1155
      %v1186 = vpack.c.bf16 %v1158, %v1157
      %v1187 = vpack.c.bf16 %v1160, %v1159
      %v1188 = vpack.c.bf16 %v1162, %v1161
      %v1189 = vpack.c.bf16 %v1164, %v1163
      %v1190 = vpack.c.bf16 %v1166, %v1165
      %v1191 = vpack.c.bf16 %v1168, %v1167
      %v1192 = vpack.c.bf16 %v1170, %v1169
      %v1193 = vpack.c.bf16 %v1172, %v1171
      %v1194 = vpack.c.bf16 %v1174, %v1173
      %v1195 = vpack.c.bf16 %v1176, %v1175
      %v1196 = vpack.c.bf16 %v1178, %v1177
      %v1197 = vpack.c.bf16 %v1180, %v1179
      %v1198 = vpack.c.bf16 %v1182, %v1181
      %s1199 = scalar_lea.vmem %s1, 108
      %v1200 = vld [vmem:[%s1199] sm:$0xf]
      %v1201 = vld [vmem:[%s1199 + $0x4] sm:$0xf]
      %v1202 = vld [vmem:[%s1199 + $0x8] sm:$0xf]
      %v1203 = vld [vmem:[%s1199 + $0xc] sm:$0xf]
      %v1204 = vld [vmem:[%s1199 + $0x10] sm:$0xf]
      %v1205 = vld [vmem:[%s1199 + $0x14] sm:$0xf]
      %v1206 = vld [vmem:[%s1199 + $0x18] sm:$0xf]
      %v1207 = vld [vmem:[%s1199 + $0x1c] sm:$0xf]
      %v1208 = vld [vmem:[%s1199 + $0x20] sm:$0xf]
      %v1218 = vunpack.c.l.b16 %v1200
      %v1219 = vunpack.c.l.b16 %v1201
      %v1220 = vunpack.c.l.b16 %v1202
      %v1221 = vunpack.c.l.b16 %v1203
      %v1222 = vunpack.c.l.b16 %v1204
      %v1223 = vunpack.c.l.b16 %v1205
      %v1224 = vunpack.c.l.b16 %v1206
      %v1225 = vunpack.c.l.b16 %v1207
      %v1226 = vunpack.c.l.b16 %v1208
      %v1227 = vpack.c.b16 %v1219, %v1218
      %v1228 = vpack.c.b16 %v1221, %v1220
      %v1229 = vpack.c.b16 %v1223, %v1222
      %v1230 = vpack.c.b16 %v1225, %v1224
      %v1231 = vpack.c.b16 %v1226, %v1226
      %v1237 = vsel %vm368, %v1183, 0
      %v1240 = vsel %vm368, %v1184, 0
      %v1243 = vsel %vm368, %v1185, 0
      %v1246 = vsel %vm368, %v1186, 0
      %v1249 = vsel %vm368, %v1187, 0
      %v1252 = vsel %vm368, %v1188, 0
      %v1255 = vsel %vm368, %v1189, 0
      %v1258 = vsel %vm368, %v1190, 0
      %v1261 = vsel %vm368, %v1191, 0
      %v1264 = vsel %vm368, %v1192, 0
      %v1267 = vsel %vm368, %v1193, 0
      %v1270 = vsel %vm368, %v1194, 0
      %v1273 = vsel %vm368, %v1195, 0
      %v1276 = vsel %vm368, %v1196, 0
      %v1279 = vsel %vm368, %v1197, 0
      %v1282 = vsel %vm368, %v1198, 0
      %v1285 = vsel %vm417, %v1231, 0
      %1287 = vmatprep.subr.bf16.mxu0 0
      %1288 = vmatpush1.bf16.msra.mxu0 %v1227
      %1289 = vmatprep.subr.bf16.mxu0 0
      %1290 = vmatpush1.bf16.msra.mxu0 %v1228
      %1291 = vmatprep.subr.bf16.mxu0 0
      %1292 = vmatpush1.bf16.msra.mxu0 %v1229
      %1293 = vmatprep.subr.bf16.mxu0 0
      %1294 = vmatpush1.bf16.msra.mxu0 %v1230
      %1295 = vmatprep.subr.bf16.mxu0 0
      %1296 = vmatpush1.bf16.msra.mxu0 %v1285
      %1297 = vmatprep.subr.bf16.mxu0 0
      %1298 = vmatpush1.bf16.msra.mxu0 0
      %1299 = vmatprep.subr.bf16.mxu0 0
      %1300 = vmatpush1.bf16.msra.mxu0 0
      %1301 = vmatprep.subr.bf16.mxu0 0
      %1302 = vmatpush1.bf16.msra.mxu0 0
      %1303 = vmatprep.subr.bf16.mxu0 0
      %1304 = vmatpush1.bf16.msra.mxu0 0
      %1305 = vmatprep.subr.bf16.mxu0 0
      %1306 = vmatpush1.bf16.msra.mxu0 0
      %1307 = vmatprep.subr.bf16.mxu0 0
      %1308 = vmatpush1.bf16.msra.mxu0 0
      %1309 = vmatprep.subr.bf16.mxu0 0
      %1310 = vmatpush1.bf16.msra.mxu0 0
      %1311 = vmatprep.subr.bf16.mxu0 0
      %1312 = vmatpush1.bf16.msra.mxu0 0
      %1313 = vmatprep.subr.bf16.mxu0 0
      %1314 = vmatpush1.bf16.msra.mxu0 0
      %1315 = vmatprep.subr.bf16.mxu0 0
      %1316 = vmatpush1.bf16.msra.mxu0 0
      %1317 = vmatprep.subr.bf16.mxu0 0
      %1318 = vmatpush1.bf16.msra.mxu0 0
      %1319 = vmatprep.mubr.bf16.mxu0 0
      %1320 = vmatmul.mubr.bf16.gmra.mrb[0].mxu0 %v1237
      %v1321 = vpop.f32.mrb[0].mxu0
      %v1322 = vadd.f32 0.0, %v1321
      %v1323 = vpop.f32.mrb[0].mxu0
      %v1324 = vpop.f32.mrb[0].mxu0
      %v1325 = vadd.f32 0.0, %v1324
      %v1326 = vpop.f32.mrb[0].mxu0
      %1327 = vmatprep.mubr.bf16.mxu0 0
      %1328 = vmatmul.mubr.bf16.gmra.mrb[0].mxu0 %v1240
      %v1329 = vpop.f32.mrb[0].mxu0
      %v1330 = vadd.f32 0.0, %v1329
      %v1331 = vpop.f32.mrb[0].mxu0
      %v1332 = vpop.f32.mrb[0].mxu0
      %v1333 = vadd.f32 0.0, %v1332
      %v1334 = vpop.f32.mrb[0].mxu0
      %1335 = vmatprep.mubr.bf16.mxu0 0
      %1336 = vmatmul.mubr.bf16.gmra.mrb[0].mxu0 %v1243
      %v1337 = vpop.f32.mrb[0].mxu0
      %v1338 = vadd.f32 0.0, %v1337
      %v1339 = vpop.f32.mrb[0].mxu0
      %v1340 = vpop.f32.mrb[0].mxu0
      %v1341 = vadd.f32 0.0, %v1340
      %v1342 = vpop.f32.mrb[0].mxu0
      %1343 = vmatprep.mubr.bf16.mxu0 0
      %1344 = vmatmul.mubr.bf16.gmra.mrb[0].mxu0 %v1246
      %v1345 = vpop.f32.mrb[0].mxu0
      %v1346 = vadd.f32 0.0, %v1345
      %v1347 = vpop.f32.mrb[0].mxu0
      %v1348 = vpop.f32.mrb[0].mxu0
      %v1349 = vadd.f32 0.0, %v1348
      %v1350 = vpop.f32.mrb[0].mxu0
      %1351 = vmatprep.mubr.bf16.mxu0 0
      %1352 = vmatmul.mubr.bf16.gmra.mrb[0].mxu0 %v1249
      %v1353 = vpop.f32.mrb[0].mxu0
      %v1354 = vadd.f32 0.0, %v1353
      %v1355 = vpop.f32.mrb[0].mxu0
      %v1356 = vpop.f32.mrb[0].mxu0
      %v1357 = vadd.f32 0.0, %v1356
      %v1358 = vpop.f32.mrb[0].mxu0
      %1359 = vmatprep.mubr.bf16.mxu0 0
      %1360 = vmatmul.mubr.bf16.gmra.mrb[0].mxu0 %v1252
      %v1361 = vpop.f32.mrb[0].mxu0
      %v1362 = vadd.f32 0.0, %v1361
      %v1363 = vpop.f32.mrb[0].mxu0
      %v1364 = vpop.f32.mrb[0].mxu0
      %v1365 = vadd.f32 0.0, %v1364
      %v1366 = vpop.f32.mrb[0].mxu0
      %1367 = vmatprep.mubr.bf16.mxu0 0
      %1368 = vmatmul.mubr.bf16.gmra.mrb[0].mxu0 %v1255
      %v1369 = vpop.f32.mrb[0].mxu0
      %v1370 = vadd.f32 0.0, %v1369
      %v1371 = vpop.f32.mrb[0].mxu0
      %v1372 = vpop.f32.mrb[0].mxu0
      %v1373 = vadd.f32 0.0, %v1372
      %v1374 = vpop.f32.mrb[0].mxu0
      %1375 = vmatprep.mubr.bf16.mxu0 0
      %1376 = vmatmul.mubr.bf16.gmra.mrb[0].mxu0 %v1258
      %v1377 = vpop.f32.mrb[0].mxu0
      %v1378 = vadd.f32 0.0, %v1377
      %v1379 = vpop.f32.mrb[0].mxu0
      %v1380 = vpop.f32.mrb[0].mxu0
      %v1381 = vadd.f32 0.0, %v1380
      %v1382 = vpop.f32.mrb[0].mxu0
      %1383 = vmatprep.mubr.bf16.mxu0 0
      %1384 = vmatmul.mubr.bf16.gmra.mrb[0].mxu0 %v1261
      %v1385 = vpop.f32.mrb[0].mxu0
      %v1386 = vadd.f32 0.0, %v1385
      %v1387 = vpop.f32.mrb[0].mxu0
      %v1388 = vpop.f32.mrb[0].mxu0
      %v1389 = vadd.f32 0.0, %v1388
      %v1390 = vpop.f32.mrb[0].mxu0
      %1391 = vmatprep.mubr.bf16.mxu0 0
      %1392 = vmatmul.mubr.bf16.gmra.mrb[0].mxu0 %v1264
      %v1393 = vpop.f32.mrb[0].mxu0
      %v1394 = vadd.f32 0.0, %v1393
      %v1395 = vpop.f32.mrb[0].mxu0
      %v1396 = vpop.f32.mrb[0].mxu0
      %v1397 = vadd.f32 0.0, %v1396
      %v1398 = vpop.f32.mrb[0].mxu0
      %1399 = vmatprep.mubr.bf16.mxu0 0
      %1400 = vmatmul.mubr.bf16.gmra.mrb[0].mxu0 %v1267
      %v1401 = vpop.f32.mrb[0].mxu0
      %v1402 = vadd.f32 0.0, %v1401
      %v1403 = vpop.f32.mrb[0].mxu0
      %v1404 = vpop.f32.mrb[0].mxu0
      %v1405 = vadd.f32 0.0, %v1404
      %v1406 = vpop.f32.mrb[0].mxu0
      %1407 = vmatprep.mubr.bf16.mxu0 0
      %1408 = vmatmul.mubr.bf16.gmra.mrb[0].mxu0 %v1270
      %v1409 = vpop.f32.mrb[0].mxu0
      %v1410 = vadd.f32 0.0, %v1409
      %v1411 = vpop.f32.mrb[0].mxu0
      %v1412 = vpop.f32.mrb[0].mxu0
      %v1413 = vadd.f32 0.0, %v1412
      %v1414 = vpop.f32.mrb[0].mxu0
      %1415 = vmatprep.mubr.bf16.mxu0 0
      %1416 = vmatmul.mubr.bf16.gmra.mrb[0].mxu0 %v1273
      %v1417 = vpop.f32.mrb[0].mxu0
      %v1418 = vadd.f32 0.0, %v1417
      %v1419 = vpop.f32.mrb[0].mxu0
      %v1420 = vpop.f32.mrb[0].mxu0
      %v1421 = vadd.f32 0.0, %v1420
      %v1422 = vpop.f32.mrb[0].mxu0
      %1423 = vmatprep.mubr.bf16.mxu0 0
      %1424 = vmatmul.mubr.bf16.gmra.mrb[0].mxu0 %v1276
      %v1425 = vpop.f32.mrb[0].mxu0
      %v1426 = vadd.f32 0.0, %v1425
      %v1427 = vpop.f32.mrb[0].mxu0
      %v1428 = vpop.f32.mrb[0].mxu0
      %v1429 = vadd.f32 0.0, %v1428
      %v1430 = vpop.f32.mrb[0].mxu0
      %1431 = vmatprep.mubr.bf16.mxu0 0
      %1432 = vmatmul.mubr.bf16.gmra.mrb[0].mxu0 %v1279
      %v1433 = vpop.f32.mrb[0].mxu0
      %v1434 = vadd.f32 0.0, %v1433
      %v1435 = vpop.f32.mrb[0].mxu0
      %v1436 = vpop.f32.mrb[0].mxu0
      %v1437 = vadd.f32 0.0, %v1436
      %v1438 = vpop.f32.mrb[0].mxu0
      %1439 = vmatprep.mubr.bf16.mxu0 0
      %1440 = vmatmul.mubr.bf16.gmra.mrb[0].mxu0 %v1282
      %v1441 = vpop.f32.mrb[0].mxu0
      %v1442 = vadd.f32 0.0, %v1441
      %v1443 = vpop.f32.mrb[0].mxu0
      %v1444 = vpop.f32.mrb[0].mxu0
      %v1445 = vadd.f32 0.0, %v1444
      %v1446 = vpop.f32.mrb[0].mxu0
      %1447 = vdwg.mxu0
      %v1448 = vadd.f32 %v1118, %v1322
      %v1449 = vadd.f32 %v1119, %v1325
      %v1450 = vadd.f32 %v1120, %v1330
      %v1451 = vadd.f32 %v1121, %v1333
      %v1452 = vadd.f32 %v1122, %v1338
      %v1453 = vadd.f32 %v1123, %v1341
      %v1454 = vadd.f32 %v1124, %v1346
      %v1455 = vadd.f32 %v1125, %v1349
      %v1456 = vadd.f32 %v1126, %v1354
      %v1457 = vadd.f32 %v1127, %v1357
      %v1458 = vadd.f32 %v1128, %v1362
      %v1459 = vadd.f32 %v1129, %v1365
      %v1460 = vadd.f32 %v1130, %v1370
      %v1461 = vadd.f32 %v1131, %v1373
      %v1462 = vadd.f32 %v1132, %v1378
      %v1463 = vadd.f32 %v1133, %v1381
      %v1464 = vadd.f32 %v1134, %v1386
      %v1465 = vadd.f32 %v1135, %v1389
      %v1466 = vadd.f32 %v1136, %v1394
      %v1467 = vadd.f32 %v1137, %v1397
      %v1468 = vadd.f32 %v1138, %v1402
      %v1469 = vadd.f32 %v1139, %v1405
      %v1470 = vadd.f32 %v1140, %v1410
      %v1471 = vadd.f32 %v1141, %v1413
      %v1472 = vadd.f32 %v1142, %v1418
      %v1473 = vadd.f32 %v1143, %v1421
      %v1474 = vadd.f32 %v1144, %v1426
      %v1475 = vadd.f32 %v1145, %v1429
      %v1476 = vadd.f32 %v1146, %v1434
      %v1477 = vadd.f32 %v1147, %v1437
      %v1478 = vadd.f32 %v1148, %v1442
      %v1479 = vadd.f32 %v1149, %v1445
      %v1480 = vld [vmem:[%s1150 + $0x1] sm:$0xff]
      %v1481 = vld [vmem:[%s1150 + $0x9] sm:$0xff]
      %v1482 = vld [vmem:[%s1150 + $0x19] sm:$0xff]
      %v1483 = vld [vmem:[%s1150 + $0x21] sm:$0xff]
      %v1484 = vld [vmem:[%s1150 + $0x31] sm:$0xff]
      %v1485 = vld [vmem:[%s1150 + $0x39] sm:$0xff]
      %v1486 = vld [vmem:[%s1150 + $0x49] sm:$0xff]
      %v1487 = vld [vmem:[%s1150 + $0x51] sm:$0xff]
      %v1488 = vld [vmem:[%s1150 + $0x61] sm:$0xff]
      %v1489 = vld [vmem:[%s1150 + $0x69] sm:$0xff]
      %v1490 = vld [vmem:[%s1150 + $0x79] sm:$0xff]
      %v1491 = vld [vmem:[%s1150 + $0x81] sm:$0xff]
      %v1492 = vld [vmem:[%s1150 + $0x91] sm:$0xff]
      %v1493 = vld [vmem:[%s1150 + $0x99] sm:$0xff]
      %v1494 = vld [vmem:[%s1150 + $0xa9] sm:$0xff]
      %v1495 = vld [vmem:[%s1150 + $0xb1] sm:$0xff]
      %v1496 = vld [vmem:[%s1150 + $0xc1] sm:$0xff]
      %v1497 = vld [vmem:[%s1150 + $0xc9] sm:$0xff]
      %v1498 = vld [vmem:[%s1150 + $0xd9] sm:$0xff]
      %v1499 = vld [vmem:[%s1150 + $0xe1] sm:$0xff]
      %v1500 = vld [vmem:[%s1150 + $0xf1] sm:$0xff]
      %v1501 = vld [vmem:[%s1150 + $0xf9] sm:$0xff]
      %v1502 = vld [vmem:[%s1150 + $0x109] sm:$0xff]
      %v1503 = vld [vmem:[%s1150 + $0x111] sm:$0xff]
      %v1504 = vld [vmem:[%s1150 + $0x121] sm:$0xff]
      %v1505 = vld [vmem:[%s1150 + $0x129] sm:$0xff]
      %v1506 = vld [vmem:[%s1150 + $0x139] sm:$0xff]
      %v1507 = vld [vmem:[%s1150 + $0x141] sm:$0xff]
      %v1508 = vld [vmem:[%s1150 + $0x151] sm:$0xff]
      %v1509 = vld [vmem:[%s1150 + $0x159] sm:$0xff]
      %v1510 = vld [vmem:[%s1150 + $0x169] sm:$0xff]
      %v1511 = vld [vmem:[%s1150 + $0x171] sm:$0xff]
      %v1512 = vpack.c.bf16 %v1481, %v1480
      %v1513 = vpack.c.bf16 %v1483, %v1482
      %v1514 = vpack.c.bf16 %v1485, %v1484
      %v1515 = vpack.c.bf16 %v1487, %v1486
      %v1516 = vpack.c.bf16 %v1489, %v1488
      %v1517 = vpack.c.bf16 %v1491, %v1490
      %v1518 = vpack.c.bf16 %v1493, %v1492
      %v1519 = vpack.c.bf16 %v1495, %v1494
      %v1520 = vpack.c.bf16 %v1497, %v1496
      %v1521 = vpack.c.bf16 %v1499, %v1498
      %v1522 = vpack.c.bf16 %v1501, %v1500
      %v1523 = vpack.c.bf16 %v1503, %v1502
      %v1524 = vpack.c.bf16 %v1505, %v1504
      %v1525 = vpack.c.bf16 %v1507, %v1506
      %v1526 = vpack.c.bf16 %v1509, %v1508
      %v1527 = vpack.c.bf16 %v1511, %v1510
      %s1528 = scalar_lea.vmem %s1, 144
      %v1529 = vld [vmem:[%s1528] sm:$0xf]
      %v1530 = vld [vmem:[%s1528 + $0x4] sm:$0xf]
      %v1531 = vld [vmem:[%s1528 + $0x8] sm:$0xf]
      %v1532 = vld [vmem:[%s1528 + $0xc] sm:$0xf]
      %v1533 = vld [vmem:[%s1528 + $0x10] sm:$0xf]
      %v1534 = vld [vmem:[%s1528 + $0x14] sm:$0xf]
      %v1535 = vld [vmem:[%s1528 + $0x18] sm:$0xf]
      %v1536 = vld [vmem:[%s1528 + $0x1c] sm:$0xf]
      %v1537 = vld [vmem:[%s1528 + $0x20] sm:$0xf]
      %v1547 = vunpack.c.l.b16 %v1529
      %v1548 = vunpack.c.l.b16 %v1530
      %v1549 = vunpack.c.l.b16 %v1531
      %v1550 = vunpack.c.l.b16 %v1532
      %v1551 = vunpack.c.l.b16 %v1533
      %v1552 = vunpack.c.l.b16 %v1534
      %v1553 = vunpack.c.l.b16 %v1535
      %v1554 = vunpack.c.l.b16 %v1536
      %v1555 = vunpack.c.l.b16 %v1537
      %v1556 = vpack.c.b16 %v1548, %v1547
      %v1557 = vpack.c.b16 %v1550, %v1549
      %v1558 = vpack.c.b16 %v1552, %v1551
      %v1559 = vpack.c.b16 %v1554, %v1553
      %v1560 = vpack.c.b16 %v1555, %v1555
      %v1566 = vsel %vm368, %v1512, 0
      %v1569 = vsel %vm368, %v1513, 0
      %v1572 = vsel %vm368, %v1514, 0
      %v1575 = vsel %vm368, %v1515, 0
      %v1578 = vsel %vm368, %v1516, 0
      %v1581 = vsel %vm368, %v1517, 0
      %v1584 = vsel %vm368, %v1518, 0
      %v1587 = vsel %vm368, %v1519, 0
      %v1590 = vsel %vm368, %v1520, 0
      %v1593 = vsel %vm368, %v1521, 0
      %v1596 = vsel %vm368, %v1522, 0
      %v1599 = vsel %vm368, %v1523, 0
      %v1602 = vsel %vm368, %v1524, 0
      %v1605 = vsel %vm368, %v1525, 0
      %v1608 = vsel %vm368, %v1526, 0
      %v1611 = vsel %vm368, %v1527, 0
      %v1614 = vsel %vm417, %v1560, 0
      %1616 = vmatprep.subr.bf16.mxu0 0
      %1617 = vmatpush1.bf16.msra.mxu0 %v1556
      %1618 = vmatprep.subr.bf16.mxu0 0
      %1619 = vmatpush1.bf16.msra.mxu0 %v1557
      %1620 = vmatprep.subr.bf16.mxu0 0
      %1621 = vmatpush1.bf16.msra.mxu0 %v1558
      %1622 = vmatprep.subr.bf16.mxu0 0
      %1623 = vmatpush1.bf16.msra.mxu0 %v1559
      %1624 = vmatprep.subr.bf16.mxu0 0
      %1625 = vmatpush1.bf16.msra.mxu0 %v1614
      %1626 = vmatprep.subr.bf16.mxu0 0
      %1627 = vmatpush1.bf16.msra.mxu0 0
      %1628 = vmatprep.subr.bf16.mxu0 0
      %1629 = vmatpush1.bf16.msra.mxu0 0
      %1630 = vmatprep.subr.bf16.mxu0 0
      %1631 = vmatpush1.bf16.msra.mxu0 0
      %1632 = vmatprep.subr.bf16.mxu0 0
      %1633 = vmatpush1.bf16.msra.mxu0 0
      %1634 = vmatprep.subr.bf16.mxu0 0
      %1635 = vmatpush1.bf16.msra.mxu0 0
      %1636 = vmatprep.subr.bf16.mxu0 0
      %1637 = vmatpush1.bf16.msra.mxu0 0
      %1638 = vmatprep.subr.bf16.mxu0 0
      %1639 = vmatpush1.bf16.msra.mxu0 0
      %1640 = vmatprep.subr.bf16.mxu0 0
      %1641 = vmatpush1.bf16.msra.mxu0 0
      %1642 = vmatprep.subr.bf16.mxu0 0
      %1643 = vmatpush1.bf16.msra.mxu0 0
      %1644 = vmatprep.subr.bf16.mxu0 0
      %1645 = vmatpush1.bf16.msra.mxu0 0
      %1646 = vmatprep.subr.bf16.mxu0 0
      %1647 = vmatpush1.bf16.msra.mxu0 0
      %1648 = vmatprep.mubr.bf16.mxu0 0
      %1649 = vmatmul.mubr.bf16.gmra.mrb[0].mxu0 %v1566
      %v1650 = vpop.f32.mrb[0].mxu0
      %v1651 = vadd.f32 0.0, %v1650
      %v1652 = vpop.f32.mrb[0].mxu0
      %v1653 = vpop.f32.mrb[0].mxu0
      %v1654 = vadd.f32 0.0, %v1653
      %v1655 = vpop.f32.mrb[0].mxu0
      %1656 = vmatprep.mubr.bf16.mxu0 0
      %1657 = vmatmul.mubr.bf16.gmra.mrb[0].mxu0 %v1569
      %v1658 = vpop.f32.mrb[0].mxu0
      %v1659 = vadd.f32 0.0, %v1658
      %v1660 = vpop.f32.mrb[0].mxu0
      %v1661 = vpop.f32.mrb[0].mxu0
      %v1662 = vadd.f32 0.0, %v1661
      %v1663 = vpop.f32.mrb[0].mxu0
      %1664 = vmatprep.mubr.bf16.mxu0 0
      %1665 = vmatmul.mubr.bf16.gmra.mrb[0].mxu0 %v1572
      %v1666 = vpop.f32.mrb[0].mxu0
      %v1667 = vadd.f32 0.0, %v1666
      %v1668 = vpop.f32.mrb[0].mxu0
      %v1669 = vpop.f32.mrb[0].mxu0
      %v1670 = vadd.f32 0.0, %v1669
      %v1671 = vpop.f32.mrb[0].mxu0
      %1672 = vmatprep.mubr.bf16.mxu0 0
      %1673 = vmatmul.mubr.bf16.gmra.mrb[0].mxu0 %v1575
      %v1674 = vpop.f32.mrb[0].mxu0
      %v1675 = vadd.f32 0.0, %v1674
      %v1676 = vpop.f32.mrb[0].mxu0
      %v1677 = vpop.f32.mrb[0].mxu0
      %v1678 = vadd.f32 0.0, %v1677
      %v1679 = vpop.f32.mrb[0].mxu0
      %1680 = vmatprep.mubr.bf16.mxu0 0
      %1681 = vmatmul.mubr.bf16.gmra.mrb[0].mxu0 %v1578
      %v1682 = vpop.f32.mrb[0].mxu0
      %v1683 = vadd.f32 0.0, %v1682
      %v1684 = vpop.f32.mrb[0].mxu0
      %v1685 = vpop.f32.mrb[0].mxu0
      %v1686 = vadd.f32 0.0, %v1685
      %v1687 = vpop.f32.mrb[0].mxu0
      %1688 = vmatprep.mubr.bf16.mxu0 0
      %1689 = vmatmul.mubr.bf16.gmra.mrb[0].mxu0 %v1581
      %v1690 = vpop.f32.mrb[0].mxu0
      %v1691 = vadd.f32 0.0, %v1690
      %v1692 = vpop.f32.mrb[0].mxu0
      %v1693 = vpop.f32.mrb[0].mxu0
      %v1694 = vadd.f32 0.0, %v1693
      %v1695 = vpop.f32.mrb[0].mxu0
      %1696 = vmatprep.mubr.bf16.mxu0 0
      %1697 = vmatmul.mubr.bf16.gmra.mrb[0].mxu0 %v1584
      %v1698 = vpop.f32.mrb[0].mxu0
      %v1699 = vadd.f32 0.0, %v1698
      %v1700 = vpop.f32.mrb[0].mxu0
      %v1701 = vpop.f32.mrb[0].mxu0
      %v1702 = vadd.f32 0.0, %v1701
      %v1703 = vpop.f32.mrb[0].mxu0
      %1704 = vmatprep.mubr.bf16.mxu0 0
      %1705 = vmatmul.mubr.bf16.gmra.mrb[0].mxu0 %v1587
      %v1706 = vpop.f32.mrb[0].mxu0
      %v1707 = vadd.f32 0.0, %v1706
      %v1708 = vpop.f32.mrb[0].mxu0
      %v1709 = vpop.f32.mrb[0].mxu0
      %v1710 = vadd.f32 0.0, %v1709
      %v1711 = vpop.f32.mrb[0].mxu0
      %1712 = vmatprep.mubr.bf16.mxu0 0
      %1713 = vmatmul.mubr.bf16.gmra.mrb[0].mxu0 %v1590
      %v1714 = vpop.f32.mrb[0].mxu0
      %v1715 = vadd.f32 0.0, %v1714
      %v1716 = vpop.f32.mrb[0].mxu0
      %v1717 = vpop.f32.mrb[0].mxu0
      %v1718 = vadd.f32 0.0, %v1717
      %v1719 = vpop.f32.mrb[0].mxu0
      %1720 = vmatprep.mubr.bf16.mxu0 0
      %1721 = vmatmul.mubr.bf16.gmra.mrb[0].mxu0 %v1593
      %v1722 = vpop.f32.mrb[0].mxu0
      %v1723 = vadd.f32 0.0, %v1722
      %v1724 = vpop.f32.mrb[0].mxu0
      %v1725 = vpop.f32.mrb[0].mxu0
      %v1726 = vadd.f32 0.0, %v1725
      %v1727 = vpop.f32.mrb[0].mxu0
      %1728 = vmatprep.mubr.bf16.mxu0 0
      %1729 = vmatmul.mubr.bf16.gmra.mrb[0].mxu0 %v1596
      %v1730 = vpop.f32.mrb[0].mxu0
      %v1731 = vadd.f32 0.0, %v1730
      %v1732 = vpop.f32.mrb[0].mxu0
      %v1733 = vpop.f32.mrb[0].mxu0
      %v1734 = vadd.f32 0.0, %v1733
      %v1735 = vpop.f32.mrb[0].mxu0
      %1736 = vmatprep.mubr.bf16.mxu0 0
      %1737 = vmatmul.mubr.bf16.gmra.mrb[0].mxu0 %v1599
      %v1738 = vpop.f32.mrb[0].mxu0
      %v1739 = vadd.f32 0.0, %v1738
      %v1740 = vpop.f32.mrb[0].mxu0
      %v1741 = vpop.f32.mrb[0].mxu0
      %v1742 = vadd.f32 0.0, %v1741
      %v1743 = vpop.f32.mrb[0].mxu0
      %1744 = vmatprep.mubr.bf16.mxu0 0
      %1745 = vmatmul.mubr.bf16.gmra.mrb[0].mxu0 %v1602
      %v1746 = vpop.f32.mrb[0].mxu0
      %v1747 = vadd.f32 0.0, %v1746
      %v1748 = vpop.f32.mrb[0].mxu0
      %v1749 = vpop.f32.mrb[0].mxu0
      %v1750 = vadd.f32 0.0, %v1749
      %v1751 = vpop.f32.mrb[0].mxu0
      %1752 = vmatprep.mubr.bf16.mxu0 0
      %1753 = vmatmul.mubr.bf16.gmra.mrb[0].mxu0 %v1605
      %v1754 = vpop.f32.mrb[0].mxu0
      %v1755 = vadd.f32 0.0, %v1754
      %v1756 = vpop.f32.mrb[0].mxu0
      %v1757 = vpop.f32.mrb[0].mxu0
      %v1758 = vadd.f32 0.0, %v1757
      %v1759 = vpop.f32.mrb[0].mxu0
      %1760 = vmatprep.mubr.bf16.mxu0 0
      %1761 = vmatmul.mubr.bf16.gmra.mrb[0].mxu0 %v1608
      %v1762 = vpop.f32.mrb[0].mxu0
      %v1763 = vadd.f32 0.0, %v1762
      %v1764 = vpop.f32.mrb[0].mxu0
      %v1765 = vpop.f32.mrb[0].mxu0
      %v1766 = vadd.f32 0.0, %v1765
      %v1767 = vpop.f32.mrb[0].mxu0
      %1768 = vmatprep.mubr.bf16.mxu0 0
      %1769 = vmatmul.mubr.bf16.gmra.mrb[0].mxu0 %v1611
      %v1770 = vpop.f32.mrb[0].mxu0
      %v1771 = vadd.f32 0.0, %v1770
      %v1772 = vpop.f32.mrb[0].mxu0
      %v1773 = vpop.f32.mrb[0].mxu0
      %v1774 = vadd.f32 0.0, %v1773
      %v1775 = vpop.f32.mrb[0].mxu0
      %1776 = vdwg.mxu0
      %v1777 = vadd.f32 %v1448, %v1651
      %v1778 = vadd.f32 %v1449, %v1654
      %v1779 = vadd.f32 %v1450, %v1659
      %v1780 = vadd.f32 %v1451, %v1662
      %v1781 = vadd.f32 %v1452, %v1667
      %v1782 = vadd.f32 %v1453, %v1670
      %v1783 = vadd.f32 %v1454, %v1675
      %v1784 = vadd.f32 %v1455, %v1678
      %v1785 = vadd.f32 %v1456, %v1683
      %v1786 = vadd.f32 %v1457, %v1686
      %v1787 = vadd.f32 %v1458, %v1691
      %v1788 = vadd.f32 %v1459, %v1694
      %v1789 = vadd.f32 %v1460, %v1699
      %v1790 = vadd.f32 %v1461, %v1702
      %v1791 = vadd.f32 %v1462, %v1707
      %v1792 = vadd.f32 %v1463, %v1710
      %v1793 = vadd.f32 %v1464, %v1715
      %v1794 = vadd.f32 %v1465, %v1718
      %v1795 = vadd.f32 %v1466, %v1723
      %v1796 = vadd.f32 %v1467, %v1726
      %v1797 = vadd.f32 %v1468, %v1731
      %v1798 = vadd.f32 %v1469, %v1734
      %v1799 = vadd.f32 %v1470, %v1739
      %v1800 = vadd.f32 %v1471, %v1742
      %v1801 = vadd.f32 %v1472, %v1747
      %v1802 = vadd.f32 %v1473, %v1750
      %v1803 = vadd.f32 %v1474, %v1755
      %v1804 = vadd.f32 %v1475, %v1758
      %v1805 = vadd.f32 %v1476, %v1763
      %v1806 = vadd.f32 %v1477, %v1766
      %v1807 = vadd.f32 %v1478, %v1771
      %v1808 = vadd.f32 %v1479, %v1774
      %v1809 = vld [vmem:[%s1150 + $0x2] sm:$0xff]
      %v1810 = vld [vmem:[%s1150 + $0xa] sm:$0xff]
      %v1811 = vld [vmem:[%s1150 + $0x1a] sm:$0xff]
      %v1812 = vld [vmem:[%s1150 + $0x22] sm:$0xff]
      %v1813 = vld [vmem:[%s1150 + $0x32] sm:$0xff]
      %v1814 = vld [vmem:[%s1150 + $0x3a] sm:$0xff]
      %v1815 = vld [vmem:[%s1150 + $0x4a] sm:$0xff]
      %v1816 = vld [vmem:[%s1150 + $0x52] sm:$0xff]
      %v1817 = vld [vmem:[%s1150 + $0x62] sm:$0xff]
      %v1818 = vld [vmem:[%s1150 + $0x6a] sm:$0xff]
      %v1819 = vld [vmem:[%s1150 + $0x7a] sm:$0xff]
      %v1820 = vld [vmem:[%s1150 + $0x82] sm:$0xff]
      %v1821 = vld [vmem:[%s1150 + $0x92] sm:$0xff]
      %v1822 = vld [vmem:[%s1150 + $0x9a] sm:$0xff]
      %v1823 = vld [vmem:[%s1150 + $0xaa] sm:$0xff]
      %v1824 = vld [vmem:[%s1150 + $0xb2] sm:$0xff]
      %v1825 = vld [vmem:[%s1150 + $0xc2] sm:$0xff]
      %v1826 = vld [vmem:[%s1150 + $0xca] sm:$0xff]
      %v1827 = vld [vmem:[%s1150 + $0xda] sm:$0xff]
      %v1828 = vld [vmem:[%s1150 + $0xe2] sm:$0xff]
      %v1829 = vld [vmem:[%s1150 + $0xf2] sm:$0xff]
      %v1830 = vld [vmem:[%s1150 + $0xfa] sm:$0xff]
      %v1831 = vld [vmem:[%s1150 + $0x10a] sm:$0xff]
      %v1832 = vld [vmem:[%s1150 + $0x112] sm:$0xff]
      %v1833 = vld [vmem:[%s1150 + $0x122] sm:$0xff]
      %v1834 = vld [vmem:[%s1150 + $0x12a] sm:$0xff]
      %v1835 = vld [vmem:[%s1150 + $0x13a] sm:$0xff]
      %v1836 = vld [vmem:[%s1150 + $0x142] sm:$0xff]
      %v1837 = vld [vmem:[%s1150 + $0x152] sm:$0xff]
      %v1838 = vld [vmem:[%s1150 + $0x15a] sm:$0xff]
      %v1839 = vld [vmem:[%s1150 + $0x16a] sm:$0xff]
      %v1840 = vld [vmem:[%s1150 + $0x172] sm:$0xff]
      %v1841 = vpack.c.bf16 %v1810, %v1809
      %v1842 = vpack.c.bf16 %v1812, %v1811
      %v1843 = vpack.c.bf16 %v1814, %v1813
      %v1844 = vpack.c.bf16 %v1816, %v1815
      %v1845 = vpack.c.bf16 %v1818, %v1817
      %v1846 = vpack.c.bf16 %v1820, %v1819
      %v1847 = vpack.c.bf16 %v1822, %v1821
      %v1848 = vpack.c.bf16 %v1824, %v1823
      %v1849 = vpack.c.bf16 %v1826, %v1825
      %v1850 = vpack.c.bf16 %v1828, %v1827
      %v1851 = vpack.c.bf16 %v1830, %v1829
      %v1852 = vpack.c.bf16 %v1832, %v1831
      %v1853 = vpack.c.bf16 %v1834, %v1833
      %v1854 = vpack.c.bf16 %v1836, %v1835
      %v1855 = vpack.c.bf16 %v1838, %v1837
      %v1856 = vpack.c.bf16 %v1840, %v1839
      %s1857 = scalar_lea.vmem %s1, 180
      %v1858 = vld [vmem:[%s1857] sm:$0xf]
      %v1859 = vld [vmem:[%s1857 + $0x4] sm:$0xf]
      %v1860 = vld [vmem:[%s1857 + $0x8] sm:$0xf]
      %v1861 = vld [vmem:[%s1857 + $0xc] sm:$0xf]
      %v1862 = vld [vmem:[%s1857 + $0x10] sm:$0xf]
      %v1863 = vld [vmem:[%s1857 + $0x14] sm:$0xf]
      %v1864 = vld [vmem:[%s1857 + $0x18] sm:$0xf]
      %v1865 = vld [vmem:[%s1857 + $0x1c] sm:$0xf]
      %v1866 = vld [vmem:[%s1857 + $0x20] sm:$0xf]
      %v1876 = vunpack.c.l.b16 %v1858
      %v1877 = vunpack.c.l.b16 %v1859
      %v1878 = vunpack.c.l.b16 %v1860
      %v1879 = vunpack.c.l.b16 %v1861
      %v1880 = vunpack.c.l.b16 %v1862
      %v1881 = vunpack.c.l.b16 %v1863
      %v1882 = vunpack.c.l.b16 %v1864
      %v1883 = vunpack.c.l.b16 %v1865
      %v1884 = vunpack.c.l.b16 %v1866
      %v1885 = vpack.c.b16 %v1877, %v1876
      %v1886 = vpack.c.b16 %v1879, %v1878
      %v1887 = vpack.c.b16 %v1881, %v1880
      %v1888 = vpack.c.b16 %v1883, %v1882
      %v1889 = vpack.c.b16 %v1884, %v1884
      %v1895 = vsel %vm368, %v1841, 0
      %v1898 = vsel %vm368, %v1842, 0
      %v1901 = vsel %vm368, %v1843, 0
      %v1904 = vsel %vm368, %v1844, 0
      %v1907 = vsel %vm368, %v1845, 0
      %v1910 = vsel %vm368, %v1846, 0
      %v1913 = vsel %vm368, %v1847, 0
      %v1916 = vsel %vm368, %v1848, 0
      %v1919 = vsel %vm368, %v1849, 0
      %v1922 = vsel %vm368, %v1850, 0
      %v1925 = vsel %vm368, %v1851, 0
      %v1928 = vsel %vm368, %v1852, 0
      %v1931 = vsel %vm368, %v1853, 0
      %v1934 = vsel %vm368, %v1854, 0
      %v1937 = vsel %vm368, %v1855, 0
      %v1940 = vsel %vm368, %v1856, 0
      %v1943 = vsel %vm417, %v1889, 0
      %1945 = vmatprep.subr.bf16.mxu0 0
      %1946 = vmatpush1.bf16.msra.mxu0 %v1885
      %1947 = vmatprep.subr.bf16.mxu0 0
      %1948 = vmatpush1.bf16.msra.mxu0 %v1886
      %1949 = vmatprep.subr.bf16.mxu0 0
      %1950 = vmatpush1.bf16.msra.mxu0 %v1887
      %1951 = vmatprep.subr.bf16.mxu0 0
      %1952 = vmatpush1.bf16.msra.mxu0 %v1888
      %1953 = vmatprep.subr.bf16.mxu0 0
      %1954 = vmatpush1.bf16.msra.mxu0 %v1943
      %1955 = vmatprep.subr.bf16.mxu0 0
      %1956 = vmatpush1.bf16.msra.mxu0 0
      %1957 = vmatprep.subr.bf16.mxu0 0
      %1958 = vmatpush1.bf16.msra.mxu0 0
      %1959 = vmatprep.subr.bf16.mxu0 0
      %1960 = vmatpush1.bf16.msra.mxu0 0
      %1961 = vmatprep.subr.bf16.mxu0 0
      %1962 = vmatpush1.bf16.msra.mxu0 0
      %1963 = vmatprep.subr.bf16.mxu0 0
      %1964 = vmatpush1.bf16.msra.mxu0 0
      %1965 = vmatprep.subr.bf16.mxu0 0
      %1966 = vmatpush1.bf16.msra.mxu0 0
      %1967 = vmatprep.subr.bf16.mxu0 0
      %1968 = vmatpush1.bf16.msra.mxu0 0
      %1969 = vmatprep.subr.bf16.mxu0 0
      %1970 = vmatpush1.bf16.msra.mxu0 0
      %1971 = vmatprep.subr.bf16.mxu0 0
      %1972 = vmatpush1.bf16.msra.mxu0 0
      %1973 = vmatprep.subr.bf16.mxu0 0
      %1974 = vmatpush1.bf16.msra.mxu0 0
      %1975 = vmatprep.subr.bf16.mxu0 0
      %1976 = vmatpush1.bf16.msra.mxu0 0
      %1977 = vmatprep.mubr.bf16.mxu0 0
      %1978 = vmatmul.mubr.bf16.gmra.mrb[0].mxu0 %v1895
      %v1979 = vpop.f32.mrb[0].mxu0
      %v1980 = vadd.f32 0.0, %v1979
      %v1981 = vpop.f32.mrb[0].mxu0
      %v1982 = vpop.f32.mrb[0].mxu0
      %v1983 = vadd.f32 0.0, %v1982
      %v1984 = vpop.f32.mrb[0].mxu0
      %1985 = vmatprep.mubr.bf16.mxu0 0
      %1986 = vmatmul.mubr.bf16.gmra.mrb[0].mxu0 %v1898
      %v1987 = vpop.f32.mrb[0].mxu0
      %v1988 = vadd.f32 0.0, %v1987
      %v1989 = vpop.f32.mrb[0].mxu0
      %v1990 = vpop.f32.mrb[0].mxu0
      %v1991 = vadd.f32 0.0, %v1990
      %v1992 = vpop.f32.mrb[0].mxu0
      %1993 = vmatprep.mubr.bf16.mxu0 0
      %1994 = vmatmul.mubr.bf16.gmra.mrb[0].mxu0 %v1901
      %v1995 = vpop.f32.mrb[0].mxu0
      %v1996 = vadd.f32 0.0, %v1995
      %v1997 = vpop.f32.mrb[0].mxu0
      %v1998 = vpop.f32.mrb[0].mxu0
      %v1999 = vadd.f32 0.0, %v1998
      %v2000 = vpop.f32.mrb[0].mxu0
      %2001 = vmatprep.mubr.bf16.mxu0 0
      %2002 = vmatmul.mubr.bf16.gmra.mrb[0].mxu0 %v1904
      %v2003 = vpop.f32.mrb[0].mxu0
      %v2004 = vadd.f32 0.0, %v2003
      %v2005 = vpop.f32.mrb[0].mxu0
      %v2006 = vpop.f32.mrb[0].mxu0
      %v2007 = vadd.f32 0.0, %v2006
      %v2008 = vpop.f32.mrb[0].mxu0
      %2009 = vmatprep.mubr.bf16.mxu0 0
      %2010 = vmatmul.mubr.bf16.gmra.mrb[0].mxu0 %v1907
      %v2011 = vpop.f32.mrb[0].mxu0
      %v2012 = vadd.f32 0.0, %v2011
      %v2013 = vpop.f32.mrb[0].mxu0
      %v2014 = vpop.f32.mrb[0].mxu0
      %v2015 = vadd.f32 0.0, %v2014
      %v2016 = vpop.f32.mrb[0].mxu0
      %2017 = vmatprep.mubr.bf16.mxu0 0
      %2018 = vmatmul.mubr.bf16.gmra.mrb[0].mxu0 %v1910
      %v2019 = vpop.f32.mrb[0].mxu0
      %v2020 = vadd.f32 0.0, %v2019
      %v2021 = vpop.f32.mrb[0].mxu0
      %v2022 = vpop.f32.mrb[0].mxu0
      %v2023 = vadd.f32 0.0, %v2022
      %v2024 = vpop.f32.mrb[0].mxu0
      %2025 = vmatprep.mubr.bf16.mxu0 0
      %2026 = vmatmul.mubr.bf16.gmra.mrb[0].mxu0 %v1913
      %v2027 = vpop.f32.mrb[0].mxu0
      %v2028 = vadd.f32 0.0, %v2027
      %v2029 = vpop.f32.mrb[0].mxu0
      %v2030 = vpop.f32.mrb[0].mxu0
      %v2031 = vadd.f32 0.0, %v2030
      %v2032 = vpop.f32.mrb[0].mxu0
      %2033 = vmatprep.mubr.bf16.mxu0 0
      %2034 = vmatmul.mubr.bf16.gmra.mrb[0].mxu0 %v1916
      %v2035 = vpop.f32.mrb[0].mxu0
      %v2036 = vadd.f32 0.0, %v2035
      %v2037 = vpop.f32.mrb[0].mxu0
      %v2038 = vpop.f32.mrb[0].mxu0
      %v2039 = vadd.f32 0.0, %v2038
      %v2040 = vpop.f32.mrb[0].mxu0
      %2041 = vmatprep.mubr.bf16.mxu0 0
      %2042 = vmatmul.mubr.bf16.gmra.mrb[0].mxu0 %v1919
      %v2043 = vpop.f32.mrb[0].mxu0
      %v2044 = vadd.f32 0.0, %v2043
      %v2045 = vpop.f32.mrb[0].mxu0
      %v2046 = vpop.f32.mrb[0].mxu0
      %v2047 = vadd.f32 0.0, %v2046
      %v2048 = vpop.f32.mrb[0].mxu0
      %2049 = vmatprep.mubr.bf16.mxu0 0
      %2050 = vmatmul.mubr.bf16.gmra.mrb[0].mxu0 %v1922
      %v2051 = vpop.f32.mrb[0].mxu0
      %v2052 = vadd.f32 0.0, %v2051
      %v2053 = vpop.f32.mrb[0].mxu0
      %v2054 = vpop.f32.mrb[0].mxu0
      %v2055 = vadd.f32 0.0, %v2054
      %v2056 = vpop.f32.mrb[0].mxu0
      %2057 = vmatprep.mubr.bf16.mxu0 0
      %2058 = vmatmul.mubr.bf16.gmra.mrb[0].mxu0 %v1925
      %v2059 = vpop.f32.mrb[0].mxu0
      %v2060 = vadd.f32 0.0, %v2059
      %v2061 = vpop.f32.mrb[0].mxu0
      %v2062 = vpop.f32.mrb[0].mxu0
      %v2063 = vadd.f32 0.0, %v2062
      %v2064 = vpop.f32.mrb[0].mxu0
      %2065 = vmatprep.mubr.bf16.mxu0 0
      %2066 = vmatmul.mubr.bf16.gmra.mrb[0].mxu0 %v1928
      %v2067 = vpop.f32.mrb[0].mxu0
      %v2068 = vadd.f32 0.0, %v2067
      %v2069 = vpop.f32.mrb[0].mxu0
      %v2070 = vpop.f32.mrb[0].mxu0
      %v2071 = vadd.f32 0.0, %v2070
      %v2072 = vpop.f32.mrb[0].mxu0
      %2073 = vmatprep.mubr.bf16.mxu0 0
      %2074 = vmatmul.mubr.bf16.gmra.mrb[0].mxu0 %v1931
      %v2075 = vpop.f32.mrb[0].mxu0
      %v2076 = vadd.f32 0.0, %v2075
      %v2077 = vpop.f32.mrb[0].mxu0
      %v2078 = vpop.f32.mrb[0].mxu0
      %v2079 = vadd.f32 0.0, %v2078
      %v2080 = vpop.f32.mrb[0].mxu0
      %2081 = vmatprep.mubr.bf16.mxu0 0
      %2082 = vmatmul.mubr.bf16.gmra.mrb[0].mxu0 %v1934
      %v2083 = vpop.f32.mrb[0].mxu0
      %v2084 = vadd.f32 0.0, %v2083
      %v2085 = vpop.f32.mrb[0].mxu0
      %v2086 = vpop.f32.mrb[0].mxu0
      %v2087 = vadd.f32 0.0, %v2086
      %v2088 = vpop.f32.mrb[0].mxu0
      %2089 = vmatprep.mubr.bf16.mxu0 0
      %2090 = vmatmul.mubr.bf16.gmra.mrb[0].mxu0 %v1937
      %v2091 = vpop.f32.mrb[0].mxu0
      %v2092 = vadd.f32 0.0, %v2091
      %v2093 = vpop.f32.mrb[0].mxu0
      %v2094 = vpop.f32.mrb[0].mxu0
      %v2095 = vadd.f32 0.0, %v2094
      %v2096 = vpop.f32.mrb[0].mxu0
      %2097 = vmatprep.mubr.bf16.mxu0 0
      %2098 = vmatmul.mubr.bf16.gmra.mrb[0].mxu0 %v1940
      %v2099 = vpop.f32.mrb[0].mxu0
      %v2100 = vadd.f32 0.0, %v2099
      %v2101 = vpop.f32.mrb[0].mxu0
      %v2102 = vpop.f32.mrb[0].mxu0
      %v2103 = vadd.f32 0.0, %v2102
      %v2104 = vpop.f32.mrb[0].mxu0
      %2105 = vdwg.mxu0
      %v2106 = vadd.f32 %v1777, %v1980
      %v2107 = vadd.f32 %v1778, %v1983
      %v2108 = vadd.f32 %v1779, %v1988
      %v2109 = vadd.f32 %v1780, %v1991
      %v2110 = vadd.f32 %v1781, %v1996
      %v2111 = vadd.f32 %v1782, %v1999
      %v2112 = vadd.f32 %v1783, %v2004
      %v2113 = vadd.f32 %v1784, %v2007
      %v2114 = vadd.f32 %v1785, %v2012
      %v2115 = vadd.f32 %v1786, %v2015
      %v2116 = vadd.f32 %v1787, %v2020
      %v2117 = vadd.f32 %v1788, %v2023
      %v2118 = vadd.f32 %v1789, %v2028
      %v2119 = vadd.f32 %v1790, %v2031
      %v2120 = vadd.f32 %v1791, %v2036
      %v2121 = vadd.f32 %v1792, %v2039
      %v2122 = vadd.f32 %v1793, %v2044
      %v2123 = vadd.f32 %v1794, %v2047
      %v2124 = vadd.f32 %v1795, %v2052
      %v2125 = vadd.f32 %v1796, %v2055
      %v2126 = vadd.f32 %v1797, %v2060
      %v2127 = vadd.f32 %v1798, %v2063
      %v2128 = vadd.f32 %v1799, %v2068
      %v2129 = vadd.f32 %v1800, %v2071
      %v2130 = vadd.f32 %v1801, %v2076
      %v2131 = vadd.f32 %v1802, %v2079
      %v2132 = vadd.f32 %v1803, %v2084
      %v2133 = vadd.f32 %v1804, %v2087
      %v2134 = vadd.f32 %v1805, %v2092
      %v2135 = vadd.f32 %v1806, %v2095
      %v2136 = vadd.f32 %v1807, %v2100
      %v2137 = vadd.f32 %v1808, %v2103
      %s2138 = scalar_lea.vmem %s219, 48
      %v2139 = vld [vmem:[%s2138] sm:$0xff]
      %v2140 = vld [vmem:[%s2138 + $0x8] sm:$0xff]
      %v2141 = vld [vmem:[%s2138 + $0x18] sm:$0xff]
      %v2142 = vld [vmem:[%s2138 + $0x20] sm:$0xff]
      %v2143 = vld [vmem:[%s2138 + $0x30] sm:$0xff]
      %v2144 = vld [vmem:[%s2138 + $0x38] sm:$0xff]
      %v2145 = vld [vmem:[%s2138 + $0x48] sm:$0xff]
      %v2146 = vld [vmem:[%s2138 + $0x50] sm:$0xff]
      %v2147 = vld [vmem:[%s2138 + $0x60] sm:$0xff]
      %v2148 = vld [vmem:[%s2138 + $0x68] sm:$0xff]
      %v2149 = vld [vmem:[%s2138 + $0x78] sm:$0xff]
      %v2150 = vld [vmem:[%s2138 + $0x80] sm:$0xff]
      %v2151 = vld [vmem:[%s2138 + $0x90] sm:$0xff]
      %v2152 = vld [vmem:[%s2138 + $0x98] sm:$0xff]
      %v2153 = vld [vmem:[%s2138 + $0xa8] sm:$0xff]
      %v2154 = vld [vmem:[%s2138 + $0xb0] sm:$0xff]
      %v2155 = vld [vmem:[%s2138 + $0xc0] sm:$0xff]
      %v2156 = vld [vmem:[%s2138 + $0xc8] sm:$0xff]
      %v2157 = vld [vmem:[%s2138 + $0xd8] sm:$0xff]
      %v2158 = vld [vmem:[%s2138 + $0xe0] sm:$0xff]
      %v2159 = vld [vmem:[%s2138 + $0xf0] sm:$0xff]
      %v2160 = vld [vmem:[%s2138 + $0xf8] sm:$0xff]
      %v2161 = vld [vmem:[%s2138 + $0x108] sm:$0xff]
      %v2162 = vld [vmem:[%s2138 + $0x110] sm:$0xff]
      %v2163 = vld [vmem:[%s2138 + $0x120] sm:$0xff]
      %v2164 = vld [vmem:[%s2138 + $0x128] sm:$0xff]
      %v2165 = vld [vmem:[%s2138 + $0x138] sm:$0xff]
      %v2166 = vld [vmem:[%s2138 + $0x140] sm:$0xff]
      %v2167 = vld [vmem:[%s2138 + $0x150] sm:$0xff]
      %v2168 = vld [vmem:[%s2138 + $0x158] sm:$0xff]
      %v2169 = vld [vmem:[%s2138 + $0x168] sm:$0xff]
      %v2170 = vld [vmem:[%s2138 + $0x170] sm:$0xff]
      %v2171 = vpack.c.bf16 %v2140, %v2139
      %v2172 = vpack.c.bf16 %v2142, %v2141
      %v2173 = vpack.c.bf16 %v2144, %v2143
      %v2174 = vpack.c.bf16 %v2146, %v2145
      %v2175 = vpack.c.bf16 %v2148, %v2147
      %v2176 = vpack.c.bf16 %v2150, %v2149
      %v2177 = vpack.c.bf16 %v2152, %v2151
      %v2178 = vpack.c.bf16 %v2154, %v2153
      %v2179 = vpack.c.bf16 %v2156, %v2155
      %v2180 = vpack.c.bf16 %v2158, %v2157
      %v2181 = vpack.c.bf16 %v2160, %v2159
      %v2182 = vpack.c.bf16 %v2162, %v2161
      %v2183 = vpack.c.bf16 %v2164, %v2163
      %v2184 = vpack.c.bf16 %v2166, %v2165
      %v2185 = vpack.c.bf16 %v2168, %v2167
      %v2186 = vpack.c.bf16 %v2170, %v2169
      %s2187 = scalar_lea.vmem %s1, 216
      %v2188 = vld [vmem:[%s2187] sm:$0xf]
      %v2189 = vld [vmem:[%s2187 + $0x4] sm:$0xf]
      %v2190 = vld [vmem:[%s2187 + $0x8] sm:$0xf]
      %v2191 = vld [vmem:[%s2187 + $0xc] sm:$0xf]
      %v2192 = vld [vmem:[%s2187 + $0x10] sm:$0xf]
      %v2193 = vld [vmem:[%s2187 + $0x14] sm:$0xf]
      %v2194 = vld [vmem:[%s2187 + $0x18] sm:$0xf]
      %v2195 = vld [vmem:[%s2187 + $0x1c] sm:$0xf]
      %v2196 = vld [vmem:[%s2187 + $0x20] sm:$0xf]
      %v2206 = vunpack.c.l.b16 %v2188
      %v2207 = vunpack.c.l.b16 %v2189
      %v2208 = vunpack.c.l.b16 %v2190
      %v2209 = vunpack.c.l.b16 %v2191
      %v2210 = vunpack.c.l.b16 %v2192
      %v2211 = vunpack.c.l.b16 %v2193
      %v2212 = vunpack.c.l.b16 %v2194
      %v2213 = vunpack.c.l.b16 %v2195
      %v2214 = vunpack.c.l.b16 %v2196
      %v2215 = vpack.c.b16 %v2207, %v2206
      %v2216 = vpack.c.b16 %v2209, %v2208
      %v2217 = vpack.c.b16 %v2211, %v2210
      %v2218 = vpack.c.b16 %v2213, %v2212
      %v2219 = vpack.c.b16 %v2214, %v2214
      %v2225 = vsel %vm368, %v2171, 0
      %v2228 = vsel %vm368, %v2172, 0
      %v2231 = vsel %vm368, %v2173, 0
      %v2234 = vsel %vm368, %v2174, 0
      %v2237 = vsel %vm368, %v2175, 0
      %v2240 = vsel %vm368, %v2176, 0
      %v2243 = vsel %vm368, %v2177, 0
      %v2246 = vsel %vm368, %v2178, 0
      %v2249 = vsel %vm368, %v2179, 0
      %v2252 = vsel %vm368, %v2180, 0
      %v2255 = vsel %vm368, %v2181, 0
      %v2258 = vsel %vm368, %v2182, 0
      %v2261 = vsel %vm368, %v2183, 0
      %v2264 = vsel %vm368, %v2184, 0
      %v2267 = vsel %vm368, %v2185, 0
      %v2270 = vsel %vm368, %v2186, 0
      %v2273 = vsel %vm417, %v2219, 0
      %2275 = vmatprep.subr.bf16.mxu0 0
      %2276 = vmatpush1.bf16.msra.mxu0 %v2215
      %2277 = vmatprep.subr.bf16.mxu0 0
      %2278 = vmatpush1.bf16.msra.mxu0 %v2216
      %2279 = vmatprep.subr.bf16.mxu0 0
      %2280 = vmatpush1.bf16.msra.mxu0 %v2217
      %2281 = vmatprep.subr.bf16.mxu0 0
      %2282 = vmatpush1.bf16.msra.mxu0 %v2218
      %2283 = vmatprep.subr.bf16.mxu0 0
      %2284 = vmatpush1.bf16.msra.mxu0 %v2273
      %2285 = vmatprep.subr.bf16.mxu0 0
      %2286 = vmatpush1.bf16.msra.mxu0 0
      %2287 = vmatprep.subr.bf16.mxu0 0
      %2288 = vmatpush1.bf16.msra.mxu0 0
      %2289 = vmatprep.subr.bf16.mxu0 0
      %2290 = vmatpush1.bf16.msra.mxu0 0
      %2291 = vmatprep.subr.bf16.mxu0 0
      %2292 = vmatpush1.bf16.msra.mxu0 0
      %2293 = vmatprep.subr.bf16.mxu0 0
      %2294 = vmatpush1.bf16.msra.mxu0 0
      %2295 = vmatprep.subr.bf16.mxu0 0
      %2296 = vmatpush1.bf16.msra.mxu0 0
      %2297 = vmatprep.subr.bf16.mxu0 0
      %2298 = vmatpush1.bf16.msra.mxu0 0
      %2299 = vmatprep.subr.bf16.mxu0 0
      %2300 = vmatpush1.bf16.msra.mxu0 0
      %2301 = vmatprep.subr.bf16.mxu0 0
      %2302 = vmatpush1.bf16.msra.mxu0 0
      %2303 = vmatprep.subr.bf16.mxu0 0
      %2304 = vmatpush1.bf16.msra.mxu0 0
      %2305 = vmatprep.subr.bf16.mxu0 0
      %2306 = vmatpush1.bf16.msra.mxu0 0
      %2307 = vmatprep.mubr.bf16.mxu0 0
      %2308 = vmatmul.mubr.bf16.gmra.mrb[0].mxu0 %v2225
      %v2309 = vpop.f32.mrb[0].mxu0
      %v2310 = vadd.f32 0.0, %v2309
      %v2311 = vpop.f32.mrb[0].mxu0
      %v2312 = vpop.f32.mrb[0].mxu0
      %v2313 = vadd.f32 0.0, %v2312
      %v2314 = vpop.f32.mrb[0].mxu0
      %2315 = vmatprep.mubr.bf16.mxu0 0
      %2316 = vmatmul.mubr.bf16.gmra.mrb[0].mxu0 %v2228
      %v2317 = vpop.f32.mrb[0].mxu0
      %v2318 = vadd.f32 0.0, %v2317
      %v2319 = vpop.f32.mrb[0].mxu0
      %v2320 = vpop.f32.mrb[0].mxu0
      %v2321 = vadd.f32 0.0, %v2320
      %v2322 = vpop.f32.mrb[0].mxu0
      %2323 = vmatprep.mubr.bf16.mxu0 0
      %2324 = vmatmul.mubr.bf16.gmra.mrb[0].mxu0 %v2231
      %v2325 = vpop.f32.mrb[0].mxu0
      %v2326 = vadd.f32 0.0, %v2325
      %v2327 = vpop.f32.mrb[0].mxu0
      %v2328 = vpop.f32.mrb[0].mxu0
      %v2329 = vadd.f32 0.0, %v2328
      %v2330 = vpop.f32.mrb[0].mxu0
      %2331 = vmatprep.mubr.bf16.mxu0 0
      %2332 = vmatmul.mubr.bf16.gmra.mrb[0].mxu0 %v2234
      %v2333 = vpop.f32.mrb[0].mxu0
      %v2334 = vadd.f32 0.0, %v2333
      %v2335 = vpop.f32.mrb[0].mxu0
      %v2336 = vpop.f32.mrb[0].mxu0
      %v2337 = vadd.f32 0.0, %v2336
      %v2338 = vpop.f32.mrb[0].mxu0
      %2339 = vmatprep.mubr.bf16.mxu0 0
      %2340 = vmatmul.mubr.bf16.gmra.mrb[0].mxu0 %v2237
      %v2341 = vpop.f32.mrb[0].mxu0
      %v2342 = vadd.f32 0.0, %v2341
      %v2343 = vpop.f32.mrb[0].mxu0
      %v2344 = vpop.f32.mrb[0].mxu0
      %v2345 = vadd.f32 0.0, %v2344
      %v2346 = vpop.f32.mrb[0].mxu0
      %2347 = vmatprep.mubr.bf16.mxu0 0
      %2348 = vmatmul.mubr.bf16.gmra.mrb[0].mxu0 %v2240
      %v2349 = vpop.f32.mrb[0].mxu0
      %v2350 = vadd.f32 0.0, %v2349
      %v2351 = vpop.f32.mrb[0].mxu0
      %v2352 = vpop.f32.mrb[0].mxu0
      %v2353 = vadd.f32 0.0, %v2352
      %v2354 = vpop.f32.mrb[0].mxu0
      %2355 = vmatprep.mubr.bf16.mxu0 0
      %2356 = vmatmul.mubr.bf16.gmra.mrb[0].mxu0 %v2243
      %v2357 = vpop.f32.mrb[0].mxu0
      %v2358 = vadd.f32 0.0, %v2357
      %v2359 = vpop.f32.mrb[0].mxu0
      %v2360 = vpop.f32.mrb[0].mxu0
      %v2361 = vadd.f32 0.0, %v2360
      %v2362 = vpop.f32.mrb[0].mxu0
      %2363 = vmatprep.mubr.bf16.mxu0 0
      %2364 = vmatmul.mubr.bf16.gmra.mrb[0].mxu0 %v2246
      %v2365 = vpop.f32.mrb[0].mxu0
      %v2366 = vadd.f32 0.0, %v2365
      %v2367 = vpop.f32.mrb[0].mxu0
      %v2368 = vpop.f32.mrb[0].mxu0
      %v2369 = vadd.f32 0.0, %v2368
      %v2370 = vpop.f32.mrb[0].mxu0
      %2371 = vmatprep.mubr.bf16.mxu0 0
      %2372 = vmatmul.mubr.bf16.gmra.mrb[0].mxu0 %v2249
      %v2373 = vpop.f32.mrb[0].mxu0
      %v2374 = vadd.f32 0.0, %v2373
      %v2375 = vpop.f32.mrb[0].mxu0
      %v2376 = vpop.f32.mrb[0].mxu0
      %v2377 = vadd.f32 0.0, %v2376
      %v2378 = vpop.f32.mrb[0].mxu0
      %2379 = vmatprep.mubr.bf16.mxu0 0
      %2380 = vmatmul.mubr.bf16.gmra.mrb[0].mxu0 %v2252
      %v2381 = vpop.f32.mrb[0].mxu0
      %v2382 = vadd.f32 0.0, %v2381
      %v2383 = vpop.f32.mrb[0].mxu0
      %v2384 = vpop.f32.mrb[0].mxu0
      %v2385 = vadd.f32 0.0, %v2384
      %v2386 = vpop.f32.mrb[0].mxu0
      %2387 = vmatprep.mubr.bf16.mxu0 0
      %2388 = vmatmul.mubr.bf16.gmra.mrb[0].mxu0 %v2255
      %v2389 = vpop.f32.mrb[0].mxu0
      %v2390 = vadd.f32 0.0, %v2389
      %v2391 = vpop.f32.mrb[0].mxu0
      %v2392 = vpop.f32.mrb[0].mxu0
      %v2393 = vadd.f32 0.0, %v2392
      %v2394 = vpop.f32.mrb[0].mxu0
      %2395 = vmatprep.mubr.bf16.mxu0 0
      %2396 = vmatmul.mubr.bf16.gmra.mrb[0].mxu0 %v2258
      %v2397 = vpop.f32.mrb[0].mxu0
      %v2398 = vadd.f32 0.0, %v2397
      %v2399 = vpop.f32.mrb[0].mxu0
      %v2400 = vpop.f32.mrb[0].mxu0
      %v2401 = vadd.f32 0.0, %v2400
      %v2402 = vpop.f32.mrb[0].mxu0
      %2403 = vmatprep.mubr.bf16.mxu0 0
      %2404 = vmatmul.mubr.bf16.gmra.mrb[0].mxu0 %v2261
      %v2405 = vpop.f32.mrb[0].mxu0
      %v2406 = vadd.f32 0.0, %v2405
      %v2407 = vpop.f32.mrb[0].mxu0
      %v2408 = vpop.f32.mrb[0].mxu0
      %v2409 = vadd.f32 0.0, %v2408
      %v2410 = vpop.f32.mrb[0].mxu0
      %2411 = vmatprep.mubr.bf16.mxu0 0
      %2412 = vmatmul.mubr.bf16.gmra.mrb[0].mxu0 %v2264
      %v2413 = vpop.f32.mrb[0].mxu0
      %v2414 = vadd.f32 0.0, %v2413
      %v2415 = vpop.f32.mrb[0].mxu0
      %v2416 = vpop.f32.mrb[0].mxu0
      %v2417 = vadd.f32 0.0, %v2416
      %v2418 = vpop.f32.mrb[0].mxu0
      %2419 = vmatprep.mubr.bf16.mxu0 0
      %2420 = vmatmul.mubr.bf16.gmra.mrb[0].mxu0 %v2267
      %v2421 = vpop.f32.mrb[0].mxu0
      %v2422 = vadd.f32 0.0, %v2421
      %v2423 = vpop.f32.mrb[0].mxu0
      %v2424 = vpop.f32.mrb[0].mxu0
      %v2425 = vadd.f32 0.0, %v2424
      %v2426 = vpop.f32.mrb[0].mxu0
      %2427 = vmatprep.mubr.bf16.mxu0 0
      %2428 = vmatmul.mubr.bf16.gmra.mrb[0].mxu0 %v2270
      %v2429 = vpop.f32.mrb[0].mxu0
      %v2430 = vadd.f32 0.0, %v2429
      %v2431 = vpop.f32.mrb[0].mxu0
      %v2432 = vpop.f32.mrb[0].mxu0
      %v2433 = vadd.f32 0.0, %v2432
      %v2434 = vpop.f32.mrb[0].mxu0
      %2435 = vdwg.mxu0
      %v2436 = vadd.f32 %v2106, %v2310
      %v2437 = vadd.f32 %v2107, %v2313
      %v2438 = vadd.f32 %v2108, %v2318
      %v2439 = vadd.f32 %v2109, %v2321
      %v2440 = vadd.f32 %v2110, %v2326
      %v2441 = vadd.f32 %v2111, %v2329
      %v2442 = vadd.f32 %v2112, %v2334
      %v2443 = vadd.f32 %v2113, %v2337
      %v2444 = vadd.f32 %v2114, %v2342
      %v2445 = vadd.f32 %v2115, %v2345
      %v2446 = vadd.f32 %v2116, %v2350
      %v2447 = vadd.f32 %v2117, %v2353
      %v2448 = vadd.f32 %v2118, %v2358
      %v2449 = vadd.f32 %v2119, %v2361
      %v2450 = vadd.f32 %v2120, %v2366
      %v2451 = vadd.f32 %v2121, %v2369
      %v2452 = vadd.f32 %v2122, %v2374
      %v2453 = vadd.f32 %v2123, %v2377
      %v2454 = vadd.f32 %v2124, %v2382
      %v2455 = vadd.f32 %v2125, %v2385
      %v2456 = vadd.f32 %v2126, %v2390
      %v2457 = vadd.f32 %v2127, %v2393
      %v2458 = vadd.f32 %v2128, %v2398
      %v2459 = vadd.f32 %v2129, %v2401
      %v2460 = vadd.f32 %v2130, %v2406
      %v2461 = vadd.f32 %v2131, %v2409
      %v2462 = vadd.f32 %v2132, %v2414
      %v2463 = vadd.f32 %v2133, %v2417
      %v2464 = vadd.f32 %v2134, %v2422
      %v2465 = vadd.f32 %v2135, %v2425
      %v2466 = vadd.f32 %v2136, %v2430
      %v2467 = vadd.f32 %v2137, %v2433
      %v2468 = vld [vmem:[%s2138 + $0x1] sm:$0xff]
      %v2469 = vld [vmem:[%s2138 + $0x9] sm:$0xff]
      %v2470 = vld [vmem:[%s2138 + $0x19] sm:$0xff]
      %v2471 = vld [vmem:[%s2138 + $0x21] sm:$0xff]
      %v2472 = vld [vmem:[%s2138 + $0x31] sm:$0xff]
      %v2473 = vld [vmem:[%s2138 + $0x39] sm:$0xff]
      %v2474 = vld [vmem:[%s2138 + $0x49] sm:$0xff]
      %v2475 = vld [vmem:[%s2138 + $0x51] sm:$0xff]
      %v2476 = vld [vmem:[%s2138 + $0x61] sm:$0xff]
      %v2477 = vld [vmem:[%s2138 + $0x69] sm:$0xff]
      %v2478 = vld [vmem:[%s2138 + $0x79] sm:$0xff]
      %v2479 = vld [vmem:[%s2138 + $0x81] sm:$0xff]
      %v2480 = vld [vmem:[%s2138 + $0x91] sm:$0xff]
      %v2481 = vld [vmem:[%s2138 + $0x99] sm:$0xff]
      %v2482 = vld [vmem:[%s2138 + $0xa9] sm:$0xff]
      %v2483 = vld [vmem:[%s2138 + $0xb1] sm:$0xff]
      %v2484 = vld [vmem:[%s2138 + $0xc1] sm:$0xff]
      %v2485 = vld [vmem:[%s2138 + $0xc9] sm:$0xff]
      %v2486 = vld [vmem:[%s2138 + $0xd9] sm:$0xff]
      %v2487 = vld [vmem:[%s2138 + $0xe1] sm:$0xff]
      %v2488 = vld [vmem:[%s2138 + $0xf1] sm:$0xff]
      %v2489 = vld [vmem:[%s2138 + $0xf9] sm:$0xff]
      %v2490 = vld [vmem:[%s2138 + $0x109] sm:$0xff]
      %v2491 = vld [vmem:[%s2138 + $0x111] sm:$0xff]
      %v2492 = vld [vmem:[%s2138 + $0x121] sm:$0xff]
      %v2493 = vld [vmem:[%s2138 + $0x129] sm:$0xff]
      %v2494 = vld [vmem:[%s2138 + $0x139] sm:$0xff]
      %v2495 = vld [vmem:[%s2138 + $0x141] sm:$0xff]
      %v2496 = vld [vmem:[%s2138 + $0x151] sm:$0xff]
      %v2497 = vld [vmem:[%s2138 + $0x159] sm:$0xff]
      %v2498 = vld [vmem:[%s2138 + $0x169] sm:$0xff]
      %v2499 = vld [vmem:[%s2138 + $0x171] sm:$0xff]
      %v2500 = vpack.c.bf16 %v2469, %v2468
      %v2501 = vpack.c.bf16 %v2471, %v2470
      %v2502 = vpack.c.bf16 %v2473, %v2472
      %v2503 = vpack.c.bf16 %v2475, %v2474
      %v2504 = vpack.c.bf16 %v2477, %v2476
      %v2505 = vpack.c.bf16 %v2479, %v2478
      %v2506 = vpack.c.bf16 %v2481, %v2480
      %v2507 = vpack.c.bf16 %v2483, %v2482
      %v2508 = vpack.c.bf16 %v2485, %v2484
      %v2509 = vpack.c.bf16 %v2487, %v2486
      %v2510 = vpack.c.bf16 %v2489, %v2488
      %v2511 = vpack.c.bf16 %v2491, %v2490
      %v2512 = vpack.c.bf16 %v2493, %v2492
      %v2513 = vpack.c.bf16 %v2495, %v2494
      %v2514 = vpack.c.bf16 %v2497, %v2496
      %v2515 = vpack.c.bf16 %v2499, %v2498
      %s2516 = scalar_lea.vmem %s1, 252
      %v2517 = vld [vmem:[%s2516] sm:$0xf]
      %v2518 = vld [vmem:[%s2516 + $0x4] sm:$0xf]
      %v2519 = vld [vmem:[%s2516 + $0x8] sm:$0xf]
      %v2520 = vld [vmem:[%s2516 + $0xc] sm:$0xf]
      %v2521 = vld [vmem:[%s2516 + $0x10] sm:$0xf]
      %v2522 = vld [vmem:[%s2516 + $0x14] sm:$0xf]
      %v2523 = vld [vmem:[%s2516 + $0x18] sm:$0xf]
      %v2524 = vld [vmem:[%s2516 + $0x1c] sm:$0xf]
      %v2525 = vld [vmem:[%s2516 + $0x20] sm:$0xf]
      %v2535 = vunpack.c.l.b16 %v2517
      %v2536 = vunpack.c.l.b16 %v2518
      %v2537 = vunpack.c.l.b16 %v2519
      %v2538 = vunpack.c.l.b16 %v2520
      %v2539 = vunpack.c.l.b16 %v2521
      %v2540 = vunpack.c.l.b16 %v2522
      %v2541 = vunpack.c.l.b16 %v2523
      %v2542 = vunpack.c.l.b16 %v2524
      %v2543 = vunpack.c.l.b16 %v2525
      %v2544 = vpack.c.b16 %v2536, %v2535
      %v2545 = vpack.c.b16 %v2538, %v2537
      %v2546 = vpack.c.b16 %v2540, %v2539
      %v2547 = vpack.c.b16 %v2542, %v2541
      %v2548 = vpack.c.b16 %v2543, %v2543
      %v2554 = vsel %vm368, %v2500, 0
      %v2557 = vsel %vm368, %v2501, 0
      %v2560 = vsel %vm368, %v2502, 0
      %v2563 = vsel %vm368, %v2503, 0
      %v2566 = vsel %vm368, %v2504, 0
      %v2569 = vsel %vm368, %v2505, 0
      %v2572 = vsel %vm368, %v2506, 0
      %v2575 = vsel %vm368, %v2507, 0
      %v2578 = vsel %vm368, %v2508, 0
      %v2581 = vsel %vm368, %v2509, 0
      %v2584 = vsel %vm368, %v2510, 0
      %v2587 = vsel %vm368, %v2511, 0
      %v2590 = vsel %vm368, %v2512, 0
      %v2593 = vsel %vm368, %v2513, 0
      %v2596 = vsel %vm368, %v2514, 0
      %v2599 = vsel %vm368, %v2515, 0
      %v2602 = vsel %vm417, %v2548, 0
      %2604 = vmatprep.subr.bf16.mxu0 0
      %2605 = vmatpush1.bf16.msra.mxu0 %v2544
      %2606 = vmatprep.subr.bf16.mxu0 0
      %2607 = vmatpush1.bf16.msra.mxu0 %v2545
      %2608 = vmatprep.subr.bf16.mxu0 0
      %2609 = vmatpush1.bf16.msra.mxu0 %v2546
      %2610 = vmatprep.subr.bf16.mxu0 0
      %2611 = vmatpush1.bf16.msra.mxu0 %v2547
      %2612 = vmatprep.subr.bf16.mxu0 0
      %2613 = vmatpush1.bf16.msra.mxu0 %v2602
      %2614 = vmatprep.subr.bf16.mxu0 0
      %2615 = vmatpush1.bf16.msra.mxu0 0
      %2616 = vmatprep.subr.bf16.mxu0 0
      %2617 = vmatpush1.bf16.msra.mxu0 0
      %2618 = vmatprep.subr.bf16.mxu0 0
      %2619 = vmatpush1.bf16.msra.mxu0 0
      %2620 = vmatprep.subr.bf16.mxu0 0
      %2621 = vmatpush1.bf16.msra.mxu0 0
      %2622 = vmatprep.subr.bf16.mxu0 0
      %2623 = vmatpush1.bf16.msra.mxu0 0
      %2624 = vmatprep.subr.bf16.mxu0 0
      %2625 = vmatpush1.bf16.msra.mxu0 0
      %2626 = vmatprep.subr.bf16.mxu0 0
      %2627 = vmatpush1.bf16.msra.mxu0 0
      %2628 = vmatprep.subr.bf16.mxu0 0
      %2629 = vmatpush1.bf16.msra.mxu0 0
      %2630 = vmatprep.subr.bf16.mxu0 0
      %2631 = vmatpush1.bf16.msra.mxu0 0
      %2632 = vmatprep.subr.bf16.mxu0 0
      %2633 = vmatpush1.bf16.msra.mxu0 0
      %2634 = vmatprep.subr.bf16.mxu0 0
      %2635 = vmatpush1.bf16.msra.mxu0 0
      %2636 = vmatprep.mubr.bf16.mxu0 0
      %2637 = vmatmul.mubr.bf16.gmra.mrb[0].mxu0 %v2554
      %v2638 = vpop.f32.mrb[0].mxu0
      %v2639 = vadd.f32 0.0, %v2638
      %v2640 = vpop.f32.mrb[0].mxu0
      %v2641 = vpop.f32.mrb[0].mxu0
      %v2642 = vadd.f32 0.0, %v2641
      %v2643 = vpop.f32.mrb[0].mxu0
      %2644 = vmatprep.mubr.bf16.mxu0 0
      %2645 = vmatmul.mubr.bf16.gmra.mrb[0].mxu0 %v2557
      %v2646 = vpop.f32.mrb[0].mxu0
      %v2647 = vadd.f32 0.0, %v2646
      %v2648 = vpop.f32.mrb[0].mxu0
      %v2649 = vpop.f32.mrb[0].mxu0
      %v2650 = vadd.f32 0.0, %v2649
      %v2651 = vpop.f32.mrb[0].mxu0
      %2652 = vmatprep.mubr.bf16.mxu0 0
      %2653 = vmatmul.mubr.bf16.gmra.mrb[0].mxu0 %v2560
      %v2654 = vpop.f32.mrb[0].mxu0
      %v2655 = vadd.f32 0.0, %v2654
      %v2656 = vpop.f32.mrb[0].mxu0
      %v2657 = vpop.f32.mrb[0].mxu0
      %v2658 = vadd.f32 0.0, %v2657
      %v2659 = vpop.f32.mrb[0].mxu0
      %2660 = vmatprep.mubr.bf16.mxu0 0
      %2661 = vmatmul.mubr.bf16.gmra.mrb[0].mxu0 %v2563
      %v2662 = vpop.f32.mrb[0].mxu0
      %v2663 = vadd.f32 0.0, %v2662
      %v2664 = vpop.f32.mrb[0].mxu0
      %v2665 = vpop.f32.mrb[0].mxu0
      %v2666 = vadd.f32 0.0, %v2665
      %v2667 = vpop.f32.mrb[0].mxu0
      %2668 = vmatprep.mubr.bf16.mxu0 0
      %2669 = vmatmul.mubr.bf16.gmra.mrb[0].mxu0 %v2566
      %v2670 = vpop.f32.mrb[0].mxu0
      %v2671 = vadd.f32 0.0, %v2670
      %v2672 = vpop.f32.mrb[0].mxu0
      %v2673 = vpop.f32.mrb[0].mxu0
      %v2674 = vadd.f32 0.0, %v2673
      %v2675 = vpop.f32.mrb[0].mxu0
      %2676 = vmatprep.mubr.bf16.mxu0 0
      %2677 = vmatmul.mubr.bf16.gmra.mrb[0].mxu0 %v2569
      %v2678 = vpop.f32.mrb[0].mxu0
      %v2679 = vadd.f32 0.0, %v2678
      %v2680 = vpop.f32.mrb[0].mxu0
      %v2681 = vpop.f32.mrb[0].mxu0
      %v2682 = vadd.f32 0.0, %v2681
      %v2683 = vpop.f32.mrb[0].mxu0
      %2684 = vmatprep.mubr.bf16.mxu0 0
      %2685 = vmatmul.mubr.bf16.gmra.mrb[0].mxu0 %v2572
      %v2686 = vpop.f32.mrb[0].mxu0
      %v2687 = vadd.f32 0.0, %v2686
      %v2688 = vpop.f32.mrb[0].mxu0
      %v2689 = vpop.f32.mrb[0].mxu0
      %v2690 = vadd.f32 0.0, %v2689
      %v2691 = vpop.f32.mrb[0].mxu0
      %2692 = vmatprep.mubr.bf16.mxu0 0
      %2693 = vmatmul.mubr.bf16.gmra.mrb[0].mxu0 %v2575
      %v2694 = vpop.f32.mrb[0].mxu0
      %v2695 = vadd.f32 0.0, %v2694
      %v2696 = vpop.f32.mrb[0].mxu0
      %v2697 = vpop.f32.mrb[0].mxu0
      %v2698 = vadd.f32 0.0, %v2697
      %v2699 = vpop.f32.mrb[0].mxu0
      %2700 = vmatprep.mubr.bf16.mxu0 0
      %2701 = vmatmul.mubr.bf16.gmra.mrb[0].mxu0 %v2578
      %v2702 = vpop.f32.mrb[0].mxu0
      %v2703 = vadd.f32 0.0, %v2702
      %v2704 = vpop.f32.mrb[0].mxu0
      %v2705 = vpop.f32.mrb[0].mxu0
      %v2706 = vadd.f32 0.0, %v2705
      %v2707 = vpop.f32.mrb[0].mxu0
      %2708 = vmatprep.mubr.bf16.mxu0 0
      %2709 = vmatmul.mubr.bf16.gmra.mrb[0].mxu0 %v2581
      %v2710 = vpop.f32.mrb[0].mxu0
      %v2711 = vadd.f32 0.0, %v2710
      %v2712 = vpop.f32.mrb[0].mxu0
      %v2713 = vpop.f32.mrb[0].mxu0
      %v2714 = vadd.f32 0.0, %v2713
      %v2715 = vpop.f32.mrb[0].mxu0
      %2716 = vmatprep.mubr.bf16.mxu0 0
      %2717 = vmatmul.mubr.bf16.gmra.mrb[0].mxu0 %v2584
      %v2718 = vpop.f32.mrb[0].mxu0
      %v2719 = vadd.f32 0.0, %v2718
      %v2720 = vpop.f32.mrb[0].mxu0
      %v2721 = vpop.f32.mrb[0].mxu0
      %v2722 = vadd.f32 0.0, %v2721
      %v2723 = vpop.f32.mrb[0].mxu0
      %2724 = vmatprep.mubr.bf16.mxu0 0
      %2725 = vmatmul.mubr.bf16.gmra.mrb[0].mxu0 %v2587
      %v2726 = vpop.f32.mrb[0].mxu0
      %v2727 = vadd.f32 0.0, %v2726
      %v2728 = vpop.f32.mrb[0].mxu0
      %v2729 = vpop.f32.mrb[0].mxu0
      %v2730 = vadd.f32 0.0, %v2729
      %v2731 = vpop.f32.mrb[0].mxu0
      %2732 = vmatprep.mubr.bf16.mxu0 0
      %2733 = vmatmul.mubr.bf16.gmra.mrb[0].mxu0 %v2590
      %v2734 = vpop.f32.mrb[0].mxu0
      %v2735 = vadd.f32 0.0, %v2734
      %v2736 = vpop.f32.mrb[0].mxu0
      %v2737 = vpop.f32.mrb[0].mxu0
      %v2738 = vadd.f32 0.0, %v2737
      %v2739 = vpop.f32.mrb[0].mxu0
      %2740 = vmatprep.mubr.bf16.mxu0 0
      %2741 = vmatmul.mubr.bf16.gmra.mrb[0].mxu0 %v2593
      %v2742 = vpop.f32.mrb[0].mxu0
      %v2743 = vadd.f32 0.0, %v2742
      %v2744 = vpop.f32.mrb[0].mxu0
      %v2745 = vpop.f32.mrb[0].mxu0
      %v2746 = vadd.f32 0.0, %v2745
      %v2747 = vpop.f32.mrb[0].mxu0
      %2748 = vmatprep.mubr.bf16.mxu0 0
      %2749 = vmatmul.mubr.bf16.gmra.mrb[0].mxu0 %v2596
      %v2750 = vpop.f32.mrb[0].mxu0
      %v2751 = vadd.f32 0.0, %v2750
      %v2752 = vpop.f32.mrb[0].mxu0
      %v2753 = vpop.f32.mrb[0].mxu0
      %v2754 = vadd.f32 0.0, %v2753
      %v2755 = vpop.f32.mrb[0].mxu0
      %2756 = vmatprep.mubr.bf16.mxu0 0
      %2757 = vmatmul.mubr.bf16.gmra.mrb[0].mxu0 %v2599
      %v2758 = vpop.f32.mrb[0].mxu0
      %v2759 = vadd.f32 0.0, %v2758
      %v2760 = vpop.f32.mrb[0].mxu0
      %v2761 = vpop.f32.mrb[0].mxu0
      %v2762 = vadd.f32 0.0, %v2761
      %v2763 = vpop.f32.mrb[0].mxu0
      %2764 = vdwg.mxu0
      %v2765 = vadd.f32 %v2436, %v2639
      %v2766 = vadd.f32 %v2437, %v2642
      %v2767 = vadd.f32 %v2438, %v2647
      %v2768 = vadd.f32 %v2439, %v2650
      %v2769 = vadd.f32 %v2440, %v2655
      %v2770 = vadd.f32 %v2441, %v2658
      %v2771 = vadd.f32 %v2442, %v2663
      %v2772 = vadd.f32 %v2443, %v2666
      %v2773 = vadd.f32 %v2444, %v2671
      %v2774 = vadd.f32 %v2445, %v2674
      %v2775 = vadd.f32 %v2446, %v2679
      %v2776 = vadd.f32 %v2447, %v2682
      %v2777 = vadd.f32 %v2448, %v2687
      %v2778 = vadd.f32 %v2449, %v2690
      %v2779 = vadd.f32 %v2450, %v2695
      %v2780 = vadd.f32 %v2451, %v2698
      %v2781 = vadd.f32 %v2452, %v2703
      %v2782 = vadd.f32 %v2453, %v2706
      %v2783 = vadd.f32 %v2454, %v2711
      %v2784 = vadd.f32 %v2455, %v2714
      %v2785 = vadd.f32 %v2456, %v2719
      %v2786 = vadd.f32 %v2457, %v2722
      %v2787 = vadd.f32 %v2458, %v2727
      %v2788 = vadd.f32 %v2459, %v2730
      %v2789 = vadd.f32 %v2460, %v2735
      %v2790 = vadd.f32 %v2461, %v2738
      %v2791 = vadd.f32 %v2462, %v2743
      %v2792 = vadd.f32 %v2463, %v2746
      %v2793 = vadd.f32 %v2464, %v2751
      %v2794 = vadd.f32 %v2465, %v2754
      %v2795 = vadd.f32 %v2466, %v2759
      %v2796 = vadd.f32 %v2467, %v2762
      %v2797 = vld [vmem:[%s2138 + $0x2] sm:$0xff]
      %v2798 = vld [vmem:[%s2138 + $0xa] sm:$0xff]
      %v2799 = vld [vmem:[%s2138 + $0x1a] sm:$0xff]
      %v2800 = vld [vmem:[%s2138 + $0x22] sm:$0xff]
      %v2801 = vld [vmem:[%s2138 + $0x32] sm:$0xff]
      %v2802 = vld [vmem:[%s2138 + $0x3a] sm:$0xff]
      %v2803 = vld [vmem:[%s2138 + $0x4a] sm:$0xff]
      %v2804 = vld [vmem:[%s2138 + $0x52] sm:$0xff]
      %v2805 = vld [vmem:[%s2138 + $0x62] sm:$0xff]
      %v2806 = vld [vmem:[%s2138 + $0x6a] sm:$0xff]
      %v2807 = vld [vmem:[%s2138 + $0x7a] sm:$0xff]
      %v2808 = vld [vmem:[%s2138 + $0x82] sm:$0xff]
      %v2809 = vld [vmem:[%s2138 + $0x92] sm:$0xff]
      %v2810 = vld [vmem:[%s2138 + $0x9a] sm:$0xff]
      %v2811 = vld [vmem:[%s2138 + $0xaa] sm:$0xff]
      %v2812 = vld [vmem:[%s2138 + $0xb2] sm:$0xff]
      %v2813 = vld [vmem:[%s2138 + $0xc2] sm:$0xff]
      %v2814 = vld [vmem:[%s2138 + $0xca] sm:$0xff]
      %v2815 = vld [vmem:[%s2138 + $0xda] sm:$0xff]
      %v2816 = vld [vmem:[%s2138 + $0xe2] sm:$0xff]
      %v2817 = vld [vmem:[%s2138 + $0xf2] sm:$0xff]
      %v2818 = vld [vmem:[%s2138 + $0xfa] sm:$0xff]
      %v2819 = vld [vmem:[%s2138 + $0x10a] sm:$0xff]
      %v2820 = vld [vmem:[%s2138 + $0x112] sm:$0xff]
      %v2821 = vld [vmem:[%s2138 + $0x122] sm:$0xff]
      %v2822 = vld [vmem:[%s2138 + $0x12a] sm:$0xff]
      %v2823 = vld [vmem:[%s2138 + $0x13a] sm:$0xff]
      %v2824 = vld [vmem:[%s2138 + $0x142] sm:$0xff]
      %v2825 = vld [vmem:[%s2138 + $0x152] sm:$0xff]
      %v2826 = vld [vmem:[%s2138 + $0x15a] sm:$0xff]
      %v2827 = vld [vmem:[%s2138 + $0x16a] sm:$0xff]
      %v2828 = vld [vmem:[%s2138 + $0x172] sm:$0xff]
      %v2829 = vpack.c.bf16 %v2798, %v2797
      %v2830 = vpack.c.bf16 %v2800, %v2799
      %v2831 = vpack.c.bf16 %v2802, %v2801
      %v2832 = vpack.c.bf16 %v2804, %v2803
      %v2833 = vpack.c.bf16 %v2806, %v2805
      %v2834 = vpack.c.bf16 %v2808, %v2807
      %v2835 = vpack.c.bf16 %v2810, %v2809
      %v2836 = vpack.c.bf16 %v2812, %v2811
      %v2837 = vpack.c.bf16 %v2814, %v2813
      %v2838 = vpack.c.bf16 %v2816, %v2815
      %v2839 = vpack.c.bf16 %v2818, %v2817
      %v2840 = vpack.c.bf16 %v2820, %v2819
      %v2841 = vpack.c.bf16 %v2822, %v2821
      %v2842 = vpack.c.bf16 %v2824, %v2823
      %v2843 = vpack.c.bf16 %v2826, %v2825
      %v2844 = vpack.c.bf16 %v2828, %v2827
      %s2845 = scalar_lea.vmem %s1, 288
      %v2846 = vld [vmem:[%s2845] sm:$0xf]
      %v2847 = vld [vmem:[%s2845 + $0x4] sm:$0xf]
      %v2848 = vld [vmem:[%s2845 + $0x8] sm:$0xf]
      %v2849 = vld [vmem:[%s2845 + $0xc] sm:$0xf]
      %v2850 = vld [vmem:[%s2845 + $0x10] sm:$0xf]
      %v2851 = vld [vmem:[%s2845 + $0x14] sm:$0xf]
      %v2852 = vld [vmem:[%s2845 + $0x18] sm:$0xf]
      %v2853 = vld [vmem:[%s2845 + $0x1c] sm:$0xf]
      %v2854 = vld [vmem:[%s2845 + $0x20] sm:$0xf]
      %v2864 = vunpack.c.l.b16 %v2846
      %v2865 = vunpack.c.l.b16 %v2847
      %v2866 = vunpack.c.l.b16 %v2848
      %v2867 = vunpack.c.l.b16 %v2849
      %v2868 = vunpack.c.l.b16 %v2850
      %v2869 = vunpack.c.l.b16 %v2851
      %v2870 = vunpack.c.l.b16 %v2852
      %v2871 = vunpack.c.l.b16 %v2853
      %v2872 = vunpack.c.l.b16 %v2854
      %v2873 = vpack.c.b16 %v2865, %v2864
      %v2874 = vpack.c.b16 %v2867, %v2866
      %v2875 = vpack.c.b16 %v2869, %v2868
      %v2876 = vpack.c.b16 %v2871, %v2870
      %v2877 = vpack.c.b16 %v2872, %v2872
      %v2883 = vsel %vm368, %v2829, 0
      %v2886 = vsel %vm368, %v2830, 0
      %v2889 = vsel %vm368, %v2831, 0
      %v2892 = vsel %vm368, %v2832, 0
      %v2895 = vsel %vm368, %v2833, 0
      %v2898 = vsel %vm368, %v2834, 0
      %v2901 = vsel %vm368, %v2835, 0
      %v2904 = vsel %vm368, %v2836, 0
      %v2907 = vsel %vm368, %v2837, 0
      %v2910 = vsel %vm368, %v2838, 0
      %v2913 = vsel %vm368, %v2839, 0
      %v2916 = vsel %vm368, %v2840, 0
      %v2919 = vsel %vm368, %v2841, 0
      %v2922 = vsel %vm368, %v2842, 0
      %v2925 = vsel %vm368, %v2843, 0
      %v2928 = vsel %vm368, %v2844, 0
      %v2931 = vsel %vm417, %v2877, 0
      %2933 = vmatprep.subr.bf16.mxu0 0
      %2934 = vmatpush1.bf16.msra.mxu0 %v2873
      %2935 = vmatprep.subr.bf16.mxu0 0
      %2936 = vmatpush1.bf16.msra.mxu0 %v2874
      %2937 = vmatprep.subr.bf16.mxu0 0
      %2938 = vmatpush1.bf16.msra.mxu0 %v2875
      %2939 = vmatprep.subr.bf16.mxu0 0
      %2940 = vmatpush1.bf16.msra.mxu0 %v2876
      %2941 = vmatprep.subr.bf16.mxu0 0
      %2942 = vmatpush1.bf16.msra.mxu0 %v2931
      %2943 = vmatprep.subr.bf16.mxu0 0
      %2944 = vmatpush1.bf16.msra.mxu0 0
      %2945 = vmatprep.subr.bf16.mxu0 0
      %2946 = vmatpush1.bf16.msra.mxu0 0
      %2947 = vmatprep.subr.bf16.mxu0 0
      %2948 = vmatpush1.bf16.msra.mxu0 0
      %2949 = vmatprep.subr.bf16.mxu0 0
      %2950 = vmatpush1.bf16.msra.mxu0 0
      %2951 = vmatprep.subr.bf16.mxu0 0
      %2952 = vmatpush1.bf16.msra.mxu0 0
      %2953 = vmatprep.subr.bf16.mxu0 0
      %2954 = vmatpush1.bf16.msra.mxu0 0
      %2955 = vmatprep.subr.bf16.mxu0 0
      %2956 = vmatpush1.bf16.msra.mxu0 0
      %2957 = vmatprep.subr.bf16.mxu0 0
      %2958 = vmatpush1.bf16.msra.mxu0 0
      %2959 = vmatprep.subr.bf16.mxu0 0
      %2960 = vmatpush1.bf16.msra.mxu0 0
      %2961 = vmatprep.subr.bf16.mxu0 0
      %2962 = vmatpush1.bf16.msra.mxu0 0
      %2963 = vmatprep.subr.bf16.mxu0 0
      %2964 = vmatpush1.bf16.msra.mxu0 0
      %2965 = vmatprep.mubr.bf16.mxu0 0
      %2966 = vmatmul.mubr.bf16.gmra.mrb[0].mxu0 %v2883
      %v2967 = vpop.f32.mrb[0].mxu0
      %v2968 = vadd.f32 0.0, %v2967
      %v2969 = vpop.f32.mrb[0].mxu0
      %v2970 = vpop.f32.mrb[0].mxu0
      %v2971 = vadd.f32 0.0, %v2970
      %v2972 = vpop.f32.mrb[0].mxu0
      %2973 = vmatprep.mubr.bf16.mxu0 0
      %2974 = vmatmul.mubr.bf16.gmra.mrb[0].mxu0 %v2886
      %v2975 = vpop.f32.mrb[0].mxu0
      %v2976 = vadd.f32 0.0, %v2975
      %v2977 = vpop.f32.mrb[0].mxu0
      %v2978 = vpop.f32.mrb[0].mxu0
      %v2979 = vadd.f32 0.0, %v2978
      %v2980 = vpop.f32.mrb[0].mxu0
      %2981 = vmatprep.mubr.bf16.mxu0 0
      %2982 = vmatmul.mubr.bf16.gmra.mrb[0].mxu0 %v2889
      %v2983 = vpop.f32.mrb[0].mxu0
      %v2984 = vadd.f32 0.0, %v2983
      %v2985 = vpop.f32.mrb[0].mxu0
      %v2986 = vpop.f32.mrb[0].mxu0
      %v2987 = vadd.f32 0.0, %v2986
      %v2988 = vpop.f32.mrb[0].mxu0
      %2989 = vmatprep.mubr.bf16.mxu0 0
      %2990 = vmatmul.mubr.bf16.gmra.mrb[0].mxu0 %v2892
      %v2991 = vpop.f32.mrb[0].mxu0
      %v2992 = vadd.f32 0.0, %v2991
      %v2993 = vpop.f32.mrb[0].mxu0
      %v2994 = vpop.f32.mrb[0].mxu0
      %v2995 = vadd.f32 0.0, %v2994
      %v2996 = vpop.f32.mrb[0].mxu0
      %2997 = vmatprep.mubr.bf16.mxu0 0
      %2998 = vmatmul.mubr.bf16.gmra.mrb[0].mxu0 %v2895
      %v2999 = vpop.f32.mrb[0].mxu0
      %v3000 = vadd.f32 0.0, %v2999
      %v3001 = vpop.f32.mrb[0].mxu0
      %v3002 = vpop.f32.mrb[0].mxu0
      %v3003 = vadd.f32 0.0, %v3002
      %v3004 = vpop.f32.mrb[0].mxu0
      %3005 = vmatprep.mubr.bf16.mxu0 0
      %3006 = vmatmul.mubr.bf16.gmra.mrb[0].mxu0 %v2898
      %v3007 = vpop.f32.mrb[0].mxu0
      %v3008 = vadd.f32 0.0, %v3007
      %v3009 = vpop.f32.mrb[0].mxu0
      %v3010 = vpop.f32.mrb[0].mxu0
      %v3011 = vadd.f32 0.0, %v3010
      %v3012 = vpop.f32.mrb[0].mxu0
      %3013 = vmatprep.mubr.bf16.mxu0 0
      %3014 = vmatmul.mubr.bf16.gmra.mrb[0].mxu0 %v2901
      %v3015 = vpop.f32.mrb[0].mxu0
      %v3016 = vadd.f32 0.0, %v3015
      %v3017 = vpop.f32.mrb[0].mxu0
      %v3018 = vpop.f32.mrb[0].mxu0
      %v3019 = vadd.f32 0.0, %v3018
      %v3020 = vpop.f32.mrb[0].mxu0
      %3021 = vmatprep.mubr.bf16.mxu0 0
      %3022 = vmatmul.mubr.bf16.gmra.mrb[0].mxu0 %v2904
      %v3023 = vpop.f32.mrb[0].mxu0
      %v3024 = vadd.f32 0.0, %v3023
      %v3025 = vpop.f32.mrb[0].mxu0
      %v3026 = vpop.f32.mrb[0].mxu0
      %v3027 = vadd.f32 0.0, %v3026
      %v3028 = vpop.f32.mrb[0].mxu0
      %3029 = vmatprep.mubr.bf16.mxu0 0
      %3030 = vmatmul.mubr.bf16.gmra.mrb[0].mxu0 %v2907
      %v3031 = vpop.f32.mrb[0].mxu0
      %v3032 = vadd.f32 0.0, %v3031
      %v3033 = vpop.f32.mrb[0].mxu0
      %v3034 = vpop.f32.mrb[0].mxu0
      %v3035 = vadd.f32 0.0, %v3034
      %v3036 = vpop.f32.mrb[0].mxu0
      %3037 = vmatprep.mubr.bf16.mxu0 0
      %3038 = vmatmul.mubr.bf16.gmra.mrb[0].mxu0 %v2910
      %v3039 = vpop.f32.mrb[0].mxu0
      %v3040 = vadd.f32 0.0, %v3039
      %v3041 = vpop.f32.mrb[0].mxu0
      %v3042 = vpop.f32.mrb[0].mxu0
      %v3043 = vadd.f32 0.0, %v3042
      %v3044 = vpop.f32.mrb[0].mxu0
      %3045 = vmatprep.mubr.bf16.mxu0 0
      %3046 = vmatmul.mubr.bf16.gmra.mrb[0].mxu0 %v2913
      %v3047 = vpop.f32.mrb[0].mxu0
      %v3048 = vadd.f32 0.0, %v3047
      %v3049 = vpop.f32.mrb[0].mxu0
      %v3050 = vpop.f32.mrb[0].mxu0
      %v3051 = vadd.f32 0.0, %v3050
      %v3052 = vpop.f32.mrb[0].mxu0
      %3053 = vmatprep.mubr.bf16.mxu0 0
      %3054 = vmatmul.mubr.bf16.gmra.mrb[0].mxu0 %v2916
      %v3055 = vpop.f32.mrb[0].mxu0
      %v3056 = vadd.f32 0.0, %v3055
      %v3057 = vpop.f32.mrb[0].mxu0
      %v3058 = vpop.f32.mrb[0].mxu0
      %v3059 = vadd.f32 0.0, %v3058
      %v3060 = vpop.f32.mrb[0].mxu0
      %3061 = vmatprep.mubr.bf16.mxu0 0
      %3062 = vmatmul.mubr.bf16.gmra.mrb[0].mxu0 %v2919
      %v3063 = vpop.f32.mrb[0].mxu0
      %v3064 = vadd.f32 0.0, %v3063
      %v3065 = vpop.f32.mrb[0].mxu0
      %v3066 = vpop.f32.mrb[0].mxu0
      %v3067 = vadd.f32 0.0, %v3066
      %v3068 = vpop.f32.mrb[0].mxu0
      %3069 = vmatprep.mubr.bf16.mxu0 0
      %3070 = vmatmul.mubr.bf16.gmra.mrb[0].mxu0 %v2922
      %v3071 = vpop.f32.mrb[0].mxu0
      %v3072 = vadd.f32 0.0, %v3071
      %v3073 = vpop.f32.mrb[0].mxu0
      %v3074 = vpop.f32.mrb[0].mxu0
      %v3075 = vadd.f32 0.0, %v3074
      %v3076 = vpop.f32.mrb[0].mxu0
      %3077 = vmatprep.mubr.bf16.mxu0 0
      %3078 = vmatmul.mubr.bf16.gmra.mrb[0].mxu0 %v2925
      %v3079 = vpop.f32.mrb[0].mxu0
      %v3080 = vadd.f32 0.0, %v3079
      %v3081 = vpop.f32.mrb[0].mxu0
      %v3082 = vpop.f32.mrb[0].mxu0
      %v3083 = vadd.f32 0.0, %v3082
      %v3084 = vpop.f32.mrb[0].mxu0
      %3085 = vmatprep.mubr.bf16.mxu0 0
      %3086 = vmatmul.mubr.bf16.gmra.mrb[0].mxu0 %v2928
      %v3087 = vpop.f32.mrb[0].mxu0
      %v3088 = vadd.f32 0.0, %v3087
      %v3089 = vpop.f32.mrb[0].mxu0
      %v3090 = vpop.f32.mrb[0].mxu0
      %v3091 = vadd.f32 0.0, %v3090
      %v3092 = vpop.f32.mrb[0].mxu0
      %3093 = vdwg.mxu0
      %v3094 = vadd.f32 %v2765, %v2968
      %v3095 = vadd.f32 %v2766, %v2971
      %v3096 = vadd.f32 %v2767, %v2976
      %v3097 = vadd.f32 %v2768, %v2979
      %v3098 = vadd.f32 %v2769, %v2984
      %v3099 = vadd.f32 %v2770, %v2987
      %v3100 = vadd.f32 %v2771, %v2992
      %v3101 = vadd.f32 %v2772, %v2995
      %v3102 = vadd.f32 %v2773, %v3000
      %v3103 = vadd.f32 %v2774, %v3003
      %v3104 = vadd.f32 %v2775, %v3008
      %v3105 = vadd.f32 %v2776, %v3011
      %v3106 = vadd.f32 %v2777, %v3016
      %v3107 = vadd.f32 %v2778, %v3019
      %v3108 = vadd.f32 %v2779, %v3024
      %v3109 = vadd.f32 %v2780, %v3027
      %v3110 = vadd.f32 %v2781, %v3032
      %v3111 = vadd.f32 %v2782, %v3035
      %v3112 = vadd.f32 %v2783, %v3040
      %v3113 = vadd.f32 %v2784, %v3043
      %v3114 = vadd.f32 %v2785, %v3048
      %v3115 = vadd.f32 %v2786, %v3051
      %v3116 = vadd.f32 %v2787, %v3056
      %v3117 = vadd.f32 %v2788, %v3059
      %v3118 = vadd.f32 %v2789, %v3064
      %v3119 = vadd.f32 %v2790, %v3067
      %v3120 = vadd.f32 %v2791, %v3072
      %v3121 = vadd.f32 %v2792, %v3075
      %v3122 = vadd.f32 %v2793, %v3080
      %v3123 = vadd.f32 %v2794, %v3083
      %v3124 = vadd.f32 %v2795, %v3088
      %v3125 = vadd.f32 %v2796, %v3091
      %v3126 = vadd.f32 %v3094, %v3095
      %v3127 = vadd.f32 %v3126, %v3096
      %v3128 = vadd.f32 %v3127, %v3097
      %v3129 = vadd.f32 %v3128, %v3098
      %v3130 = vadd.f32 %v3129, %v3099
      %v3131 = vadd.f32 %v3130, %v3100
      %v3132 = vadd.f32 %v3131, %v3101
      %v3133 = vadd.f32 %v3132, %v3102
      %v3134 = vadd.f32 %v3133, %v3103
      %v3135 = vadd.f32 %v3134, %v3104
      %v3136 = vadd.f32 %v3135, %v3105
      %v3137 = vadd.f32 %v3136, %v3106
      %v3138 = vadd.f32 %v3137, %v3107
      %v3139 = vadd.f32 %v3138, %v3108
      %v3140 = vadd.f32 %v3139, %v3109
      %v3141 = vadd.f32 %v3140, %v3110
      %v3142 = vadd.f32 %v3141, %v3111
      %v3143 = vadd.f32 %v3142, %v3112
      %v3144 = vadd.f32 %v3143, %v3113
      %v3145 = vadd.f32 %v3144, %v3114
      %v3146 = vadd.f32 %v3145, %v3115
      %v3147 = vadd.f32 %v3146, %v3116
      %v3148 = vadd.f32 %v3147, %v3117
      %v3149 = vadd.f32 %v3148, %v3118
      %v3150 = vadd.f32 %v3149, %v3119
      %v3151 = vadd.f32 %v3150, %v3120
      %v3152 = vadd.f32 %v3151, %v3121
      %v3153 = vadd.f32 %v3152, %v3122
      %v3154 = vadd.f32 %v3153, %v3123
      %v3155 = vadd.f32 %v3154, %v3124
      %v3156 = vadd.f32 %v3155, %v3125
      %v3157 = vrot.slane %v3156, 4
      %v3158 = vadd.f32 %v3156, %v3157
      %v3159 = vrot.slane %v3158, 2
      %v3160 = vadd.f32 %v3158, %v3159
      %v3161 = vrot.slane %v3160, 1
      %v3162 = vadd.f32 %v3160, %v3161
      %v3163 = vmul.f32 %v3094, %v3094
      %v3164 = vmul.f32 %v3095, %v3095
      %v3165 = vmul.f32 %v3096, %v3096
      %v3166 = vmul.f32 %v3097, %v3097
      %v3167 = vmul.f32 %v3098, %v3098
      %v3168 = vmul.f32 %v3099, %v3099
      %v3169 = vmul.f32 %v3100, %v3100
      %v3170 = vmul.f32 %v3101, %v3101
      %v3171 = vmul.f32 %v3102, %v3102
      %v3172 = vmul.f32 %v3103, %v3103
      %v3173 = vmul.f32 %v3104, %v3104
      %v3174 = vmul.f32 %v3105, %v3105
      %v3175 = vmul.f32 %v3106, %v3106
      %v3176 = vmul.f32 %v3107, %v3107
      %v3177 = vmul.f32 %v3108, %v3108
      %v3178 = vmul.f32 %v3109, %v3109
      %v3179 = vmul.f32 %v3110, %v3110
      %v3180 = vmul.f32 %v3111, %v3111
      %v3181 = vmul.f32 %v3112, %v3112
      %v3182 = vmul.f32 %v3113, %v3113
      %v3183 = vmul.f32 %v3114, %v3114
      %v3184 = vmul.f32 %v3115, %v3115
      %v3185 = vmul.f32 %v3116, %v3116
      %v3186 = vmul.f32 %v3117, %v3117
      %v3187 = vmul.f32 %v3118, %v3118
      %v3188 = vmul.f32 %v3119, %v3119
      %v3189 = vmul.f32 %v3120, %v3120
      %v3190 = vmul.f32 %v3121, %v3121
      %v3191 = vmul.f32 %v3122, %v3122
      %v3192 = vmul.f32 %v3123, %v3123
      %v3193 = vmul.f32 %v3124, %v3124
      %v3194 = vmul.f32 %v3125, %v3125
      %v3195 = vadd.f32 %v3163, %v3164
      %v3196 = vadd.f32 %v3195, %v3165
      %v3197 = vadd.f32 %v3196, %v3166
      %v3198 = vadd.f32 %v3197, %v3167
      %v3199 = vadd.f32 %v3198, %v3168
      %v3200 = vadd.f32 %v3199, %v3169
      %v3201 = vadd.f32 %v3200, %v3170
      %v3202 = vadd.f32 %v3201, %v3171
      %v3203 = vadd.f32 %v3202, %v3172
      %v3204 = vadd.f32 %v3203, %v3173
      %v3205 = vadd.f32 %v3204, %v3174
      %v3206 = vadd.f32 %v3205, %v3175
      %v3207 = vadd.f32 %v3206, %v3176
      %v3208 = vadd.f32 %v3207, %v3177
      %v3209 = vadd.f32 %v3208, %v3178
      %v3210 = vadd.f32 %v3209, %v3179
      %v3211 = vadd.f32 %v3210, %v3180
      %v3212 = vadd.f32 %v3211, %v3181
      %v3213 = vadd.f32 %v3212, %v3182
      %v3214 = vadd.f32 %v3213, %v3183
      %v3215 = vadd.f32 %v3214, %v3184
      %v3216 = vadd.f32 %v3215, %v3185
      %v3217 = vadd.f32 %v3216, %v3186
      %v3218 = vadd.f32 %v3217, %v3187
      %v3219 = vadd.f32 %v3218, %v3188
      %v3220 = vadd.f32 %v3219, %v3189
      %v3221 = vadd.f32 %v3220, %v3190
      %v3222 = vadd.f32 %v3221, %v3191
      %v3223 = vadd.f32 %v3222, %v3192
      %v3224 = vadd.f32 %v3223, %v3193
      %v3225 = vadd.f32 %v3224, %v3194
      %v3226 = vrot.slane %v3225, 4
      %v3227 = vadd.f32 %v3225, %v3226
      %v3228 = vrot.slane %v3227, 2
      %v3229 = vadd.f32 %v3227, %v3228
      %v3230 = vrot.slane %v3229, 1
      %v3231 = vadd.f32 %v3229, %v3230
      %v3232 = vld [vmem:[%s3] sm:$0xff]
      %v3233 = vld [vmem:[%s3 + $0x8] sm:$0xff]
      %v3234 = vld [vmem:[%s3 + $0x10] sm:$0xff]
      %v3235 = vld [vmem:[%s3 + $0x18] sm:$0xff]
      %v3236 = vld [vmem:[%s3 + $0x20] sm:$0xff]
      %v3237 = vld [vmem:[%s3 + $0x28] sm:$0xff]
      %v3238 = vld [vmem:[%s3 + $0x30] sm:$0xff]
      %v3239 = vld [vmem:[%s3 + $0x38] sm:$0xff]
      %v3240 = vld [vmem:[%s3 + $0x40] sm:$0xff]
      %v3241 = vld [vmem:[%s3 + $0x48] sm:$0xff]
      %v3242 = vld [vmem:[%s3 + $0x50] sm:$0xff]
      %v3243 = vld [vmem:[%s3 + $0x58] sm:$0xff]
      %v3244 = vld [vmem:[%s3 + $0x60] sm:$0xff]
      %v3245 = vld [vmem:[%s3 + $0x68] sm:$0xff]
      %v3246 = vld [vmem:[%s3 + $0x70] sm:$0xff]
      %v3247 = vld [vmem:[%s3 + $0x78] sm:$0xff]
      %3248 = vmatprep.subr.mxu0 0.0
      %3249 = vmatpush1.msra.mxu0 %v3232
      %3250 = vmatprep.subr.mxu0 0.0
      %3251 = vmatpush1.msra.mxu0 %v3233
      %3252 = vmatprep.subr.mxu0 0.0
      %3253 = vmatpush1.msra.mxu0 %v3234
      %3254 = vmatprep.subr.mxu0 0.0
      %3255 = vmatpush1.msra.mxu0 %v3235
      %3256 = vmatprep.subr.mxu0 0.0
      %3257 = vmatpush1.msra.mxu0 %v3236
      %3258 = vmatprep.subr.mxu0 0.0
      %3259 = vmatpush1.msra.mxu0 %v3237
      %3260 = vmatprep.subr.mxu0 0.0
      %3261 = vmatpush1.msra.mxu0 %v3238
      %3262 = vmatprep.subr.mxu0 0.0
      %3263 = vmatpush1.msra.mxu0 %v3239
      %3264 = vmatprep.subr.mxu0 0.0
      %3265 = vmatpush1.msra.mxu0 %v3240
      %3266 = vmatprep.subr.mxu0 0.0
      %3267 = vmatpush1.msra.mxu0 %v3241
      %3268 = vmatprep.subr.mxu0 0.0
      %3269 = vmatpush1.msra.mxu0 %v3242
      %3270 = vmatprep.subr.mxu0 0.0
      %3271 = vmatpush1.msra.mxu0 %v3243
      %3272 = vmatprep.subr.mxu0 0.0
      %3273 = vmatpush1.msra.mxu0 %v3244
      %3274 = vmatprep.subr.mxu0 0.0
      %3275 = vmatpush1.msra.mxu0 %v3245
      %3276 = vmatprep.subr.mxu0 0.0
      %3277 = vmatpush1.msra.mxu0 %v3246
      %3278 = vmatprep.subr.mxu0 0.0
      %3279 = vmatpush1.msra.mxu0 %v3247
      %3280 = vmatprep.subr.mxu0 0.0
      %3281 = vmatpush1.msra.mxu0 0.0
      %3282 = vmatprep.subr.mxu0 0.0
      %3283 = vmatpush1.msra.mxu0 0.0
      %3284 = vmatprep.subr.mxu0 0.0
      %3285 = vmatpush1.msra.mxu0 0.0
      %3286 = vmatprep.subr.mxu0 0.0
      %3287 = vmatpush1.msra.mxu0 0.0
      %3288 = vmatprep.subr.mxu0 0.0
      %3289 = vmatpush1.msra.mxu0 0.0
      %3290 = vmatprep.subr.mxu0 0.0
      %3291 = vmatpush1.msra.mxu0 0.0
      %3292 = vmatprep.subr.mxu0 0.0
      %3293 = vmatpush1.msra.mxu0 0.0
      %3294 = vmatprep.subr.mxu0 0.0
      %3295 = vmatpush1.msra.mxu0 0.0
      %3296 = vmatprep.subr.mxu0 0.0
      %3297 = vmatpush1.msra.mxu0 0.0
      %3298 = vmatprep.subr.mxu0 0.0
      %3299 = vmatpush1.msra.mxu0 0.0
      %3300 = vmatprep.subr.mxu0 0.0
      %3301 = vmatpush1.msra.mxu0 0.0
      %3302 = vmatprep.subr.mxu0 0.0
      %3303 = vmatpush1.msra.mxu0 0.0
      %3304 = vmatprep.subr.mxu0 0.0
      %3305 = vmatpush1.msra.mxu0 0.0
      %3306 = vmatprep.subr.mxu0 0.0
      %3307 = vmatpush1.msra.mxu0 0.0
      %3308 = vmatprep.subr.mxu0 0.0
      %3309 = vmatpush1.msra.mxu0 0.0
      %3310 = vmatprep.subr.mxu0 0.0
      %3311 = vmatpush1.msra.mxu0 0.0
      %3312 = vmatprep.mubr.f32.mxu0 0.0
      %3313 = vmatmul.mubr.f32.gmra.mrb[0].mxu0 %v3162
      %v3314 = vpop.f32.mrb[0].mxu0
      %v3315 = vadd.f32 0.0, %v3314
      %v3316 = vpop.f32.mrb[0].mxu0
      %3317 = vdwg.mxu0
      %3318 = vmatprep.subr.mxu0 0.0
      %3319 = vmatpush1.msra.mxu0 %v3232
      %3320 = vmatprep.subr.mxu0 0.0
      %3321 = vmatpush1.msra.mxu0 %v3233
      %3322 = vmatprep.subr.mxu0 0.0
      %3323 = vmatpush1.msra.mxu0 %v3234
      %3324 = vmatprep.subr.mxu0 0.0
      %3325 = vmatpush1.msra.mxu0 %v3235
      %3326 = vmatprep.subr.mxu0 0.0
      %3327 = vmatpush1.msra.mxu0 %v3236
      %3328 = vmatprep.subr.mxu0 0.0
      %3329 = vmatpush1.msra.mxu0 %v3237
      %3330 = vmatprep.subr.mxu0 0.0
      %3331 = vmatpush1.msra.mxu0 %v3238
      %3332 = vmatprep.subr.mxu0 0.0
      %3333 = vmatpush1.msra.mxu0 %v3239
      %3334 = vmatprep.subr.mxu0 0.0
      %3335 = vmatpush1.msra.mxu0 %v3240
      %3336 = vmatprep.subr.mxu0 0.0
      %3337 = vmatpush1.msra.mxu0 %v3241
      %3338 = vmatprep.subr.mxu0 0.0
      %3339 = vmatpush1.msra.mxu0 %v3242
      %3340 = vmatprep.subr.mxu0 0.0
      %3341 = vmatpush1.msra.mxu0 %v3243
      %3342 = vmatprep.subr.mxu0 0.0
      %3343 = vmatpush1.msra.mxu0 %v3244
      %3344 = vmatprep.subr.mxu0 0.0
      %3345 = vmatpush1.msra.mxu0 %v3245
      %3346 = vmatprep.subr.mxu0 0.0
      %3347 = vmatpush1.msra.mxu0 %v3246
      %3348 = vmatprep.subr.mxu0 0.0
      %3349 = vmatpush1.msra.mxu0 %v3247
      %3350 = vmatprep.subr.mxu0 0.0
      %3351 = vmatpush1.msra.mxu0 0.0
      %3352 = vmatprep.subr.mxu0 0.0
      %3353 = vmatpush1.msra.mxu0 0.0
      %3354 = vmatprep.subr.mxu0 0.0
      %3355 = vmatpush1.msra.mxu0 0.0
      %3356 = vmatprep.subr.mxu0 0.0
      %3357 = vmatpush1.msra.mxu0 0.0
      %3358 = vmatprep.subr.mxu0 0.0
      %3359 = vmatpush1.msra.mxu0 0.0
      %3360 = vmatprep.subr.mxu0 0.0
      %3361 = vmatpush1.msra.mxu0 0.0
      %3362 = vmatprep.subr.mxu0 0.0
      %3363 = vmatpush1.msra.mxu0 0.0
      %3364 = vmatprep.subr.mxu0 0.0
      %3365 = vmatpush1.msra.mxu0 0.0
      %3366 = vmatprep.subr.mxu0 0.0
      %3367 = vmatpush1.msra.mxu0 0.0
      %3368 = vmatprep.subr.mxu0 0.0
      %3369 = vmatpush1.msra.mxu0 0.0
      %3370 = vmatprep.subr.mxu0 0.0
      %3371 = vmatpush1.msra.mxu0 0.0
      %3372 = vmatprep.subr.mxu0 0.0
      %3373 = vmatpush1.msra.mxu0 0.0
      %3374 = vmatprep.subr.mxu0 0.0
      %3375 = vmatpush1.msra.mxu0 0.0
      %3376 = vmatprep.subr.mxu0 0.0
      %3377 = vmatpush1.msra.mxu0 0.0
      %3378 = vmatprep.subr.mxu0 0.0
      %3379 = vmatpush1.msra.mxu0 0.0
      %3380 = vmatprep.subr.mxu0 0.0
      %3381 = vmatpush1.msra.mxu0 0.0
      %3382 = vmatprep.mubr.f32.mxu0 0.0
      %3383 = vmatmul.mubr.f32.gmra.mrb[0].mxu0 %v3231
      %v3384 = vpop.f32.mrb[0].mxu0
      %v3385 = vadd.f32 0.0, %v3384
      %v3386 = vpop.f32.mrb[0].mxu0
      %3387 = vdwg.mxu0
      %v3388 = vmul.f32 %v3315, %v3315
      %v3389 = vsub.f32 %v3385, %v3388
      %v3390 = vmax.f32 %v3389, 0.0
      %v3391 = vlaneseq
      %v3392 = vshrl.u32 %v3391, 7
      %v3393 = vsub.s32 0, %v3392
      %v3394 = vrot.slane %v3315, %v3393
      %v3395 = vsub.f32 %v3094, %v3394
      %v3396 = vsub.f32 %v3095, %v3394
      %v3397 = vsub.f32 %v3096, %v3394
      %v3398 = vsub.f32 %v3097, %v3394
      %v3399 = vsub.f32 %v3098, %v3394
      %v3400 = vsub.f32 %v3099, %v3394
      %v3401 = vsub.f32 %v3100, %v3394
      %v3402 = vsub.f32 %v3101, %v3394
      %v3403 = vsub.f32 %v3102, %v3394
      %v3404 = vsub.f32 %v3103, %v3394
      %v3405 = vsub.f32 %v3104, %v3394
      %v3406 = vsub.f32 %v3105, %v3394
      %v3407 = vsub.f32 %v3106, %v3394
      %v3408 = vsub.f32 %v3107, %v3394
      %v3409 = vsub.f32 %v3108, %v3394
      %v3410 = vsub.f32 %v3109, %v3394
      %v3411 = vsub.f32 %v3110, %v3394
      %v3412 = vsub.f32 %v3111, %v3394
      %v3413 = vsub.f32 %v3112, %v3394
      %v3414 = vsub.f32 %v3113, %v3394
      %v3415 = vsub.f32 %v3114, %v3394
      %v3416 = vsub.f32 %v3115, %v3394
      %v3417 = vsub.f32 %v3116, %v3394
      %v3418 = vsub.f32 %v3117, %v3394
      %v3419 = vsub.f32 %v3118, %v3394
      %v3420 = vsub.f32 %v3119, %v3394
      %v3421 = vsub.f32 %v3120, %v3394
      %v3422 = vsub.f32 %v3121, %v3394
      %v3423 = vsub.f32 %v3122, %v3394
      %v3424 = vsub.f32 %v3123, %v3394
      %v3425 = vsub.f32 %v3124, %v3394
      %v3426 = vsub.f32 %v3125, %v3394
      %v3427 = vadd.f32 %v3390, 1e-05
      %v3428 = vrsqrt.pop %v3427
      %v3429 = vlaneseq
      %v3430 = vshrl.u32 %v3429, 7
      %v3431 = vsub.s32 0, %v3430
      %v3432 = vrot.slane %v3428, %v3431
      %v3433 = vmul.f32 %v3395, %v3432
      %v3434 = vmul.f32 %v3396, %v3432
      %v3435 = vmul.f32 %v3397, %v3432
      %v3436 = vmul.f32 %v3398, %v3432
      %v3437 = vmul.f32 %v3399, %v3432
      %v3438 = vmul.f32 %v3400, %v3432
      %v3439 = vmul.f32 %v3401, %v3432
      %v3440 = vmul.f32 %v3402, %v3432
      %v3441 = vmul.f32 %v3403, %v3432
      %v3442 = vmul.f32 %v3404, %v3432
      %v3443 = vmul.f32 %v3405, %v3432
      %v3444 = vmul.f32 %v3406, %v3432
      %v3445 = vmul.f32 %v3407, %v3432
      %v3446 = vmul.f32 %v3408, %v3432
      %v3447 = vmul.f32 %v3409, %v3432
      %v3448 = vmul.f32 %v3410, %v3432
      %v3449 = vmul.f32 %v3411, %v3432
      %v3450 = vmul.f32 %v3412, %v3432
      %v3451 = vmul.f32 %v3413, %v3432
      %v3452 = vmul.f32 %v3414, %v3432
      %v3453 = vmul.f32 %v3415, %v3432
      %v3454 = vmul.f32 %v3416, %v3432
      %v3455 = vmul.f32 %v3417, %v3432
      %v3456 = vmul.f32 %v3418, %v3432
      %v3457 = vmul.f32 %v3419, %v3432
      %v3458 = vmul.f32 %v3420, %v3432
      %v3459 = vmul.f32 %v3421, %v3432
      %v3460 = vmul.f32 %v3422, %v3432
      %v3461 = vmul.f32 %v3423, %v3432
      %v3462 = vmul.f32 %v3424, %v3432
      %v3463 = vmul.f32 %v3425, %v3432
      %v3464 = vmul.f32 %v3426, %v3432
      %v3465 = vmul.f32 %v3433, 0.5
      %v3466 = vmul.f32 %v3434, 0.5
      %v3467 = vmul.f32 %v3435, 0.5
      %v3468 = vmul.f32 %v3436, 0.5
      %v3469 = vmul.f32 %v3437, 0.5
      %v3470 = vmul.f32 %v3438, 0.5
      %v3471 = vmul.f32 %v3439, 0.5
      %v3472 = vmul.f32 %v3440, 0.5
      %v3473 = vmul.f32 %v3441, 0.5
      %v3474 = vmul.f32 %v3442, 0.5
      %v3475 = vmul.f32 %v3443, 0.5
      %v3476 = vmul.f32 %v3444, 0.5
      %v3477 = vmul.f32 %v3445, 0.5
      %v3478 = vmul.f32 %v3446, 0.5
      %v3479 = vmul.f32 %v3447, 0.5
      %v3480 = vmul.f32 %v3448, 0.5
      %v3481 = vmul.f32 %v3449, 0.5
      %v3482 = vmul.f32 %v3450, 0.5
      %v3483 = vmul.f32 %v3451, 0.5
      %v3484 = vmul.f32 %v3452, 0.5
      %v3485 = vmul.f32 %v3453, 0.5
      %v3486 = vmul.f32 %v3454, 0.5
      %v3487 = vmul.f32 %v3455, 0.5
      %v3488 = vmul.f32 %v3456, 0.5
      %v3489 = vmul.f32 %v3457, 0.5
      %v3490 = vmul.f32 %v3458, 0.5
      %v3491 = vmul.f32 %v3459, 0.5
      %v3492 = vmul.f32 %v3460, 0.5
      %v3493 = vmul.f32 %v3461, 0.5
      %v3494 = vmul.f32 %v3462, 0.5
      %v3495 = vmul.f32 %v3463, 0.5
      %v3496 = vmul.f32 %v3464, 0.5
      %v3497 = vmul.f32 %v3433, 0.70710677
      %v3498 = vmul.f32 %v3434, 0.70710677
      %v3499 = vmul.f32 %v3435, 0.70710677
      %v3500 = vmul.f32 %v3436, 0.70710677
      %v3501 = vmul.f32 %v3437, 0.70710677
      %v3502 = vmul.f32 %v3438, 0.70710677
      %v3503 = vmul.f32 %v3439, 0.70710677
      %v3504 = vmul.f32 %v3440, 0.70710677
      %v3505 = vmul.f32 %v3441, 0.70710677
      %v3506 = vmul.f32 %v3442, 0.70710677
      %v3507 = vmul.f32 %v3443, 0.70710677
      %v3508 = vmul.f32 %v3444, 0.70710677
      %v3509 = vmul.f32 %v3445, 0.70710677
      %v3510 = vmul.f32 %v3446, 0.70710677
      %v3511 = vmul.f32 %v3447, 0.70710677
      %v3512 = vmul.f32 %v3448, 0.70710677
      %v3513 = vmul.f32 %v3449, 0.70710677
      %v3514 = vmul.f32 %v3450, 0.70710677
      %v3515 = vmul.f32 %v3451, 0.70710677
      %v3516 = vmul.f32 %v3452, 0.70710677
      %v3517 = vmul.f32 %v3453, 0.70710677
      %v3518 = vmul.f32 %v3454, 0.70710677
      %v3519 = vmul.f32 %v3455, 0.70710677
      %v3520 = vmul.f32 %v3456, 0.70710677
      %v3521 = vmul.f32 %v3457, 0.70710677
      %v3522 = vmul.f32 %v3458, 0.70710677
      %v3523 = vmul.f32 %v3459, 0.70710677
      %v3524 = vmul.f32 %v3460, 0.70710677
      %v3525 = vmul.f32 %v3461, 0.70710677
      %v3526 = vmul.f32 %v3462, 0.70710677
      %v3527 = vmul.f32 %v3463, 0.70710677
      %v3528 = vmul.f32 %v3464, 0.70710677
      %v3529 = verf.f32.pop %v3497
      %v3530 = verf.f32.pop %v3498
      %v3531 = verf.f32.pop %v3499
      %v3532 = verf.f32.pop %v3500
      %v3533 = verf.f32.pop %v3501
      %v3534 = verf.f32.pop %v3502
      %v3535 = verf.f32.pop %v3503
      %v3536 = verf.f32.pop %v3504
      %v3537 = verf.f32.pop %v3505
      %v3538 = verf.f32.pop %v3506
      %v3539 = verf.f32.pop %v3507
      %v3540 = verf.f32.pop %v3508
      %v3541 = verf.f32.pop %v3509
      %v3542 = verf.f32.pop %v3510
      %v3543 = verf.f32.pop %v3511
      %v3544 = verf.f32.pop %v3512
      %v3545 = verf.f32.pop %v3513
      %v3546 = verf.f32.pop %v3514
      %v3547 = verf.f32.pop %v3515
      %v3548 = verf.f32.pop %v3516
      %v3549 = verf.f32.pop %v3517
      %v3550 = verf.f32.pop %v3518
      %v3551 = verf.f32.pop %v3519
      %v3552 = verf.f32.pop %v3520
      %v3553 = verf.f32.pop %v3521
      %v3554 = verf.f32.pop %v3522
      %v3555 = verf.f32.pop %v3523
      %v3556 = verf.f32.pop %v3524
      %v3557 = verf.f32.pop %v3525
      %v3558 = verf.f32.pop %v3526
      %v3559 = verf.f32.pop %v3527
      %v3560 = verf.f32.pop %v3528
      %v3561 = vadd.f32 %v3529, 1.0
      %v3562 = vadd.f32 %v3530, 1.0
      %v3563 = vadd.f32 %v3531, 1.0
      %v3564 = vadd.f32 %v3532, 1.0
      %v3565 = vadd.f32 %v3533, 1.0
      %v3566 = vadd.f32 %v3534, 1.0
      %v3567 = vadd.f32 %v3535, 1.0
      %v3568 = vadd.f32 %v3536, 1.0
      %v3569 = vadd.f32 %v3537, 1.0
      %v3570 = vadd.f32 %v3538, 1.0
      %v3571 = vadd.f32 %v3539, 1.0
      %v3572 = vadd.f32 %v3540, 1.0
      %v3573 = vadd.f32 %v3541, 1.0
      %v3574 = vadd.f32 %v3542, 1.0
      %v3575 = vadd.f32 %v3543, 1.0
      %v3576 = vadd.f32 %v3544, 1.0
      %v3577 = vadd.f32 %v3545, 1.0
      %v3578 = vadd.f32 %v3546, 1.0
      %v3579 = vadd.f32 %v3547, 1.0
      %v3580 = vadd.f32 %v3548, 1.0
      %v3581 = vadd.f32 %v3549, 1.0
      %v3582 = vadd.f32 %v3550, 1.0
      %v3583 = vadd.f32 %v3551, 1.0
      %v3584 = vadd.f32 %v3552, 1.0
      %v3585 = vadd.f32 %v3553, 1.0
      %v3586 = vadd.f32 %v3554, 1.0
      %v3587 = vadd.f32 %v3555, 1.0
      %v3588 = vadd.f32 %v3556, 1.0
      %v3589 = vadd.f32 %v3557, 1.0
      %v3590 = vadd.f32 %v3558, 1.0
      %v3591 = vadd.f32 %v3559, 1.0
      %v3592 = vadd.f32 %v3560, 1.0
      %v3593 = vmul.f32 %v3465, %v3561
      %v3594 = vmul.f32 %v3466, %v3562
      %v3595 = vmul.f32 %v3467, %v3563
      %v3596 = vmul.f32 %v3468, %v3564
      %v3597 = vmul.f32 %v3469, %v3565
      %v3598 = vmul.f32 %v3470, %v3566
      %v3599 = vmul.f32 %v3471, %v3567
      %v3600 = vmul.f32 %v3472, %v3568
      %v3601 = vmul.f32 %v3473, %v3569
      %v3602 = vmul.f32 %v3474, %v3570
      %v3603 = vmul.f32 %v3475, %v3571
      %v3604 = vmul.f32 %v3476, %v3572
      %v3605 = vmul.f32 %v3477, %v3573
      %v3606 = vmul.f32 %v3478, %v3574
      %v3607 = vmul.f32 %v3479, %v3575
      %v3608 = vmul.f32 %v3480, %v3576
      %v3609 = vmul.f32 %v3481, %v3577
      %v3610 = vmul.f32 %v3482, %v3578
      %v3611 = vmul.f32 %v3483, %v3579
      %v3612 = vmul.f32 %v3484, %v3580
      %v3613 = vmul.f32 %v3485, %v3581
      %v3614 = vmul.f32 %v3486, %v3582
      %v3615 = vmul.f32 %v3487, %v3583
      %v3616 = vmul.f32 %v3488, %v3584
      %v3617 = vmul.f32 %v3489, %v3585
      %v3618 = vmul.f32 %v3490, %v3586
      %v3619 = vmul.f32 %v3491, %v3587
      %v3620 = vmul.f32 %v3492, %v3588
      %v3621 = vmul.f32 %v3493, %v3589
      %v3622 = vmul.f32 %v3494, %v3590
      %v3623 = vmul.f32 %v3495, %v3591
      %v3624 = vmul.f32 %v3496, %v3592
      %3625 = vst [vmem:[#allocation2] sm:$0xff] 0.0
      %vm3626 = vcmask 130048
      %3627 = vst.msk [vmem:[#allocation2 + $0x8] sm:$0xff] %vm3626, 0.0
      %3628 = vst [vmem:[#allocation2 + $0x10] sm:$0xff] 0.0
      %3629 = vst.msk [vmem:[#allocation2 + $0x18] sm:$0xff] %vm3626, 0.0
      %3630 = vst [vmem:[#allocation2 + $0x20] sm:$0x3] 0.0
      %vm3631 = vcmask 123904
      %3632 = vst.msk [vmem:[#allocation2 + $0x28] sm:$0x3] %vm3631, 0.0
      %s3633 = scalar_lea.vmem [#allocation2], 816
      %3634 = vst [vmem:[%s3633] sm:$0xff] 0.0
      %3635 = vst.msk [vmem:[%s3633 + $0x8] sm:$0xff] %vm3626, 0.0
      %3636 = vst [vmem:[%s3633 + $0x10] sm:$0xff] 0.0
      %3637 = vst.msk [vmem:[%s3633 + $0x18] sm:$0xff] %vm3626, 0.0
      %3638 = vst [vmem:[%s3633 + $0x20] sm:$0x3] 0.0
      %3639 = vst.msk [vmem:[%s3633 + $0x28] sm:$0x3] %vm3631, 0.0
      %s3640 = scalar_lea.vmem [#allocation2], 48
      %v3641 = vlaneseq
      %vm3642 = vcmp.ge.s32.totalorder %v3641, 0
      %vm3643 = vcmp.lt.s32.totalorder %v3641, 144
      %vm3644 = vmand %vm3642, %vm3643
      %3645 = vst.msk [vmem:[%s3640] ss:$8 sm:$0x3] %vm3644, 0.0
      %3646 = vst.msk [vmem:[%s3640] ss:$8 sm:$0x0] %vm3644, 0.0
      %s3647 = scalar_lea.vmem %s3640, 48 [#allocation2]
      %3648 = vst.msk [vmem:[%s3647] ss:$8 sm:$0x3] %vm3644, 0.0
      %3649 = vst.msk [vmem:[%s3647] ss:$8 sm:$0x0] %vm3644, 0.0
      %s3650 = scalar_lea.vmem %s3640, 96 [#allocation2]
      %3651 = vst.msk [vmem:[%s3650] ss:$8 sm:$0x3] %vm3644, 0.0
      %3652 = vst.msk [vmem:[%s3650] ss:$8 sm:$0x0] %vm3644, 0.0
      %s3653 = scalar_lea.vmem %s3640, 144 [#allocation2]
      %3654 = vst.msk [vmem:[%s3653] ss:$8 sm:$0x3] %vm3644, 0.0
      %3655 = vst.msk [vmem:[%s3653] ss:$8 sm:$0x0] %vm3644, 0.0
      %s3656 = scalar_lea.vmem %s3640, 192 [#allocation2]
      %3657 = vst.msk [vmem:[%s3656] ss:$8 sm:$0x3] %vm3644, 0.0
      %3658 = vst.msk [vmem:[%s3656] ss:$8 sm:$0x0] %vm3644, 0.0
      %s3659 = scalar_lea.vmem %s3640, 240 [#allocation2]
      %3660 = vst.msk [vmem:[%s3659] ss:$8 sm:$0x3] %vm3644, 0.0
      %3661 = vst.msk [vmem:[%s3659] ss:$8 sm:$0x0] %vm3644, 0.0
      %s3662 = scalar_lea.vmem %s3640, 288 [#allocation2]
      %3663 = vst.msk [vmem:[%s3662] ss:$8 sm:$0x3] %vm3644, 0.0
      %3664 = vst.msk [vmem:[%s3662] ss:$8 sm:$0x0] %vm3644, 0.0
      %s3665 = scalar_lea.vmem %s3640, 336 [#allocation2]
      %3666 = vst.msk [vmem:[%s3665] ss:$8 sm:$0x3] %vm3644, 0.0
      %3667 = vst.msk [vmem:[%s3665] ss:$8 sm:$0x0] %vm3644, 0.0
      %s3668 = scalar_lea.vmem %s3640, 384 [#allocation2]
      %3669 = vst.msk [vmem:[%s3668] ss:$8 sm:$0x3] %vm3644, 0.0
      %3670 = vst.msk [vmem:[%s3668] ss:$8 sm:$0x0] %vm3644, 0.0
      %s3671 = scalar_lea.vmem %s3640, 432 [#allocation2]
      %3672 = vst.msk [vmem:[%s3671] ss:$8 sm:$0x3] %vm3644, 0.0
      %3673 = vst.msk [vmem:[%s3671] ss:$8 sm:$0x0] %vm3644, 0.0
      %s3674 = scalar_lea.vmem %s3640, 480 [#allocation2]
      %3675 = vst.msk [vmem:[%s3674] ss:$8 sm:$0x3] %vm3644, 0.0
      %3676 = vst.msk [vmem:[%s3674] ss:$8 sm:$0x0] %vm3644, 0.0
      %s3677 = scalar_lea.vmem %s3640, 528 [#allocation2]
      %3678 = vst.msk [vmem:[%s3677] ss:$8 sm:$0x3] %vm3644, 0.0
      %3679 = vst.msk [vmem:[%s3677] ss:$8 sm:$0x0] %vm3644, 0.0
      %s3680 = scalar_lea.vmem %s3640, 576 [#allocation2]
      %3681 = vst.msk [vmem:[%s3680] ss:$8 sm:$0x3] %vm3644, 0.0
      %3682 = vst.msk [vmem:[%s3680] ss:$8 sm:$0x0] %vm3644, 0.0
      %s3683 = scalar_lea.vmem %s3640, 624 [#allocation2]
      %3684 = vst.msk [vmem:[%s3683] ss:$8 sm:$0x3] %vm3644, 0.0
      %3685 = vst.msk [vmem:[%s3683] ss:$8 sm:$0x0] %vm3644, 0.0
      %s3686 = scalar_lea.vmem %s3640, 672 [#allocation2]
      %3687 = vst.msk [vmem:[%s3686] ss:$8 sm:$0x3] %vm3644, 0.0
      %3688 = vst.msk [vmem:[%s3686] ss:$8 sm:$0x0] %vm3644, 0.0
      %s3689 = scalar_lea.vmem %s3640, 720 [#allocation2]
      %3690 = vst.msk [vmem:[%s3689] ss:$8 sm:$0x3] %vm3644, 0.0
      %3691 = vst.msk [vmem:[%s3689] ss:$8 sm:$0x0] %vm3644, 0.0
      %s3692 = scalar_lea.vmem %s3640, 33 [#allocation2]
      %3693 = vst.msk [vmem:[%s3692] ss:$8 sm:$0x3] %vm3644, 0.0
      %3694 = vst.msk [vmem:[%s3692] ss:$8 sm:$0x0] %vm3644, 0.0
      %s3695 = scalar_lea.vmem %s3640, 81 [#allocation2]
      %3696 = vst.msk [vmem:[%s3695] ss:$8 sm:$0x3] %vm3644, 0.0
      %3697 = vst.msk [vmem:[%s3695] ss:$8 sm:$0x0] %vm3644, 0.0
      %s3698 = scalar_lea.vmem %s3640, 129 [#allocation2]
      %3699 = vst.msk [vmem:[%s3698] ss:$8 sm:$0x3] %vm3644, 0.0
      %3700 = vst.msk [vmem:[%s3698] ss:$8 sm:$0x0] %vm3644, 0.0
      %s3701 = scalar_lea.vmem %s3640, 177 [#allocation2]
      %3702 = vst.msk [vmem:[%s3701] ss:$8 sm:$0x3] %vm3644, 0.0
      %3703 = vst.msk [vmem:[%s3701] ss:$8 sm:$0x0] %vm3644, 0.0
      %s3704 = scalar_lea.vmem %s3640, 225 [#allocation2]
      %3705 = vst.msk [vmem:[%s3704] ss:$8 sm:$0x3] %vm3644, 0.0
      %3706 = vst.msk [vmem:[%s3704] ss:$8 sm:$0x0] %vm3644, 0.0
      %s3707 = scalar_lea.vmem %s3640, 273 [#allocation2]
      %3708 = vst.msk [vmem:[%s3707] ss:$8 sm:$0x3] %vm3644, 0.0
      %3709 = vst.msk [vmem:[%s3707] ss:$8 sm:$0x0] %vm3644, 0.0
      %s3710 = scalar_lea.vmem %s3640, 321 [#allocation2]
      %3711 = vst.msk [vmem:[%s3710] ss:$8 sm:$0x3] %vm3644, 0.0
      %3712 = vst.msk [vmem:[%s3710] ss:$8 sm:$0x0] %vm3644, 0.0
      %s3713 = scalar_lea.vmem %s3640, 369 [#allocation2]
      %3714 = vst.msk [vmem:[%s3713] ss:$8 sm:$0x3] %vm3644, 0.0
      %3715 = vst.msk [vmem:[%s3713] ss:$8 sm:$0x0] %vm3644, 0.0
      %s3716 = scalar_lea.vmem %s3640, 417 [#allocation2]
      %3717 = vst.msk [vmem:[%s3716] ss:$8 sm:$0x3] %vm3644, 0.0
      %3718 = vst.msk [vmem:[%s3716] ss:$8 sm:$0x0] %vm3644, 0.0
      %s3719 = scalar_lea.vmem %s3640, 465 [#allocation2]
      %3720 = vst.msk [vmem:[%s3719] ss:$8 sm:$0x3] %vm3644, 0.0
      %3721 = vst.msk [vmem:[%s3719] ss:$8 sm:$0x0] %vm3644, 0.0
      %s3722 = scalar_lea.vmem %s3640, 513 [#allocation2]
      %3723 = vst.msk [vmem:[%s3722] ss:$8 sm:$0x3] %vm3644, 0.0
      %3724 = vst.msk [vmem:[%s3722] ss:$8 sm:$0x0] %vm3644, 0.0
      %s3725 = scalar_lea.vmem %s3640, 561 [#allocation2]
      %3726 = vst.msk [vmem:[%s3725] ss:$8 sm:$0x3] %vm3644, 0.0
      %3727 = vst.msk [vmem:[%s3725] ss:$8 sm:$0x0] %vm3644, 0.0
      %s3728 = scalar_lea.vmem %s3640, 609 [#allocation2]
      %3729 = vst.msk [vmem:[%s3728] ss:$8 sm:$0x3] %vm3644, 0.0
      %3730 = vst.msk [vmem:[%s3728] ss:$8 sm:$0x0] %vm3644, 0.0
      %s3731 = scalar_lea.vmem %s3640, 657 [#allocation2]
      %3732 = vst.msk [vmem:[%s3731] ss:$8 sm:$0x3] %vm3644, 0.0
      %3733 = vst.msk [vmem:[%s3731] ss:$8 sm:$0x0] %vm3644, 0.0
      %s3734 = scalar_lea.vmem %s3640, 705 [#allocation2]
      %3735 = vst.msk [vmem:[%s3734] ss:$8 sm:$0x3] %vm3644, 0.0
      %3736 = vst.msk [vmem:[%s3734] ss:$8 sm:$0x0] %vm3644, 0.0
      %s3737 = scalar_lea.vmem %s3640, 753 [#allocation2]
      %3738 = vst.msk [vmem:[%s3737] ss:$8 sm:$0x3] %vm3644, 0.0
      %3739 = vst.msk [vmem:[%s3737] ss:$8 sm:$0x0] %vm3644, 0.0
      %vm3740 = vcmask 130049
      %3741 = vst.msk [vmem:[%s3640 + $0x8] sm:$0xfe] %vm3740, 0.0
      %3742 = vst.msk [vmem:[%s3640 + $0x18] sm:$0xff] %vm3626, 0.0
      %vm3743 = vcmask 122880
      %3744 = vst.msk [vmem:[%s3640 + $0x28] sm:$0x1] %vm3743, 0.0
      %3745 = vst.msk [vmem:[%s3640 + $0x38] sm:$0xfe] %vm3740, 0.0
      %3746 = vst.msk [vmem:[%s3640 + $0x48] sm:$0xff] %vm3626, 0.0
      %3747 = vst.msk [vmem:[%s3640 + $0x58] sm:$0x1] %vm3743, 0.0
      %3748 = vst.msk [vmem:[%s3640 + $0x68] sm:$0xfe] %vm3740, 0.0
      %3749 = vst.msk [vmem:[%s3640 + $0x78] sm:$0xff] %vm3626, 0.0
      %3750 = vst.msk [vmem:[%s3640 + $0x88] sm:$0x1] %vm3743, 0.0
      %3751 = vst.msk [vmem:[%s3640 + $0x98] sm:$0xfe] %vm3740, 0.0
      %3752 = vst.msk [vmem:[%s3640 + $0xa8] sm:$0xff] %vm3626, 0.0
      %3753 = vst.msk [vmem:[%s3640 + $0xb8] sm:$0x1] %vm3743, 0.0
      %3754 = vst.msk [vmem:[%s3640 + $0xc8] sm:$0xfe] %vm3740, 0.0
      %3755 = vst.msk [vmem:[%s3640 + $0xd8] sm:$0xff] %vm3626, 0.0
      %3756 = vst.msk [vmem:[%s3640 + $0xe8] sm:$0x1] %vm3743, 0.0
      %3757 = vst.msk [vmem:[%s3640 + $0xf8] sm:$0xfe] %vm3740, 0.0
      %3758 = vst.msk [vmem:[%s3640 + $0x108] sm:$0xff] %vm3626, 0.0
      %3759 = vst.msk [vmem:[%s3640 + $0x118] sm:$0x1] %vm3743, 0.0
      %3760 = vst.msk [vmem:[%s3640 + $0x128] sm:$0xfe] %vm3740, 0.0
      %3761 = vst.msk [vmem:[%s3640 + $0x138] sm:$0xff] %vm3626, 0.0
      %3762 = vst.msk [vmem:[%s3640 + $0x148] sm:$0x1] %vm3743, 0.0
      %3763 = vst.msk [vmem:[%s3640 + $0x158] sm:$0xfe] %vm3740, 0.0
      %3764 = vst.msk [vmem:[%s3640 + $0x168] sm:$0xff] %vm3626, 0.0
      %3765 = vst.msk [vmem:[%s3640 + $0x178] sm:$0x1] %vm3743, 0.0
      %3766 = vst.msk [vmem:[%s3640 + $0x188] sm:$0xfe] %vm3740, 0.0
      %3767 = vst.msk [vmem:[%s3640 + $0x198] sm:$0xff] %vm3626, 0.0
      %3768 = vst.msk [vmem:[%s3640 + $0x1a8] sm:$0x1] %vm3743, 0.0
      %3769 = vst.msk [vmem:[%s3640 + $0x1b8] sm:$0xfe] %vm3740, 0.0
      %3770 = vst.msk [vmem:[%s3640 + $0x1c8] sm:$0xff] %vm3626, 0.0
      %3771 = vst.msk [vmem:[%s3640 + $0x1d8] sm:$0x1] %vm3743, 0.0
      %3772 = vst.msk [vmem:[%s3640 + $0x1e8] sm:$0xfe] %vm3740, 0.0
      %3773 = vst.msk [vmem:[%s3640 + $0x1f8] sm:$0xff] %vm3626, 0.0
      %3774 = vst.msk [vmem:[%s3640 + $0x208] sm:$0x1] %vm3743, 0.0
      %3775 = vst.msk [vmem:[%s3640 + $0x218] sm:$0xfe] %vm3740, 0.0
      %3776 = vst.msk [vmem:[%s3640 + $0x228] sm:$0xff] %vm3626, 0.0
      %3777 = vst.msk [vmem:[%s3640 + $0x238] sm:$0x1] %vm3743, 0.0
      %3778 = vst.msk [vmem:[%s3640 + $0x248] sm:$0xfe] %vm3740, 0.0
      %3779 = vst.msk [vmem:[%s3640 + $0x258] sm:$0xff] %vm3626, 0.0
      %3780 = vst.msk [vmem:[%s3640 + $0x268] sm:$0x1] %vm3743, 0.0
      %3781 = vst.msk [vmem:[%s3640 + $0x278] sm:$0xfe] %vm3740, 0.0
      %3782 = vst.msk [vmem:[%s3640 + $0x288] sm:$0xff] %vm3626, 0.0
      %3783 = vst.msk [vmem:[%s3640 + $0x298] sm:$0x1] %vm3743, 0.0
      %3784 = vst.msk [vmem:[%s3640 + $0x2a8] sm:$0xfe] %vm3740, 0.0
      %3785 = vst.msk [vmem:[%s3640 + $0x2b8] sm:$0xff] %vm3626, 0.0
      %3786 = vst.msk [vmem:[%s3640 + $0x2c8] sm:$0x1] %vm3743, 0.0
      %3787 = vst.msk [vmem:[%s3640 + $0x2d8] sm:$0xfe] %vm3740, 0.0
      %3788 = vst.msk [vmem:[%s3640 + $0x2e8] sm:$0xff] %vm3626, 0.0
      %3789 = vst.msk [vmem:[%s3640 + $0x2f8] sm:$0x1] %vm3743, 0.0
      %vm3822 = vcmask 1040384
      %v3823 = vrot.slane %v3593, 7
      %v3824 = vrot.slane %v3594, 7
      %v3825 = vsel %vm3822, %v3823, %v3824
      %v3826 = vrot.slane %v3595, 7
      %v3827 = vrot.slane %v3596, 7
      %v3828 = vsel %vm3822, %v3826, %v3827
      %v3829 = vrot.slane %v3597, 7
      %v3830 = vrot.slane %v3598, 7
      %v3831 = vsel %vm3822, %v3829, %v3830
      %v3832 = vrot.slane %v3599, 7
      %v3833 = vrot.slane %v3600, 7
      %v3834 = vsel %vm3822, %v3832, %v3833
      %v3835 = vrot.slane %v3601, 7
      %v3836 = vrot.slane %v3602, 7
      %v3837 = vsel %vm3822, %v3835, %v3836
      %v3838 = vrot.slane %v3603, 7
      %v3839 = vrot.slane %v3604, 7
      %v3840 = vsel %vm3822, %v3838, %v3839
      %v3841 = vrot.slane %v3605, 7
      %v3842 = vrot.slane %v3606, 7
      %v3843 = vsel %vm3822, %v3841, %v3842
      %v3844 = vrot.slane %v3607, 7
      %v3845 = vrot.slane %v3608, 7
      %v3846 = vsel %vm3822, %v3844, %v3845
      %v3847 = vrot.slane %v3609, 7
      %v3848 = vrot.slane %v3610, 7
      %v3849 = vsel %vm3822, %v3847, %v3848
      %v3850 = vrot.slane %v3611, 7
      %v3851 = vrot.slane %v3612, 7
      %v3852 = vsel %vm3822, %v3850, %v3851
      %v3853 = vrot.slane %v3613, 7
      %v3854 = vrot.slane %v3614, 7
      %v3855 = vsel %vm3822, %v3853, %v3854
      %v3856 = vrot.slane %v3615, 7
      %v3857 = vrot.slane %v3616, 7
      %v3858 = vsel %vm3822, %v3856, %v3857
      %v3859 = vrot.slane %v3617, 7
      %v3860 = vrot.slane %v3618, 7
      %v3861 = vsel %vm3822, %v3859, %v3860
      %v3862 = vrot.slane %v3619, 7
      %v3863 = vrot.slane %v3620, 7
      %v3864 = vsel %vm3822, %v3862, %v3863
      %v3865 = vrot.slane %v3621, 7
      %v3866 = vrot.slane %v3622, 7
      %v3867 = vsel %vm3822, %v3865, %v3866
      %v3868 = vrot.slane %v3623, 7
      %v3869 = vrot.slane %v3624, 7
      %v3870 = vsel %vm3822, %v3868, %v3869
      %3919 = vst [vmem:[%s3640] sm:$0xfe] %v3823
      %3920 = vst [vmem:[%s3640 + $0x10] sm:$0xff] %v3825
      %3921 = vst [vmem:[%s3640 + $0x20] sm:$0x1] %v3824
      %3922 = vst [vmem:[%s3640 + $0x30] sm:$0xfe] %v3826
      %3923 = vst [vmem:[%s3640 + $0x40] sm:$0xff] %v3828
      %3924 = vst [vmem:[%s3640 + $0x50] sm:$0x1] %v3827
      %3925 = vst [vmem:[%s3640 + $0x60] sm:$0xfe] %v3829
      %3926 = vst [vmem:[%s3640 + $0x70] sm:$0xff] %v3831
      %3927 = vst [vmem:[%s3640 + $0x80] sm:$0x1] %v3830
      %3928 = vst [vmem:[%s3640 + $0x90] sm:$0xfe] %v3832
      %3929 = vst [vmem:[%s3640 + $0xa0] sm:$0xff] %v3834
      %3930 = vst [vmem:[%s3640 + $0xb0] sm:$0x1] %v3833
      %3931 = vst [vmem:[%s3640 + $0xc0] sm:$0xfe] %v3835
      %3932 = vst [vmem:[%s3640 + $0xd0] sm:$0xff] %v3837
      %3933 = vst [vmem:[%s3640 + $0xe0] sm:$0x1] %v3836
      %3934 = vst [vmem:[%s3640 + $0xf0] sm:$0xfe] %v3838
      %3935 = vst [vmem:[%s3640 + $0x100] sm:$0xff] %v3840
      %3936 = vst [vmem:[%s3640 + $0x110] sm:$0x1] %v3839
      %3937 = vst [vmem:[%s3640 + $0x120] sm:$0xfe] %v3841
      %3938 = vst [vmem:[%s3640 + $0x130] sm:$0xff] %v3843
      %3939 = vst [vmem:[%s3640 + $0x140] sm:$0x1] %v3842
      %3940 = vst [vmem:[%s3640 + $0x150] sm:$0xfe] %v3844
      %3941 = vst [vmem:[%s3640 + $0x160] sm:$0xff] %v3846
      %3942 = vst [vmem:[%s3640 + $0x170] sm:$0x1] %v3845
      %3943 = vst [vmem:[%s3640 + $0x180] sm:$0xfe] %v3847
      %3944 = vst [vmem:[%s3640 + $0x190] sm:$0xff] %v3849
      %3945 = vst [vmem:[%s3640 + $0x1a0] sm:$0x1] %v3848
      %3946 = vst [vmem:[%s3640 + $0x1b0] sm:$0xfe] %v3850
      %3947 = vst [vmem:[%s3640 + $0x1c0] sm:$0xff] %v3852
      %3948 = vst [vmem:[%s3640 + $0x1d0] sm:$0x1] %v3851
      %3949 = vst [vmem:[%s3640 + $0x1e0] sm:$0xfe] %v3853
      %3950 = vst [vmem:[%s3640 + $0x1f0] sm:$0xff] %v3855
      %3951 = vst [vmem:[%s3640 + $0x200] sm:$0x1] %v3854
      %3952 = vst [vmem:[%s3640 + $0x210] sm:$0xfe] %v3856
      %3953 = vst [vmem:[%s3640 + $0x220] sm:$0xff] %v3858
      %3954 = vst [vmem:[%s3640 + $0x230] sm:$0x1] %v3857
      %3955 = vst [vmem:[%s3640 + $0x240] sm:$0xfe] %v3859
      %3956 = vst [vmem:[%s3640 + $0x250] sm:$0xff] %v3861
      %3957 = vst [vmem:[%s3640 + $0x260] sm:$0x1] %v3860
      %3958 = vst [vmem:[%s3640 + $0x270] sm:$0xfe] %v3862
      %3959 = vst [vmem:[%s3640 + $0x280] sm:$0xff] %v3864
      %3960 = vst [vmem:[%s3640 + $0x290] sm:$0x1] %v3863
      %3961 = vst [vmem:[%s3640 + $0x2a0] sm:$0xfe] %v3865
      %3962 = vst [vmem:[%s3640 + $0x2b0] sm:$0xff] %v3867
      %3963 = vst [vmem:[%s3640 + $0x2c0] sm:$0x1] %v3866
      %3964 = vst [vmem:[%s3640 + $0x2d0] sm:$0xfe] %v3868
      %3965 = vst [vmem:[%s3640 + $0x2e0] sm:$0xff] %v3870
      %3966 = vst [vmem:[%s3640 + $0x2f0] sm:$0x1] %v3869
      %v3967 = vld [vmem:[#allocation2] sm:$0xff]
      %v3968 = vld [vmem:[#allocation2 + $0x8] sm:$0xff]
      %v3969 = vld [vmem:[#allocation2 + $0x10] sm:$0xff]
      %v3970 = vld [vmem:[#allocation2 + $0x18] sm:$0xff]
      %v3971 = vld [vmem:[#allocation2 + $0x30] sm:$0xff]
      %v3972 = vld [vmem:[#allocation2 + $0x38] sm:$0xff]
      %v3973 = vld [vmem:[#allocation2 + $0x40] sm:$0xff]
      %v3974 = vld [vmem:[#allocation2 + $0x48] sm:$0xff]
      %v3975 = vld [vmem:[#allocation2 + $0x60] sm:$0xff]
      %v3976 = vld [vmem:[#allocation2 + $0x68] sm:$0xff]
      %v3977 = vld [vmem:[#allocation2 + $0x70] sm:$0xff]
      %v3978 = vld [vmem:[#allocation2 + $0x78] sm:$0xff]
      %v3979 = vld [vmem:[#allocation2 + $0x90] sm:$0xff]
      %v3980 = vld [vmem:[#allocation2 + $0x98] sm:$0xff]
      %v3981 = vld [vmem:[#allocation2 + $0xa0] sm:$0xff]
      %v3982 = vld [vmem:[#allocation2 + $0xa8] sm:$0xff]
      %v3983 = vld [vmem:[#allocation2 + $0xc0] sm:$0xff]
      %v3984 = vld [vmem:[#allocation2 + $0xc8] sm:$0xff]
      %v3985 = vld [vmem:[#allocation2 + $0xd0] sm:$0xff]
      %v3986 = vld [vmem:[#allocation2 + $0xd8] sm:$0xff]
      %v3987 = vld [vmem:[#allocation2 + $0xf0] sm:$0xff]
      %v3988 = vld [vmem:[#allocation2 + $0xf8] sm:$0xff]
      %v3989 = vld [vmem:[#allocation2 + $0x100] sm:$0xff]
      %v3990 = vld [vmem:[#allocation2 + $0x108] sm:$0xff]
      %v3991 = vld [vmem:[#allocation2 + $0x120] sm:$0xff]
      %v3992 = vld [vmem:[#allocation2 + $0x128] sm:$0xff]
      %v3993 = vld [vmem:[#allocation2 + $0x130] sm:$0xff]
      %v3994 = vld [vmem:[#allocation2 + $0x138] sm:$0xff]
      %v3995 = vld [vmem:[#allocation2 + $0x150] sm:$0xff]
      %v3996 = vld [vmem:[#allocation2 + $0x158] sm:$0xff]
      %v3997 = vld [vmem:[#allocation2 + $0x160] sm:$0xff]
      %v3998 = vld [vmem:[#allocation2 + $0x168] sm:$0xff]
      %v3999 = vld [vmem:[#allocation2 + $0x180] sm:$0xff]
      %v4000 = vld [vmem:[#allocation2 + $0x188] sm:$0xff]
      %v4001 = vld [vmem:[#allocation2 + $0x190] sm:$0xff]
      %v4002 = vld [vmem:[#allocation2 + $0x198] sm:$0xff]
      %v4003 = vld [vmem:[#allocation2 + $0x1b0] sm:$0xff]
      %v4004 = vld [vmem:[#allocation2 + $0x1b8] sm:$0xff]
      %v4005 = vld [vmem:[#allocation2 + $0x1c0] sm:$0xff]
      %v4006 = vld [vmem:[#allocation2 + $0x1c8] sm:$0xff]
      %v4007 = vld [vmem:[#allocation2 + $0x1e0] sm:$0xff]
      %v4008 = vld [vmem:[#allocation2 + $0x1e8] sm:$0xff]
      %v4009 = vld [vmem:[#allocation2 + $0x1f0] sm:$0xff]
      %v4010 = vld [vmem:[#allocation2 + $0x1f8] sm:$0xff]
      %v4011 = vld [vmem:[#allocation2 + $0x210] sm:$0xff]
      %v4012 = vld [vmem:[#allocation2 + $0x218] sm:$0xff]
      %v4013 = vld [vmem:[#allocation2 + $0x220] sm:$0xff]
      %v4014 = vld [vmem:[#allocation2 + $0x228] sm:$0xff]
      %v4015 = vld [vmem:[#allocation2 + $0x240] sm:$0xff]
      %v4016 = vld [vmem:[#allocation2 + $0x248] sm:$0xff]
      %v4017 = vld [vmem:[#allocation2 + $0x250] sm:$0xff]
      %v4018 = vld [vmem:[#allocation2 + $0x258] sm:$0xff]
      %v4019 = vld [vmem:[#allocation2 + $0x270] sm:$0xff]
      %v4020 = vld [vmem:[#allocation2 + $0x278] sm:$0xff]
      %v4021 = vld [vmem:[#allocation2 + $0x280] sm:$0xff]
      %v4022 = vld [vmem:[#allocation2 + $0x288] sm:$0xff]
      %v4023 = vld [vmem:[#allocation2 + $0x2a0] sm:$0xff]
      %v4024 = vld [vmem:[#allocation2 + $0x2a8] sm:$0xff]
      %v4025 = vld [vmem:[#allocation2 + $0x2b0] sm:$0xff]
      %v4026 = vld [vmem:[#allocation2 + $0x2b8] sm:$0xff]
      %v4027 = vld [vmem:[#allocation2 + $0x2d0] sm:$0xff]
      %v4028 = vld [vmem:[#allocation2 + $0x2d8] sm:$0xff]
      %v4029 = vld [vmem:[#allocation2 + $0x2e0] sm:$0xff]
      %v4030 = vld [vmem:[#allocation2 + $0x2e8] sm:$0xff]
      %v4031 = vpack.c.bf16 %v3969, %v3967
      %v4032 = vpack.c.bf16 %v3970, %v3968
      %v4033 = vpack.c.bf16 %v3973, %v3971
      %v4034 = vpack.c.bf16 %v3974, %v3972
      %v4035 = vpack.c.bf16 %v3977, %v3975
      %v4036 = vpack.c.bf16 %v3978, %v3976
      %v4037 = vpack.c.bf16 %v3981, %v3979
      %v4038 = vpack.c.bf16 %v3982, %v3980
      %v4039 = vpack.c.bf16 %v3985, %v3983
      %v4040 = vpack.c.bf16 %v3986, %v3984
      %v4041 = vpack.c.bf16 %v3989, %v3987
      %v4042 = vpack.c.bf16 %v3990, %v3988
      %v4043 = vpack.c.bf16 %v3993, %v3991
      %v4044 = vpack.c.bf16 %v3994, %v3992
      %v4045 = vpack.c.bf16 %v3997, %v3995
      %v4046 = vpack.c.bf16 %v3998, %v3996
      %v4047 = vpack.c.bf16 %v4001, %v3999
      %v4048 = vpack.c.bf16 %v4002, %v4000
      %v4049 = vpack.c.bf16 %v4005, %v4003
      %v4050 = vpack.c.bf16 %v4006, %v4004
      %v4051 = vpack.c.bf16 %v4009, %v4007
      %v4052 = vpack.c.bf16 %v4010, %v4008
      %v4053 = vpack.c.bf16 %v4013, %v4011
      %v4054 = vpack.c.bf16 %v4014, %v4012
      %v4055 = vpack.c.bf16 %v4017, %v4015
      %v4056 = vpack.c.bf16 %v4018, %v4016
      %v4057 = vpack.c.bf16 %v4021, %v4019
      %v4058 = vpack.c.bf16 %v4022, %v4020
      %v4059 = vpack.c.bf16 %v4025, %v4023
      %v4060 = vpack.c.bf16 %v4026, %v4024
      %v4061 = vpack.c.bf16 %v4029, %v4027
      %v4062 = vpack.c.bf16 %v4030, %v4028
      %v4063 = vld [vmem:[%s2] sm:$0xf]
      %v4064 = vld [vmem:[%s2 + $0x4] sm:$0xf]
      %v4065 = vld [vmem:[%s2 + $0x8] sm:$0xf]
      %v4066 = vld [vmem:[%s2 + $0xc] sm:$0xf]
      %v4067 = vld [vmem:[%s2 + $0x10] sm:$0xf]
      %v4068 = vld [vmem:[%s2 + $0x14] sm:$0xf]
      %v4069 = vld [vmem:[%s2 + $0x18] sm:$0xf]
      %v4070 = vld [vmem:[%s2 + $0x1c] sm:$0xf]
      %v4071 = vld [vmem:[%s2 + $0x20] sm:$0xf]
      %v4072 = vld [vmem:[%s2 + $0x24] sm:$0xf]
      %v4073 = vld [vmem:[%s2 + $0x28] sm:$0xf]
      %v4074 = vld [vmem:[%s2 + $0x2c] sm:$0xf]
      %v4075 = vld [vmem:[%s2 + $0x30] sm:$0xf]
      %v4076 = vld [vmem:[%s2 + $0x34] sm:$0xf]
      %v4077 = vld [vmem:[%s2 + $0x38] sm:$0xf]
      %v4078 = vld [vmem:[%s2 + $0x3c] sm:$0xf]
      %v4079 = vld [vmem:[%s2 + $0x40] sm:$0xf]
      %v4080 = vld [vmem:[%s2 + $0x44] sm:$0xf]
      %v4081 = vld [vmem:[#allocation2] sm:$0xfe]
      %v4082 = vld [vmem:[#allocation2 + $0x8] sm:$0xfe]
      %v4083 = vld [vmem:[#allocation2 + $0x20] sm:$0x1]
      %v4084 = vld [vmem:[#allocation2 + $0x28] sm:$0x1]
      %v4085 = vld [vmem:[#allocation2 + $0x30] sm:$0xfe]
      %v4086 = vld [vmem:[#allocation2 + $0x38] sm:$0xfe]
      %v4087 = vld [vmem:[#allocation2 + $0x50] sm:$0x1]
      %v4088 = vld [vmem:[#allocation2 + $0x58] sm:$0x1]
      %v4089 = vld [vmem:[#allocation2 + $0x60] sm:$0xfe]
      %v4090 = vld [vmem:[#allocation2 + $0x68] sm:$0xfe]
      %v4091 = vld [vmem:[#allocation2 + $0x80] sm:$0x1]
      %v4092 = vld [vmem:[#allocation2 + $0x88] sm:$0x1]
      %v4093 = vld [vmem:[#allocation2 + $0x90] sm:$0xfe]
      %v4094 = vld [vmem:[#allocation2 + $0x98] sm:$0xfe]
      %v4095 = vld [vmem:[#allocation2 + $0xb0] sm:$0x1]
      %v4096 = vld [vmem:[#allocation2 + $0xb8] sm:$0x1]
      %v4097 = vld [vmem:[#allocation2 + $0xc0] sm:$0xfe]
      %v4098 = vld [vmem:[#allocation2 + $0xc8] sm:$0xfe]
      %v4099 = vld [vmem:[#allocation2 + $0xe0] sm:$0x1]
      %v4100 = vld [vmem:[#allocation2 + $0xe8] sm:$0x1]
      %v4101 = vld [vmem:[#allocation2 + $0xf0] sm:$0xfe]
      %v4102 = vld [vmem:[#allocation2 + $0xf8] sm:$0xfe]
      %v4103 = vld [vmem:[#allocation2 + $0x110] sm:$0x1]
      %v4104 = vld [vmem:[#allocation2 + $0x118] sm:$0x1]
      %v4105 = vld [vmem:[#allocation2 + $0x120] sm:$0xfe]
      %v4106 = vld [vmem:[#allocation2 + $0x128] sm:$0xfe]
      %v4107 = vld [vmem:[#allocation2 + $0x140] sm:$0x1]
      %v4108 = vld [vmem:[#allocation2 + $0x148] sm:$0x1]
      %v4109 = vld [vmem:[#allocation2 + $0x150] sm:$0xfe]
      %v4110 = vld [vmem:[#allocation2 + $0x158] sm:$0xfe]
      %v4111 = vld [vmem:[#allocation2 + $0x170] sm:$0x1]
      %v4112 = vld [vmem:[#allocation2 + $0x178] sm:$0x1]
      %v4113 = vld [vmem:[#allocation2 + $0x180] sm:$0xfe]
      %v4114 = vld [vmem:[#allocation2 + $0x188] sm:$0xfe]
      %v4115 = vld [vmem:[#allocation2 + $0x1a0] sm:$0x1]
      %v4116 = vld [vmem:[#allocation2 + $0x1a8] sm:$0x1]
      %v4117 = vld [vmem:[#allocation2 + $0x1b0] sm:$0xfe]
      %v4118 = vld [vmem:[#allocation2 + $0x1b8] sm:$0xfe]
      %v4119 = vld [vmem:[#allocation2 + $0x1d0] sm:$0x1]
      %v4120 = vld [vmem:[#allocation2 + $0x1d8] sm:$0x1]
      %v4121 = vld [vmem:[#allocation2 + $0x1e0] sm:$0xfe]
      %v4122 = vld [vmem:[#allocation2 + $0x1e8] sm:$0xfe]
      %v4123 = vld [vmem:[#allocation2 + $0x200] sm:$0x1]
      %v4124 = vld [vmem:[#allocation2 + $0x208] sm:$0x1]
      %v4125 = vld [vmem:[#allocation2 + $0x210] sm:$0xfe]
      %v4126 = vld [vmem:[#allocation2 + $0x218] sm:$0xfe]
      %v4127 = vld [vmem:[#allocation2 + $0x230] sm:$0x1]
      %v4128 = vld [vmem:[#allocation2 + $0x238] sm:$0x1]
      %v4129 = vld [vmem:[#allocation2 + $0x240] sm:$0xfe]
      %v4130 = vld [vmem:[#allocation2 + $0x248] sm:$0xfe]
      %v4131 = vld [vmem:[#allocation2 + $0x260] sm:$0x1]
      %v4132 = vld [vmem:[#allocation2 + $0x268] sm:$0x1]
      %v4133 = vld [vmem:[#allocation2 + $0x270] sm:$0xfe]
      %v4134 = vld [vmem:[#allocation2 + $0x278] sm:$0xfe]
      %v4135 = vld [vmem:[#allocation2 + $0x290] sm:$0x1]
      %v4136 = vld [vmem:[#allocation2 + $0x298] sm:$0x1]
      %v4137 = vld [vmem:[#allocation2 + $0x2a0] sm:$0xfe]
      %v4138 = vld [vmem:[#allocation2 + $0x2a8] sm:$0xfe]
      %v4139 = vld [vmem:[#allocation2 + $0x2c0] sm:$0x1]
      %v4140 = vld [vmem:[#allocation2 + $0x2c8] sm:$0x1]
      %v4141 = vld [vmem:[#allocation2 + $0x2d0] sm:$0xfe]
      %v4142 = vld [vmem:[#allocation2 + $0x2d8] sm:$0xfe]
      %v4143 = vld [vmem:[#allocation2 + $0x2f0] sm:$0x1]
      %v4144 = vld [vmem:[#allocation2 + $0x2f8] sm:$0x1]
      %vm4241 = vcmask 1046528
      %v4242 = vrot.slane %v4081, 1
      %v4243 = vrot.slane %v3969, 1
      %v4244 = vsel %vm4241, %v4242, %v4243
      %v4245 = vrot.slane %v4082, 1
      %v4246 = vrot.slane %v3970, 1
      %v4247 = vsel %vm4241, %v4245, %v4246
      %v4248 = vrot.slane %v4083, 1
      %v4249 = vsel %vm4241, %v4243, %v4248
      %v4250 = vrot.slane %v4084, 1
      %v4251 = vsel %vm4241, %v4246, %v4250
      %v4252 = vrot.slane %v4085, 1
      %v4253 = vrot.slane %v3973, 1
      %v4254 = vsel %vm4241, %v4252, %v4253
      %v4255 = vrot.slane %v4086, 1
      %v4256 = vrot.slane %v3974, 1
      %v4257 = vsel %vm4241, %v4255, %v4256
      %v4258 = vrot.slane %v4087, 1
      %v4259 = vsel %vm4241, %v4253, %v4258
      %v4260 = vrot.slane %v4088, 1
      %v4261 = vsel %vm4241, %v4256, %v4260
      %v4262 = vrot.slane %v4089, 1
      %v4263 = vrot.slane %v3977, 1
      %v4264 = vsel %vm4241, %v4262, %v4263
      %v4265 = vrot.slane %v4090, 1
      %v4266 = vrot.slane %v3978, 1
      %v4267 = vsel %vm4241, %v4265, %v4266
      %v4268 = vrot.slane %v4091, 1
      %v4269 = vsel %vm4241, %v4263, %v4268
      %v4270 = vrot.slane %v4092, 1
      %v4271 = vsel %vm4241, %v4266, %v4270
      %v4272 = vrot.slane %v4093, 1
      %v4273 = vrot.slane %v3981, 1
      %v4274 = vsel %vm4241, %v4272, %v4273
      %v4275 = vrot.slane %v4094, 1
      %v4276 = vrot.slane %v3982, 1
      %v4277 = vsel %vm4241, %v4275, %v4276
      %v4278 = vrot.slane %v4095, 1
      %v4279 = vsel %vm4241, %v4273, %v4278
      %v4280 = vrot.slane %v4096, 1
      %v4281 = vsel %vm4241, %v4276, %v4280
      %v4282 = vrot.slane %v4097, 1
      %v4283 = vrot.slane %v3985, 1
      %v4284 = vsel %vm4241, %v4282, %v4283
      %v4285 = vrot.slane %v4098, 1
      %v4286 = vrot.slane %v3986, 1
      %v4287 = vsel %vm4241, %v4285, %v4286
      %v4288 = vrot.slane %v4099, 1
      %v4289 = vsel %vm4241, %v4283, %v4288
      %v4290 = vrot.slane %v4100, 1
      %v4291 = vsel %vm4241, %v4286, %v4290
      %v4292 = vrot.slane %v4101, 1
      %v4293 = vrot.slane %v3989, 1
      %v4294 = vsel %vm4241, %v4292, %v4293
      %v4295 = vrot.slane %v4102, 1
      %v4296 = vrot.slane %v3990, 1
      %v4297 = vsel %vm4241, %v4295, %v4296
      %v4298 = vrot.slane %v4103, 1
      %v4299 = vsel %vm4241, %v4293, %v4298
      %v4300 = vrot.slane %v4104, 1
      %v4301 = vsel %vm4241, %v4296, %v4300
      %v4302 = vrot.slane %v4105, 1
      %v4303 = vrot.slane %v3993, 1
      %v4304 = vsel %vm4241, %v4302, %v4303
      %v4305 = vrot.slane %v4106, 1
      %v4306 = vrot.slane %v3994, 1
      %v4307 = vsel %vm4241, %v4305, %v4306
      %v4308 = vrot.slane %v4107, 1
      %v4309 = vsel %vm4241, %v4303, %v4308
      %v4310 = vrot.slane %v4108, 1
      %v4311 = vsel %vm4241, %v4306, %v4310
      %v4312 = vrot.slane %v4109, 1
      %v4313 = vrot.slane %v3997, 1
      %v4314 = vsel %vm4241, %v4312, %v4313
      %v4315 = vrot.slane %v4110, 1
      %v4316 = vrot.slane %v3998, 1
      %v4317 = vsel %vm4241, %v4315, %v4316
      %v4318 = vrot.slane %v4111, 1
      %v4319 = vsel %vm4241, %v4313, %v4318
      %v4320 = vrot.slane %v4112, 1
      %v4321 = vsel %vm4241, %v4316, %v4320
      %v4322 = vrot.slane %v4113, 1
      %v4323 = vrot.slane %v4001, 1
      %v4324 = vsel %vm4241, %v4322, %v4323
      %v4325 = vrot.slane %v4114, 1
      %v4326 = vrot.slane %v4002, 1
      %v4327 = vsel %vm4241, %v4325, %v4326
      %v4328 = vrot.slane %v4115, 1
      %v4329 = vsel %vm4241, %v4323, %v4328
      %v4330 = vrot.slane %v4116, 1
      %v4331 = vsel %vm4241, %v4326, %v4330
      %v4332 = vrot.slane %v4117, 1
      %v4333 = vrot.slane %v4005, 1
      %v4334 = vsel %vm4241, %v4332, %v4333
      %v4335 = vrot.slane %v4118, 1
      %v4336 = vrot.slane %v4006, 1
      %v4337 = vsel %vm4241, %v4335, %v4336
      %v4338 = vrot.slane %v4119, 1
      %v4339 = vsel %vm4241, %v4333, %v4338
      %v4340 = vrot.slane %v4120, 1
      %v4341 = vsel %vm4241, %v4336, %v4340
      %v4342 = vrot.slane %v4121, 1
      %v4343 = vrot.slane %v4009, 1
      %v4344 = vsel %vm4241, %v4342, %v4343
      %v4345 = vrot.slane %v4122, 1
      %v4346 = vrot.slane %v4010, 1
      %v4347 = vsel %vm4241, %v4345, %v4346
      %v4348 = vrot.slane %v4123, 1
      %v4349 = vsel %vm4241, %v4343, %v4348
      %v4350 = vrot.slane %v4124, 1
      %v4351 = vsel %vm4241, %v4346, %v4350
      %v4352 = vrot.slane %v4125, 1
      %v4353 = vrot.slane %v4013, 1
      %v4354 = vsel %vm4241, %v4352, %v4353
      %v4355 = vrot.slane %v4126, 1
      %v4356 = vrot.slane %v4014, 1
      %v4357 = vsel %vm4241, %v4355, %v4356
      %v4358 = vrot.slane %v4127, 1
      %v4359 = vsel %vm4241, %v4353, %v4358
      %v4360 = vrot.slane %v4128, 1
      %v4361 = vsel %vm4241, %v4356, %v4360
      %v4362 = vrot.slane %v4129, 1
      %v4363 = vrot.slane %v4017, 1
      %v4364 = vsel %vm4241, %v4362, %v4363
      %v4365 = vrot.slane %v4130, 1
      %v4366 = vrot.slane %v4018, 1
      %v4367 = vsel %vm4241, %v4365, %v4366
      %v4368 = vrot.slane %v4131, 1
      %v4369 = vsel %vm4241, %v4363, %v4368
      %v4370 = vrot.slane %v4132, 1
      %v4371 = vsel %vm4241, %v4366, %v4370
      %v4372 = vrot.slane %v4133, 1
      %v4373 = vrot.slane %v4021, 1
      %v4374 = vsel %vm4241, %v4372, %v4373
      %v4375 = vrot.slane %v4134, 1
      %v4376 = vrot.slane %v4022, 1
      %v4377 = vsel %vm4241, %v4375, %v4376
      %v4378 = vrot.slane %v4135, 1
      %v4379 = vsel %vm4241, %v4373, %v4378
      %v4380 = vrot.slane %v4136, 1
      %v4381 = vsel %vm4241, %v4376, %v4380
      %v4382 = vrot.slane %v4137, 1
      %v4383 = vrot.slane %v4025, 1
      %v4384 = vsel %vm4241, %v4382, %v4383
      %v4385 = vrot.slane %v4138, 1
      %v4386 = vrot.slane %v4026, 1
      %v4387 = vsel %vm4241, %v4385, %v4386
      %v4388 = vrot.slane %v4139, 1
      %v4389 = vsel %vm4241, %v4383, %v4388
      %v4390 = vrot.slane %v4140, 1
      %v4391 = vsel %vm4241, %v4386, %v4390
      %v4392 = vrot.slane %v4141, 1
      %v4393 = vrot.slane %v4029, 1
      %v4394 = vsel %vm4241, %v4392, %v4393
      %v4395 = vrot.slane %v4142, 1
      %v4396 = vrot.slane %v4030, 1
      %v4397 = vsel %vm4241, %v4395, %v4396
      %v4398 = vrot.slane %v4143, 1
      %v4399 = vsel %vm4241, %v4393, %v4398
      %v4400 = vrot.slane %v4144, 1
      %v4401 = vsel %vm4241, %v4396, %v4400
      %v4466 = vpack.c.bf16 %v4249, %v4244
      %v4467 = vpack.c.bf16 %v4251, %v4247
      %v4468 = vpack.c.bf16 %v4259, %v4254
      %v4469 = vpack.c.bf16 %v4261, %v4257
      %v4470 = vpack.c.bf16 %v4269, %v4264
      %v4471 = vpack.c.bf16 %v4271, %v4267
      %v4472 = vpack.c.bf16 %v4279, %v4274
      %v4473 = vpack.c.bf16 %v4281, %v4277
      %v4474 = vpack.c.bf16 %v4289, %v4284
      %v4475 = vpack.c.bf16 %v4291, %v4287
      %v4476 = vpack.c.bf16 %v4299, %v4294
      %v4477 = vpack.c.bf16 %v4301, %v4297
      %v4478 = vpack.c.bf16 %v4309, %v4304
      %v4479 = vpack.c.bf16 %v4311, %v4307
      %v4480 = vpack.c.bf16 %v4319, %v4314
      %v4481 = vpack.c.bf16 %v4321, %v4317
      %v4482 = vpack.c.bf16 %v4329, %v4324
      %v4483 = vpack.c.bf16 %v4331, %v4327
      %v4484 = vpack.c.bf16 %v4339, %v4334
      %v4485 = vpack.c.bf16 %v4341, %v4337
      %v4486 = vpack.c.bf16 %v4349, %v4344
      %v4487 = vpack.c.bf16 %v4351, %v4347
      %v4488 = vpack.c.bf16 %v4359, %v4354
      %v4489 = vpack.c.bf16 %v4361, %v4357
      %v4490 = vpack.c.bf16 %v4369, %v4364
      %v4491 = vpack.c.bf16 %v4371, %v4367
      %v4492 = vpack.c.bf16 %v4379, %v4374
      %v4493 = vpack.c.bf16 %v4381, %v4377
      %v4494 = vpack.c.bf16 %v4389, %v4384
      %v4495 = vpack.c.bf16 %v4391, %v4387
      %v4496 = vpack.c.bf16 %v4399, %v4394
      %v4497 = vpack.c.bf16 %v4401, %v4397
      %s4498 = scalar_lea.vmem %s2, 72
      %v4499 = vld [vmem:[%s4498] sm:$0xf]
      %v4500 = vld [vmem:[%s4498 + $0x4] sm:$0xf]
      %v4501 = vld [vmem:[%s4498 + $0x8] sm:$0xf]
      %v4502 = vld [vmem:[%s4498 + $0xc] sm:$0xf]
      %v4503 = vld [vmem:[%s4498 + $0x10] sm:$0xf]
      %v4504 = vld [vmem:[%s4498 + $0x14] sm:$0xf]
      %v4505 = vld [vmem:[%s4498 + $0x18] sm:$0xf]
      %v4506 = vld [vmem:[%s4498 + $0x1c] sm:$0xf]
      %v4507 = vld [vmem:[%s4498 + $0x20] sm:$0xf]
      %v4508 = vld [vmem:[%s4498 + $0x24] sm:$0xf]
      %v4509 = vld [vmem:[%s4498 + $0x28] sm:$0xf]
      %v4510 = vld [vmem:[%s4498 + $0x2c] sm:$0xf]
      %v4511 = vld [vmem:[%s4498 + $0x30] sm:$0xf]
      %v4512 = vld [vmem:[%s4498 + $0x34] sm:$0xf]
      %v4513 = vld [vmem:[%s4498 + $0x38] sm:$0xf]
      %v4514 = vld [vmem:[%s4498 + $0x3c] sm:$0xf]
      %v4515 = vld [vmem:[%s4498 + $0x40] sm:$0xf]
      %v4516 = vld [vmem:[%s4498 + $0x44] sm:$0xf]
      %v4535 = vunpack.c.l.b16 %v4499
      %v4536 = vunpack.c.l.b16 %v4500
      %v4537 = vunpack.c.l.b16 %v4501
      %v4538 = vunpack.c.l.b16 %v4502
      %v4539 = vunpack.c.l.b16 %v4503
      %v4540 = vunpack.c.l.b16 %v4504
      %v4541 = vunpack.c.l.b16 %v4505
      %v4542 = vunpack.c.l.b16 %v4506
      %v4543 = vunpack.c.l.b16 %v4507
      %v4544 = vunpack.c.l.b16 %v4508
      %v4545 = vunpack.c.l.b16 %v4509
      %v4546 = vunpack.c.l.b16 %v4510
      %v4547 = vunpack.c.l.b16 %v4511
      %v4548 = vunpack.c.l.b16 %v4512
      %v4549 = vunpack.c.l.b16 %v4513
      %v4550 = vunpack.c.l.b16 %v4514
      %v4551 = vunpack.c.l.b16 %v4515
      %v4552 = vunpack.c.l.b16 %v4516
      %v4553 = vpack.c.b16 %v4536, %v4535
      %v4554 = vpack.c.b16 %v4538, %v4537
      %v4555 = vpack.c.b16 %v4540, %v4539
      %v4556 = vpack.c.b16 %v4542, %v4541
      %v4557 = vpack.c.b16 %v4544, %v4543
      %v4558 = vpack.c.b16 %v4546, %v4545
      %v4559 = vpack.c.b16 %v4548, %v4547
      %v4560 = vpack.c.b16 %v4550, %v4549
      %v4561 = vpack.c.b16 %v4552, %v4551
      %v4572 = vsel %vm3626, %v4467, 0
      %v4575 = vsel %vm3626, %v4469, 0
      %v4578 = vsel %vm3626, %v4471, 0
      %v4581 = vsel %vm3626, %v4473, 0
      %v4584 = vsel %vm3626, %v4475, 0
      %v4587 = vsel %vm3626, %v4477, 0
      %v4590 = vsel %vm3626, %v4479, 0
      %v4593 = vsel %vm3626, %v4481, 0
      %v4596 = vsel %vm3626, %v4483, 0
      %v4599 = vsel %vm3626, %v4485, 0
      %v4602 = vsel %vm3626, %v4487, 0
      %v4605 = vsel %vm3626, %v4489, 0
      %v4608 = vsel %vm3626, %v4491, 0
      %v4611 = vsel %vm3626, %v4493, 0
      %v4614 = vsel %vm3626, %v4495, 0
      %v4617 = vsel %vm3626, %v4497, 0
      %4619 = vmatprep.subr.bf16.mxu0 0
      %4620 = vmatpush1.bf16.msra.mxu0 %v4553
      %4621 = vmatprep.subr.bf16.mxu0 0
      %4622 = vmatpush1.bf16.msra.mxu0 %v4554
      %4623 = vmatprep.subr.bf16.mxu0 0
      %4624 = vmatpush1.bf16.msra.mxu0 %v4555
      %4625 = vmatprep.subr.bf16.mxu0 0
      %4626 = vmatpush1.bf16.msra.mxu0 %v4556
      %4627 = vmatprep.subr.bf16.mxu0 0
      %4628 = vmatpush1.bf16.msra.mxu0 %v4557
      %4629 = vmatprep.subr.bf16.mxu0 0
      %4630 = vmatpush1.bf16.msra.mxu0 %v4558
      %4631 = vmatprep.subr.bf16.mxu0 0
      %4632 = vmatpush1.bf16.msra.mxu0 %v4559
      %4633 = vmatprep.subr.bf16.mxu0 0
      %4634 = vmatpush1.bf16.msra.mxu0 %v4560
      %4635 = vmatprep.subr.bf16.mxu0 0
      %4636 = vmatpush1.bf16.msra.mxu0 %v4561
      %4637 = vmatprep.subr.bf16.mxu0 0
      %4638 = vmatpush1.bf16.msra.mxu0 0
      %4639 = vmatprep.subr.bf16.mxu0 0
      %4640 = vmatpush1.bf16.msra.mxu0 0
      %4641 = vmatprep.subr.bf16.mxu0 0
      %4642 = vmatpush1.bf16.msra.mxu0 0
      %4643 = vmatprep.subr.bf16.mxu0 0
      %4644 = vmatpush1.bf16.msra.mxu0 0
      %4645 = vmatprep.subr.bf16.mxu0 0
      %4646 = vmatpush1.bf16.msra.mxu0 0
      %4647 = vmatprep.subr.bf16.mxu0 0
      %4648 = vmatpush1.bf16.msra.mxu0 0
      %4649 = vmatprep.subr.bf16.mxu0 0
      %4650 = vmatpush1.bf16.msra.mxu0 0
      %4651 = vmatprep.mubr.bf16.mxu0 %v4572
      %4652 = vmatmul.mubr.bf16.gmra.mrb[0].mxu0 %v4466
      %v4653 = vpop.f32.mrb[0].mxu0
      %v4654 = vadd.f32 0.0, %v4653
      %v4655 = vpop.f32.mrb[0].mxu0
      %v4656 = vpop.f32.mrb[0].mxu0
      %v4657 = vadd.f32 0.0, %v4656
      %v4658 = vpop.f32.mrb[0].mxu0
      %4659 = vmatprep.mubr.bf16.mxu0 %v4575
      %4660 = vmatmul.mubr.bf16.gmra.mrb[0].mxu0 %v4468
      %v4661 = vpop.f32.mrb[0].mxu0
      %v4662 = vadd.f32 0.0, %v4661
      %v4663 = vpop.f32.mrb[0].mxu0
      %v4664 = vpop.f32.mrb[0].mxu0
      %v4665 = vadd.f32 0.0, %v4664
      %v4666 = vpop.f32.mrb[0].mxu0
      %4667 = vmatprep.mubr.bf16.mxu0 %v4578
      %4668 = vmatmul.mubr.bf16.gmra.mrb[0].mxu0 %v4470
      %v4669 = vpop.f32.mrb[0].mxu0
      %v4670 = vadd.f32 0.0, %v4669
      %v4671 = vpop.f32.mrb[0].mxu0
      %v4672 = vpop.f32.mrb[0].mxu0
      %v4673 = vadd.f32 0.0, %v4672
      %v4674 = vpop.f32.mrb[0].mxu0
      %4675 = vmatprep.mubr.bf16.mxu0 %v4581
      %4676 = vmatmul.mubr.bf16.gmra.mrb[0].mxu0 %v4472
      %v4677 = vpop.f32.mrb[0].mxu0
      %v4678 = vadd.f32 0.0, %v4677
      %v4679 = vpop.f32.mrb[0].mxu0
      %v4680 = vpop.f32.mrb[0].mxu0
      %v4681 = vadd.f32 0.0, %v4680
      %v4682 = vpop.f32.mrb[0].mxu0
      %4683 = vmatprep.mubr.bf16.mxu0 %v4584
      %4684 = vmatmul.mubr.bf16.gmra.mrb[0].mxu0 %v4474
      %v4685 = vpop.f32.mrb[0].mxu0
      %v4686 = vadd.f32 0.0, %v4685
      %v4687 = vpop.f32.mrb[0].mxu0
      %v4688 = vpop.f32.mrb[0].mxu0
      %v4689 = vadd.f32 0.0, %v4688
      %v4690 = vpop.f32.mrb[0].mxu0
      %4691 = vmatprep.mubr.bf16.mxu0 %v4587
      %4692 = vmatmul.mubr.bf16.gmra.mrb[0].mxu0 %v4476
      %v4693 = vpop.f32.mrb[0].mxu0
      %v4694 = vadd.f32 0.0, %v4693
      %v4695 = vpop.f32.mrb[0].mxu0
      %v4696 = vpop.f32.mrb[0].mxu0
      %v4697 = vadd.f32 0.0, %v4696
      %v4698 = vpop.f32.mrb[0].mxu0
      %4699 = vmatprep.mubr.bf16.mxu0 %v4590
      %4700 = vmatmul.mubr.bf16.gmra.mrb[0].mxu0 %v4478
      %v4701 = vpop.f32.mrb[0].mxu0
      %v4702 = vadd.f32 0.0, %v4701
      %v4703 = vpop.f32.mrb[0].mxu0
      %v4704 = vpop.f32.mrb[0].mxu0
      %v4705 = vadd.f32 0.0, %v4704
      %v4706 = vpop.f32.mrb[0].mxu0
      %4707 = vmatprep.mubr.bf16.mxu0 %v4593
      %4708 = vmatmul.mubr.bf16.gmra.mrb[0].mxu0 %v4480
      %v4709 = vpop.f32.mrb[0].mxu0
      %v4710 = vadd.f32 0.0, %v4709
      %v4711 = vpop.f32.mrb[0].mxu0
      %v4712 = vpop.f32.mrb[0].mxu0
      %v4713 = vadd.f32 0.0, %v4712
      %v4714 = vpop.f32.mrb[0].mxu0
      %4715 = vmatprep.mubr.bf16.mxu0 %v4596
      %4716 = vmatmul.mubr.bf16.gmra.mrb[0].mxu0 %v4482
      %v4717 = vpop.f32.mrb[0].mxu0
      %v4718 = vadd.f32 0.0, %v4717
      %v4719 = vpop.f32.mrb[0].mxu0
      %v4720 = vpop.f32.mrb[0].mxu0
      %v4721 = vadd.f32 0.0, %v4720
      %v4722 = vpop.f32.mrb[0].mxu0
      %4723 = vmatprep.mubr.bf16.mxu0 %v4599
      %4724 = vmatmul.mubr.bf16.gmra.mrb[0].mxu0 %v4484
      %v4725 = vpop.f32.mrb[0].mxu0
      %v4726 = vadd.f32 0.0, %v4725
      %v4727 = vpop.f32.mrb[0].mxu0
      %v4728 = vpop.f32.mrb[0].mxu0
      %v4729 = vadd.f32 0.0, %v4728
      %v4730 = vpop.f32.mrb[0].mxu0
      %4731 = vmatprep.mubr.bf16.mxu0 %v4602
      %4732 = vmatmul.mubr.bf16.gmra.mrb[0].mxu0 %v4486
      %v4733 = vpop.f32.mrb[0].mxu0
      %v4734 = vadd.f32 0.0, %v4733
      %v4735 = vpop.f32.mrb[0].mxu0
      %v4736 = vpop.f32.mrb[0].mxu0
      %v4737 = vadd.f32 0.0, %v4736
      %v4738 = vpop.f32.mrb[0].mxu0
      %4739 = vmatprep.mubr.bf16.mxu0 %v4605
      %4740 = vmatmul.mubr.bf16.gmra.mrb[0].mxu0 %v4488
      %v4741 = vpop.f32.mrb[0].mxu0
      %v4742 = vadd.f32 0.0, %v4741
      %v4743 = vpop.f32.mrb[0].mxu0
      %v4744 = vpop.f32.mrb[0].mxu0
      %v4745 = vadd.f32 0.0, %v4744
      %v4746 = vpop.f32.mrb[0].mxu0
      %4747 = vmatprep.mubr.bf16.mxu0 %v4608
      %4748 = vmatmul.mubr.bf16.gmra.mrb[0].mxu0 %v4490
      %v4749 = vpop.f32.mrb[0].mxu0
      %v4750 = vadd.f32 0.0, %v4749
      %v4751 = vpop.f32.mrb[0].mxu0
      %v4752 = vpop.f32.mrb[0].mxu0
      %v4753 = vadd.f32 0.0, %v4752
      %v4754 = vpop.f32.mrb[0].mxu0
      %4755 = vmatprep.mubr.bf16.mxu0 %v4611
      %4756 = vmatmul.mubr.bf16.gmra.mrb[0].mxu0 %v4492
      %v4757 = vpop.f32.mrb[0].mxu0
      %v4758 = vadd.f32 0.0, %v4757
      %v4759 = vpop.f32.mrb[0].mxu0
      %v4760 = vpop.f32.mrb[0].mxu0
      %v4761 = vadd.f32 0.0, %v4760
      %v4762 = vpop.f32.mrb[0].mxu0
      %4763 = vmatprep.mubr.bf16.mxu0 %v4614
      %4764 = vmatmul.mubr.bf16.gmra.mrb[0].mxu0 %v4494
      %v4765 = vpop.f32.mrb[0].mxu0
      %v4766 = vadd.f32 0.0, %v4765
      %v4767 = vpop.f32.mrb[0].mxu0
      %v4768 = vpop.f32.mrb[0].mxu0
      %v4769 = vadd.f32 0.0, %v4768
      %v4770 = vpop.f32.mrb[0].mxu0
      %4771 = vmatprep.mubr.bf16.mxu0 %v4617
      %4772 = vmatmul.mubr.bf16.gmra.mrb[0].mxu0 %v4496
      %v4773 = vpop.f32.mrb[0].mxu0
      %v4774 = vadd.f32 0.0, %v4773
      %v4775 = vpop.f32.mrb[0].mxu0
      %v4776 = vpop.f32.mrb[0].mxu0
      %v4777 = vadd.f32 0.0, %v4776
      %v4778 = vpop.f32.mrb[0].mxu0
      %4779 = vdwg.mxu0
      %v4798 = vunpack.c.l.b16 %v4063
      %v4799 = vunpack.c.l.b16 %v4064
      %v4800 = vunpack.c.l.b16 %v4065
      %v4801 = vunpack.c.l.b16 %v4066
      %v4802 = vunpack.c.l.b16 %v4067
      %v4803 = vunpack.c.l.b16 %v4068
      %v4804 = vunpack.c.l.b16 %v4069
      %v4805 = vunpack.c.l.b16 %v4070
      %v4806 = vunpack.c.l.b16 %v4071
      %v4807 = vunpack.c.l.b16 %v4072
      %v4808 = vunpack.c.l.b16 %v4073
      %v4809 = vunpack.c.l.b16 %v4074
      %v4810 = vunpack.c.l.b16 %v4075
      %v4811 = vunpack.c.l.b16 %v4076
      %v4812 = vunpack.c.l.b16 %v4077
      %v4813 = vunpack.c.l.b16 %v4078
      %v4814 = vunpack.c.l.b16 %v4079
      %v4815 = vunpack.c.l.b16 %v4080
      %v4816 = vpack.c.b16 %v4799, %v4798
      %v4817 = vpack.c.b16 %v4801, %v4800
      %v4818 = vpack.c.b16 %v4803, %v4802
      %v4819 = vpack.c.b16 %v4805, %v4804
      %v4820 = vpack.c.b16 %v4807, %v4806
      %v4821 = vpack.c.b16 %v4809, %v4808
      %v4822 = vpack.c.b16 %v4811, %v4810
      %v4823 = vpack.c.b16 %v4813, %v4812
      %v4824 = vpack.c.b16 %v4815, %v4814
      %v4835 = vsel %vm3626, %v4032, 0
      %v4838 = vsel %vm3626, %v4034, 0
      %v4841 = vsel %vm3626, %v4036, 0
      %v4844 = vsel %vm3626, %v4038, 0
      %v4847 = vsel %vm3626, %v4040, 0
      %v4850 = vsel %vm3626, %v4042, 0
      %v4853 = vsel %vm3626, %v4044, 0
      %v4856 = vsel %vm3626, %v4046, 0
      %v4859 = vsel %vm3626, %v4048, 0
      %v4862 = vsel %vm3626, %v4050, 0
      %v4865 = vsel %vm3626, %v4052, 0
      %v4868 = vsel %vm3626, %v4054, 0
      %v4871 = vsel %vm3626, %v4056, 0
      %v4874 = vsel %vm3626, %v4058, 0
      %v4877 = vsel %vm3626, %v4060, 0
      %v4880 = vsel %vm3626, %v4062, 0
      %4882 = vmatprep.subr.bf16.mxu0 0
      %4883 = vmatpush1.bf16.msra.mxu0 %v4816
      %4884 = vmatprep.subr.bf16.mxu0 0
      %4885 = vmatpush1.bf16.msra.mxu0 %v4817
      %4886 = vmatprep.subr.bf16.mxu0 0
      %4887 = vmatpush1.bf16.msra.mxu0 %v4818
      %4888 = vmatprep.subr.bf16.mxu0 0
      %4889 = vmatpush1.bf16.msra.mxu0 %v4819
      %4890 = vmatprep.subr.bf16.mxu0 0
      %4891 = vmatpush1.bf16.msra.mxu0 %v4820
      %4892 = vmatprep.subr.bf16.mxu0 0
      %4893 = vmatpush1.bf16.msra.mxu0 %v4821
      %4894 = vmatprep.subr.bf16.mxu0 0
      %4895 = vmatpush1.bf16.msra.mxu0 %v4822
      %4896 = vmatprep.subr.bf16.mxu0 0
      %4897 = vmatpush1.bf16.msra.mxu0 %v4823
      %4898 = vmatprep.subr.bf16.mxu0 0
      %4899 = vmatpush1.bf16.msra.mxu0 %v4824
      %4900 = vmatprep.subr.bf16.mxu0 0
      %4901 = vmatpush1.bf16.msra.mxu0 0
      %4902 = vmatprep.subr.bf16.mxu0 0
      %4903 = vmatpush1.bf16.msra.mxu0 0
      %4904 = vmatprep.subr.bf16.mxu0 0
      %4905 = vmatpush1.bf16.msra.mxu0 0
      %4906 = vmatprep.subr.bf16.mxu0 0
      %4907 = vmatpush1.bf16.msra.mxu0 0
      %4908 = vmatprep.subr.bf16.mxu0 0
      %4909 = vmatpush1.bf16.msra.mxu0 0
      %4910 = vmatprep.subr.bf16.mxu0 0
      %4911 = vmatpush1.bf16.msra.mxu0 0
      %4912 = vmatprep.subr.bf16.mxu0 0
      %4913 = vmatpush1.bf16.msra.mxu0 0
      %4914 = vmatprep.mubr.bf16.mxu0 %v4835
      %4915 = vmatmul.mubr.bf16.gmra.mrb[0].mxu0 %v4031
      %v4916 = vpop.f32.mrb[0].mxu0
      %v4917 = vadd.f32 %v4654, %v4916
      %v4918 = vpop.f32.mrb[0].mxu0
      %v4919 = vpop.f32.mrb[0].mxu0
      %v4920 = vadd.f32 %v4657, %v4919
      %v4921 = vpop.f32.mrb[0].mxu0
      %4922 = vmatprep.mubr.bf16.mxu0 %v4838
      %4923 = vmatmul.mubr.bf16.gmra.mrb[0].mxu0 %v4033
      %v4924 = vpop.f32.mrb[0].mxu0
      %v4925 = vadd.f32 %v4662, %v4924
      %v4926 = vpop.f32.mrb[0].mxu0
      %v4927 = vpop.f32.mrb[0].mxu0
      %v4928 = vadd.f32 %v4665, %v4927
      %v4929 = vpop.f32.mrb[0].mxu0
      %4930 = vmatprep.mubr.bf16.mxu0 %v4841
      %4931 = vmatmul.mubr.bf16.gmra.mrb[0].mxu0 %v4035
      %v4932 = vpop.f32.mrb[0].mxu0
      %v4933 = vadd.f32 %v4670, %v4932
      %v4934 = vpop.f32.mrb[0].mxu0
      %v4935 = vpop.f32.mrb[0].mxu0
      %v4936 = vadd.f32 %v4673, %v4935
      %v4937 = vpop.f32.mrb[0].mxu0
      %4938 = vmatprep.mubr.bf16.mxu0 %v4844
      %4939 = vmatmul.mubr.bf16.gmra.mrb[0].mxu0 %v4037
      %v4940 = vpop.f32.mrb[0].mxu0
      %v4941 = vadd.f32 %v4678, %v4940
      %v4942 = vpop.f32.mrb[0].mxu0
      %v4943 = vpop.f32.mrb[0].mxu0
      %v4944 = vadd.f32 %v4681, %v4943
      %v4945 = vpop.f32.mrb[0].mxu0
      %4946 = vmatprep.mubr.bf16.mxu0 %v4847
      %4947 = vmatmul.mubr.bf16.gmra.mrb[0].mxu0 %v4039
      %v4948 = vpop.f32.mrb[0].mxu0
      %v4949 = vadd.f32 %v4686, %v4948
      %v4950 = vpop.f32.mrb[0].mxu0
      %v4951 = vpop.f32.mrb[0].mxu0
      %v4952 = vadd.f32 %v4689, %v4951
      %v4953 = vpop.f32.mrb[0].mxu0
      %4954 = vmatprep.mubr.bf16.mxu0 %v4850
      %4955 = vmatmul.mubr.bf16.gmra.mrb[0].mxu0 %v4041
      %v4956 = vpop.f32.mrb[0].mxu0
      %v4957 = vadd.f32 %v4694, %v4956
      %v4958 = vpop.f32.mrb[0].mxu0
      %v4959 = vpop.f32.mrb[0].mxu0
      %v4960 = vadd.f32 %v4697, %v4959
      %v4961 = vpop.f32.mrb[0].mxu0
      %4962 = vmatprep.mubr.bf16.mxu0 %v4853
      %4963 = vmatmul.mubr.bf16.gmra.mrb[0].mxu0 %v4043
      %v4964 = vpop.f32.mrb[0].mxu0
      %v4965 = vadd.f32 %v4702, %v4964
      %v4966 = vpop.f32.mrb[0].mxu0
      %v4967 = vpop.f32.mrb[0].mxu0
      %v4968 = vadd.f32 %v4705, %v4967
      %v4969 = vpop.f32.mrb[0].mxu0
      %4970 = vmatprep.mubr.bf16.mxu0 %v4856
      %4971 = vmatmul.mubr.bf16.gmra.mrb[0].mxu0 %v4045
      %v4972 = vpop.f32.mrb[0].mxu0
      %v4973 = vadd.f32 %v4710, %v4972
      %v4974 = vpop.f32.mrb[0].mxu0
      %v4975 = vpop.f32.mrb[0].mxu0
      %v4976 = vadd.f32 %v4713, %v4975
      %v4977 = vpop.f32.mrb[0].mxu0
      %4978 = vmatprep.mubr.bf16.mxu0 %v4859
      %4979 = vmatmul.mubr.bf16.gmra.mrb[0].mxu0 %v4047
      %v4980 = vpop.f32.mrb[0].mxu0
      %v4981 = vadd.f32 %v4718, %v4980
      %v4982 = vpop.f32.mrb[0].mxu0
      %v4983 = vpop.f32.mrb[0].mxu0
      %v4984 = vadd.f32 %v4721, %v4983
      %v4985 = vpop.f32.mrb[0].mxu0
      %4986 = vmatprep.mubr.bf16.mxu0 %v4862
      %4987 = vmatmul.mubr.bf16.gmra.mrb[0].mxu0 %v4049
      %v4988 = vpop.f32.mrb[0].mxu0
      %v4989 = vadd.f32 %v4726, %v4988
      %v4990 = vpop.f32.mrb[0].mxu0
      %v4991 = vpop.f32.mrb[0].mxu0
      %v4992 = vadd.f32 %v4729, %v4991
      %v4993 = vpop.f32.mrb[0].mxu0
      %4994 = vmatprep.mubr.bf16.mxu0 %v4865
      %4995 = vmatmul.mubr.bf16.gmra.mrb[0].mxu0 %v4051
      %v4996 = vpop.f32.mrb[0].mxu0
      %v4997 = vadd.f32 %v4734, %v4996
      %v4998 = vpop.f32.mrb[0].mxu0
      %v4999 = vpop.f32.mrb[0].mxu0
      %v5000 = vadd.f32 %v4737, %v4999
      %v5001 = vpop.f32.mrb[0].mxu0
      %5002 = vmatprep.mubr.bf16.mxu0 %v4868
      %5003 = vmatmul.mubr.bf16.gmra.mrb[0].mxu0 %v4053
      %v5004 = vpop.f32.mrb[0].mxu0
      %v5005 = vadd.f32 %v4742, %v5004
      %v5006 = vpop.f32.mrb[0].mxu0
      %v5007 = vpop.f32.mrb[0].mxu0
      %v5008 = vadd.f32 %v4745, %v5007
      %v5009 = vpop.f32.mrb[0].mxu0
      %5010 = vmatprep.mubr.bf16.mxu0 %v4871
      %5011 = vmatmul.mubr.bf16.gmra.mrb[0].mxu0 %v4055
      %v5012 = vpop.f32.mrb[0].mxu0
      %v5013 = vadd.f32 %v4750, %v5012
      %v5014 = vpop.f32.mrb[0].mxu0
      %v5015 = vpop.f32.mrb[0].mxu0
      %v5016 = vadd.f32 %v4753, %v5015
      %v5017 = vpop.f32.mrb[0].mxu0
      %5018 = vmatprep.mubr.bf16.mxu0 %v4874
      %5019 = vmatmul.mubr.bf16.gmra.mrb[0].mxu0 %v4057
      %v5020 = vpop.f32.mrb[0].mxu0
      %v5021 = vadd.f32 %v4758, %v5020
      %v5022 = vpop.f32.mrb[0].mxu0
      %v5023 = vpop.f32.mrb[0].mxu0
      %v5024 = vadd.f32 %v4761, %v5023
      %v5025 = vpop.f32.mrb[0].mxu0
      %5026 = vmatprep.mubr.bf16.mxu0 %v4877
      %5027 = vmatmul.mubr.bf16.gmra.mrb[0].mxu0 %v4059
      %v5028 = vpop.f32.mrb[0].mxu0
      %v5029 = vadd.f32 %v4766, %v5028
      %v5030 = vpop.f32.mrb[0].mxu0
      %v5031 = vpop.f32.mrb[0].mxu0
      %v5032 = vadd.f32 %v4769, %v5031
      %v5033 = vpop.f32.mrb[0].mxu0
      %5034 = vmatprep.mubr.bf16.mxu0 %v4880
      %5035 = vmatmul.mubr.bf16.gmra.mrb[0].mxu0 %v4061
      %v5036 = vpop.f32.mrb[0].mxu0
      %v5037 = vadd.f32 %v4774, %v5036
      %v5038 = vpop.f32.mrb[0].mxu0
      %v5039 = vpop.f32.mrb[0].mxu0
      %v5040 = vadd.f32 %v4777, %v5039
      %v5041 = vpop.f32.mrb[0].mxu0
      %5042 = vdwg.mxu0
      %v5043 = vld [vmem:[#allocation2] sm:$0xfc]
      %v5044 = vld [vmem:[#allocation2 + $0x8] sm:$0xfc]
      %v5045 = vld [vmem:[#allocation2 + $0x20] sm:$0x3]
      %v5046 = vld [vmem:[#allocation2 + $0x28] sm:$0x3]
      %v5047 = vld [vmem:[#allocation2 + $0x30] sm:$0xfc]
      %v5048 = vld [vmem:[#allocation2 + $0x38] sm:$0xfc]
      %v5049 = vld [vmem:[#allocation2 + $0x50] sm:$0x3]
      %v5050 = vld [vmem:[#allocation2 + $0x58] sm:$0x3]
      %v5051 = vld [vmem:[#allocation2 + $0x60] sm:$0xfc]
      %v5052 = vld [vmem:[#allocation2 + $0x68] sm:$0xfc]
      %v5053 = vld [vmem:[#allocation2 + $0x80] sm:$0x3]
      %v5054 = vld [vmem:[#allocation2 + $0x88] sm:$0x3]
      %v5055 = vld [vmem:[#allocation2 + $0x90] sm:$0xfc]
      %v5056 = vld [vmem:[#allocation2 + $0x98] sm:$0xfc]
      %v5057 = vld [vmem:[#allocation2 + $0xb0] sm:$0x3]
      %v5058 = vld [vmem:[#allocation2 + $0xb8] sm:$0x3]
      %v5059 = vld [vmem:[#allocation2 + $0xc0] sm:$0xfc]
      %v5060 = vld [vmem:[#allocation2 + $0xc8] sm:$0xfc]
      %v5061 = vld [vmem:[#allocation2 + $0xe0] sm:$0x3]
      %v5062 = vld [vmem:[#allocation2 + $0xe8] sm:$0x3]
      %v5063 = vld [vmem:[#allocation2 + $0xf0] sm:$0xfc]
      %v5064 = vld [vmem:[#allocation2 + $0xf8] sm:$0xfc]
      %v5065 = vld [vmem:[#allocation2 + $0x110] sm:$0x3]
      %v5066 = vld [vmem:[#allocation2 + $0x118] sm:$0x3]
      %v5067 = vld [vmem:[#allocation2 + $0x120] sm:$0xfc]
      %v5068 = vld [vmem:[#allocation2 + $0x128] sm:$0xfc]
      %v5069 = vld [vmem:[#allocation2 + $0x140] sm:$0x3]
      %v5070 = vld [vmem:[#allocation2 + $0x148] sm:$0x3]
      %v5071 = vld [vmem:[#allocation2 + $0x150] sm:$0xfc]
      %v5072 = vld [vmem:[#allocation2 + $0x158] sm:$0xfc]
      %v5073 = vld [vmem:[#allocation2 + $0x170] sm:$0x3]
      %v5074 = vld [vmem:[#allocation2 + $0x178] sm:$0x3]
      %v5075 = vld [vmem:[#allocation2 + $0x180] sm:$0xfc]
      %v5076 = vld [vmem:[#allocation2 + $0x188] sm:$0xfc]
      %v5077 = vld [vmem:[#allocation2 + $0x1a0] sm:$0x3]
      %v5078 = vld [vmem:[#allocation2 + $0x1a8] sm:$0x3]
      %v5079 = vld [vmem:[#allocation2 + $0x1b0] sm:$0xfc]
      %v5080 = vld [vmem:[#allocation2 + $0x1b8] sm:$0xfc]
      %v5081 = vld [vmem:[#allocation2 + $0x1d0] sm:$0x3]
      %v5082 = vld [vmem:[#allocation2 + $0x1d8] sm:$0x3]
      %v5083 = vld [vmem:[#allocation2 + $0x1e0] sm:$0xfc]
      %v5084 = vld [vmem:[#allocation2 + $0x1e8] sm:$0xfc]
      %v5085 = vld [vmem:[#allocation2 + $0x200] sm:$0x3]
      %v5086 = vld [vmem:[#allocation2 + $0x208] sm:$0x3]
      %v5087 = vld [vmem:[#allocation2 + $0x210] sm:$0xfc]
      %v5088 = vld [vmem:[#allocation2 + $0x218] sm:$0xfc]
      %v5089 = vld [vmem:[#allocation2 + $0x230] sm:$0x3]
      %v5090 = vld [vmem:[#allocation2 + $0x238] sm:$0x3]
      %v5091 = vld [vmem:[#allocation2 + $0x240] sm:$0xfc]
      %v5092 = vld [vmem:[#allocation2 + $0x248] sm:$0xfc]
      %v5093 = vld [vmem:[#allocation2 + $0x260] sm:$0x3]
      %v5094 = vld [vmem:[#allocation2 + $0x268] sm:$0x3]
      %v5095 = vld [vmem:[#allocation2 + $0x270] sm:$0xfc]
      %v5096 = vld [vmem:[#allocation2 + $0x278] sm:$0xfc]
      %v5097 = vld [vmem:[#allocation2 + $0x290] sm:$0x3]
      %v5098 = vld [vmem:[#allocation2 + $0x298] sm:$0x3]
      %v5099 = vld [vmem:[#allocation2 + $0x2a0] sm:$0xfc]
      %v5100 = vld [vmem:[#allocation2 + $0x2a8] sm:$0xfc]
      %v5101 = vld [vmem:[#allocation2 + $0x2c0] sm:$0x3]
      %v5102 = vld [vmem:[#allocation2 + $0x2c8] sm:$0x3]
      %v5103 = vld [vmem:[#allocation2 + $0x2d0] sm:$0xfc]
      %v5104 = vld [vmem:[#allocation2 + $0x2d8] sm:$0xfc]
      %v5105 = vld [vmem:[#allocation2 + $0x2f0] sm:$0x3]
      %v5106 = vld [vmem:[#allocation2 + $0x2f8] sm:$0x3]
      %vm5171 = vcmask 1045504
      %v5172 = vrot.slane %v5043, 2
      %v5173 = vrot.slane %v3969, 2
      %v5174 = vsel %vm5171, %v5172, %v5173
      %v5175 = vrot.slane %v5044, 2
      %v5176 = vrot.slane %v3970, 2
      %v5177 = vsel %vm5171, %v5175, %v5176
      %v5178 = vrot.slane %v5045, 2
      %v5179 = vsel %vm5171, %v5173, %v5178
      %v5180 = vrot.slane %v5046, 2
      %v5181 = vsel %vm5171, %v5176, %v5180
      %v5182 = vrot.slane %v5047, 2
      %v5183 = vrot.slane %v3973, 2
      %v5184 = vsel %vm5171, %v5182, %v5183
      %v5185 = vrot.slane %v5048, 2
      %v5186 = vrot.slane %v3974, 2
      %v5187 = vsel %vm5171, %v5185, %v5186
      %v5188 = vrot.slane %v5049, 2
      %v5189 = vsel %vm5171, %v5183, %v5188
      %v5190 = vrot.slane %v5050, 2
      %v5191 = vsel %vm5171, %v5186, %v5190
      %v5192 = vrot.slane %v5051, 2
      %v5193 = vrot.slane %v3977, 2
      %v5194 = vsel %vm5171, %v5192, %v5193
      %v5195 = vrot.slane %v5052, 2
      %v5196 = vrot.slane %v3978, 2
      %v5197 = vsel %vm5171, %v5195, %v5196
      %v5198 = vrot.slane %v5053, 2
      %v5199 = vsel %vm5171, %v5193, %v5198
      %v5200 = vrot.slane %v5054, 2
      %v5201 = vsel %vm5171, %v5196, %v5200
      %v5202 = vrot.slane %v5055, 2
      %v5203 = vrot.slane %v3981, 2
      %v5204 = vsel %vm5171, %v5202, %v5203
      %v5205 = vrot.slane %v5056, 2
      %v5206 = vrot.slane %v3982, 2
      %v5207 = vsel %vm5171, %v5205, %v5206
      %v5208 = vrot.slane %v5057, 2
      %v5209 = vsel %vm5171, %v5203, %v5208
      %v5210 = vrot.slane %v5058, 2
      %v5211 = vsel %vm5171, %v5206, %v5210
      %v5212 = vrot.slane %v5059, 2
      %v5213 = vrot.slane %v3985, 2
      %v5214 = vsel %vm5171, %v5212, %v5213
      %v5215 = vrot.slane %v5060, 2
      %v5216 = vrot.slane %v3986, 2
      %v5217 = vsel %vm5171, %v5215, %v5216
      %v5218 = vrot.slane %v5061, 2
      %v5219 = vsel %vm5171, %v5213, %v5218
      %v5220 = vrot.slane %v5062, 2
      %v5221 = vsel %vm5171, %v5216, %v5220
      %v5222 = vrot.slane %v5063, 2
      %v5223 = vrot.slane %v3989, 2
      %v5224 = vsel %vm5171, %v5222, %v5223
      %v5225 = vrot.slane %v5064, 2
      %v5226 = vrot.slane %v3990, 2
      %v5227 = vsel %vm5171, %v5225, %v5226
      %v5228 = vrot.slane %v5065, 2
      %v5229 = vsel %vm5171, %v5223, %v5228
      %v5230 = vrot.slane %v5066, 2
      %v5231 = vsel %vm5171, %v5226, %v5230
      %v5232 = vrot.slane %v5067, 2
      %v5233 = vrot.slane %v3993, 2
      %v5234 = vsel %vm5171, %v5232, %v5233
      %v5235 = vrot.slane %v5068, 2
      %v5236 = vrot.slane %v3994, 2
      %v5237 = vsel %vm5171, %v5235, %v5236
      %v5238 = vrot.slane %v5069, 2
      %v5239 = vsel %vm5171, %v5233, %v5238
      %v5240 = vrot.slane %v5070, 2
      %v5241 = vsel %vm5171, %v5236, %v5240
      %v5242 = vrot.slane %v5071, 2
      %v5243 = vrot.slane %v3997, 2
      %v5244 = vsel %vm5171, %v5242, %v5243
      %v5245 = vrot.slane %v5072, 2
      %v5246 = vrot.slane %v3998, 2
      %v5247 = vsel %vm5171, %v5245, %v5246
      %v5248 = vrot.slane %v5073, 2
      %v5249 = vsel %vm5171, %v5243, %v5248
      %v5250 = vrot.slane %v5074, 2
      %v5251 = vsel %vm5171, %v5246, %v5250
      %v5252 = vrot.slane %v5075, 2
      %v5253 = vrot.slane %v4001, 2
      %v5254 = vsel %vm5171, %v5252, %v5253
      %v5255 = vrot.slane %v5076, 2
      %v5256 = vrot.slane %v4002, 2
      %v5257 = vsel %vm5171, %v5255, %v5256
      %v5258 = vrot.slane %v5077, 2
      %v5259 = vsel %vm5171, %v5253, %v5258
      %v5260 = vrot.slane %v5078, 2
      %v5261 = vsel %vm5171, %v5256, %v5260
      %v5262 = vrot.slane %v5079, 2
      %v5263 = vrot.slane %v4005, 2
      %v5264 = vsel %vm5171, %v5262, %v5263
      %v5265 = vrot.slane %v5080, 2
      %v5266 = vrot.slane %v4006, 2
      %v5267 = vsel %vm5171, %v5265, %v5266
      %v5268 = vrot.slane %v5081, 2
      %v5269 = vsel %vm5171, %v5263, %v5268
      %v5270 = vrot.slane %v5082, 2
      %v5271 = vsel %vm5171, %v5266, %v5270
      %v5272 = vrot.slane %v5083, 2
      %v5273 = vrot.slane %v4009, 2
      %v5274 = vsel %vm5171, %v5272, %v5273
      %v5275 = vrot.slane %v5084, 2
      %v5276 = vrot.slane %v4010, 2
      %v5277 = vsel %vm5171, %v5275, %v5276
      %v5278 = vrot.slane %v5085, 2
      %v5279 = vsel %vm5171, %v5273, %v5278
      %v5280 = vrot.slane %v5086, 2
      %v5281 = vsel %vm5171, %v5276, %v5280
      %v5282 = vrot.slane %v5087, 2
      %v5283 = vrot.slane %v4013, 2
      %v5284 = vsel %vm5171, %v5282, %v5283
      %v5285 = vrot.slane %v5088, 2
      %v5286 = vrot.slane %v4014, 2
      %v5287 = vsel %vm5171, %v5285, %v5286
      %v5288 = vrot.slane %v5089, 2
      %v5289 = vsel %vm5171, %v5283, %v5288
      %v5290 = vrot.slane %v5090, 2
      %v5291 = vsel %vm5171, %v5286, %v5290
      %v5292 = vrot.slane %v5091, 2
      %v5293 = vrot.slane %v4017, 2
      %v5294 = vsel %vm5171, %v5292, %v5293
      %v5295 = vrot.slane %v5092, 2
      %v5296 = vrot.slane %v4018, 2
      %v5297 = vsel %vm5171, %v5295, %v5296
      %v5298 = vrot.slane %v5093, 2
      %v5299 = vsel %vm5171, %v5293, %v5298
      %v5300 = vrot.slane %v5094, 2
      %v5301 = vsel %vm5171, %v5296, %v5300
      %v5302 = vrot.slane %v5095, 2
      %v5303 = vrot.slane %v4021, 2
      %v5304 = vsel %vm5171, %v5302, %v5303
      %v5305 = vrot.slane %v5096, 2
      %v5306 = vrot.slane %v4022, 2
      %v5307 = vsel %vm5171, %v5305, %v5306
      %v5308 = vrot.slane %v5097, 2
      %v5309 = vsel %vm5171, %v5303, %v5308
      %v5310 = vrot.slane %v5098, 2
      %v5311 = vsel %vm5171, %v5306, %v5310
      %v5312 = vrot.slane %v5099, 2
      %v5313 = vrot.slane %v4025, 2
      %v5314 = vsel %vm5171, %v5312, %v5313
      %v5315 = vrot.slane %v5100, 2
      %v5316 = vrot.slane %v4026, 2
      %v5317 = vsel %vm5171, %v5315, %v5316
      %v5318 = vrot.slane %v5101, 2
      %v5319 = vsel %vm5171, %v5313, %v5318
      %v5320 = vrot.slane %v5102, 2
      %v5321 = vsel %vm5171, %v5316, %v5320
      %v5322 = vrot.slane %v5103, 2
      %v5323 = vrot.slane %v4029, 2
      %v5324 = vsel %vm5171, %v5322, %v5323
      %v5325 = vrot.slane %v5104, 2
      %v5326 = vrot.slane %v4030, 2
      %v5327 = vsel %vm5171, %v5325, %v5326
      %v5328 = vrot.slane %v5105, 2
      %v5329 = vsel %vm5171, %v5323, %v5328
      %v5330 = vrot.slane %v5106, 2
      %v5331 = vsel %vm5171, %v5326, %v5330
      %v5396 = vpack.c.bf16 %v5179, %v5174
      %v5397 = vpack.c.bf16 %v5181, %v5177
      %v5398 = vpack.c.bf16 %v5189, %v5184
      %v5399 = vpack.c.bf16 %v5191, %v5187
      %v5400 = vpack.c.bf16 %v5199, %v5194
      %v5401 = vpack.c.bf16 %v5201, %v5197
      %v5402 = vpack.c.bf16 %v5209, %v5204
      %v5403 = vpack.c.bf16 %v5211, %v5207
      %v5404 = vpack.c.bf16 %v5219, %v5214
      %v5405 = vpack.c.bf16 %v5221, %v5217
      %v5406 = vpack.c.bf16 %v5229, %v5224
      %v5407 = vpack.c.bf16 %v5231, %v5227
      %v5408 = vpack.c.bf16 %v5239, %v5234
      %v5409 = vpack.c.bf16 %v5241, %v5237
      %v5410 = vpack.c.bf16 %v5249, %v5244
      %v5411 = vpack.c.bf16 %v5251, %v5247
      %v5412 = vpack.c.bf16 %v5259, %v5254
      %v5413 = vpack.c.bf16 %v5261, %v5257
      %v5414 = vpack.c.bf16 %v5269, %v5264
      %v5415 = vpack.c.bf16 %v5271, %v5267
      %v5416 = vpack.c.bf16 %v5279, %v5274
      %v5417 = vpack.c.bf16 %v5281, %v5277
      %v5418 = vpack.c.bf16 %v5289, %v5284
      %v5419 = vpack.c.bf16 %v5291, %v5287
      %v5420 = vpack.c.bf16 %v5299, %v5294
      %v5421 = vpack.c.bf16 %v5301, %v5297
      %v5422 = vpack.c.bf16 %v5309, %v5304
      %v5423 = vpack.c.bf16 %v5311, %v5307
      %v5424 = vpack.c.bf16 %v5319, %v5314
      %v5425 = vpack.c.bf16 %v5321, %v5317
      %v5426 = vpack.c.bf16 %v5329, %v5324
      %v5427 = vpack.c.bf16 %v5331, %v5327
      %s5428 = scalar_lea.vmem %s2, 144
      %v5429 = vld [vmem:[%s5428] sm:$0xf]
      %v5430 = vld [vmem:[%s5428 + $0x4] sm:$0xf]
      %v5431 = vld [vmem:[%s5428 + $0x8] sm:$0xf]
      %v5432 = vld [vmem:[%s5428 + $0xc] sm:$0xf]
      %v5433 = vld [vmem:[%s5428 + $0x10] sm:$0xf]
      %v5434 = vld [vmem:[%s5428 + $0x14] sm:$0xf]
      %v5435 = vld [vmem:[%s5428 + $0x18] sm:$0xf]
      %v5436 = vld [vmem:[%s5428 + $0x1c] sm:$0xf]
      %v5437 = vld [vmem:[%s5428 + $0x20] sm:$0xf]
      %v5438 = vld [vmem:[%s5428 + $0x24] sm:$0xf]
      %v5439 = vld [vmem:[%s5428 + $0x28] sm:$0xf]
      %v5440 = vld [vmem:[%s5428 + $0x2c] sm:$0xf]
      %v5441 = vld [vmem:[%s5428 + $0x30] sm:$0xf]
      %v5442 = vld [vmem:[%s5428 + $0x34] sm:$0xf]
      %v5443 = vld [vmem:[%s5428 + $0x38] sm:$0xf]
      %v5444 = vld [vmem:[%s5428 + $0x3c] sm:$0xf]
      %v5445 = vld [vmem:[%s5428 + $0x40] sm:$0xf]
      %v5446 = vld [vmem:[%s5428 + $0x44] sm:$0xf]
      %v5465 = vunpack.c.l.b16 %v5429
      %v5466 = vunpack.c.l.b16 %v5430
      %v5467 = vunpack.c.l.b16 %v5431
      %v5468 = vunpack.c.l.b16 %v5432
      %v5469 = vunpack.c.l.b16 %v5433
      %v5470 = vunpack.c.l.b16 %v5434
      %v5471 = vunpack.c.l.b16 %v5435
      %v5472 = vunpack.c.l.b16 %v5436
      %v5473 = vunpack.c.l.b16 %v5437
      %v5474 = vunpack.c.l.b16 %v5438
      %v5475 = vunpack.c.l.b16 %v5439
      %v5476 = vunpack.c.l.b16 %v5440
      %v5477 = vunpack.c.l.b16 %v5441
      %v5478 = vunpack.c.l.b16 %v5442
      %v5479 = vunpack.c.l.b16 %v5443
      %v5480 = vunpack.c.l.b16 %v5444
      %v5481 = vunpack.c.l.b16 %v5445
      %v5482 = vunpack.c.l.b16 %v5446
      %v5483 = vpack.c.b16 %v5466, %v5465
      %v5484 = vpack.c.b16 %v5468, %v5467
      %v5485 = vpack.c.b16 %v5470, %v5469
      %v5486 = vpack.c.b16 %v5472, %v5471
      %v5487 = vpack.c.b16 %v5474, %v5473
      %v5488 = vpack.c.b16 %v5476, %v5475
      %v5489 = vpack.c.b16 %v5478, %v5477
      %v5490 = vpack.c.b16 %v5480, %v5479
      %v5491 = vpack.c.b16 %v5482, %v5481
      %v5502 = vsel %vm3626, %v5397, 0
      %v5505 = vsel %vm3626, %v5399, 0
      %v5508 = vsel %vm3626, %v5401, 0
      %v5511 = vsel %vm3626, %v5403, 0
      %v5514 = vsel %vm3626, %v5405, 0
      %v5517 = vsel %vm3626, %v5407, 0
      %v5520 = vsel %vm3626, %v5409, 0
      %v5523 = vsel %vm3626, %v5411, 0
      %v5526 = vsel %vm3626, %v5413, 0
      %v5529 = vsel %vm3626, %v5415, 0
      %v5532 = vsel %vm3626, %v5417, 0
      %v5535 = vsel %vm3626, %v5419, 0
      %v5538 = vsel %vm3626, %v5421, 0
      %v5541 = vsel %vm3626, %v5423, 0
      %v5544 = vsel %vm3626, %v5425, 0
      %v5547 = vsel %vm3626, %v5427, 0
      %5549 = vmatprep.subr.bf16.mxu0 0
      %5550 = vmatpush1.bf16.msra.mxu0 %v5483
      %5551 = vmatprep.subr.bf16.mxu0 0
      %5552 = vmatpush1.bf16.msra.mxu0 %v5484
      %5553 = vmatprep.subr.bf16.mxu0 0
      %5554 = vmatpush1.bf16.msra.mxu0 %v5485
      %5555 = vmatprep.subr.bf16.mxu0 0
      %5556 = vmatpush1.bf16.msra.mxu0 %v5486
      %5557 = vmatprep.subr.bf16.mxu0 0
      %5558 = vmatpush1.bf16.msra.mxu0 %v5487
      %5559 = vmatprep.subr.bf16.mxu0 0
      %5560 = vmatpush1.bf16.msra.mxu0 %v5488
      %5561 = vmatprep.subr.bf16.mxu0 0
      %5562 = vmatpush1.bf16.msra.mxu0 %v5489
      %5563 = vmatprep.subr.bf16.mxu0 0
      %5564 = vmatpush1.bf16.msra.mxu0 %v5490
      %5565 = vmatprep.subr.bf16.mxu0 0
      %5566 = vmatpush1.bf16.msra.mxu0 %v5491
      %5567 = vmatprep.subr.bf16.mxu0 0
      %5568 = vmatpush1.bf16.msra.mxu0 0
      %5569 = vmatprep.subr.bf16.mxu0 0
      %5570 = vmatpush1.bf16.msra.mxu0 0
      %5571 = vmatprep.subr.bf16.mxu0 0
      %5572 = vmatpush1.bf16.msra.mxu0 0
      %5573 = vmatprep.subr.bf16.mxu0 0
      %5574 = vmatpush1.bf16.msra.mxu0 0
      %5575 = vmatprep.subr.bf16.mxu0 0
      %5576 = vmatpush1.bf16.msra.mxu0 0
      %5577 = vmatprep.subr.bf16.mxu0 0
      %5578 = vmatpush1.bf16.msra.mxu0 0
      %5579 = vmatprep.subr.bf16.mxu0 0
      %5580 = vmatpush1.bf16.msra.mxu0 0
      %5581 = vmatprep.mubr.bf16.mxu0 %v5502
      %5582 = vmatmul.mubr.bf16.gmra.mrb[0].mxu0 %v5396
      %v5583 = vpop.f32.mrb[0].mxu0
      %v5584 = vadd.f32 0.0, %v5583
      %v5585 = vpop.f32.mrb[0].mxu0
      %v5586 = vpop.f32.mrb[0].mxu0
      %v5587 = vadd.f32 0.0, %v5586
      %v5588 = vpop.f32.mrb[0].mxu0
      %5589 = vmatprep.mubr.bf16.mxu0 %v5505
      %5590 = vmatmul.mubr.bf16.gmra.mrb[0].mxu0 %v5398
      %v5591 = vpop.f32.mrb[0].mxu0
      %v5592 = vadd.f32 0.0, %v5591
      %v5593 = vpop.f32.mrb[0].mxu0
      %v5594 = vpop.f32.mrb[0].mxu0
      %v5595 = vadd.f32 0.0, %v5594
      %v5596 = vpop.f32.mrb[0].mxu0
      %5597 = vmatprep.mubr.bf16.mxu0 %v5508
      %5598 = vmatmul.mubr.bf16.gmra.mrb[0].mxu0 %v5400
      %v5599 = vpop.f32.mrb[0].mxu0
      %v5600 = vadd.f32 0.0, %v5599
      %v5601 = vpop.f32.mrb[0].mxu0
      %v5602 = vpop.f32.mrb[0].mxu0
      %v5603 = vadd.f32 0.0, %v5602
      %v5604 = vpop.f32.mrb[0].mxu0
      %5605 = vmatprep.mubr.bf16.mxu0 %v5511
      %5606 = vmatmul.mubr.bf16.gmra.mrb[0].mxu0 %v5402
      %v5607 = vpop.f32.mrb[0].mxu0
      %v5608 = vadd.f32 0.0, %v5607
      %v5609 = vpop.f32.mrb[0].mxu0
      %v5610 = vpop.f32.mrb[0].mxu0
      %v5611 = vadd.f32 0.0, %v5610
      %v5612 = vpop.f32.mrb[0].mxu0
      %5613 = vmatprep.mubr.bf16.mxu0 %v5514
      %5614 = vmatmul.mubr.bf16.gmra.mrb[0].mxu0 %v5404
      %v5615 = vpop.f32.mrb[0].mxu0
      %v5616 = vadd.f32 0.0, %v5615
      %v5617 = vpop.f32.mrb[0].mxu0
      %v5618 = vpop.f32.mrb[0].mxu0
      %v5619 = vadd.f32 0.0, %v5618
      %v5620 = vpop.f32.mrb[0].mxu0
      %5621 = vmatprep.mubr.bf16.mxu0 %v5517
      %5622 = vmatmul.mubr.bf16.gmra.mrb[0].mxu0 %v5406
      %v5623 = vpop.f32.mrb[0].mxu0
      %v5624 = vadd.f32 0.0, %v5623
      %v5625 = vpop.f32.mrb[0].mxu0
      %v5626 = vpop.f32.mrb[0].mxu0
      %v5627 = vadd.f32 0.0, %v5626
      %v5628 = vpop.f32.mrb[0].mxu0
      %5629 = vmatprep.mubr.bf16.mxu0 %v5520
      %5630 = vmatmul.mubr.bf16.gmra.mrb[0].mxu0 %v5408
      %v5631 = vpop.f32.mrb[0].mxu0
      %v5632 = vadd.f32 0.0, %v5631
      %v5633 = vpop.f32.mrb[0].mxu0
      %v5634 = vpop.f32.mrb[0].mxu0
      %v5635 = vadd.f32 0.0, %v5634
      %v5636 = vpop.f32.mrb[0].mxu0
      %5637 = vmatprep.mubr.bf16.mxu0 %v5523
      %5638 = vmatmul.mubr.bf16.gmra.mrb[0].mxu0 %v5410
      %v5639 = vpop.f32.mrb[0].mxu0
      %v5640 = vadd.f32 0.0, %v5639
      %v5641 = vpop.f32.mrb[0].mxu0
      %v5642 = vpop.f32.mrb[0].mxu0
      %v5643 = vadd.f32 0.0, %v5642
      %v5644 = vpop.f32.mrb[0].mxu0
      %5645 = vmatprep.mubr.bf16.mxu0 %v5526
      %5646 = vmatmul.mubr.bf16.gmra.mrb[0].mxu0 %v5412
      %v5647 = vpop.f32.mrb[0].mxu0
      %v5648 = vadd.f32 0.0, %v5647
      %v5649 = vpop.f32.mrb[0].mxu0
      %v5650 = vpop.f32.mrb[0].mxu0
      %v5651 = vadd.f32 0.0, %v5650
      %v5652 = vpop.f32.mrb[0].mxu0
      %5653 = vmatprep.mubr.bf16.mxu0 %v5529
      %5654 = vmatmul.mubr.bf16.gmra.mrb[0].mxu0 %v5414
      %v5655 = vpop.f32.mrb[0].mxu0
      %v5656 = vadd.f32 0.0, %v5655
      %v5657 = vpop.f32.mrb[0].mxu0
      %v5658 = vpop.f32.mrb[0].mxu0
      %v5659 = vadd.f32 0.0, %v5658
      %v5660 = vpop.f32.mrb[0].mxu0
      %5661 = vmatprep.mubr.bf16.mxu0 %v5532
      %5662 = vmatmul.mubr.bf16.gmra.mrb[0].mxu0 %v5416
      %v5663 = vpop.f32.mrb[0].mxu0
      %v5664 = vadd.f32 0.0, %v5663
      %v5665 = vpop.f32.mrb[0].mxu0
      %v5666 = vpop.f32.mrb[0].mxu0
      %v5667 = vadd.f32 0.0, %v5666
      %v5668 = vpop.f32.mrb[0].mxu0
      %5669 = vmatprep.mubr.bf16.mxu0 %v5535
      %5670 = vmatmul.mubr.bf16.gmra.mrb[0].mxu0 %v5418
      %v5671 = vpop.f32.mrb[0].mxu0
      %v5672 = vadd.f32 0.0, %v5671
      %v5673 = vpop.f32.mrb[0].mxu0
      %v5674 = vpop.f32.mrb[0].mxu0
      %v5675 = vadd.f32 0.0, %v5674
      %v5676 = vpop.f32.mrb[0].mxu0
      %5677 = vmatprep.mubr.bf16.mxu0 %v5538
      %5678 = vmatmul.mubr.bf16.gmra.mrb[0].mxu0 %v5420
      %v5679 = vpop.f32.mrb[0].mxu0
      %v5680 = vadd.f32 0.0, %v5679
      %v5681 = vpop.f32.mrb[0].mxu0
      %v5682 = vpop.f32.mrb[0].mxu0
      %v5683 = vadd.f32 0.0, %v5682
      %v5684 = vpop.f32.mrb[0].mxu0
      %5685 = vmatprep.mubr.bf16.mxu0 %v5541
      %5686 = vmatmul.mubr.bf16.gmra.mrb[0].mxu0 %v5422
      %v5687 = vpop.f32.mrb[0].mxu0
      %v5688 = vadd.f32 0.0, %v5687
      %v5689 = vpop.f32.mrb[0].mxu0
      %v5690 = vpop.f32.mrb[0].mxu0
      %v5691 = vadd.f32 0.0, %v5690
      %v5692 = vpop.f32.mrb[0].mxu0
      %5693 = vmatprep.mubr.bf16.mxu0 %v5544
      %5694 = vmatmul.mubr.bf16.gmra.mrb[0].mxu0 %v5424
      %v5695 = vpop.f32.mrb[0].mxu0
      %v5696 = vadd.f32 0.0, %v5695
      %v5697 = vpop.f32.mrb[0].mxu0
      %v5698 = vpop.f32.mrb[0].mxu0
      %v5699 = vadd.f32 0.0, %v5698
      %v5700 = vpop.f32.mrb[0].mxu0
      %5701 = vmatprep.mubr.bf16.mxu0 %v5547
      %5702 = vmatmul.mubr.bf16.gmra.mrb[0].mxu0 %v5426
      %v5703 = vpop.f32.mrb[0].mxu0
      %v5704 = vadd.f32 0.0, %v5703
      %v5705 = vpop.f32.mrb[0].mxu0
      %v5706 = vpop.f32.mrb[0].mxu0
      %v5707 = vadd.f32 0.0, %v5706
      %v5708 = vpop.f32.mrb[0].mxu0
      %5709 = vdwg.mxu0
      %v5710 = vadd.f32 %v4917, %v5584
      %v5711 = vadd.f32 %v4920, %v5587
      %v5712 = vadd.f32 %v4925, %v5592
      %v5713 = vadd.f32 %v4928, %v5595
      %v5714 = vadd.f32 %v4933, %v5600
      %v5715 = vadd.f32 %v4936, %v5603
      %v5716 = vadd.f32 %v4941, %v5608
      %v5717 = vadd.f32 %v4944, %v5611
      %v5718 = vadd.f32 %v4949, %v5616
      %v5719 = vadd.f32 %v4952, %v5619
      %v5720 = vadd.f32 %v4957, %v5624
      %v5721 = vadd.f32 %v4960, %v5627
      %v5722 = vadd.f32 %v4965, %v5632
      %v5723 = vadd.f32 %v4968, %v5635
      %v5724 = vadd.f32 %v4973, %v5640
      %v5725 = vadd.f32 %v4976, %v5643
      %v5726 = vadd.f32 %v4981, %v5648
      %v5727 = vadd.f32 %v4984, %v5651
      %v5728 = vadd.f32 %v4989, %v5656
      %v5729 = vadd.f32 %v4992, %v5659
      %v5730 = vadd.f32 %v4997, %v5664
      %v5731 = vadd.f32 %v5000, %v5667
      %v5732 = vadd.f32 %v5005, %v5672
      %v5733 = vadd.f32 %v5008, %v5675
      %v5734 = vadd.f32 %v5013, %v5680
      %v5735 = vadd.f32 %v5016, %v5683
      %v5736 = vadd.f32 %v5021, %v5688
      %v5737 = vadd.f32 %v5024, %v5691
      %v5738 = vadd.f32 %v5029, %v5696
      %v5739 = vadd.f32 %v5032, %v5699
      %v5740 = vadd.f32 %v5037, %v5704
      %v5741 = vadd.f32 %v5040, %v5707
      %v5742 = vld [vmem:[%s3640] sm:$0xff]
      %v5743 = vld [vmem:[%s3640 + $0x8] sm:$0xff]
      %v5744 = vld [vmem:[%s3640 + $0x10] sm:$0xff]
      %v5745 = vld [vmem:[%s3640 + $0x18] sm:$0xff]
      %v5746 = vld [vmem:[%s3640 + $0x30] sm:$0xff]
      %v5747 = vld [vmem:[%s3640 + $0x38] sm:$0xff]
      %v5748 = vld [vmem:[%s3640 + $0x40] sm:$0xff]
      %v5749 = vld [vmem:[%s3640 + $0x48] sm:$0xff]
      %v5750 = vld [vmem:[%s3640 + $0x60] sm:$0xff]
      %v5751 = vld [vmem:[%s3640 + $0x68] sm:$0xff]
      %v5752 = vld [vmem:[%s3640 + $0x70] sm:$0xff]
      %v5753 = vld [vmem:[%s3640 + $0x78] sm:$0xff]
      %v5754 = vld [vmem:[%s3640 + $0x90] sm:$0xff]
      %v5755 = vld [vmem:[%s3640 + $0x98] sm:$0xff]
      %v5756 = vld [vmem:[%s3640 + $0xa0] sm:$0xff]
      %v5757 = vld [vmem:[%s3640 + $0xa8] sm:$0xff]
      %v5758 = vld [vmem:[%s3640 + $0xc0] sm:$0xff]
      %v5759 = vld [vmem:[%s3640 + $0xc8] sm:$0xff]
      %v5760 = vld [vmem:[%s3640 + $0xd0] sm:$0xff]
      %v5761 = vld [vmem:[%s3640 + $0xd8] sm:$0xff]
      %v5762 = vld [vmem:[%s3640 + $0xf0] sm:$0xff]
      %v5763 = vld [vmem:[%s3640 + $0xf8] sm:$0xff]
      %v5764 = vld [vmem:[%s3640 + $0x100] sm:$0xff]
      %v5765 = vld [vmem:[%s3640 + $0x108] sm:$0xff]
      %v5766 = vld [vmem:[%s3640 + $0x120] sm:$0xff]
      %v5767 = vld [vmem:[%s3640 + $0x128] sm:$0xff]
      %v5768 = vld [vmem:[%s3640 + $0x130] sm:$0xff]
      %v5769 = vld [vmem:[%s3640 + $0x138] sm:$0xff]
      %v5770 = vld [vmem:[%s3640 + $0x150] sm:$0xff]
      %v5771 = vld [vmem:[%s3640 + $0x158] sm:$0xff]
      %v5772 = vld [vmem:[%s3640 + $0x160] sm:$0xff]
      %v5773 = vld [vmem:[%s3640 + $0x168] sm:$0xff]
      %v5774 = vld [vmem:[%s3640 + $0x180] sm:$0xff]
      %v5775 = vld [vmem:[%s3640 + $0x188] sm:$0xff]
      %v5776 = vld [vmem:[%s3640 + $0x190] sm:$0xff]
      %v5777 = vld [vmem:[%s3640 + $0x198] sm:$0xff]
      %v5778 = vld [vmem:[%s3640 + $0x1b0] sm:$0xff]
      %v5779 = vld [vmem:[%s3640 + $0x1b8] sm:$0xff]
      %v5780 = vld [vmem:[%s3640 + $0x1c0] sm:$0xff]
      %v5781 = vld [vmem:[%s3640 + $0x1c8] sm:$0xff]
      %v5782 = vld [vmem:[%s3640 + $0x1e0] sm:$0xff]
      %v5783 = vld [vmem:[%s3640 + $0x1e8] sm:$0xff]
      %v5784 = vld [vmem:[%s3640 + $0x1f0] sm:$0xff]
      %v5785 = vld [vmem:[%s3640 + $0x1f8] sm:$0xff]
      %v5786 = vld [vmem:[%s3640 + $0x210] sm:$0xff]
      %v5787 = vld [vmem:[%s3640 + $0x218] sm:$0xff]
      %v5788 = vld [vmem:[%s3640 + $0x220] sm:$0xff]
      %v5789 = vld [vmem:[%s3640 + $0x228] sm:$0xff]
      %v5790 = vld [vmem:[%s3640 + $0x240] sm:$0xff]
      %v5791 = vld [vmem:[%s3640 + $0x248] sm:$0xff]
      %v5792 = vld [vmem:[%s3640 + $0x250] sm:$0xff]
      %v5793 = vld [vmem:[%s3640 + $0x258] sm:$0xff]
      %v5794 = vld [vmem:[%s3640 + $0x270] sm:$0xff]
      %v5795 = vld [vmem:[%s3640 + $0x278] sm:$0xff]
      %v5796 = vld [vmem:[%s3640 + $0x280] sm:$0xff]
      %v5797 = vld [vmem:[%s3640 + $0x288] sm:$0xff]
      %v5798 = vld [vmem:[%s3640 + $0x2a0] sm:$0xff]
      %v5799 = vld [vmem:[%s3640 + $0x2a8] sm:$0xff]
      %v5800 = vld [vmem:[%s3640 + $0x2b0] sm:$0xff]
      %v5801 = vld [vmem:[%s3640 + $0x2b8] sm:$0xff]
      %v5802 = vld [vmem:[%s3640 + $0x2d0] sm:$0xff]
      %v5803 = vld [vmem:[%s3640 + $0x2d8] sm:$0xff]
      %v5804 = vld [vmem:[%s3640 + $0x2e0] sm:$0xff]
      %v5805 = vld [vmem:[%s3640 + $0x2e8] sm:$0xff]
      %v5806 = vpack.c.bf16 %v5744, %v5742
      %v5807 = vpack.c.bf16 %v5745, %v5743
      %v5808 = vpack.c.bf16 %v5748, %v5746
      %v5809 = vpack.c.bf16 %v5749, %v5747
      %v5810 = vpack.c.bf16 %v5752, %v5750
      %v5811 = vpack.c.bf16 %v5753, %v5751
      %v5812 = vpack.c.bf16 %v5756, %v5754
      %v5813 = vpack.c.bf16 %v5757, %v5755
      %v5814 = vpack.c.bf16 %v5760, %v5758
      %v5815 = vpack.c.bf16 %v5761, %v5759
      %v5816 = vpack.c.bf16 %v5764, %v5762
      %v5817 = vpack.c.bf16 %v5765, %v5763
      %v5818 = vpack.c.bf16 %v5768, %v5766
      %v5819 = vpack.c.bf16 %v5769, %v5767
      %v5820 = vpack.c.bf16 %v5772, %v5770
      %v5821 = vpack.c.bf16 %v5773, %v5771
      %v5822 = vpack.c.bf16 %v5776, %v5774
      %v5823 = vpack.c.bf16 %v5777, %v5775
      %v5824 = vpack.c.bf16 %v5780, %v5778
      %v5825 = vpack.c.bf16 %v5781, %v5779
      %v5826 = vpack.c.bf16 %v5784, %v5782
      %v5827 = vpack.c.bf16 %v5785, %v5783
      %v5828 = vpack.c.bf16 %v5788, %v5786
      %v5829 = vpack.c.bf16 %v5789, %v5787
      %v5830 = vpack.c.bf16 %v5792, %v5790
      %v5831 = vpack.c.bf16 %v5793, %v5791
      %v5832 = vpack.c.bf16 %v5796, %v5794
      %v5833 = vpack.c.bf16 %v5797, %v5795
      %v5834 = vpack.c.bf16 %v5800, %v5798
      %v5835 = vpack.c.bf16 %v5801, %v5799
      %v5836 = vpack.c.bf16 %v5804, %v5802
      %v5837 = vpack.c.bf16 %v5805, %v5803
      %s5838 = scalar_lea.vmem %s2, 216
      %v5839 = vld [vmem:[%s5838] sm:$0xf]
      %v5840 = vld [vmem:[%s5838 + $0x4] sm:$0xf]
      %v5841 = vld [vmem:[%s5838 + $0x8] sm:$0xf]
      %v5842 = vld [vmem:[%s5838 + $0xc] sm:$0xf]
      %v5843 = vld [vmem:[%s5838 + $0x10] sm:$0xf]
      %v5844 = vld [vmem:[%s5838 + $0x14] sm:$0xf]
      %v5845 = vld [vmem:[%s5838 + $0x18] sm:$0xf]
      %v5846 = vld [vmem:[%s5838 + $0x1c] sm:$0xf]
      %v5847 = vld [vmem:[%s5838 + $0x20] sm:$0xf]
      %v5848 = vld [vmem:[%s5838 + $0x24] sm:$0xf]
      %v5849 = vld [vmem:[%s5838 + $0x28] sm:$0xf]
      %v5850 = vld [vmem:[%s5838 + $0x2c] sm:$0xf]
      %v5851 = vld [vmem:[%s5838 + $0x30] sm:$0xf]
      %v5852 = vld [vmem:[%s5838 + $0x34] sm:$0xf]
      %v5853 = vld [vmem:[%s5838 + $0x38] sm:$0xf]
      %v5854 = vld [vmem:[%s5838 + $0x3c] sm:$0xf]
      %v5855 = vld [vmem:[%s5838 + $0x40] sm:$0xf]
      %v5856 = vld [vmem:[%s5838 + $0x44] sm:$0xf]
      %v5875 = vunpack.c.l.b16 %v5839
      %v5876 = vunpack.c.l.b16 %v5840
      %v5877 = vunpack.c.l.b16 %v5841
      %v5878 = vunpack.c.l.b16 %v5842
      %v5879 = vunpack.c.l.b16 %v5843
      %v5880 = vunpack.c.l.b16 %v5844
      %v5881 = vunpack.c.l.b16 %v5845
      %v5882 = vunpack.c.l.b16 %v5846
      %v5883 = vunpack.c.l.b16 %v5847
      %v5884 = vunpack.c.l.b16 %v5848
      %v5885 = vunpack.c.l.b16 %v5849
      %v5886 = vunpack.c.l.b16 %v5850
      %v5887 = vunpack.c.l.b16 %v5851
      %v5888 = vunpack.c.l.b16 %v5852
      %v5889 = vunpack.c.l.b16 %v5853
      %v5890 = vunpack.c.l.b16 %v5854
      %v5891 = vunpack.c.l.b16 %v5855
      %v5892 = vunpack.c.l.b16 %v5856
      %v5893 = vpack.c.b16 %v5876, %v5875
      %v5894 = vpack.c.b16 %v5878, %v5877
      %v5895 = vpack.c.b16 %v5880, %v5879
      %v5896 = vpack.c.b16 %v5882, %v5881
      %v5897 = vpack.c.b16 %v5884, %v5883
      %v5898 = vpack.c.b16 %v5886, %v5885
      %v5899 = vpack.c.b16 %v5888, %v5887
      %v5900 = vpack.c.b16 %v5890, %v5889
      %v5901 = vpack.c.b16 %v5892, %v5891
      %v5912 = vsel %vm3626, %v5807, 0
      %v5915 = vsel %vm3626, %v5809, 0
      %v5918 = vsel %vm3626, %v5811, 0
      %v5921 = vsel %vm3626, %v5813, 0
      %v5924 = vsel %vm3626, %v5815, 0
      %v5927 = vsel %vm3626, %v5817, 0
      %v5930 = vsel %vm3626, %v5819, 0
      %v5933 = vsel %vm3626, %v5821, 0
      %v5936 = vsel %vm3626, %v5823, 0
      %v5939 = vsel %vm3626, %v5825, 0
      %v5942 = vsel %vm3626, %v5827, 0
      %v5945 = vsel %vm3626, %v5829, 0
      %v5948 = vsel %vm3626, %v5831, 0
      %v5951 = vsel %vm3626, %v5833, 0
      %v5954 = vsel %vm3626, %v5835, 0
      %v5957 = vsel %vm3626, %v5837, 0
      %5959 = vmatprep.subr.bf16.mxu0 0
      %5960 = vmatpush1.bf16.msra.mxu0 %v5893
      %5961 = vmatprep.subr.bf16.mxu0 0
      %5962 = vmatpush1.bf16.msra.mxu0 %v5894
      %5963 = vmatprep.subr.bf16.mxu0 0
      %5964 = vmatpush1.bf16.msra.mxu0 %v5895
      %5965 = vmatprep.subr.bf16.mxu0 0
      %5966 = vmatpush1.bf16.msra.mxu0 %v5896
      %5967 = vmatprep.subr.bf16.mxu0 0
      %5968 = vmatpush1.bf16.msra.mxu0 %v5897
      %5969 = vmatprep.subr.bf16.mxu0 0
      %5970 = vmatpush1.bf16.msra.mxu0 %v5898
      %5971 = vmatprep.subr.bf16.mxu0 0
      %5972 = vmatpush1.bf16.msra.mxu0 %v5899
      %5973 = vmatprep.subr.bf16.mxu0 0
      %5974 = vmatpush1.bf16.msra.mxu0 %v5900
      %5975 = vmatprep.subr.bf16.mxu0 0
      %5976 = vmatpush1.bf16.msra.mxu0 %v5901
      %5977 = vmatprep.subr.bf16.mxu0 0
      %5978 = vmatpush1.bf16.msra.mxu0 0
      %5979 = vmatprep.subr.bf16.mxu0 0
      %5980 = vmatpush1.bf16.msra.mxu0 0
      %5981 = vmatprep.subr.bf16.mxu0 0
      %5982 = vmatpush1.bf16.msra.mxu0 0
      %5983 = vmatprep.subr.bf16.mxu0 0
      %5984 = vmatpush1.bf16.msra.mxu0 0
      %5985 = vmatprep.subr.bf16.mxu0 0
      %5986 = vmatpush1.bf16.msra.mxu0 0
      %5987 = vmatprep.subr.bf16.mxu0 0
      %5988 = vmatpush1.bf16.msra.mxu0 0
      %5989 = vmatprep.subr.bf16.mxu0 0
      %5990 = vmatpush1.bf16.msra.mxu0 0
      %5991 = vmatprep.mubr.bf16.mxu0 %v5912
      %5992 = vmatmul.mubr.bf16.gmra.mrb[0].mxu0 %v5806
      %v5993 = vpop.f32.mrb[0].mxu0
      %v5994 = vadd.f32 0.0, %v5993
      %v5995 = vpop.f32.mrb[0].mxu0
      %v5996 = vpop.f32.mrb[0].mxu0
      %v5997 = vadd.f32 0.0, %v5996
      %v5998 = vpop.f32.mrb[0].mxu0
      %5999 = vmatprep.mubr.bf16.mxu0 %v5915
      %6000 = vmatmul.mubr.bf16.gmra.mrb[0].mxu0 %v5808
      %v6001 = vpop.f32.mrb[0].mxu0
      %v6002 = vadd.f32 0.0, %v6001
      %v6003 = vpop.f32.mrb[0].mxu0
      %v6004 = vpop.f32.mrb[0].mxu0
      %v6005 = vadd.f32 0.0, %v6004
      %v6006 = vpop.f32.mrb[0].mxu0
      %6007 = vmatprep.mubr.bf16.mxu0 %v5918
      %6008 = vmatmul.mubr.bf16.gmra.mrb[0].mxu0 %v5810
      %v6009 = vpop.f32.mrb[0].mxu0
      %v6010 = vadd.f32 0.0, %v6009
      %v6011 = vpop.f32.mrb[0].mxu0
      %v6012 = vpop.f32.mrb[0].mxu0
      %v6013 = vadd.f32 0.0, %v6012
      %v6014 = vpop.f32.mrb[0].mxu0
      %6015 = vmatprep.mubr.bf16.mxu0 %v5921
      %6016 = vmatmul.mubr.bf16.gmra.mrb[0].mxu0 %v5812
      %v6017 = vpop.f32.mrb[0].mxu0
      %v6018 = vadd.f32 0.0, %v6017
      %v6019 = vpop.f32.mrb[0].mxu0
      %v6020 = vpop.f32.mrb[0].mxu0
      %v6021 = vadd.f32 0.0, %v6020
      %v6022 = vpop.f32.mrb[0].mxu0
      %6023 = vmatprep.mubr.bf16.mxu0 %v5924
      %6024 = vmatmul.mubr.bf16.gmra.mrb[0].mxu0 %v5814
      %v6025 = vpop.f32.mrb[0].mxu0
      %v6026 = vadd.f32 0.0, %v6025
      %v6027 = vpop.f32.mrb[0].mxu0
      %v6028 = vpop.f32.mrb[0].mxu0
      %v6029 = vadd.f32 0.0, %v6028
      %v6030 = vpop.f32.mrb[0].mxu0
      %6031 = vmatprep.mubr.bf16.mxu0 %v5927
      %6032 = vmatmul.mubr.bf16.gmra.mrb[0].mxu0 %v5816
      %v6033 = vpop.f32.mrb[0].mxu0
      %v6034 = vadd.f32 0.0, %v6033
      %v6035 = vpop.f32.mrb[0].mxu0
      %v6036 = vpop.f32.mrb[0].mxu0
      %v6037 = vadd.f32 0.0, %v6036
      %v6038 = vpop.f32.mrb[0].mxu0
      %6039 = vmatprep.mubr.bf16.mxu0 %v5930
      %6040 = vmatmul.mubr.bf16.gmra.mrb[0].mxu0 %v5818
      %v6041 = vpop.f32.mrb[0].mxu0
      %v6042 = vadd.f32 0.0, %v6041
      %v6043 = vpop.f32.mrb[0].mxu0
      %v6044 = vpop.f32.mrb[0].mxu0
      %v6045 = vadd.f32 0.0, %v6044
      %v6046 = vpop.f32.mrb[0].mxu0
      %6047 = vmatprep.mubr.bf16.mxu0 %v5933
      %6048 = vmatmul.mubr.bf16.gmra.mrb[0].mxu0 %v5820
      %v6049 = vpop.f32.mrb[0].mxu0
      %v6050 = vadd.f32 0.0, %v6049
      %v6051 = vpop.f32.mrb[0].mxu0
      %v6052 = vpop.f32.mrb[0].mxu0
      %v6053 = vadd.f32 0.0, %v6052
      %v6054 = vpop.f32.mrb[0].mxu0
      %6055 = vmatprep.mubr.bf16.mxu0 %v5936
      %6056 = vmatmul.mubr.bf16.gmra.mrb[0].mxu0 %v5822
      %v6057 = vpop.f32.mrb[0].mxu0
      %v6058 = vadd.f32 0.0, %v6057
      %v6059 = vpop.f32.mrb[0].mxu0
      %v6060 = vpop.f32.mrb[0].mxu0
      %v6061 = vadd.f32 0.0, %v6060
      %v6062 = vpop.f32.mrb[0].mxu0
      %6063 = vmatprep.mubr.bf16.mxu0 %v5939
      %6064 = vmatmul.mubr.bf16.gmra.mrb[0].mxu0 %v5824
      %v6065 = vpop.f32.mrb[0].mxu0
      %v6066 = vadd.f32 0.0, %v6065
      %v6067 = vpop.f32.mrb[0].mxu0
      %v6068 = vpop.f32.mrb[0].mxu0
      %v6069 = vadd.f32 0.0, %v6068
      %v6070 = vpop.f32.mrb[0].mxu0
      %6071 = vmatprep.mubr.bf16.mxu0 %v5942
      %6072 = vmatmul.mubr.bf16.gmra.mrb[0].mxu0 %v5826
      %v6073 = vpop.f32.mrb[0].mxu0
      %v6074 = vadd.f32 0.0, %v6073
      %v6075 = vpop.f32.mrb[0].mxu0
      %v6076 = vpop.f32.mrb[0].mxu0
      %v6077 = vadd.f32 0.0, %v6076
      %v6078 = vpop.f32.mrb[0].mxu0
      %6079 = vmatprep.mubr.bf16.mxu0 %v5945
      %6080 = vmatmul.mubr.bf16.gmra.mrb[0].mxu0 %v5828
      %v6081 = vpop.f32.mrb[0].mxu0
      %v6082 = vadd.f32 0.0, %v6081
      %v6083 = vpop.f32.mrb[0].mxu0
      %v6084 = vpop.f32.mrb[0].mxu0
      %v6085 = vadd.f32 0.0, %v6084
      %v6086 = vpop.f32.mrb[0].mxu0
      %6087 = vmatprep.mubr.bf16.mxu0 %v5948
      %6088 = vmatmul.mubr.bf16.gmra.mrb[0].mxu0 %v5830
      %v6089 = vpop.f32.mrb[0].mxu0
      %v6090 = vadd.f32 0.0, %v6089
      %v6091 = vpop.f32.mrb[0].mxu0
      %v6092 = vpop.f32.mrb[0].mxu0
      %v6093 = vadd.f32 0.0, %v6092
      %v6094 = vpop.f32.mrb[0].mxu0
      %6095 = vmatprep.mubr.bf16.mxu0 %v5951
      %6096 = vmatmul.mubr.bf16.gmra.mrb[0].mxu0 %v5832
      %v6097 = vpop.f32.mrb[0].mxu0
      %v6098 = vadd.f32 0.0, %v6097
      %v6099 = vpop.f32.mrb[0].mxu0
      %v6100 = vpop.f32.mrb[0].mxu0
      %v6101 = vadd.f32 0.0, %v6100
      %v6102 = vpop.f32.mrb[0].mxu0
      %6103 = vmatprep.mubr.bf16.mxu0 %v5954
      %6104 = vmatmul.mubr.bf16.gmra.mrb[0].mxu0 %v5834
      %v6105 = vpop.f32.mrb[0].mxu0
      %v6106 = vadd.f32 0.0, %v6105
      %v6107 = vpop.f32.mrb[0].mxu0
      %v6108 = vpop.f32.mrb[0].mxu0
      %v6109 = vadd.f32 0.0, %v6108
      %v6110 = vpop.f32.mrb[0].mxu0
      %6111 = vmatprep.mubr.bf16.mxu0 %v5957
      %6112 = vmatmul.mubr.bf16.gmra.mrb[0].mxu0 %v5836
      %v6113 = vpop.f32.mrb[0].mxu0
      %v6114 = vadd.f32 0.0, %v6113
      %v6115 = vpop.f32.mrb[0].mxu0
      %v6116 = vpop.f32.mrb[0].mxu0
      %v6117 = vadd.f32 0.0, %v6116
      %v6118 = vpop.f32.mrb[0].mxu0
      %6119 = vdwg.mxu0
      %v6120 = vadd.f32 %v5710, %v5994
      %v6121 = vadd.f32 %v5711, %v5997
      %v6122 = vadd.f32 %v5712, %v6002
      %v6123 = vadd.f32 %v5713, %v6005
      %v6124 = vadd.f32 %v5714, %v6010
      %v6125 = vadd.f32 %v5715, %v6013
      %v6126 = vadd.f32 %v5716, %v6018
      %v6127 = vadd.f32 %v5717, %v6021
      %v6128 = vadd.f32 %v5718, %v6026
      %v6129 = vadd.f32 %v5719, %v6029
      %v6130 = vadd.f32 %v5720, %v6034
      %v6131 = vadd.f32 %v5721, %v6037
      %v6132 = vadd.f32 %v5722, %v6042
      %v6133 = vadd.f32 %v5723, %v6045
      %v6134 = vadd.f32 %v5724, %v6050
      %v6135 = vadd.f32 %v5725, %v6053
      %v6136 = vadd.f32 %v5726, %v6058
      %v6137 = vadd.f32 %v5727, %v6061
      %v6138 = vadd.f32 %v5728, %v6066
      %v6139 = vadd.f32 %v5729, %v6069
      %v6140 = vadd.f32 %v5730, %v6074
      %v6141 = vadd.f32 %v5731, %v6077
      %v6142 = vadd.f32 %v5732, %v6082
      %v6143 = vadd.f32 %v5733, %v6085
      %v6144 = vadd.f32 %v5734, %v6090
      %v6145 = vadd.f32 %v5735, %v6093
      %v6146 = vadd.f32 %v5736, %v6098
      %v6147 = vadd.f32 %v5737, %v6101
      %v6148 = vadd.f32 %v5738, %v6106
      %v6149 = vadd.f32 %v5739, %v6109
      %v6150 = vadd.f32 %v5740, %v6114
      %v6151 = vadd.f32 %v5741, %v6117
      %v6152 = vld [vmem:[%s3640] sm:$0xfe]
      %v6153 = vld [vmem:[%s3640 + $0x8] sm:$0xfe]
      %v6154 = vld [vmem:[%s3640 + $0x10] sm:$0xff]
      %v6155 = vld [vmem:[%s3640 + $0x18] sm:$0xff]
      %v6156 = vld [vmem:[%s3640 + $0x20] sm:$0x1]
      %v6157 = vld [vmem:[%s3640 + $0x28] sm:$0x1]
      %v6158 = vld [vmem:[%s3640 + $0x30] sm:$0xfe]
      %v6159 = vld [vmem:[%s3640 + $0x38] sm:$0xfe]
      %v6160 = vld [vmem:[%s3640 + $0x40] sm:$0xff]
      %v6161 = vld [vmem:[%s3640 + $0x48] sm:$0xff]
      %v6162 = vld [vmem:[%s3640 + $0x50] sm:$0x1]
      %v6163 = vld [vmem:[%s3640 + $0x58] sm:$0x1]
      %v6164 = vld [vmem:[%s3640 + $0x60] sm:$0xfe]
      %v6165 = vld [vmem:[%s3640 + $0x68] sm:$0xfe]
      %v6166 = vld [vmem:[%s3640 + $0x70] sm:$0xff]
      %v6167 = vld [vmem:[%s3640 + $0x78] sm:$0xff]
      %v6168 = vld [vmem:[%s3640 + $0x80] sm:$0x1]
      %v6169 = vld [vmem:[%s3640 + $0x88] sm:$0x1]
      %v6170 = vld [vmem:[%s3640 + $0x90] sm:$0xfe]
      %v6171 = vld [vmem:[%s3640 + $0x98] sm:$0xfe]
      %v6172 = vld [vmem:[%s3640 + $0xa0] sm:$0xff]
      %v6173 = vld [vmem:[%s3640 + $0xa8] sm:$0xff]
      %v6174 = vld [vmem:[%s3640 + $0xb0] sm:$0x1]
      %v6175 = vld [vmem:[%s3640 + $0xb8] sm:$0x1]
      %v6176 = vld [vmem:[%s3640 + $0xc0] sm:$0xfe]
      %v6177 = vld [vmem:[%s3640 + $0xc8] sm:$0xfe]
      %v6178 = vld [vmem:[%s3640 + $0xd0] sm:$0xff]
      %v6179 = vld [vmem:[%s3640 + $0xd8] sm:$0xff]
      %v6180 = vld [vmem:[%s3640 + $0xe0] sm:$0x1]
      %v6181 = vld [vmem:[%s3640 + $0xe8] sm:$0x1]
      %v6182 = vld [vmem:[%s3640 + $0xf0] sm:$0xfe]
      %v6183 = vld [vmem:[%s3640 + $0xf8] sm:$0xfe]
      %v6184 = vld [vmem:[%s3640 + $0x100] sm:$0xff]
      %v6185 = vld [vmem:[%s3640 + $0x108] sm:$0xff]
      %v6186 = vld [vmem:[%s3640 + $0x110] sm:$0x1]
      %v6187 = vld [vmem:[%s3640 + $0x118] sm:$0x1]
      %v6188 = vld [vmem:[%s3640 + $0x120] sm:$0xfe]
      %v6189 = vld [vmem:[%s3640 + $0x128] sm:$0xfe]
      %v6190 = vld [vmem:[%s3640 + $0x130] sm:$0xff]
      %v6191 = vld [vmem:[%s3640 + $0x138] sm:$0xff]
      %v6192 = vld [vmem:[%s3640 + $0x140] sm:$0x1]
      %v6193 = vld [vmem:[%s3640 + $0x148] sm:$0x1]
      %v6194 = vld [vmem:[%s3640 + $0x150] sm:$0xfe]
      %v6195 = vld [vmem:[%s3640 + $0x158] sm:$0xfe]
      %v6196 = vld [vmem:[%s3640 + $0x160] sm:$0xff]
      %v6197 = vld [vmem:[%s3640 + $0x168] sm:$0xff]
      %v6198 = vld [vmem:[%s3640 + $0x170] sm:$0x1]
      %v6199 = vld [vmem:[%s3640 + $0x178] sm:$0x1]
      %v6200 = vld [vmem:[%s3640 + $0x180] sm:$0xfe]
      %v6201 = vld [vmem:[%s3640 + $0x188] sm:$0xfe]
      %v6202 = vld [vmem:[%s3640 + $0x190] sm:$0xff]
      %v6203 = vld [vmem:[%s3640 + $0x198] sm:$0xff]
      %v6204 = vld [vmem:[%s3640 + $0x1a0] sm:$0x1]
      %v6205 = vld [vmem:[%s3640 + $0x1a8] sm:$0x1]
      %v6206 = vld [vmem:[%s3640 + $0x1b0] sm:$0xfe]
      %v6207 = vld [vmem:[%s3640 + $0x1b8] sm:$0xfe]
      %v6208 = vld [vmem:[%s3640 + $0x1c0] sm:$0xff]
      %v6209 = vld [vmem:[%s3640 + $0x1c8] sm:$0xff]
      %v6210 = vld [vmem:[%s3640 + $0x1d0] sm:$0x1]
      %v6211 = vld [vmem:[%s3640 + $0x1d8] sm:$0x1]
      %v6212 = vld [vmem:[%s3640 + $0x1e0] sm:$0xfe]
      %v6213 = vld [vmem:[%s3640 + $0x1e8] sm:$0xfe]
      %v6214 = vld [vmem:[%s3640 + $0x1f0] sm:$0xff]
      %v6215 = vld [vmem:[%s3640 + $0x1f8] sm:$0xff]
      %v6216 = vld [vmem:[%s3640 + $0x200] sm:$0x1]
      %v6217 = vld [vmem:[%s3640 + $0x208] sm:$0x1]
      %v6218 = vld [vmem:[%s3640 + $0x210] sm:$0xfe]
      %v6219 = vld [vmem:[%s3640 + $0x218] sm:$0xfe]
      %v6220 = vld [vmem:[%s3640 + $0x220] sm:$0xff]
      %v6221 = vld [vmem:[%s3640 + $0x228] sm:$0xff]
      %v6222 = vld [vmem:[%s3640 + $0x230] sm:$0x1]
      %v6223 = vld [vmem:[%s3640 + $0x238] sm:$0x1]
      %v6224 = vld [vmem:[%s3640 + $0x240] sm:$0xfe]
      %v6225 = vld [vmem:[%s3640 + $0x248] sm:$0xfe]
      %v6226 = vld [vmem:[%s3640 + $0x250] sm:$0xff]
      %v6227 = vld [vmem:[%s3640 + $0x258] sm:$0xff]
      %v6228 = vld [vmem:[%s3640 + $0x260] sm:$0x1]
      %v6229 = vld [vmem:[%s3640 + $0x268] sm:$0x1]
      %v6230 = vld [vmem:[%s3640 + $0x270] sm:$0xfe]
      %v6231 = vld [vmem:[%s3640 + $0x278] sm:$0xfe]
      %v6232 = vld [vmem:[%s3640 + $0x280] sm:$0xff]
      %v6233 = vld [vmem:[%s3640 + $0x288] sm:$0xff]
      %v6234 = vld [vmem:[%s3640 + $0x290] sm:$0x1]
      %v6235 = vld [vmem:[%s3640 + $0x298] sm:$0x1]
      %v6236 = vld [vmem:[%s3640 + $0x2a0] sm:$0xfe]
      %v6237 = vld [vmem:[%s3640 + $0x2a8] sm:$0xfe]
      %v6238 = vld [vmem:[%s3640 + $0x2b0] sm:$0xff]
      %v6239 = vld [vmem:[%s3640 + $0x2b8] sm:$0xff]
      %v6240 = vld [vmem:[%s3640 + $0x2c0] sm:$0x1]
      %v6241 = vld [vmem:[%s3640 + $0x2c8] sm:$0x1]
      %v6242 = vld [vmem:[%s3640 + $0x2d0] sm:$0xfe]
      %v6243 = vld [vmem:[%s3640 + $0x2d8] sm:$0xfe]
      %v6244 = vld [vmem:[%s3640 + $0x2e0] sm:$0xff]
      %v6245 = vld [vmem:[%s3640 + $0x2e8] sm:$0xff]
      %v6246 = vld [vmem:[%s3640 + $0x2f0] sm:$0x1]
      %v6247 = vld [vmem:[%s3640 + $0x2f8] sm:$0x1]
      %v6344 = vrot.slane %v6152, 1
      %v6345 = vrot.slane %v6154, 1
      %v6346 = vsel %vm4241, %v6344, %v6345
      %v6347 = vrot.slane %v6153, 1
      %v6348 = vrot.slane %v6155, 1
      %v6349 = vsel %vm4241, %v6347, %v6348
      %v6350 = vrot.slane %v6156, 1
      %v6351 = vsel %vm4241, %v6345, %v6350
      %v6352 = vrot.slane %v6157, 1
      %v6353 = vsel %vm4241, %v6348, %v6352
      %v6354 = vrot.slane %v6158, 1
      %v6355 = vrot.slane %v6160, 1
      %v6356 = vsel %vm4241, %v6354, %v6355
      %v6357 = vrot.slane %v6159, 1
      %v6358 = vrot.slane %v6161, 1
      %v6359 = vsel %vm4241, %v6357, %v6358
      %v6360 = vrot.slane %v6162, 1
      %v6361 = vsel %vm4241, %v6355, %v6360
      %v6362 = vrot.slane %v6163, 1
      %v6363 = vsel %vm4241, %v6358, %v6362
      %v6364 = vrot.slane %v6164, 1
      %v6365 = vrot.slane %v6166, 1
      %v6366 = vsel %vm4241, %v6364, %v6365
      %v6367 = vrot.slane %v6165, 1
      %v6368 = vrot.slane %v6167, 1
      %v6369 = vsel %vm4241, %v6367, %v6368
      %v6370 = vrot.slane %v6168, 1
      %v6371 = vsel %vm4241, %v6365, %v6370
      %v6372 = vrot.slane %v6169, 1
      %v6373 = vsel %vm4241, %v6368, %v6372
      %v6374 = vrot.slane %v6170, 1
      %v6375 = vrot.slane %v6172, 1
      %v6376 = vsel %vm4241, %v6374, %v6375
      %v6377 = vrot.slane %v6171, 1
      %v6378 = vrot.slane %v6173, 1
      %v6379 = vsel %vm4241, %v6377, %v6378
      %v6380 = vrot.slane %v6174, 1
      %v6381 = vsel %vm4241, %v6375, %v6380
      %v6382 = vrot.slane %v6175, 1
      %v6383 = vsel %vm4241, %v6378, %v6382
      %v6384 = vrot.slane %v6176, 1
      %v6385 = vrot.slane %v6178, 1
      %v6386 = vsel %vm4241, %v6384, %v6385
      %v6387 = vrot.slane %v6177, 1
      %v6388 = vrot.slane %v6179, 1
      %v6389 = vsel %vm4241, %v6387, %v6388
      %v6390 = vrot.slane %v6180, 1
      %v6391 = vsel %vm4241, %v6385, %v6390
      %v6392 = vrot.slane %v6181, 1
      %v6393 = vsel %vm4241, %v6388, %v6392
      %v6394 = vrot.slane %v6182, 1
      %v6395 = vrot.slane %v6184, 1
      %v6396 = vsel %vm4241, %v6394, %v6395
      %v6397 = vrot.slane %v6183, 1
      %v6398 = vrot.slane %v6185, 1
      %v6399 = vsel %vm4241, %v6397, %v6398
      %v6400 = vrot.slane %v6186, 1
      %v6401 = vsel %vm4241, %v6395, %v6400
      %v6402 = vrot.slane %v6187, 1
      %v6403 = vsel %vm4241, %v6398, %v6402
      %v6404 = vrot.slane %v6188, 1
      %v6405 = vrot.slane %v6190, 1
      %v6406 = vsel %vm4241, %v6404, %v6405
      %v6407 = vrot.slane %v6189, 1
      %v6408 = vrot.slane %v6191, 1
      %v6409 = vsel %vm4241, %v6407, %v6408
      %v6410 = vrot.slane %v6192, 1
      %v6411 = vsel %vm4241, %v6405, %v6410
      %v6412 = vrot.slane %v6193, 1
      %v6413 = vsel %vm4241, %v6408, %v6412
      %v6414 = vrot.slane %v6194, 1
      %v6415 = vrot.slane %v6196, 1
      %v6416 = vsel %vm4241, %v6414, %v6415
      %v6417 = vrot.slane %v6195, 1
      %v6418 = vrot.slane %v6197, 1
      %v6419 = vsel %vm4241, %v6417, %v6418
      %v6420 = vrot.slane %v6198, 1
      %v6421 = vsel %vm4241, %v6415, %v6420
      %v6422 = vrot.slane %v6199, 1
      %v6423 = vsel %vm4241, %v6418, %v6422
      %v6424 = vrot.slane %v6200, 1
      %v6425 = vrot.slane %v6202, 1
      %v6426 = vsel %vm4241, %v6424, %v6425
      %v6427 = vrot.slane %v6201, 1
      %v6428 = vrot.slane %v6203, 1
      %v6429 = vsel %vm4241, %v6427, %v6428
      %v6430 = vrot.slane %v6204, 1
      %v6431 = vsel %vm4241, %v6425, %v6430
      %v6432 = vrot.slane %v6205, 1
      %v6433 = vsel %vm4241, %v6428, %v6432
      %v6434 = vrot.slane %v6206, 1
      %v6435 = vrot.slane %v6208, 1
      %v6436 = vsel %vm4241, %v6434, %v6435
      %v6437 = vrot.slane %v6207, 1
      %v6438 = vrot.slane %v6209, 1
      %v6439 = vsel %vm4241, %v6437, %v6438
      %v6440 = vrot.slane %v6210, 1
      %v6441 = vsel %vm4241, %v6435, %v6440
      %v6442 = vrot.slane %v6211, 1
      %v6443 = vsel %vm4241, %v6438, %v6442
      %v6444 = vrot.slane %v6212, 1
      %v6445 = vrot.slane %v6214, 1
      %v6446 = vsel %vm4241, %v6444, %v6445
      %v6447 = vrot.slane %v6213, 1
      %v6448 = vrot.slane %v6215, 1
      %v6449 = vsel %vm4241, %v6447, %v6448
      %v6450 = vrot.slane %v6216, 1
      %v6451 = vsel %vm4241, %v6445, %v6450
      %v6452 = vrot.slane %v6217, 1
      %v6453 = vsel %vm4241, %v6448, %v6452
      %v6454 = vrot.slane %v6218, 1
      %v6455 = vrot.slane %v6220, 1
      %v6456 = vsel %vm4241, %v6454, %v6455
      %v6457 = vrot.slane %v6219, 1
      %v6458 = vrot.slane %v6221, 1
      %v6459 = vsel %vm4241, %v6457, %v6458
      %v6460 = vrot.slane %v6222, 1
      %v6461 = vsel %vm4241, %v6455, %v6460
      %v6462 = vrot.slane %v6223, 1
      %v6463 = vsel %vm4241, %v6458, %v6462
      %v6464 = vrot.slane %v6224, 1
      %v6465 = vrot.slane %v6226, 1
      %v6466 = vsel %vm4241, %v6464, %v6465
      %v6467 = vrot.slane %v6225, 1
      %v6468 = vrot.slane %v6227, 1
      %v6469 = vsel %vm4241, %v6467, %v6468
      %v6470 = vrot.slane %v6228, 1
      %v6471 = vsel %vm4241, %v6465, %v6470
      %v6472 = vrot.slane %v6229, 1
      %v6473 = vsel %vm4241, %v6468, %v6472
      %v6474 = vrot.slane %v6230, 1
      %v6475 = vrot.slane %v6232, 1
      %v6476 = vsel %vm4241, %v6474, %v6475
      %v6477 = vrot.slane %v6231, 1
      %v6478 = vrot.slane %v6233, 1
      %v6479 = vsel %vm4241, %v6477, %v6478
      %v6480 = vrot.slane %v6234, 1
      %v6481 = vsel %vm4241, %v6475, %v6480
      %v6482 = vrot.slane %v6235, 1
      %v6483 = vsel %vm4241, %v6478, %v6482
      %v6484 = vrot.slane %v6236, 1
      %v6485 = vrot.slane %v6238, 1
      %v6486 = vsel %vm4241, %v6484, %v6485
      %v6487 = vrot.slane %v6237, 1
      %v6488 = vrot.slane %v6239, 1
      %v6489 = vsel %vm4241, %v6487, %v6488
      %v6490 = vrot.slane %v6240, 1
      %v6491 = vsel %vm4241, %v6485, %v6490
      %v6492 = vrot.slane %v6241, 1
      %v6493 = vsel %vm4241, %v6488, %v6492
      %v6494 = vrot.slane %v6242, 1
      %v6495 = vrot.slane %v6244, 1
      %v6496 = vsel %vm4241, %v6494, %v6495
      %v6497 = vrot.slane %v6243, 1
      %v6498 = vrot.slane %v6245, 1
      %v6499 = vsel %vm4241, %v6497, %v6498
      %v6500 = vrot.slane %v6246, 1
      %v6501 = vsel %vm4241, %v6495, %v6500
      %v6502 = vrot.slane %v6247, 1
      %v6503 = vsel %vm4241, %v6498, %v6502
      %v6568 = vpack.c.bf16 %v6351, %v6346
      %v6569 = vpack.c.bf16 %v6353, %v6349
      %v6570 = vpack.c.bf16 %v6361, %v6356
      %v6571 = vpack.c.bf16 %v6363, %v6359
      %v6572 = vpack.c.bf16 %v6371, %v6366
      %v6573 = vpack.c.bf16 %v6373, %v6369
      %v6574 = vpack.c.bf16 %v6381, %v6376
      %v6575 = vpack.c.bf16 %v6383, %v6379
      %v6576 = vpack.c.bf16 %v6391, %v6386
      %v6577 = vpack.c.bf16 %v6393, %v6389
      %v6578 = vpack.c.bf16 %v6401, %v6396
      %v6579 = vpack.c.bf16 %v6403, %v6399
      %v6580 = vpack.c.bf16 %v6411, %v6406
      %v6581 = vpack.c.bf16 %v6413, %v6409
      %v6582 = vpack.c.bf16 %v6421, %v6416
      %v6583 = vpack.c.bf16 %v6423, %v6419
      %v6584 = vpack.c.bf16 %v6431, %v6426
      %v6585 = vpack.c.bf16 %v6433, %v6429
      %v6586 = vpack.c.bf16 %v6441, %v6436
      %v6587 = vpack.c.bf16 %v6443, %v6439
      %v6588 = vpack.c.bf16 %v6451, %v6446
      %v6589 = vpack.c.bf16 %v6453, %v6449
      %v6590 = vpack.c.bf16 %v6461, %v6456
      %v6591 = vpack.c.bf16 %v6463, %v6459
      %v6592 = vpack.c.bf16 %v6471, %v6466
      %v6593 = vpack.c.bf16 %v6473, %v6469
      %v6594 = vpack.c.bf16 %v6481, %v6476
      %v6595 = vpack.c.bf16 %v6483, %v6479
      %v6596 = vpack.c.bf16 %v6491, %v6486
      %v6597 = vpack.c.bf16 %v6493, %v6489
      %v6598 = vpack.c.bf16 %v6501, %v6496
      %v6599 = vpack.c.bf16 %v6503, %v6499
      %s6600 = scalar_lea.vmem %s2, 288
      %v6601 = vld [vmem:[%s6600] sm:$0xf]
      %v6602 = vld [vmem:[%s6600 + $0x4] sm:$0xf]
      %v6603 = vld [vmem:[%s6600 + $0x8] sm:$0xf]
      %v6604 = vld [vmem:[%s6600 + $0xc] sm:$0xf]
      %v6605 = vld [vmem:[%s6600 + $0x10] sm:$0xf]
      %v6606 = vld [vmem:[%s6600 + $0x14] sm:$0xf]
      %v6607 = vld [vmem:[%s6600 + $0x18] sm:$0xf]
      %v6608 = vld [vmem:[%s6600 + $0x1c] sm:$0xf]
      %v6609 = vld [vmem:[%s6600 + $0x20] sm:$0xf]
      %v6610 = vld [vmem:[%s6600 + $0x24] sm:$0xf]
      %v6611 = vld [vmem:[%s6600 + $0x28] sm:$0xf]
      %v6612 = vld [vmem:[%s6600 + $0x2c] sm:$0xf]
      %v6613 = vld [vmem:[%s6600 + $0x30] sm:$0xf]
      %v6614 = vld [vmem:[%s6600 + $0x34] sm:$0xf]
      %v6615 = vld [vmem:[%s6600 + $0x38] sm:$0xf]
      %v6616 = vld [vmem:[%s6600 + $0x3c] sm:$0xf]
      %v6617 = vld [vmem:[%s6600 + $0x40] sm:$0xf]
      %v6618 = vld [vmem:[%s6600 + $0x44] sm:$0xf]
      %v6637 = vunpack.c.l.b16 %v6601
      %v6638 = vunpack.c.l.b16 %v6602
      %v6639 = vunpack.c.l.b16 %v6603
      %v6640 = vunpack.c.l.b16 %v6604
      %v6641 = vunpack.c.l.b16 %v6605
      %v6642 = vunpack.c.l.b16 %v6606
      %v6643 = vunpack.c.l.b16 %v6607
      %v6644 = vunpack.c.l.b16 %v6608
      %v6645 = vunpack.c.l.b16 %v6609
      %v6646 = vunpack.c.l.b16 %v6610
      %v6647 = vunpack.c.l.b16 %v6611
      %v6648 = vunpack.c.l.b16 %v6612
      %v6649 = vunpack.c.l.b16 %v6613
      %v6650 = vunpack.c.l.b16 %v6614
      %v6651 = vunpack.c.l.b16 %v6615
      %v6652 = vunpack.c.l.b16 %v6616
      %v6653 = vunpack.c.l.b16 %v6617
      %v6654 = vunpack.c.l.b16 %v6618
      %v6655 = vpack.c.b16 %v6638, %v6637
      %v6656 = vpack.c.b16 %v6640, %v6639
      %v6657 = vpack.c.b16 %v6642, %v6641
      %v6658 = vpack.c.b16 %v6644, %v6643
      %v6659 = vpack.c.b16 %v6646, %v6645
      %v6660 = vpack.c.b16 %v6648, %v6647
      %v6661 = vpack.c.b16 %v6650, %v6649
      %v6662 = vpack.c.b16 %v6652, %v6651
      %v6663 = vpack.c.b16 %v6654, %v6653
      %v6674 = vsel %vm3626, %v6569, 0
      %v6677 = vsel %vm3626, %v6571, 0
      %v6680 = vsel %vm3626, %v6573, 0
      %v6683 = vsel %vm3626, %v6575, 0
      %v6686 = vsel %vm3626, %v6577, 0
      %v6689 = vsel %vm3626, %v6579, 0
      %v6692 = vsel %vm3626, %v6581, 0
      %v6695 = vsel %vm3626, %v6583, 0
      %v6698 = vsel %vm3626, %v6585, 0
      %v6701 = vsel %vm3626, %v6587, 0
      %v6704 = vsel %vm3626, %v6589, 0
      %v6707 = vsel %vm3626, %v6591, 0
      %v6710 = vsel %vm3626, %v6593, 0
      %v6713 = vsel %vm3626, %v6595, 0
      %v6716 = vsel %vm3626, %v6597, 0
      %v6719 = vsel %vm3626, %v6599, 0
      %6721 = vmatprep.subr.bf16.mxu0 0
      %6722 = vmatpush1.bf16.msra.mxu0 %v6655
      %6723 = vmatprep.subr.bf16.mxu0 0
      %6724 = vmatpush1.bf16.msra.mxu0 %v6656
      %6725 = vmatprep.subr.bf16.mxu0 0
      %6726 = vmatpush1.bf16.msra.mxu0 %v6657
      %6727 = vmatprep.subr.bf16.mxu0 0
      %6728 = vmatpush1.bf16.msra.mxu0 %v6658
      %6729 = vmatprep.subr.bf16.mxu0 0
      %6730 = vmatpush1.bf16.msra.mxu0 %v6659
      %6731 = vmatprep.subr.bf16.mxu0 0
      %6732 = vmatpush1.bf16.msra.mxu0 %v6660
      %6733 = vmatprep.subr.bf16.mxu0 0
      %6734 = vmatpush1.bf16.msra.mxu0 %v6661
      %6735 = vmatprep.subr.bf16.mxu0 0
      %6736 = vmatpush1.bf16.msra.mxu0 %v6662
      %6737 = vmatprep.subr.bf16.mxu0 0
      %6738 = vmatpush1.bf16.msra.mxu0 %v6663
      %6739 = vmatprep.subr.bf16.mxu0 0
      %6740 = vmatpush1.bf16.msra.mxu0 0
      %6741 = vmatprep.subr.bf16.mxu0 0
      %6742 = vmatpush1.bf16.msra.mxu0 0
      %6743 = vmatprep.subr.bf16.mxu0 0
      %6744 = vmatpush1.bf16.msra.mxu0 0
      %6745 = vmatprep.subr.bf16.mxu0 0
      %6746 = vmatpush1.bf16.msra.mxu0 0
      %6747 = vmatprep.subr.bf16.mxu0 0
      %6748 = vmatpush1.bf16.msra.mxu0 0
      %6749 = vmatprep.subr.bf16.mxu0 0
      %6750 = vmatpush1.bf16.msra.mxu0 0
      %6751 = vmatprep.subr.bf16.mxu0 0
      %6752 = vmatpush1.bf16.msra.mxu0 0
      %6753 = vmatprep.mubr.bf16.mxu0 %v6674
      %6754 = vmatmul.mubr.bf16.gmra.mrb[0].mxu0 %v6568
      %v6755 = vpop.f32.mrb[0].mxu0
      %v6756 = vadd.f32 0.0, %v6755
      %v6757 = vpop.f32.mrb[0].mxu0
      %v6758 = vpop.f32.mrb[0].mxu0
      %v6759 = vadd.f32 0.0, %v6758
      %v6760 = vpop.f32.mrb[0].mxu0
      %6761 = vmatprep.mubr.bf16.mxu0 %v6677
      %6762 = vmatmul.mubr.bf16.gmra.mrb[0].mxu0 %v6570
      %v6763 = vpop.f32.mrb[0].mxu0
      %v6764 = vadd.f32 0.0, %v6763
      %v6765 = vpop.f32.mrb[0].mxu0
      %v6766 = vpop.f32.mrb[0].mxu0
      %v6767 = vadd.f32 0.0, %v6766
      %v6768 = vpop.f32.mrb[0].mxu0
      %6769 = vmatprep.mubr.bf16.mxu0 %v6680
      %6770 = vmatmul.mubr.bf16.gmra.mrb[0].mxu0 %v6572
      %v6771 = vpop.f32.mrb[0].mxu0
      %v6772 = vadd.f32 0.0, %v6771
      %v6773 = vpop.f32.mrb[0].mxu0
      %v6774 = vpop.f32.mrb[0].mxu0
      %v6775 = vadd.f32 0.0, %v6774
      %v6776 = vpop.f32.mrb[0].mxu0
      %6777 = vmatprep.mubr.bf16.mxu0 %v6683
      %6778 = vmatmul.mubr.bf16.gmra.mrb[0].mxu0 %v6574
      %v6779 = vpop.f32.mrb[0].mxu0
      %v6780 = vadd.f32 0.0, %v6779
      %v6781 = vpop.f32.mrb[0].mxu0
      %v6782 = vpop.f32.mrb[0].mxu0
      %v6783 = vadd.f32 0.0, %v6782
      %v6784 = vpop.f32.mrb[0].mxu0
      %6785 = vmatprep.mubr.bf16.mxu0 %v6686
      %6786 = vmatmul.mubr.bf16.gmra.mrb[0].mxu0 %v6576
      %v6787 = vpop.f32.mrb[0].mxu0
      %v6788 = vadd.f32 0.0, %v6787
      %v6789 = vpop.f32.mrb[0].mxu0
      %v6790 = vpop.f32.mrb[0].mxu0
      %v6791 = vadd.f32 0.0, %v6790
      %v6792 = vpop.f32.mrb[0].mxu0
      %6793 = vmatprep.mubr.bf16.mxu0 %v6689
      %6794 = vmatmul.mubr.bf16.gmra.mrb[0].mxu0 %v6578
      %v6795 = vpop.f32.mrb[0].mxu0
      %v6796 = vadd.f32 0.0, %v6795
      %v6797 = vpop.f32.mrb[0].mxu0
      %v6798 = vpop.f32.mrb[0].mxu0
      %v6799 = vadd.f32 0.0, %v6798
      %v6800 = vpop.f32.mrb[0].mxu0
      %6801 = vmatprep.mubr.bf16.mxu0 %v6692
      %6802 = vmatmul.mubr.bf16.gmra.mrb[0].mxu0 %v6580
      %v6803 = vpop.f32.mrb[0].mxu0
      %v6804 = vadd.f32 0.0, %v6803
      %v6805 = vpop.f32.mrb[0].mxu0
      %v6806 = vpop.f32.mrb[0].mxu0
      %v6807 = vadd.f32 0.0, %v6806
      %v6808 = vpop.f32.mrb[0].mxu0
      %6809 = vmatprep.mubr.bf16.mxu0 %v6695
      %6810 = vmatmul.mubr.bf16.gmra.mrb[0].mxu0 %v6582
      %v6811 = vpop.f32.mrb[0].mxu0
      %v6812 = vadd.f32 0.0, %v6811
      %v6813 = vpop.f32.mrb[0].mxu0
      %v6814 = vpop.f32.mrb[0].mxu0
      %v6815 = vadd.f32 0.0, %v6814
      %v6816 = vpop.f32.mrb[0].mxu0
      %6817 = vmatprep.mubr.bf16.mxu0 %v6698
      %6818 = vmatmul.mubr.bf16.gmra.mrb[0].mxu0 %v6584
      %v6819 = vpop.f32.mrb[0].mxu0
      %v6820 = vadd.f32 0.0, %v6819
      %v6821 = vpop.f32.mrb[0].mxu0
      %v6822 = vpop.f32.mrb[0].mxu0
      %v6823 = vadd.f32 0.0, %v6822
      %v6824 = vpop.f32.mrb[0].mxu0
      %6825 = vmatprep.mubr.bf16.mxu0 %v6701
      %6826 = vmatmul.mubr.bf16.gmra.mrb[0].mxu0 %v6586
      %v6827 = vpop.f32.mrb[0].mxu0
      %v6828 = vadd.f32 0.0, %v6827
      %v6829 = vpop.f32.mrb[0].mxu0
      %v6830 = vpop.f32.mrb[0].mxu0
      %v6831 = vadd.f32 0.0, %v6830
      %v6832 = vpop.f32.mrb[0].mxu0
      %6833 = vmatprep.mubr.bf16.mxu0 %v6704
      %6834 = vmatmul.mubr.bf16.gmra.mrb[0].mxu0 %v6588
      %v6835 = vpop.f32.mrb[0].mxu0
      %v6836 = vadd.f32 0.0, %v6835
      %v6837 = vpop.f32.mrb[0].mxu0
      %v6838 = vpop.f32.mrb[0].mxu0
      %v6839 = vadd.f32 0.0, %v6838
      %v6840 = vpop.f32.mrb[0].mxu0
      %6841 = vmatprep.mubr.bf16.mxu0 %v6707
      %6842 = vmatmul.mubr.bf16.gmra.mrb[0].mxu0 %v6590
      %v6843 = vpop.f32.mrb[0].mxu0
      %v6844 = vadd.f32 0.0, %v6843
      %v6845 = vpop.f32.mrb[0].mxu0
      %v6846 = vpop.f32.mrb[0].mxu0
      %v6847 = vadd.f32 0.0, %v6846
      %v6848 = vpop.f32.mrb[0].mxu0
      %6849 = vmatprep.mubr.bf16.mxu0 %v6710
      %6850 = vmatmul.mubr.bf16.gmra.mrb[0].mxu0 %v6592
      %v6851 = vpop.f32.mrb[0].mxu0
      %v6852 = vadd.f32 0.0, %v6851
      %v6853 = vpop.f32.mrb[0].mxu0
      %v6854 = vpop.f32.mrb[0].mxu0
      %v6855 = vadd.f32 0.0, %v6854
      %v6856 = vpop.f32.mrb[0].mxu0
      %6857 = vmatprep.mubr.bf16.mxu0 %v6713
      %6858 = vmatmul.mubr.bf16.gmra.mrb[0].mxu0 %v6594
      %v6859 = vpop.f32.mrb[0].mxu0
      %v6860 = vadd.f32 0.0, %v6859
      %v6861 = vpop.f32.mrb[0].mxu0
      %v6862 = vpop.f32.mrb[0].mxu0
      %v6863 = vadd.f32 0.0, %v6862
      %v6864 = vpop.f32.mrb[0].mxu0
      %6865 = vmatprep.mubr.bf16.mxu0 %v6716
      %6866 = vmatmul.mubr.bf16.gmra.mrb[0].mxu0 %v6596
      %v6867 = vpop.f32.mrb[0].mxu0
      %v6868 = vadd.f32 0.0, %v6867
      %v6869 = vpop.f32.mrb[0].mxu0
      %v6870 = vpop.f32.mrb[0].mxu0
      %v6871 = vadd.f32 0.0, %v6870
      %v6872 = vpop.f32.mrb[0].mxu0
      %6873 = vmatprep.mubr.bf16.mxu0 %v6719
      %6874 = vmatmul.mubr.bf16.gmra.mrb[0].mxu0 %v6598
      %v6875 = vpop.f32.mrb[0].mxu0
      %v6876 = vadd.f32 0.0, %v6875
      %v6877 = vpop.f32.mrb[0].mxu0
      %v6878 = vpop.f32.mrb[0].mxu0
      %v6879 = vadd.f32 0.0, %v6878
      %v6880 = vpop.f32.mrb[0].mxu0
      %6881 = vdwg.mxu0
      %v6882 = vadd.f32 %v6120, %v6756
      %v6883 = vadd.f32 %v6121, %v6759
      %v6884 = vadd.f32 %v6122, %v6764
      %v6885 = vadd.f32 %v6123, %v6767
      %v6886 = vadd.f32 %v6124, %v6772
      %v6887 = vadd.f32 %v6125, %v6775
      %v6888 = vadd.f32 %v6126, %v6780
      %v6889 = vadd.f32 %v6127, %v6783
      %v6890 = vadd.f32 %v6128, %v6788
      %v6891 = vadd.f32 %v6129, %v6791
      %v6892 = vadd.f32 %v6130, %v6796
      %v6893 = vadd.f32 %v6131, %v6799
      %v6894 = vadd.f32 %v6132, %v6804
      %v6895 = vadd.f32 %v6133, %v6807
      %v6896 = vadd.f32 %v6134, %v6812
      %v6897 = vadd.f32 %v6135, %v6815
      %v6898 = vadd.f32 %v6136, %v6820
      %v6899 = vadd.f32 %v6137, %v6823
      %v6900 = vadd.f32 %v6138, %v6828
      %v6901 = vadd.f32 %v6139, %v6831
      %v6902 = vadd.f32 %v6140, %v6836
      %v6903 = vadd.f32 %v6141, %v6839
      %v6904 = vadd.f32 %v6142, %v6844
      %v6905 = vadd.f32 %v6143, %v6847
      %v6906 = vadd.f32 %v6144, %v6852
      %v6907 = vadd.f32 %v6145, %v6855
      %v6908 = vadd.f32 %v6146, %v6860
      %v6909 = vadd.f32 %v6147, %v6863
      %v6910 = vadd.f32 %v6148, %v6868
      %v6911 = vadd.f32 %v6149, %v6871
      %v6912 = vadd.f32 %v6150, %v6876
      %v6913 = vadd.f32 %v6151, %v6879
      %v6914 = vld [vmem:[%s3640] sm:$0xfc]
      %v6915 = vld [vmem:[%s3640 + $0x8] sm:$0xfc]
      %v6916 = vld [vmem:[%s3640 + $0x20] sm:$0x3]
      %v6917 = vld [vmem:[%s3640 + $0x28] sm:$0x3]
      %v6918 = vld [vmem:[%s3640 + $0x30] sm:$0xfc]
      %v6919 = vld [vmem:[%s3640 + $0x38] sm:$0xfc]
      %v6920 = vld [vmem:[%s3640 + $0x50] sm:$0x3]
      %v6921 = vld [vmem:[%s3640 + $0x58] sm:$0x3]
      %v6922 = vld [vmem:[%s3640 + $0x60] sm:$0xfc]
      %v6923 = vld [vmem:[%s3640 + $0x68] sm:$0xfc]
      %v6924 = vld [vmem:[%s3640 + $0x80] sm:$0x3]
      %v6925 = vld [vmem:[%s3640 + $0x88] sm:$0x3]
      %v6926 = vld [vmem:[%s3640 + $0x90] sm:$0xfc]
      %v6927 = vld [vmem:[%s3640 + $0x98] sm:$0xfc]
      %v6928 = vld [vmem:[%s3640 + $0xb0] sm:$0x3]
      %v6929 = vld [vmem:[%s3640 + $0xb8] sm:$0x3]
      %v6930 = vld [vmem:[%s3640 + $0xc0] sm:$0xfc]
      %v6931 = vld [vmem:[%s3640 + $0xc8] sm:$0xfc]
      %v6932 = vld [vmem:[%s3640 + $0xe0] sm:$0x3]
      %v6933 = vld [vmem:[%s3640 + $0xe8] sm:$0x3]
      %v6934 = vld [vmem:[%s3640 + $0xf0] sm:$0xfc]
      %v6935 = vld [vmem:[%s3640 + $0xf8] sm:$0xfc]
      %v6936 = vld [vmem:[%s3640 + $0x110] sm:$0x3]
      %v6937 = vld [vmem:[%s3640 + $0x118] sm:$0x3]
      %v6938 = vld [vmem:[%s3640 + $0x120] sm:$0xfc]
      %v6939 = vld [vmem:[%s3640 + $0x128] sm:$0xfc]
      %v6940 = vld [vmem:[%s3640 + $0x140] sm:$0x3]
      %v6941 = vld [vmem:[%s3640 + $0x148] sm:$0x3]
      %v6942 = vld [vmem:[%s3640 + $0x150] sm:$0xfc]
      %v6943 = vld [vmem:[%s3640 + $0x158] sm:$0xfc]
      %v6944 = vld [vmem:[%s3640 + $0x170] sm:$0x3]
      %v6945 = vld [vmem:[%s3640 + $0x178] sm:$0x3]
      %v6946 = vld [vmem:[%s3640 + $0x180] sm:$0xfc]
      %v6947 = vld [vmem:[%s3640 + $0x188] sm:$0xfc]
      %v6948 = vld [vmem:[%s3640 + $0x1a0] sm:$0x3]
      %v6949 = vld [vmem:[%s3640 + $0x1a8] sm:$0x3]
      %v6950 = vld [vmem:[%s3640 + $0x1b0] sm:$0xfc]
      %v6951 = vld [vmem:[%s3640 + $0x1b8] sm:$0xfc]
      %v6952 = vld [vmem:[%s3640 + $0x1d0] sm:$0x3]
      %v6953 = vld [vmem:[%s3640 + $0x1d8] sm:$0x3]
      %v6954 = vld [vmem:[%s3640 + $0x1e0] sm:$0xfc]
      %v6955 = vld [vmem:[%s3640 + $0x1e8] sm:$0xfc]
      %v6956 = vld [vmem:[%s3640 + $0x200] sm:$0x3]
      %v6957 = vld [vmem:[%s3640 + $0x208] sm:$0x3]
      %v6958 = vld [vmem:[%s3640 + $0x210] sm:$0xfc]
      %v6959 = vld [vmem:[%s3640 + $0x218] sm:$0xfc]
      %v6960 = vld [vmem:[%s3640 + $0x230] sm:$0x3]
      %v6961 = vld [vmem:[%s3640 + $0x238] sm:$0x3]
      %v6962 = vld [vmem:[%s3640 + $0x240] sm:$0xfc]
      %v6963 = vld [vmem:[%s3640 + $0x248] sm:$0xfc]
      %v6964 = vld [vmem:[%s3640 + $0x260] sm:$0x3]
      %v6965 = vld [vmem:[%s3640 + $0x268] sm:$0x3]
      %v6966 = vld [vmem:[%s3640 + $0x270] sm:$0xfc]
      %v6967 = vld [vmem:[%s3640 + $0x278] sm:$0xfc]
      %v6968 = vld [vmem:[%s3640 + $0x290] sm:$0x3]
      %v6969 = vld [vmem:[%s3640 + $0x298] sm:$0x3]
      %v6970 = vld [vmem:[%s3640 + $0x2a0] sm:$0xfc]
      %v6971 = vld [vmem:[%s3640 + $0x2a8] sm:$0xfc]
      %v6972 = vld [vmem:[%s3640 + $0x2c0] sm:$0x3]
      %v6973 = vld [vmem:[%s3640 + $0x2c8] sm:$0x3]
      %v6974 = vld [vmem:[%s3640 + $0x2d0] sm:$0xfc]
      %v6975 = vld [vmem:[%s3640 + $0x2d8] sm:$0xfc]
      %v6976 = vld [vmem:[%s3640 + $0x2f0] sm:$0x3]
      %v6977 = vld [vmem:[%s3640 + $0x2f8] sm:$0x3]
      %v7042 = vrot.slane %v6914, 2
      %v7043 = vrot.slane %v6154, 2
      %v7044 = vsel %vm5171, %v7042, %v7043
      %v7045 = vrot.slane %v6915, 2
      %v7046 = vrot.slane %v6155, 2
      %v7047 = vsel %vm5171, %v7045, %v7046
      %v7048 = vrot.slane %v6916, 2
      %v7049 = vsel %vm5171, %v7043, %v7048
      %v7050 = vrot.slane %v6917, 2
      %v7051 = vsel %vm5171, %v7046, %v7050
      %v7052 = vrot.slane %v6918, 2
      %v7053 = vrot.slane %v6160, 2
      %v7054 = vsel %vm5171, %v7052, %v7053
      %v7055 = vrot.slane %v6919, 2
      %v7056 = vrot.slane %v6161, 2
      %v7057 = vsel %vm5171, %v7055, %v7056
      %v7058 = vrot.slane %v6920, 2
      %v7059 = vsel %vm5171, %v7053, %v7058
      %v7060 = vrot.slane %v6921, 2
      %v7061 = vsel %vm5171, %v7056, %v7060
      %v7062 = vrot.slane %v6922, 2
      %v7063 = vrot.slane %v6166, 2
      %v7064 = vsel %vm5171, %v7062, %v7063
      %v7065 = vrot.slane %v6923, 2
      %v7066 = vrot.slane %v6167, 2
      %v7067 = vsel %vm5171, %v7065, %v7066
      %v7068 = vrot.slane %v6924, 2
      %v7069 = vsel %vm5171, %v7063, %v7068
      %v7070 = vrot.slane %v6925, 2
      %v7071 = vsel %vm5171, %v7066, %v7070
      %v7072 = vrot.slane %v6926, 2
      %v7073 = vrot.slane %v6172, 2
      %v7074 = vsel %vm5171, %v7072, %v7073
      %v7075 = vrot.slane %v6927, 2
      %v7076 = vrot.slane %v6173, 2
      %v7077 = vsel %vm5171, %v7075, %v7076
      %v7078 = vrot.slane %v6928, 2
      %v7079 = vsel %vm5171, %v7073, %v7078
      %v7080 = vrot.slane %v6929, 2
      %v7081 = vsel %vm5171, %v7076, %v7080
      %v7082 = vrot.slane %v6930, 2
      %v7083 = vrot.slane %v6178, 2
      %v7084 = vsel %vm5171, %v7082, %v7083
      %v7085 = vrot.slane %v6931, 2
      %v7086 = vrot.slane %v6179, 2
      %v7087 = vsel %vm5171, %v7085, %v7086
      %v7088 = vrot.slane %v6932, 2
      %v7089 = vsel %vm5171, %v7083, %v7088
      %v7090 = vrot.slane %v6933, 2
      %v7091 = vsel %vm5171, %v7086, %v7090
      %v7092 = vrot.slane %v6934, 2
      %v7093 = vrot.slane %v6184, 2
      %v7094 = vsel %vm5171, %v7092, %v7093
      %v7095 = vrot.slane %v6935, 2
      %v7096 = vrot.slane %v6185, 2
      %v7097 = vsel %vm5171, %v7095, %v7096
      %v7098 = vrot.slane %v6936, 2
      %v7099 = vsel %vm5171, %v7093, %v7098
      %v7100 = vrot.slane %v6937, 2
      %v7101 = vsel %vm5171, %v7096, %v7100
      %v7102 = vrot.slane %v6938, 2
      %v7103 = vrot.slane %v6190, 2
      %v7104 = vsel %vm5171, %v7102, %v7103
      %v7105 = vrot.slane %v6939, 2
      %v7106 = vrot.slane %v6191, 2
      %v7107 = vsel %vm5171, %v7105, %v7106
      %v7108 = vrot.slane %v6940, 2
      %v7109 = vsel %vm5171, %v7103, %v7108
      %v7110 = vrot.slane %v6941, 2
      %v7111 = vsel %vm5171, %v7106, %v7110
      %v7112 = vrot.slane %v6942, 2
      %v7113 = vrot.slane %v6196, 2
      %v7114 = vsel %vm5171, %v7112, %v7113
      %v7115 = vrot.slane %v6943, 2
      %v7116 = vrot.slane %v6197, 2
      %v7117 = vsel %vm5171, %v7115, %v7116
      %v7118 = vrot.slane %v6944, 2
      %v7119 = vsel %vm5171, %v7113, %v7118
      %v7120 = vrot.slane %v6945, 2
      %v7121 = vsel %vm5171, %v7116, %v7120
      %v7122 = vrot.slane %v6946, 2
      %v7123 = vrot.slane %v6202, 2
      %v7124 = vsel %vm5171, %v7122, %v7123
      %v7125 = vrot.slane %v6947, 2
      %v7126 = vrot.slane %v6203, 2
      %v7127 = vsel %vm5171, %v7125, %v7126
      %v7128 = vrot.slane %v6948, 2
      %v7129 = vsel %vm5171, %v7123, %v7128
      %v7130 = vrot.slane %v6949, 2
      %v7131 = vsel %vm5171, %v7126, %v7130
      %v7132 = vrot.slane %v6950, 2
      %v7133 = vrot.slane %v6208, 2
      %v7134 = vsel %vm5171, %v7132, %v7133
      %v7135 = vrot.slane %v6951, 2
      %v7136 = vrot.slane %v6209, 2
      %v7137 = vsel %vm5171, %v7135, %v7136
      %v7138 = vrot.slane %v6952, 2
      %v7139 = vsel %vm5171, %v7133, %v7138
      %v7140 = vrot.slane %v6953, 2
      %v7141 = vsel %vm5171, %v7136, %v7140
      %v7142 = vrot.slane %v6954, 2
      %v7143 = vrot.slane %v6214, 2
      %v7144 = vsel %vm5171, %v7142, %v7143
      %v7145 = vrot.slane %v6955, 2
      %v7146 = vrot.slane %v6215, 2
      %v7147 = vsel %vm5171, %v7145, %v7146
      %v7148 = vrot.slane %v6956, 2
      %v7149 = vsel %vm5171, %v7143, %v7148
      %v7150 = vrot.slane %v6957, 2
      %v7151 = vsel %vm5171, %v7146, %v7150
      %v7152 = vrot.slane %v6958, 2
      %v7153 = vrot.slane %v6220, 2
      %v7154 = vsel %vm5171, %v7152, %v7153
      %v7155 = vrot.slane %v6959, 2
      %v7156 = vrot.slane %v6221, 2
      %v7157 = vsel %vm5171, %v7155, %v7156
      %v7158 = vrot.slane %v6960, 2
      %v7159 = vsel %vm5171, %v7153, %v7158
      %v7160 = vrot.slane %v6961, 2
      %v7161 = vsel %vm5171, %v7156, %v7160
      %v7162 = vrot.slane %v6962, 2
      %v7163 = vrot.slane %v6226, 2
      %v7164 = vsel %vm5171, %v7162, %v7163
      %v7165 = vrot.slane %v6963, 2
      %v7166 = vrot.slane %v6227, 2
      %v7167 = vsel %vm5171, %v7165, %v7166
      %v7168 = vrot.slane %v6964, 2
      %v7169 = vsel %vm5171, %v7163, %v7168
      %v7170 = vrot.slane %v6965, 2
      %v7171 = vsel %vm5171, %v7166, %v7170
      %v7172 = vrot.slane %v6966, 2
      %v7173 = vrot.slane %v6232, 2
      %v7174 = vsel %vm5171, %v7172, %v7173
      %v7175 = vrot.slane %v6967, 2
      %v7176 = vrot.slane %v6233, 2
      %v7177 = vsel %vm5171, %v7175, %v7176
      %v7178 = vrot.slane %v6968, 2
      %v7179 = vsel %vm5171, %v7173, %v7178
      %v7180 = vrot.slane %v6969, 2
      %v7181 = vsel %vm5171, %v7176, %v7180
      %v7182 = vrot.slane %v6970, 2
      %v7183 = vrot.slane %v6238, 2
      %v7184 = vsel %vm5171, %v7182, %v7183
      %v7185 = vrot.slane %v6971, 2
      %v7186 = vrot.slane %v6239, 2
      %v7187 = vsel %vm5171, %v7185, %v7186
      %v7188 = vrot.slane %v6972, 2
      %v7189 = vsel %vm5171, %v7183, %v7188
      %v7190 = vrot.slane %v6973, 2
      %v7191 = vsel %vm5171, %v7186, %v7190
      %v7192 = vrot.slane %v6974, 2
      %v7193 = vrot.slane %v6244, 2
      %v7194 = vsel %vm5171, %v7192, %v7193
      %v7195 = vrot.slane %v6975, 2
      %v7196 = vrot.slane %v6245, 2
      %v7197 = vsel %vm5171, %v7195, %v7196
      %v7198 = vrot.slane %v6976, 2
      %v7199 = vsel %vm5171, %v7193, %v7198
      %v7200 = vrot.slane %v6977, 2
      %v7201 = vsel %vm5171, %v7196, %v7200
      %v7266 = vpack.c.bf16 %v7049, %v7044
      %v7267 = vpack.c.bf16 %v7051, %v7047
      %v7268 = vpack.c.bf16 %v7059, %v7054
      %v7269 = vpack.c.bf16 %v7061, %v7057
      %v7270 = vpack.c.bf16 %v7069, %v7064
      %v7271 = vpack.c.bf16 %v7071, %v7067
      %v7272 = vpack.c.bf16 %v7079, %v7074
      %v7273 = vpack.c.bf16 %v7081, %v7077
      %v7274 = vpack.c.bf16 %v7089, %v7084
      %v7275 = vpack.c.bf16 %v7091, %v7087
      %v7276 = vpack.c.bf16 %v7099, %v7094
      %v7277 = vpack.c.bf16 %v7101, %v7097
      %v7278 = vpack.c.bf16 %v7109, %v7104
      %v7279 = vpack.c.bf16 %v7111, %v7107
      %v7280 = vpack.c.bf16 %v7119, %v7114
      %v7281 = vpack.c.bf16 %v7121, %v7117
      %v7282 = vpack.c.bf16 %v7129, %v7124
      %v7283 = vpack.c.bf16 %v7131, %v7127
      %v7284 = vpack.c.bf16 %v7139, %v7134
      %v7285 = vpack.c.bf16 %v7141, %v7137
      %v7286 = vpack.c.bf16 %v7149, %v7144
      %v7287 = vpack.c.bf16 %v7151, %v7147
      %v7288 = vpack.c.bf16 %v7159, %v7154
      %v7289 = vpack.c.bf16 %v7161, %v7157
      %v7290 = vpack.c.bf16 %v7169, %v7164
      %v7291 = vpack.c.bf16 %v7171, %v7167
      %v7292 = vpack.c.bf16 %v7179, %v7174
      %v7293 = vpack.c.bf16 %v7181, %v7177
      %v7294 = vpack.c.bf16 %v7189, %v7184
      %v7295 = vpack.c.bf16 %v7191, %v7187
      %v7296 = vpack.c.bf16 %v7199, %v7194
      %v7297 = vpack.c.bf16 %v7201, %v7197
      %s7298 = scalar_lea.vmem %s2, 360
      %v7299 = vld [vmem:[%s7298] sm:$0xf]
      %v7300 = vld [vmem:[%s7298 + $0x4] sm:$0xf]
      %v7301 = vld [vmem:[%s7298 + $0x8] sm:$0xf]
      %v7302 = vld [vmem:[%s7298 + $0xc] sm:$0xf]
      %v7303 = vld [vmem:[%s7298 + $0x10] sm:$0xf]
      %v7304 = vld [vmem:[%s7298 + $0x14] sm:$0xf]
      %v7305 = vld [vmem:[%s7298 + $0x18] sm:$0xf]
      %v7306 = vld [vmem:[%s7298 + $0x1c] sm:$0xf]
      %v7307 = vld [vmem:[%s7298 + $0x20] sm:$0xf]
      %v7308 = vld [vmem:[%s7298 + $0x24] sm:$0xf]
      %v7309 = vld [vmem:[%s7298 + $0x28] sm:$0xf]
      %v7310 = vld [vmem:[%s7298 + $0x2c] sm:$0xf]
      %v7311 = vld [vmem:[%s7298 + $0x30] sm:$0xf]
      %v7312 = vld [vmem:[%s7298 + $0x34] sm:$0xf]
      %v7313 = vld [vmem:[%s7298 + $0x38] sm:$0xf]
      %v7314 = vld [vmem:[%s7298 + $0x3c] sm:$0xf]
      %v7315 = vld [vmem:[%s7298 + $0x40] sm:$0xf]
      %v7316 = vld [vmem:[%s7298 + $0x44] sm:$0xf]
      %v7335 = vunpack.c.l.b16 %v7299
      %v7336 = vunpack.c.l.b16 %v7300
      %v7337 = vunpack.c.l.b16 %v7301
      %v7338 = vunpack.c.l.b16 %v7302
      %v7339 = vunpack.c.l.b16 %v7303
      %v7340 = vunpack.c.l.b16 %v7304
      %v7341 = vunpack.c.l.b16 %v7305
      %v7342 = vunpack.c.l.b16 %v7306
      %v7343 = vunpack.c.l.b16 %v7307
      %v7344 = vunpack.c.l.b16 %v7308
      %v7345 = vunpack.c.l.b16 %v7309
      %v7346 = vunpack.c.l.b16 %v7310
      %v7347 = vunpack.c.l.b16 %v7311
      %v7348 = vunpack.c.l.b16 %v7312
      %v7349 = vunpack.c.l.b16 %v7313
      %v7350 = vunpack.c.l.b16 %v7314
      %v7351 = vunpack.c.l.b16 %v7315
      %v7352 = vunpack.c.l.b16 %v7316
      %v7353 = vpack.c.b16 %v7336, %v7335
      %v7354 = vpack.c.b16 %v7338, %v7337
      %v7355 = vpack.c.b16 %v7340, %v7339
      %v7356 = vpack.c.b16 %v7342, %v7341
      %v7357 = vpack.c.b16 %v7344, %v7343
      %v7358 = vpack.c.b16 %v7346, %v7345
      %v7359 = vpack.c.b16 %v7348, %v7347
      %v7360 = vpack.c.b16 %v7350, %v7349
      %v7361 = vpack.c.b16 %v7352, %v7351
      %v7372 = vsel %vm3626, %v7267, 0
      %v7375 = vsel %vm3626, %v7269, 0
      %v7378 = vsel %vm3626, %v7271, 0
      %v7381 = vsel %vm3626, %v7273, 0
      %v7384 = vsel %vm3626, %v7275, 0
      %v7387 = vsel %vm3626, %v7277, 0
      %v7390 = vsel %vm3626, %v7279, 0
      %v7393 = vsel %vm3626, %v7281, 0
      %v7396 = vsel %vm3626, %v7283, 0
      %v7399 = vsel %vm3626, %v7285, 0
      %v7402 = vsel %vm3626, %v7287, 0
      %v7405 = vsel %vm3626, %v7289, 0
      %v7408 = vsel %vm3626, %v7291, 0
      %v7411 = vsel %vm3626, %v7293, 0
      %v7414 = vsel %vm3626, %v7295, 0
      %v7417 = vsel %vm3626, %v7297, 0
      %7419 = vmatprep.subr.bf16.mxu0 0
      %7420 = vmatpush1.bf16.msra.mxu0 %v7353
      %7421 = vmatprep.subr.bf16.mxu0 0
      %7422 = vmatpush1.bf16.msra.mxu0 %v7354
      %7423 = vmatprep.subr.bf16.mxu0 0
      %7424 = vmatpush1.bf16.msra.mxu0 %v7355
      %7425 = vmatprep.subr.bf16.mxu0 0
      %7426 = vmatpush1.bf16.msra.mxu0 %v7356
      %7427 = vmatprep.subr.bf16.mxu0 0
      %7428 = vmatpush1.bf16.msra.mxu0 %v7357
      %7429 = vmatprep.subr.bf16.mxu0 0
      %7430 = vmatpush1.bf16.msra.mxu0 %v7358
      %7431 = vmatprep.subr.bf16.mxu0 0
      %7432 = vmatpush1.bf16.msra.mxu0 %v7359
      %7433 = vmatprep.subr.bf16.mxu0 0
      %7434 = vmatpush1.bf16.msra.mxu0 %v7360
      %7435 = vmatprep.subr.bf16.mxu0 0
      %7436 = vmatpush1.bf16.msra.mxu0 %v7361
      %7437 = vmatprep.subr.bf16.mxu0 0
      %7438 = vmatpush1.bf16.msra.mxu0 0
      %7439 = vmatprep.subr.bf16.mxu0 0
      %7440 = vmatpush1.bf16.msra.mxu0 0
      %7441 = vmatprep.subr.bf16.mxu0 0
      %7442 = vmatpush1.bf16.msra.mxu0 0
      %7443 = vmatprep.subr.bf16.mxu0 0
      %7444 = vmatpush1.bf16.msra.mxu0 0
      %7445 = vmatprep.subr.bf16.mxu0 0
      %7446 = vmatpush1.bf16.msra.mxu0 0
      %7447 = vmatprep.subr.bf16.mxu0 0
      %7448 = vmatpush1.bf16.msra.mxu0 0
      %7449 = vmatprep.subr.bf16.mxu0 0
      %7450 = vmatpush1.bf16.msra.mxu0 0
      %7451 = vmatprep.mubr.bf16.mxu0 %v7372
      %7452 = vmatmul.mubr.bf16.gmra.mrb[0].mxu0 %v7266
      %v7453 = vpop.f32.mrb[0].mxu0
      %v7454 = vadd.f32 0.0, %v7453
      %v7455 = vpop.f32.mrb[0].mxu0
      %v7456 = vpop.f32.mrb[0].mxu0
      %v7457 = vadd.f32 0.0, %v7456
      %v7458 = vpop.f32.mrb[0].mxu0
      %7459 = vmatprep.mubr.bf16.mxu0 %v7375
      %7460 = vmatmul.mubr.bf16.gmra.mrb[0].mxu0 %v7268
      %v7461 = vpop.f32.mrb[0].mxu0
      %v7462 = vadd.f32 0.0, %v7461
      %v7463 = vpop.f32.mrb[0].mxu0
      %v7464 = vpop.f32.mrb[0].mxu0
      %v7465 = vadd.f32 0.0, %v7464
      %v7466 = vpop.f32.mrb[0].mxu0
      %7467 = vmatprep.mubr.bf16.mxu0 %v7378
      %7468 = vmatmul.mubr.bf16.gmra.mrb[0].mxu0 %v7270
      %v7469 = vpop.f32.mrb[0].mxu0
      %v7470 = vadd.f32 0.0, %v7469
      %v7471 = vpop.f32.mrb[0].mxu0
      %v7472 = vpop.f32.mrb[0].mxu0
      %v7473 = vadd.f32 0.0, %v7472
      %v7474 = vpop.f32.mrb[0].mxu0
      %7475 = vmatprep.mubr.bf16.mxu0 %v7381
      %7476 = vmatmul.mubr.bf16.gmra.mrb[0].mxu0 %v7272
      %v7477 = vpop.f32.mrb[0].mxu0
      %v7478 = vadd.f32 0.0, %v7477
      %v7479 = vpop.f32.mrb[0].mxu0
      %v7480 = vpop.f32.mrb[0].mxu0
      %v7481 = vadd.f32 0.0, %v7480
      %v7482 = vpop.f32.mrb[0].mxu0
      %7483 = vmatprep.mubr.bf16.mxu0 %v7384
      %7484 = vmatmul.mubr.bf16.gmra.mrb[0].mxu0 %v7274
      %v7485 = vpop.f32.mrb[0].mxu0
      %v7486 = vadd.f32 0.0, %v7485
      %v7487 = vpop.f32.mrb[0].mxu0
      %v7488 = vpop.f32.mrb[0].mxu0
      %v7489 = vadd.f32 0.0, %v7488
      %v7490 = vpop.f32.mrb[0].mxu0
      %7491 = vmatprep.mubr.bf16.mxu0 %v7387
      %7492 = vmatmul.mubr.bf16.gmra.mrb[0].mxu0 %v7276
      %v7493 = vpop.f32.mrb[0].mxu0
      %v7494 = vadd.f32 0.0, %v7493
      %v7495 = vpop.f32.mrb[0].mxu0
      %v7496 = vpop.f32.mrb[0].mxu0
      %v7497 = vadd.f32 0.0, %v7496
      %v7498 = vpop.f32.mrb[0].mxu0
      %7499 = vmatprep.mubr.bf16.mxu0 %v7390
      %7500 = vmatmul.mubr.bf16.gmra.mrb[0].mxu0 %v7278
      %v7501 = vpop.f32.mrb[0].mxu0
      %v7502 = vadd.f32 0.0, %v7501
      %v7503 = vpop.f32.mrb[0].mxu0
      %v7504 = vpop.f32.mrb[0].mxu0
      %v7505 = vadd.f32 0.0, %v7504
      %v7506 = vpop.f32.mrb[0].mxu0
      %7507 = vmatprep.mubr.bf16.mxu0 %v7393
      %7508 = vmatmul.mubr.bf16.gmra.mrb[0].mxu0 %v7280
      %v7509 = vpop.f32.mrb[0].mxu0
      %v7510 = vadd.f32 0.0, %v7509
      %v7511 = vpop.f32.mrb[0].mxu0
      %v7512 = vpop.f32.mrb[0].mxu0
      %v7513 = vadd.f32 0.0, %v7512
      %v7514 = vpop.f32.mrb[0].mxu0
      %7515 = vmatprep.mubr.bf16.mxu0 %v7396
      %7516 = vmatmul.mubr.bf16.gmra.mrb[0].mxu0 %v7282
      %v7517 = vpop.f32.mrb[0].mxu0
      %v7518 = vadd.f32 0.0, %v7517
      %v7519 = vpop.f32.mrb[0].mxu0
      %v7520 = vpop.f32.mrb[0].mxu0
      %v7521 = vadd.f32 0.0, %v7520
      %v7522 = vpop.f32.mrb[0].mxu0
      %7523 = vmatprep.mubr.bf16.mxu0 %v7399
      %7524 = vmatmul.mubr.bf16.gmra.mrb[0].mxu0 %v7284
      %v7525 = vpop.f32.mrb[0].mxu0
      %v7526 = vadd.f32 0.0, %v7525
      %v7527 = vpop.f32.mrb[0].mxu0
      %v7528 = vpop.f32.mrb[0].mxu0
      %v7529 = vadd.f32 0.0, %v7528
      %v7530 = vpop.f32.mrb[0].mxu0
      %7531 = vmatprep.mubr.bf16.mxu0 %v7402
      %7532 = vmatmul.mubr.bf16.gmra.mrb[0].mxu0 %v7286
      %v7533 = vpop.f32.mrb[0].mxu0
      %v7534 = vadd.f32 0.0, %v7533
      %v7535 = vpop.f32.mrb[0].mxu0
      %v7536 = vpop.f32.mrb[0].mxu0
      %v7537 = vadd.f32 0.0, %v7536
      %v7538 = vpop.f32.mrb[0].mxu0
      %7539 = vmatprep.mubr.bf16.mxu0 %v7405
      %7540 = vmatmul.mubr.bf16.gmra.mrb[0].mxu0 %v7288
      %v7541 = vpop.f32.mrb[0].mxu0
      %v7542 = vadd.f32 0.0, %v7541
      %v7543 = vpop.f32.mrb[0].mxu0
      %v7544 = vpop.f32.mrb[0].mxu0
      %v7545 = vadd.f32 0.0, %v7544
      %v7546 = vpop.f32.mrb[0].mxu0
      %7547 = vmatprep.mubr.bf16.mxu0 %v7408
      %7548 = vmatmul.mubr.bf16.gmra.mrb[0].mxu0 %v7290
      %v7549 = vpop.f32.mrb[0].mxu0
      %v7550 = vadd.f32 0.0, %v7549
      %v7551 = vpop.f32.mrb[0].mxu0
      %v7552 = vpop.f32.mrb[0].mxu0
      %v7553 = vadd.f32 0.0, %v7552
      %v7554 = vpop.f32.mrb[0].mxu0
      %7555 = vmatprep.mubr.bf16.mxu0 %v7411
      %7556 = vmatmul.mubr.bf16.gmra.mrb[0].mxu0 %v7292
      %v7557 = vpop.f32.mrb[0].mxu0
      %v7558 = vadd.f32 0.0, %v7557
      %v7559 = vpop.f32.mrb[0].mxu0
      %v7560 = vpop.f32.mrb[0].mxu0
      %v7561 = vadd.f32 0.0, %v7560
      %v7562 = vpop.f32.mrb[0].mxu0
      %7563 = vmatprep.mubr.bf16.mxu0 %v7414
      %7564 = vmatmul.mubr.bf16.gmra.mrb[0].mxu0 %v7294
      %v7565 = vpop.f32.mrb[0].mxu0
      %v7566 = vadd.f32 0.0, %v7565
      %v7567 = vpop.f32.mrb[0].mxu0
      %v7568 = vpop.f32.mrb[0].mxu0
      %v7569 = vadd.f32 0.0, %v7568
      %v7570 = vpop.f32.mrb[0].mxu0
      %7571 = vmatprep.mubr.bf16.mxu0 %v7417
      %7572 = vmatmul.mubr.bf16.gmra.mrb[0].mxu0 %v7296
      %v7573 = vpop.f32.mrb[0].mxu0
      %v7574 = vadd.f32 0.0, %v7573
      %v7575 = vpop.f32.mrb[0].mxu0
      %v7576 = vpop.f32.mrb[0].mxu0
      %v7577 = vadd.f32 0.0, %v7576
      %v7578 = vpop.f32.mrb[0].mxu0
      %7579 = vdwg.mxu0
      %v7580 = vadd.f32 %v6882, %v7454
      %v7581 = vadd.f32 %v6883, %v7457
      %v7582 = vadd.f32 %v6884, %v7462
      %v7583 = vadd.f32 %v6885, %v7465
      %v7584 = vadd.f32 %v6886, %v7470
      %v7585 = vadd.f32 %v6887, %v7473
      %v7586 = vadd.f32 %v6888, %v7478
      %v7587 = vadd.f32 %v6889, %v7481
      %v7588 = vadd.f32 %v6890, %v7486
      %v7589 = vadd.f32 %v6891, %v7489
      %v7590 = vadd.f32 %v6892, %v7494
      %v7591 = vadd.f32 %v6893, %v7497
      %v7592 = vadd.f32 %v6894, %v7502
      %v7593 = vadd.f32 %v6895, %v7505
      %v7594 = vadd.f32 %v6896, %v7510
      %v7595 = vadd.f32 %v6897, %v7513
      %v7596 = vadd.f32 %v6898, %v7518
      %v7597 = vadd.f32 %v6899, %v7521
      %v7598 = vadd.f32 %v6900, %v7526
      %v7599 = vadd.f32 %v6901, %v7529
      %v7600 = vadd.f32 %v6902, %v7534
      %v7601 = vadd.f32 %v6903, %v7537
      %v7602 = vadd.f32 %v6904, %v7542
      %v7603 = vadd.f32 %v6905, %v7545
      %v7604 = vadd.f32 %v6906, %v7550
      %v7605 = vadd.f32 %v6907, %v7553
      %v7606 = vadd.f32 %v6908, %v7558
      %v7607 = vadd.f32 %v6909, %v7561
      %v7608 = vadd.f32 %v6910, %v7566
      %v7609 = vadd.f32 %v6911, %v7569
      %v7610 = vadd.f32 %v6912, %v7574
      %v7611 = vadd.f32 %v6913, %v7577
      %s7612 = scalar_lea.vmem [#allocation2], 96
      %v7613 = vld [vmem:[%s7612] sm:$0xff]
      %v7614 = vld [vmem:[%s7612 + $0x8] sm:$0xff]
      %v7615 = vld [vmem:[%s7612 + $0x10] sm:$0xff]
      %v7616 = vld [vmem:[%s7612 + $0x18] sm:$0xff]
      %v7617 = vld [vmem:[%s7612 + $0x30] sm:$0xff]
      %v7618 = vld [vmem:[%s7612 + $0x38] sm:$0xff]
      %v7619 = vld [vmem:[%s7612 + $0x40] sm:$0xff]
      %v7620 = vld [vmem:[%s7612 + $0x48] sm:$0xff]
      %v7621 = vld [vmem:[%s7612 + $0x60] sm:$0xff]
      %v7622 = vld [vmem:[%s7612 + $0x68] sm:$0xff]
      %v7623 = vld [vmem:[%s7612 + $0x70] sm:$0xff]
      %v7624 = vld [vmem:[%s7612 + $0x78] sm:$0xff]
      %v7625 = vld [vmem:[%s7612 + $0x90] sm:$0xff]
      %v7626 = vld [vmem:[%s7612 + $0x98] sm:$0xff]
      %v7627 = vld [vmem:[%s7612 + $0xa0] sm:$0xff]
      %v7628 = vld [vmem:[%s7612 + $0xa8] sm:$0xff]
      %v7629 = vld [vmem:[%s7612 + $0xc0] sm:$0xff]
      %v7630 = vld [vmem:[%s7612 + $0xc8] sm:$0xff]
      %v7631 = vld [vmem:[%s7612 + $0xd0] sm:$0xff]
      %v7632 = vld [vmem:[%s7612 + $0xd8] sm:$0xff]
      %v7633 = vld [vmem:[%s7612 + $0xf0] sm:$0xff]
      %v7634 = vld [vmem:[%s7612 + $0xf8] sm:$0xff]
      %v7635 = vld [vmem:[%s7612 + $0x100] sm:$0xff]
      %v7636 = vld [vmem:[%s7612 + $0x108] sm:$0xff]
      %v7637 = vld [vmem:[%s7612 + $0x120] sm:$0xff]
      %v7638 = vld [vmem:[%s7612 + $0x128] sm:$0xff]
      %v7639 = vld [vmem:[%s7612 + $0x130] sm:$0xff]
      %v7640 = vld [vmem:[%s7612 + $0x138] sm:$0xff]
      %v7641 = vld [vmem:[%s7612 + $0x150] sm:$0xff]
      %v7642 = vld [vmem:[%s7612 + $0x158] sm:$0xff]
      %v7643 = vld [vmem:[%s7612 + $0x160] sm:$0xff]
      %v7644 = vld [vmem:[%s7612 + $0x168] sm:$0xff]
      %v7645 = vld [vmem:[%s7612 + $0x180] sm:$0xff]
      %v7646 = vld [vmem:[%s7612 + $0x188] sm:$0xff]
      %v7647 = vld [vmem:[%s7612 + $0x190] sm:$0xff]
      %v7648 = vld [vmem:[%s7612 + $0x198] sm:$0xff]
      %v7649 = vld [vmem:[%s7612 + $0x1b0] sm:$0xff]
      %v7650 = vld [vmem:[%s7612 + $0x1b8] sm:$0xff]
      %v7651 = vld [vmem:[%s7612 + $0x1c0] sm:$0xff]
      %v7652 = vld [vmem:[%s7612 + $0x1c8] sm:$0xff]
      %v7653 = vld [vmem:[%s7612 + $0x1e0] sm:$0xff]
      %v7654 = vld [vmem:[%s7612 + $0x1e8] sm:$0xff]
      %v7655 = vld [vmem:[%s7612 + $0x1f0] sm:$0xff]
      %v7656 = vld [vmem:[%s7612 + $0x1f8] sm:$0xff]
      %v7657 = vld [vmem:[%s7612 + $0x210] sm:$0xff]
      %v7658 = vld [vmem:[%s7612 + $0x218] sm:$0xff]
      %v7659 = vld [vmem:[%s7612 + $0x220] sm:$0xff]
      %v7660 = vld [vmem:[%s7612 + $0x228] sm:$0xff]
      %v7661 = vld [vmem:[%s7612 + $0x240] sm:$0xff]
      %v7662 = vld [vmem:[%s7612 + $0x248] sm:$0xff]
      %v7663 = vld [vmem:[%s7612 + $0x250] sm:$0xff]
      %v7664 = vld [vmem:[%s7612 + $0x258] sm:$0xff]
      %v7665 = vld [vmem:[%s7612 + $0x270] sm:$0xff]
      %v7666 = vld [vmem:[%s7612 + $0x278] sm:$0xff]
      %v7667 = vld [vmem:[%s7612 + $0x280] sm:$0xff]
      %v7668 = vld [vmem:[%s7612 + $0x288] sm:$0xff]
      %v7669 = vld [vmem:[%s7612 + $0x2a0] sm:$0xff]
      %v7670 = vld [vmem:[%s7612 + $0x2a8] sm:$0xff]
      %v7671 = vld [vmem:[%s7612 + $0x2b0] sm:$0xff]
      %v7672 = vld [vmem:[%s7612 + $0x2b8] sm:$0xff]
      %v7673 = vld [vmem:[%s7612 + $0x2d0] sm:$0xff]
      %v7674 = vld [vmem:[%s7612 + $0x2d8] sm:$0xff]
      %v7675 = vld [vmem:[%s7612 + $0x2e0] sm:$0xff]
      %v7676 = vld [vmem:[%s7612 + $0x2e8] sm:$0xff]
      %v7677 = vpack.c.bf16 %v7615, %v7613
      %v7678 = vpack.c.bf16 %v7616, %v7614
      %v7679 = vpack.c.bf16 %v7619, %v7617
      %v7680 = vpack.c.bf16 %v7620, %v7618
      %v7681 = vpack.c.bf16 %v7623, %v7621
      %v7682 = vpack.c.bf16 %v7624, %v7622
      %v7683 = vpack.c.bf16 %v7627, %v7625
      %v7684 = vpack.c.bf16 %v7628, %v7626
      %v7685 = vpack.c.bf16 %v7631, %v7629
      %v7686 = vpack.c.bf16 %v7632, %v7630
      %v7687 = vpack.c.bf16 %v7635, %v7633
      %v7688 = vpack.c.bf16 %v7636, %v7634
      %v7689 = vpack.c.bf16 %v7639, %v7637
      %v7690 = vpack.c.bf16 %v7640, %v7638
      %v7691 = vpack.c.bf16 %v7643, %v7641
      %v7692 = vpack.c.bf16 %v7644, %v7642
      %v7693 = vpack.c.bf16 %v7647, %v7645
      %v7694 = vpack.c.bf16 %v7648, %v7646
      %v7695 = vpack.c.bf16 %v7651, %v7649
      %v7696 = vpack.c.bf16 %v7652, %v7650
      %v7697 = vpack.c.bf16 %v7655, %v7653
      %v7698 = vpack.c.bf16 %v7656, %v7654
      %v7699 = vpack.c.bf16 %v7659, %v7657
      %v7700 = vpack.c.bf16 %v7660, %v7658
      %v7701 = vpack.c.bf16 %v7663, %v7661
      %v7702 = vpack.c.bf16 %v7664, %v7662
      %v7703 = vpack.c.bf16 %v7667, %v7665
      %v7704 = vpack.c.bf16 %v7668, %v7666
      %v7705 = vpack.c.bf16 %v7671, %v7669
      %v7706 = vpack.c.bf16 %v7672, %v7670
      %v7707 = vpack.c.bf16 %v7675, %v7673
      %v7708 = vpack.c.bf16 %v7676, %v7674
      %s7709 = scalar_lea.vmem %s2, 432
      %v7710 = vld [vmem:[%s7709] sm:$0xf]
      %v7711 = vld [vmem:[%s7709 + $0x4] sm:$0xf]
      %v7712 = vld [vmem:[%s7709 + $0x8] sm:$0xf]
      %v7713 = vld [vmem:[%s7709 + $0xc] sm:$0xf]
      %v7714 = vld [vmem:[%s7709 + $0x10] sm:$0xf]
      %v7715 = vld [vmem:[%s7709 + $0x14] sm:$0xf]
      %v7716 = vld [vmem:[%s7709 + $0x18] sm:$0xf]
      %v7717 = vld [vmem:[%s7709 + $0x1c] sm:$0xf]
      %v7718 = vld [vmem:[%s7709 + $0x20] sm:$0xf]
      %v7719 = vld [vmem:[%s7709 + $0x24] sm:$0xf]
      %v7720 = vld [vmem:[%s7709 + $0x28] sm:$0xf]
      %v7721 = vld [vmem:[%s7709 + $0x2c] sm:$0xf]
      %v7722 = vld [vmem:[%s7709 + $0x30] sm:$0xf]
      %v7723 = vld [vmem:[%s7709 + $0x34] sm:$0xf]
      %v7724 = vld [vmem:[%s7709 + $0x38] sm:$0xf]
      %v7725 = vld [vmem:[%s7709 + $0x3c] sm:$0xf]
      %v7726 = vld [vmem:[%s7709 + $0x40] sm:$0xf]
      %v7727 = vld [vmem:[%s7709 + $0x44] sm:$0xf]
      %v7746 = vunpack.c.l.b16 %v7710
      %v7747 = vunpack.c.l.b16 %v7711
      %v7748 = vunpack.c.l.b16 %v7712
      %v7749 = vunpack.c.l.b16 %v7713
      %v7750 = vunpack.c.l.b16 %v7714
      %v7751 = vunpack.c.l.b16 %v7715
      %v7752 = vunpack.c.l.b16 %v7716
      %v7753 = vunpack.c.l.b16 %v7717
      %v7754 = vunpack.c.l.b16 %v7718
      %v7755 = vunpack.c.l.b16 %v7719
      %v7756 = vunpack.c.l.b16 %v7720
      %v7757 = vunpack.c.l.b16 %v7721
      %v7758 = vunpack.c.l.b16 %v7722
      %v7759 = vunpack.c.l.b16 %v7723
      %v7760 = vunpack.c.l.b16 %v7724
      %v7761 = vunpack.c.l.b16 %v7725
      %v7762 = vunpack.c.l.b16 %v7726
      %v7763 = vunpack.c.l.b16 %v7727
      %v7764 = vpack.c.b16 %v7747, %v7746
      %v7765 = vpack.c.b16 %v7749, %v7748
      %v7766 = vpack.c.b16 %v7751, %v7750
      %v7767 = vpack.c.b16 %v7753, %v7752
      %v7768 = vpack.c.b16 %v7755, %v7754
      %v7769 = vpack.c.b16 %v7757, %v7756
      %v7770 = vpack.c.b16 %v7759, %v7758
      %v7771 = vpack.c.b16 %v7761, %v7760
      %v7772 = vpack.c.b16 %v7763, %v7762
      %v7783 = vsel %vm3626, %v7678, 0
      %v7786 = vsel %vm3626, %v7680, 0
      %v7789 = vsel %vm3626, %v7682, 0
      %v7792 = vsel %vm3626, %v7684, 0
      %v7795 = vsel %vm3626, %v7686, 0
      %v7798 = vsel %vm3626, %v7688, 0
      %v7801 = vsel %vm3626, %v7690, 0
      %v7804 = vsel %vm3626, %v7692, 0
      %v7807 = vsel %vm3626, %v7694, 0
      %v7810 = vsel %vm3626, %v7696, 0
      %v7813 = vsel %vm3626, %v7698, 0
      %v7816 = vsel %vm3626, %v7700, 0
      %v7819 = vsel %vm3626, %v7702, 0
      %v7822 = vsel %vm3626, %v7704, 0
      %v7825 = vsel %vm3626, %v7706, 0
      %v7828 = vsel %vm3626, %v7708, 0
      %7830 = vmatprep.subr.bf16.mxu0 0
      %7831 = vmatpush1.bf16.msra.mxu0 %v7764
      %7832 = vmatprep.subr.bf16.mxu0 0
      %7833 = vmatpush1.bf16.msra.mxu0 %v7765
      %7834 = vmatprep.subr.bf16.mxu0 0
      %7835 = vmatpush1.bf16.msra.mxu0 %v7766
      %7836 = vmatprep.subr.bf16.mxu0 0
      %7837 = vmatpush1.bf16.msra.mxu0 %v7767
      %7838 = vmatprep.subr.bf16.mxu0 0
      %7839 = vmatpush1.bf16.msra.mxu0 %v7768
      %7840 = vmatprep.subr.bf16.mxu0 0
      %7841 = vmatpush1.bf16.msra.mxu0 %v7769
      %7842 = vmatprep.subr.bf16.mxu0 0
      %7843 = vmatpush1.bf16.msra.mxu0 %v7770
      %7844 = vmatprep.subr.bf16.mxu0 0
      %7845 = vmatpush1.bf16.msra.mxu0 %v7771
      %7846 = vmatprep.subr.bf16.mxu0 0
      %7847 = vmatpush1.bf16.msra.mxu0 %v7772
      %7848 = vmatprep.subr.bf16.mxu0 0
      %7849 = vmatpush1.bf16.msra.mxu0 0
      %7850 = vmatprep.subr.bf16.mxu0 0
      %7851 = vmatpush1.bf16.msra.mxu0 0
      %7852 = vmatprep.subr.bf16.mxu0 0
      %7853 = vmatpush1.bf16.msra.mxu0 0
      %7854 = vmatprep.subr.bf16.mxu0 0
      %7855 = vmatpush1.bf16.msra.mxu0 0
      %7856 = vmatprep.subr.bf16.mxu0 0
      %7857 = vmatpush1.bf16.msra.mxu0 0
      %7858 = vmatprep.subr.bf16.mxu0 0
      %7859 = vmatpush1.bf16.msra.mxu0 0
      %7860 = vmatprep.subr.bf16.mxu0 0
      %7861 = vmatpush1.bf16.msra.mxu0 0
      %7862 = vmatprep.mubr.bf16.mxu0 %v7783
      %7863 = vmatmul.mubr.bf16.gmra.mrb[0].mxu0 %v7677
      %v7864 = vpop.f32.mrb[0].mxu0
      %v7865 = vadd.f32 0.0, %v7864
      %v7866 = vpop.f32.mrb[0].mxu0
      %v7867 = vpop.f32.mrb[0].mxu0
      %v7868 = vadd.f32 0.0, %v7867
      %v7869 = vpop.f32.mrb[0].mxu0
      %7870 = vmatprep.mubr.bf16.mxu0 %v7786
      %7871 = vmatmul.mubr.bf16.gmra.mrb[0].mxu0 %v7679
      %v7872 = vpop.f32.mrb[0].mxu0
      %v7873 = vadd.f32 0.0, %v7872
      %v7874 = vpop.f32.mrb[0].mxu0
      %v7875 = vpop.f32.mrb[0].mxu0
      %v7876 = vadd.f32 0.0, %v7875
      %v7877 = vpop.f32.mrb[0].mxu0
      %7878 = vmatprep.mubr.bf16.mxu0 %v7789
      %7879 = vmatmul.mubr.bf16.gmra.mrb[0].mxu0 %v7681
      %v7880 = vpop.f32.mrb[0].mxu0
      %v7881 = vadd.f32 0.0, %v7880
      %v7882 = vpop.f32.mrb[0].mxu0
      %v7883 = vpop.f32.mrb[0].mxu0
      %v7884 = vadd.f32 0.0, %v7883
      %v7885 = vpop.f32.mrb[0].mxu0
      %7886 = vmatprep.mubr.bf16.mxu0 %v7792
      %7887 = vmatmul.mubr.bf16.gmra.mrb[0].mxu0 %v7683
      %v7888 = vpop.f32.mrb[0].mxu0
      %v7889 = vadd.f32 0.0, %v7888
      %v7890 = vpop.f32.mrb[0].mxu0
      %v7891 = vpop.f32.mrb[0].mxu0
      %v7892 = vadd.f32 0.0, %v7891
      %v7893 = vpop.f32.mrb[0].mxu0
      %7894 = vmatprep.mubr.bf16.mxu0 %v7795
      %7895 = vmatmul.mubr.bf16.gmra.mrb[0].mxu0 %v7685
      %v7896 = vpop.f32.mrb[0].mxu0
      %v7897 = vadd.f32 0.0, %v7896
      %v7898 = vpop.f32.mrb[0].mxu0
      %v7899 = vpop.f32.mrb[0].mxu0
      %v7900 = vadd.f32 0.0, %v7899
      %v7901 = vpop.f32.mrb[0].mxu0
      %7902 = vmatprep.mubr.bf16.mxu0 %v7798
      %7903 = vmatmul.mubr.bf16.gmra.mrb[0].mxu0 %v7687
      %v7904 = vpop.f32.mrb[0].mxu0
      %v7905 = vadd.f32 0.0, %v7904
      %v7906 = vpop.f32.mrb[0].mxu0
      %v7907 = vpop.f32.mrb[0].mxu0
      %v7908 = vadd.f32 0.0, %v7907
      %v7909 = vpop.f32.mrb[0].mxu0
      %7910 = vmatprep.mubr.bf16.mxu0 %v7801
      %7911 = vmatmul.mubr.bf16.gmra.mrb[0].mxu0 %v7689
      %v7912 = vpop.f32.mrb[0].mxu0
      %v7913 = vadd.f32 0.0, %v7912
      %v7914 = vpop.f32.mrb[0].mxu0
      %v7915 = vpop.f32.mrb[0].mxu0
      %v7916 = vadd.f32 0.0, %v7915
      %v7917 = vpop.f32.mrb[0].mxu0
      %7918 = vmatprep.mubr.bf16.mxu0 %v7804
      %7919 = vmatmul.mubr.bf16.gmra.mrb[0].mxu0 %v7691
      %v7920 = vpop.f32.mrb[0].mxu0
      %v7921 = vadd.f32 0.0, %v7920
      %v7922 = vpop.f32.mrb[0].mxu0
      %v7923 = vpop.f32.mrb[0].mxu0
      %v7924 = vadd.f32 0.0, %v7923
      %v7925 = vpop.f32.mrb[0].mxu0
      %7926 = vmatprep.mubr.bf16.mxu0 %v7807
      %7927 = vmatmul.mubr.bf16.gmra.mrb[0].mxu0 %v7693
      %v7928 = vpop.f32.mrb[0].mxu0
      %v7929 = vadd.f32 0.0, %v7928
      %v7930 = vpop.f32.mrb[0].mxu0
      %v7931 = vpop.f32.mrb[0].mxu0
      %v7932 = vadd.f32 0.0, %v7931
      %v7933 = vpop.f32.mrb[0].mxu0
      %7934 = vmatprep.mubr.bf16.mxu0 %v7810
      %7935 = vmatmul.mubr.bf16.gmra.mrb[0].mxu0 %v7695
      %v7936 = vpop.f32.mrb[0].mxu0
      %v7937 = vadd.f32 0.0, %v7936
      %v7938 = vpop.f32.mrb[0].mxu0
      %v7939 = vpop.f32.mrb[0].mxu0
      %v7940 = vadd.f32 0.0, %v7939
      %v7941 = vpop.f32.mrb[0].mxu0
      %7942 = vmatprep.mubr.bf16.mxu0 %v7813
      %7943 = vmatmul.mubr.bf16.gmra.mrb[0].mxu0 %v7697
      %v7944 = vpop.f32.mrb[0].mxu0
      %v7945 = vadd.f32 0.0, %v7944
      %v7946 = vpop.f32.mrb[0].mxu0
      %v7947 = vpop.f32.mrb[0].mxu0
      %v7948 = vadd.f32 0.0, %v7947
      %v7949 = vpop.f32.mrb[0].mxu0
      %7950 = vmatprep.mubr.bf16.mxu0 %v7816
      %7951 = vmatmul.mubr.bf16.gmra.mrb[0].mxu0 %v7699
      %v7952 = vpop.f32.mrb[0].mxu0
      %v7953 = vadd.f32 0.0, %v7952
      %v7954 = vpop.f32.mrb[0].mxu0
      %v7955 = vpop.f32.mrb[0].mxu0
      %v7956 = vadd.f32 0.0, %v7955
      %v7957 = vpop.f32.mrb[0].mxu0
      %7958 = vmatprep.mubr.bf16.mxu0 %v7819
      %7959 = vmatmul.mubr.bf16.gmra.mrb[0].mxu0 %v7701
      %v7960 = vpop.f32.mrb[0].mxu0
      %v7961 = vadd.f32 0.0, %v7960
      %v7962 = vpop.f32.mrb[0].mxu0
      %v7963 = vpop.f32.mrb[0].mxu0
      %v7964 = vadd.f32 0.0, %v7963
      %v7965 = vpop.f32.mrb[0].mxu0
      %7966 = vmatprep.mubr.bf16.mxu0 %v7822
      %7967 = vmatmul.mubr.bf16.gmra.mrb[0].mxu0 %v7703
      %v7968 = vpop.f32.mrb[0].mxu0
      %v7969 = vadd.f32 0.0, %v7968
      %v7970 = vpop.f32.mrb[0].mxu0
      %v7971 = vpop.f32.mrb[0].mxu0
      %v7972 = vadd.f32 0.0, %v7971
      %v7973 = vpop.f32.mrb[0].mxu0
      %7974 = vmatprep.mubr.bf16.mxu0 %v7825
      %7975 = vmatmul.mubr.bf16.gmra.mrb[0].mxu0 %v7705
      %v7976 = vpop.f32.mrb[0].mxu0
      %v7977 = vadd.f32 0.0, %v7976
      %v7978 = vpop.f32.mrb[0].mxu0
      %v7979 = vpop.f32.mrb[0].mxu0
      %v7980 = vadd.f32 0.0, %v7979
      %v7981 = vpop.f32.mrb[0].mxu0
      %7982 = vmatprep.mubr.bf16.mxu0 %v7828
      %7983 = vmatmul.mubr.bf16.gmra.mrb[0].mxu0 %v7707
      %v7984 = vpop.f32.mrb[0].mxu0
      %v7985 = vadd.f32 0.0, %v7984
      %v7986 = vpop.f32.mrb[0].mxu0
      %v7987 = vpop.f32.mrb[0].mxu0
      %v7988 = vadd.f32 0.0, %v7987
      %v7989 = vpop.f32.mrb[0].mxu0
      %7990 = vdwg.mxu0
      %v7991 = vadd.f32 %v7580, %v7865
      %v7992 = vadd.f32 %v7581, %v7868
      %v7993 = vadd.f32 %v7582, %v7873
      %v7994 = vadd.f32 %v7583, %v7876
      %v7995 = vadd.f32 %v7584, %v7881
      %v7996 = vadd.f32 %v7585, %v7884
      %v7997 = vadd.f32 %v7586, %v7889
      %v7998 = vadd.f32 %v7587, %v7892
      %v7999 = vadd.f32 %v7588, %v7897
      %v8000 = vadd.f32 %v7589, %v7900
      %v8001 = vadd.f32 %v7590, %v7905
      %v8002 = vadd.f32 %v7591, %v7908
      %v8003 = vadd.f32 %v7592, %v7913
      %v8004 = vadd.f32 %v7593, %v7916
      %v8005 = vadd.f32 %v7594, %v7921
      %v8006 = vadd.f32 %v7595, %v7924
      %v8007 = vadd.f32 %v7596, %v7929
      %v8008 = vadd.f32 %v7597, %v7932
      %v8009 = vadd.f32 %v7598, %v7937
      %v8010 = vadd.f32 %v7599, %v7940
      %v8011 = vadd.f32 %v7600, %v7945
      %v8012 = vadd.f32 %v7601, %v7948
      %v8013 = vadd.f32 %v7602, %v7953
      %v8014 = vadd.f32 %v7603, %v7956
      %v8015 = vadd.f32 %v7604, %v7961
      %v8016 = vadd.f32 %v7605, %v7964
      %v8017 = vadd.f32 %v7606, %v7969
      %v8018 = vadd.f32 %v7607, %v7972
      %v8019 = vadd.f32 %v7608, %v7977
      %v8020 = vadd.f32 %v7609, %v7980
      %v8021 = vadd.f32 %v7610, %v7985
      %v8022 = vadd.f32 %v7611, %v7988
      %v8023 = vld [vmem:[%s7612] sm:$0xfe]
      %v8024 = vld [vmem:[%s7612 + $0x8] sm:$0xfe]
      %v8025 = vld [vmem:[%s7612 + $0x10] sm:$0xff]
      %v8026 = vld [vmem:[%s7612 + $0x18] sm:$0xff]
      %v8027 = vld [vmem:[%s7612 + $0x20] sm:$0x1]
      %v8028 = vld [vmem:[%s7612 + $0x28] sm:$0x1]
      %v8029 = vld [vmem:[%s7612 + $0x30] sm:$0xfe]
      %v8030 = vld [vmem:[%s7612 + $0x38] sm:$0xfe]
      %v8031 = vld [vmem:[%s7612 + $0x40] sm:$0xff]
      %v8032 = vld [vmem:[%s7612 + $0x48] sm:$0xff]
      %v8033 = vld [vmem:[%s7612 + $0x50] sm:$0x1]
      %v8034 = vld [vmem:[%s7612 + $0x58] sm:$0x1]
      %v8035 = vld [vmem:[%s7612 + $0x60] sm:$0xfe]
      %v8036 = vld [vmem:[%s7612 + $0x68] sm:$0xfe]
      %v8037 = vld [vmem:[%s7612 + $0x70] sm:$0xff]
      %v8038 = vld [vmem:[%s7612 + $0x78] sm:$0xff]
      %v8039 = vld [vmem:[%s7612 + $0x80] sm:$0x1]
      %v8040 = vld [vmem:[%s7612 + $0x88] sm:$0x1]
      %v8041 = vld [vmem:[%s7612 + $0x90] sm:$0xfe]
      %v8042 = vld [vmem:[%s7612 + $0x98] sm:$0xfe]
      %v8043 = vld [vmem:[%s7612 + $0xa0] sm:$0xff]
      %v8044 = vld [vmem:[%s7612 + $0xa8] sm:$0xff]
      %v8045 = vld [vmem:[%s7612 + $0xb0] sm:$0x1]
      %v8046 = vld [vmem:[%s7612 + $0xb8] sm:$0x1]
      %v8047 = vld [vmem:[%s7612 + $0xc0] sm:$0xfe]
      %v8048 = vld [vmem:[%s7612 + $0xc8] sm:$0xfe]
      %v8049 = vld [vmem:[%s7612 + $0xd0] sm:$0xff]
      %v8050 = vld [vmem:[%s7612 + $0xd8] sm:$0xff]
      %v8051 = vld [vmem:[%s7612 + $0xe0] sm:$0x1]
      %v8052 = vld [vmem:[%s7612 + $0xe8] sm:$0x1]
      %v8053 = vld [vmem:[%s7612 + $0xf0] sm:$0xfe]
      %v8054 = vld [vmem:[%s7612 + $0xf8] sm:$0xfe]
      %v8055 = vld [vmem:[%s7612 + $0x100] sm:$0xff]
      %v8056 = vld [vmem:[%s7612 + $0x108] sm:$0xff]
      %v8057 = vld [vmem:[%s7612 + $0x110] sm:$0x1]
      %v8058 = vld [vmem:[%s7612 + $0x118] sm:$0x1]
      %v8059 = vld [vmem:[%s7612 + $0x120] sm:$0xfe]
      %v8060 = vld [vmem:[%s7612 + $0x128] sm:$0xfe]
      %v8061 = vld [vmem:[%s7612 + $0x130] sm:$0xff]
      %v8062 = vld [vmem:[%s7612 + $0x138] sm:$0xff]
      %v8063 = vld [vmem:[%s7612 + $0x140] sm:$0x1]
      %v8064 = vld [vmem:[%s7612 + $0x148] sm:$0x1]
      %v8065 = vld [vmem:[%s7612 + $0x150] sm:$0xfe]
      %v8066 = vld [vmem:[%s7612 + $0x158] sm:$0xfe]
      %v8067 = vld [vmem:[%s7612 + $0x160] sm:$0xff]
      %v8068 = vld [vmem:[%s7612 + $0x168] sm:$0xff]
      %v8069 = vld [vmem:[%s7612 + $0x170] sm:$0x1]
      %v8070 = vld [vmem:[%s7612 + $0x178] sm:$0x1]
      %v8071 = vld [vmem:[%s7612 + $0x180] sm:$0xfe]
      %v8072 = vld [vmem:[%s7612 + $0x188] sm:$0xfe]
      %v8073 = vld [vmem:[%s7612 + $0x190] sm:$0xff]
      %v8074 = vld [vmem:[%s7612 + $0x198] sm:$0xff]
      %v8075 = vld [vmem:[%s7612 + $0x1a0] sm:$0x1]
      %v8076 = vld [vmem:[%s7612 + $0x1a8] sm:$0x1]
      %v8077 = vld [vmem:[%s7612 + $0x1b0] sm:$0xfe]
      %v8078 = vld [vmem:[%s7612 + $0x1b8] sm:$0xfe]
      %v8079 = vld [vmem:[%s7612 + $0x1c0] sm:$0xff]
      %v8080 = vld [vmem:[%s7612 + $0x1c8] sm:$0xff]
      %v8081 = vld [vmem:[%s7612 + $0x1d0] sm:$0x1]
      %v8082 = vld [vmem:[%s7612 + $0x1d8] sm:$0x1]
      %v8083 = vld [vmem:[%s7612 + $0x1e0] sm:$0xfe]
      %v8084 = vld [vmem:[%s7612 + $0x1e8] sm:$0xfe]
      %v8085 = vld [vmem:[%s7612 + $0x1f0] sm:$0xff]
      %v8086 = vld [vmem:[%s7612 + $0x1f8] sm:$0xff]
      %v8087 = vld [vmem:[%s7612 + $0x200] sm:$0x1]
      %v8088 = vld [vmem:[%s7612 + $0x208] sm:$0x1]
      %v8089 = vld [vmem:[%s7612 + $0x210] sm:$0xfe]
      %v8090 = vld [vmem:[%s7612 + $0x218] sm:$0xfe]
      %v8091 = vld [vmem:[%s7612 + $0x220] sm:$0xff]
      %v8092 = vld [vmem:[%s7612 + $0x228] sm:$0xff]
      %v8093 = vld [vmem:[%s7612 + $0x230] sm:$0x1]
      %v8094 = vld [vmem:[%s7612 + $0x238] sm:$0x1]
      %v8095 = vld [vmem:[%s7612 + $0x240] sm:$0xfe]
      %v8096 = vld [vmem:[%s7612 + $0x248] sm:$0xfe]
      %v8097 = vld [vmem:[%s7612 + $0x250] sm:$0xff]
      %v8098 = vld [vmem:[%s7612 + $0x258] sm:$0xff]
      %v8099 = vld [vmem:[%s7612 + $0x260] sm:$0x1]
      %v8100 = vld [vmem:[%s7612 + $0x268] sm:$0x1]
      %v8101 = vld [vmem:[%s7612 + $0x270] sm:$0xfe]
      %v8102 = vld [vmem:[%s7612 + $0x278] sm:$0xfe]
      %v8103 = vld [vmem:[%s7612 + $0x280] sm:$0xff]
      %v8104 = vld [vmem:[%s7612 + $0x288] sm:$0xff]
      %v8105 = vld [vmem:[%s7612 + $0x290] sm:$0x1]
      %v8106 = vld [vmem:[%s7612 + $0x298] sm:$0x1]
      %v8107 = vld [vmem:[%s7612 + $0x2a0] sm:$0xfe]
      %v8108 = vld [vmem:[%s7612 + $0x2a8] sm:$0xfe]
      %v8109 = vld [vmem:[%s7612 + $0x2b0] sm:$0xff]
      %v8110 = vld [vmem:[%s7612 + $0x2b8] sm:$0xff]
      %v8111 = vld [vmem:[%s7612 + $0x2c0] sm:$0x1]
      %v8112 = vld [vmem:[%s7612 + $0x2c8] sm:$0x1]
      %v8113 = vld [vmem:[%s7612 + $0x2d0] sm:$0xfe]
      %v8114 = vld [vmem:[%s7612 + $0x2d8] sm:$0xfe]
      %v8115 = vld [vmem:[%s7612 + $0x2e0] sm:$0xff]
      %v8116 = vld [vmem:[%s7612 + $0x2e8] sm:$0xff]
      %v8117 = vld [vmem:[%s7612 + $0x2f0] sm:$0x1]
      %v8118 = vld [vmem:[%s7612 + $0x2f8] sm:$0x1]
      %v8215 = vrot.slane %v8023, 1
      %v8216 = vrot.slane %v8025, 1
      %v8217 = vsel %vm4241, %v8215, %v8216
      %v8218 = vrot.slane %v8024, 1
      %v8219 = vrot.slane %v8026, 1
      %v8220 = vsel %vm4241, %v8218, %v8219
      %v8221 = vrot.slane %v8027, 1
      %v8222 = vsel %vm4241, %v8216, %v8221
      %v8223 = vrot.slane %v8028, 1
      %v8224 = vsel %vm4241, %v8219, %v8223
      %v8225 = vrot.slane %v8029, 1
      %v8226 = vrot.slane %v8031, 1
      %v8227 = vsel %vm4241, %v8225, %v8226
      %v8228 = vrot.slane %v8030, 1
      %v8229 = vrot.slane %v8032, 1
      %v8230 = vsel %vm4241, %v8228, %v8229
      %v8231 = vrot.slane %v8033, 1
      %v8232 = vsel %vm4241, %v8226, %v8231
      %v8233 = vrot.slane %v8034, 1
      %v8234 = vsel %vm4241, %v8229, %v8233
      %v8235 = vrot.slane %v8035, 1
      %v8236 = vrot.slane %v8037, 1
      %v8237 = vsel %vm4241, %v8235, %v8236
      %v8238 = vrot.slane %v8036, 1
      %v8239 = vrot.slane %v8038, 1
      %v8240 = vsel %vm4241, %v8238, %v8239
      %v8241 = vrot.slane %v8039, 1
      %v8242 = vsel %vm4241, %v8236, %v8241
      %v8243 = vrot.slane %v8040, 1
      %v8244 = vsel %vm4241, %v8239, %v8243
      %v8245 = vrot.slane %v8041, 1
      %v8246 = vrot.slane %v8043, 1
      %v8247 = vsel %vm4241, %v8245, %v8246
      %v8248 = vrot.slane %v8042, 1
      %v8249 = vrot.slane %v8044, 1
      %v8250 = vsel %vm4241, %v8248, %v8249
      %v8251 = vrot.slane %v8045, 1
      %v8252 = vsel %vm4241, %v8246, %v8251
      %v8253 = vrot.slane %v8046, 1
      %v8254 = vsel %vm4241, %v8249, %v8253
      %v8255 = vrot.slane %v8047, 1
      %v8256 = vrot.slane %v8049, 1
      %v8257 = vsel %vm4241, %v8255, %v8256
      %v8258 = vrot.slane %v8048, 1
      %v8259 = vrot.slane %v8050, 1
      %v8260 = vsel %vm4241, %v8258, %v8259
      %v8261 = vrot.slane %v8051, 1
      %v8262 = vsel %vm4241, %v8256, %v8261
      %v8263 = vrot.slane %v8052, 1
      %v8264 = vsel %vm4241, %v8259, %v8263
      %v8265 = vrot.slane %v8053, 1
      %v8266 = vrot.slane %v8055, 1
      %v8267 = vsel %vm4241, %v8265, %v8266
      %v8268 = vrot.slane %v8054, 1
      %v8269 = vrot.slane %v8056, 1
      %v8270 = vsel %vm4241, %v8268, %v8269
      %v8271 = vrot.slane %v8057, 1
      %v8272 = vsel %vm4241, %v8266, %v8271
      %v8273 = vrot.slane %v8058, 1
      %v8274 = vsel %vm4241, %v8269, %v8273
      %v8275 = vrot.slane %v8059, 1
      %v8276 = vrot.slane %v8061, 1
      %v8277 = vsel %vm4241, %v8275, %v8276
      %v8278 = vrot.slane %v8060, 1
      %v8279 = vrot.slane %v8062, 1
      %v8280 = vsel %vm4241, %v8278, %v8279
      %v8281 = vrot.slane %v8063, 1
      %v8282 = vsel %vm4241, %v8276, %v8281
      %v8283 = vrot.slane %v8064, 1
      %v8284 = vsel %vm4241, %v8279, %v8283
      %v8285 = vrot.slane %v8065, 1
      %v8286 = vrot.slane %v8067, 1
      %v8287 = vsel %vm4241, %v8285, %v8286
      %v8288 = vrot.slane %v8066, 1
      %v8289 = vrot.slane %v8068, 1
      %v8290 = vsel %vm4241, %v8288, %v8289
      %v8291 = vrot.slane %v8069, 1
      %v8292 = vsel %vm4241, %v8286, %v8291
      %v8293 = vrot.slane %v8070, 1
      %v8294 = vsel %vm4241, %v8289, %v8293
      %v8295 = vrot.slane %v8071, 1
      %v8296 = vrot.slane %v8073, 1
      %v8297 = vsel %vm4241, %v8295, %v8296
      %v8298 = vrot.slane %v8072, 1
      %v8299 = vrot.slane %v8074, 1
      %v8300 = vsel %vm4241, %v8298, %v8299
      %v8301 = vrot.slane %v8075, 1
      %v8302 = vsel %vm4241, %v8296, %v8301
      %v8303 = vrot.slane %v8076, 1
      %v8304 = vsel %vm4241, %v8299, %v8303
      %v8305 = vrot.slane %v8077, 1
      %v8306 = vrot.slane %v8079, 1
      %v8307 = vsel %vm4241, %v8305, %v8306
      %v8308 = vrot.slane %v8078, 1
      %v8309 = vrot.slane %v8080, 1
      %v8310 = vsel %vm4241, %v8308, %v8309
      %v8311 = vrot.slane %v8081, 1
      %v8312 = vsel %vm4241, %v8306, %v8311
      %v8313 = vrot.slane %v8082, 1
      %v8314 = vsel %vm4241, %v8309, %v8313
      %v8315 = vrot.slane %v8083, 1
      %v8316 = vrot.slane %v8085, 1
      %v8317 = vsel %vm4241, %v8315, %v8316
      %v8318 = vrot.slane %v8084, 1
      %v8319 = vrot.slane %v8086, 1
      %v8320 = vsel %vm4241, %v8318, %v8319
      %v8321 = vrot.slane %v8087, 1
      %v8322 = vsel %vm4241, %v8316, %v8321
      %v8323 = vrot.slane %v8088, 1
      %v8324 = vsel %vm4241, %v8319, %v8323
      %v8325 = vrot.slane %v8089, 1
      %v8326 = vrot.slane %v8091, 1
      %v8327 = vsel %vm4241, %v8325, %v8326
      %v8328 = vrot.slane %v8090, 1
      %v8329 = vrot.slane %v8092, 1
      %v8330 = vsel %vm4241, %v8328, %v8329
      %v8331 = vrot.slane %v8093, 1
      %v8332 = vsel %vm4241, %v8326, %v8331
      %v8333 = vrot.slane %v8094, 1
      %v8334 = vsel %vm4241, %v8329, %v8333
      %v8335 = vrot.slane %v8095, 1
      %v8336 = vrot.slane %v8097, 1
      %v8337 = vsel %vm4241, %v8335, %v8336
      %v8338 = vrot.slane %v8096, 1
      %v8339 = vrot.slane %v8098, 1
      %v8340 = vsel %vm4241, %v8338, %v8339
      %v8341 = vrot.slane %v8099, 1
      %v8342 = vsel %vm4241, %v8336, %v8341
      %v8343 = vrot.slane %v8100, 1
      %v8344 = vsel %vm4241, %v8339, %v8343
      %v8345 = vrot.slane %v8101, 1
      %v8346 = vrot.slane %v8103, 1
      %v8347 = vsel %vm4241, %v8345, %v8346
      %v8348 = vrot.slane %v8102, 1
      %v8349 = vrot.slane %v8104, 1
      %v8350 = vsel %vm4241, %v8348, %v8349
      %v8351 = vrot.slane %v8105, 1
      %v8352 = vsel %vm4241, %v8346, %v8351
      %v8353 = vrot.slane %v8106, 1
      %v8354 = vsel %vm4241, %v8349, %v8353
      %v8355 = vrot.slane %v8107, 1
      %v8356 = vrot.slane %v8109, 1
      %v8357 = vsel %vm4241, %v8355, %v8356
      %v8358 = vrot.slane %v8108, 1
      %v8359 = vrot.slane %v8110, 1
      %v8360 = vsel %vm4241, %v8358, %v8359
      %v8361 = vrot.slane %v8111, 1
      %v8362 = vsel %vm4241, %v8356, %v8361
      %v8363 = vrot.slane %v8112, 1
      %v8364 = vsel %vm4241, %v8359, %v8363
      %v8365 = vrot.slane %v8113, 1
      %v8366 = vrot.slane %v8115, 1
      %v8367 = vsel %vm4241, %v8365, %v8366
      %v8368 = vrot.slane %v8114, 1
      %v8369 = vrot.slane %v8116, 1
      %v8370 = vsel %vm4241, %v8368, %v8369
      %v8371 = vrot.slane %v8117, 1
      %v8372 = vsel %vm4241, %v8366, %v8371
      %v8373 = vrot.slane %v8118, 1
      %v8374 = vsel %vm4241, %v8369, %v8373
      %v8439 = vpack.c.bf16 %v8222, %v8217
      %v8440 = vpack.c.bf16 %v8224, %v8220
      %v8441 = vpack.c.bf16 %v8232, %v8227
      %v8442 = vpack.c.bf16 %v8234, %v8230
      %v8443 = vpack.c.bf16 %v8242, %v8237
      %v8444 = vpack.c.bf16 %v8244, %v8240
      %v8445 = vpack.c.bf16 %v8252, %v8247
      %v8446 = vpack.c.bf16 %v8254, %v8250
      %v8447 = vpack.c.bf16 %v8262, %v8257
      %v8448 = vpack.c.bf16 %v8264, %v8260
      %v8449 = vpack.c.bf16 %v8272, %v8267
      %v8450 = vpack.c.bf16 %v8274, %v8270
      %v8451 = vpack.c.bf16 %v8282, %v8277
      %v8452 = vpack.c.bf16 %v8284, %v8280
      %v8453 = vpack.c.bf16 %v8292, %v8287
      %v8454 = vpack.c.bf16 %v8294, %v8290
      %v8455 = vpack.c.bf16 %v8302, %v8297
      %v8456 = vpack.c.bf16 %v8304, %v8300
      %v8457 = vpack.c.bf16 %v8312, %v8307
      %v8458 = vpack.c.bf16 %v8314, %v8310
      %v8459 = vpack.c.bf16 %v8322, %v8317
      %v8460 = vpack.c.bf16 %v8324, %v8320
      %v8461 = vpack.c.bf16 %v8332, %v8327
      %v8462 = vpack.c.bf16 %v8334, %v8330
      %v8463 = vpack.c.bf16 %v8342, %v8337
      %v8464 = vpack.c.bf16 %v8344, %v8340
      %v8465 = vpack.c.bf16 %v8352, %v8347
      %v8466 = vpack.c.bf16 %v8354, %v8350
      %v8467 = vpack.c.bf16 %v8362, %v8357
      %v8468 = vpack.c.bf16 %v8364, %v8360
      %v8469 = vpack.c.bf16 %v8372, %v8367
      %v8470 = vpack.c.bf16 %v8374, %v8370
      %s8471 = scalar_lea.vmem %s2, 504
      %v8472 = vld [vmem:[%s8471] sm:$0xf]
      %v8473 = vld [vmem:[%s8471 + $0x4] sm:$0xf]
      %v8474 = vld [vmem:[%s8471 + $0x8] sm:$0xf]
      %v8475 = vld [vmem:[%s8471 + $0xc] sm:$0xf]
      %v8476 = vld [vmem:[%s8471 + $0x10] sm:$0xf]
      %v8477 = vld [vmem:[%s8471 + $0x14] sm:$0xf]
      %v8478 = vld [vmem:[%s8471 + $0x18] sm:$0xf]
      %v8479 = vld [vmem:[%s8471 + $0x1c] sm:$0xf]
      %v8480 = vld [vmem:[%s8471 + $0x20] sm:$0xf]
      %v8481 = vld [vmem:[%s8471 + $0x24] sm:$0xf]
      %v8482 = vld [vmem:[%s8471 + $0x28] sm:$0xf]
      %v8483 = vld [vmem:[%s8471 + $0x2c] sm:$0xf]
      %v8484 = vld [vmem:[%s8471 + $0x30] sm:$0xf]
      %v8485 = vld [vmem:[%s8471 + $0x34] sm:$0xf]
      %v8486 = vld [vmem:[%s8471 + $0x38] sm:$0xf]
      %v8487 = vld [vmem:[%s8471 + $0x3c] sm:$0xf]
      %v8488 = vld [vmem:[%s8471 + $0x40] sm:$0xf]
      %v8489 = vld [vmem:[%s8471 + $0x44] sm:$0xf]
      %v8508 = vunpack.c.l.b16 %v8472
      %v8509 = vunpack.c.l.b16 %v8473
      %v8510 = vunpack.c.l.b16 %v8474
      %v8511 = vunpack.c.l.b16 %v8475
      %v8512 = vunpack.c.l.b16 %v8476
      %v8513 = vunpack.c.l.b16 %v8477
      %v8514 = vunpack.c.l.b16 %v8478
      %v8515 = vunpack.c.l.b16 %v8479
      %v8516 = vunpack.c.l.b16 %v8480
      %v8517 = vunpack.c.l.b16 %v8481
      %v8518 = vunpack.c.l.b16 %v8482
      %v8519 = vunpack.c.l.b16 %v8483
      %v8520 = vunpack.c.l.b16 %v8484
      %v8521 = vunpack.c.l.b16 %v8485
      %v8522 = vunpack.c.l.b16 %v8486
      %v8523 = vunpack.c.l.b16 %v8487
      %v8524 = vunpack.c.l.b16 %v8488
      %v8525 = vunpack.c.l.b16 %v8489
      %v8526 = vpack.c.b16 %v8509, %v8508
      %v8527 = vpack.c.b16 %v8511, %v8510
      %v8528 = vpack.c.b16 %v8513, %v8512
      %v8529 = vpack.c.b16 %v8515, %v8514
      %v8530 = vpack.c.b16 %v8517, %v8516
      %v8531 = vpack.c.b16 %v8519, %v8518
      %v8532 = vpack.c.b16 %v8521, %v8520
      %v8533 = vpack.c.b16 %v8523, %v8522
      %v8534 = vpack.c.b16 %v8525, %v8524
      %v8545 = vsel %vm3626, %v8440, 0
      %v8548 = vsel %vm3626, %v8442, 0
      %v8551 = vsel %vm3626, %v8444, 0
      %v8554 = vsel %vm3626, %v8446, 0
      %v8557 = vsel %vm3626, %v8448, 0
      %v8560 = vsel %vm3626, %v8450, 0
      %v8563 = vsel %vm3626, %v8452, 0
      %v8566 = vsel %vm3626, %v8454, 0
      %v8569 = vsel %vm3626, %v8456, 0
      %v8572 = vsel %vm3626, %v8458, 0
      %v8575 = vsel %vm3626, %v8460, 0
      %v8578 = vsel %vm3626, %v8462, 0
      %v8581 = vsel %vm3626, %v8464, 0
      %v8584 = vsel %vm3626, %v8466, 0
      %v8587 = vsel %vm3626, %v8468, 0
      %v8590 = vsel %vm3626, %v8470, 0
      %8592 = vmatprep.subr.bf16.mxu0 0
      %8593 = vmatpush1.bf16.msra.mxu0 %v8526
      %8594 = vmatprep.subr.bf16.mxu0 0
      %8595 = vmatpush1.bf16.msra.mxu0 %v8527
      %8596 = vmatprep.subr.bf16.mxu0 0
      %8597 = vmatpush1.bf16.msra.mxu0 %v8528
      %8598 = vmatprep.subr.bf16.mxu0 0
      %8599 = vmatpush1.bf16.msra.mxu0 %v8529
      %8600 = vmatprep.subr.bf16.mxu0 0
      %8601 = vmatpush1.bf16.msra.mxu0 %v8530
      %8602 = vmatprep.subr.bf16.mxu0 0
      %8603 = vmatpush1.bf16.msra.mxu0 %v8531
      %8604 = vmatprep.subr.bf16.mxu0 0
      %8605 = vmatpush1.bf16.msra.mxu0 %v8532
      %8606 = vmatprep.subr.bf16.mxu0 0
      %8607 = vmatpush1.bf16.msra.mxu0 %v8533
      %8608 = vmatprep.subr.bf16.mxu0 0
      %8609 = vmatpush1.bf16.msra.mxu0 %v8534
      %8610 = vmatprep.subr.bf16.mxu0 0
      %8611 = vmatpush1.bf16.msra.mxu0 0
      %8612 = vmatprep.subr.bf16.mxu0 0
      %8613 = vmatpush1.bf16.msra.mxu0 0
      %8614 = vmatprep.subr.bf16.mxu0 0
      %8615 = vmatpush1.bf16.msra.mxu0 0
      %8616 = vmatprep.subr.bf16.mxu0 0
      %8617 = vmatpush1.bf16.msra.mxu0 0
      %8618 = vmatprep.subr.bf16.mxu0 0
      %8619 = vmatpush1.bf16.msra.mxu0 0
      %8620 = vmatprep.subr.bf16.mxu0 0
      %8621 = vmatpush1.bf16.msra.mxu0 0
      %8622 = vmatprep.subr.bf16.mxu0 0
      %8623 = vmatpush1.bf16.msra.mxu0 0
      %8624 = vmatprep.mubr.bf16.mxu0 %v8545
      %8625 = vmatmul.mubr.bf16.gmra.mrb[0].mxu0 %v8439
      %v8626 = vpop.f32.mrb[0].mxu0
      %v8627 = vadd.f32 0.0, %v8626
      %v8628 = vpop.f32.mrb[0].mxu0
      %v8629 = vpop.f32.mrb[0].mxu0
      %v8630 = vadd.f32 0.0, %v8629
      %v8631 = vpop.f32.mrb[0].mxu0
      %8632 = vmatprep.mubr.bf16.mxu0 %v8548
      %8633 = vmatmul.mubr.bf16.gmra.mrb[0].mxu0 %v8441
      %v8634 = vpop.f32.mrb[0].mxu0
      %v8635 = vadd.f32 0.0, %v8634
      %v8636 = vpop.f32.mrb[0].mxu0
      %v8637 = vpop.f32.mrb[0].mxu0
      %v8638 = vadd.f32 0.0, %v8637
      %v8639 = vpop.f32.mrb[0].mxu0
      %8640 = vmatprep.mubr.bf16.mxu0 %v8551
      %8641 = vmatmul.mubr.bf16.gmra.mrb[0].mxu0 %v8443
      %v8642 = vpop.f32.mrb[0].mxu0
      %v8643 = vadd.f32 0.0, %v8642
      %v8644 = vpop.f32.mrb[0].mxu0
      %v8645 = vpop.f32.mrb[0].mxu0
      %v8646 = vadd.f32 0.0, %v8645
      %v8647 = vpop.f32.mrb[0].mxu0
      %8648 = vmatprep.mubr.bf16.mxu0 %v8554
      %8649 = vmatmul.mubr.bf16.gmra.mrb[0].mxu0 %v8445
      %v8650 = vpop.f32.mrb[0].mxu0
      %v8651 = vadd.f32 0.0, %v8650
      %v8652 = vpop.f32.mrb[0].mxu0
      %v8653 = vpop.f32.mrb[0].mxu0
      %v8654 = vadd.f32 0.0, %v8653
      %v8655 = vpop.f32.mrb[0].mxu0
      %8656 = vmatprep.mubr.bf16.mxu0 %v8557
      %8657 = vmatmul.mubr.bf16.gmra.mrb[0].mxu0 %v8447
      %v8658 = vpop.f32.mrb[0].mxu0
      %v8659 = vadd.f32 0.0, %v8658
      %v8660 = vpop.f32.mrb[0].mxu0
      %v8661 = vpop.f32.mrb[0].mxu0
      %v8662 = vadd.f32 0.0, %v8661
      %v8663 = vpop.f32.mrb[0].mxu0
      %8664 = vmatprep.mubr.bf16.mxu0 %v8560
      %8665 = vmatmul.mubr.bf16.gmra.mrb[0].mxu0 %v8449
      %v8666 = vpop.f32.mrb[0].mxu0
      %v8667 = vadd.f32 0.0, %v8666
      %v8668 = vpop.f32.mrb[0].mxu0
      %v8669 = vpop.f32.mrb[0].mxu0
      %v8670 = vadd.f32 0.0, %v8669
      %v8671 = vpop.f32.mrb[0].mxu0
      %8672 = vmatprep.mubr.bf16.mxu0 %v8563
      %8673 = vmatmul.mubr.bf16.gmra.mrb[0].mxu0 %v8451
      %v8674 = vpop.f32.mrb[0].mxu0
      %v8675 = vadd.f32 0.0, %v8674
      %v8676 = vpop.f32.mrb[0].mxu0
      %v8677 = vpop.f32.mrb[0].mxu0
      %v8678 = vadd.f32 0.0, %v8677
      %v8679 = vpop.f32.mrb[0].mxu0
      %8680 = vmatprep.mubr.bf16.mxu0 %v8566
      %8681 = vmatmul.mubr.bf16.gmra.mrb[0].mxu0 %v8453
      %v8682 = vpop.f32.mrb[0].mxu0
      %v8683 = vadd.f32 0.0, %v8682
      %v8684 = vpop.f32.mrb[0].mxu0
      %v8685 = vpop.f32.mrb[0].mxu0
      %v8686 = vadd.f32 0.0, %v8685
      %v8687 = vpop.f32.mrb[0].mxu0
      %8688 = vmatprep.mubr.bf16.mxu0 %v8569
      %8689 = vmatmul.mubr.bf16.gmra.mrb[0].mxu0 %v8455
      %v8690 = vpop.f32.mrb[0].mxu0
      %v8691 = vadd.f32 0.0, %v8690
      %v8692 = vpop.f32.mrb[0].mxu0
      %v8693 = vpop.f32.mrb[0].mxu0
      %v8694 = vadd.f32 0.0, %v8693
      %v8695 = vpop.f32.mrb[0].mxu0
      %8696 = vmatprep.mubr.bf16.mxu0 %v8572
      %8697 = vmatmul.mubr.bf16.gmra.mrb[0].mxu0 %v8457
      %v8698 = vpop.f32.mrb[0].mxu0
      %v8699 = vadd.f32 0.0, %v8698
      %v8700 = vpop.f32.mrb[0].mxu0
      %v8701 = vpop.f32.mrb[0].mxu0
      %v8702 = vadd.f32 0.0, %v8701
      %v8703 = vpop.f32.mrb[0].mxu0
      %8704 = vmatprep.mubr.bf16.mxu0 %v8575
      %8705 = vmatmul.mubr.bf16.gmra.mrb[0].mxu0 %v8459
      %v8706 = vpop.f32.mrb[0].mxu0
      %v8707 = vadd.f32 0.0, %v8706
      %v8708 = vpop.f32.mrb[0].mxu0
      %v8709 = vpop.f32.mrb[0].mxu0
      %v8710 = vadd.f32 0.0, %v8709
      %v8711 = vpop.f32.mrb[0].mxu0
      %8712 = vmatprep.mubr.bf16.mxu0 %v8578
      %8713 = vmatmul.mubr.bf16.gmra.mrb[0].mxu0 %v8461
      %v8714 = vpop.f32.mrb[0].mxu0
      %v8715 = vadd.f32 0.0, %v8714
      %v8716 = vpop.f32.mrb[0].mxu0
      %v8717 = vpop.f32.mrb[0].mxu0
      %v8718 = vadd.f32 0.0, %v8717
      %v8719 = vpop.f32.mrb[0].mxu0
      %8720 = vmatprep.mubr.bf16.mxu0 %v8581
      %8721 = vmatmul.mubr.bf16.gmra.mrb[0].mxu0 %v8463
      %v8722 = vpop.f32.mrb[0].mxu0
      %v8723 = vadd.f32 0.0, %v8722
      %v8724 = vpop.f32.mrb[0].mxu0
      %v8725 = vpop.f32.mrb[0].mxu0
      %v8726 = vadd.f32 0.0, %v8725
      %v8727 = vpop.f32.mrb[0].mxu0
      %8728 = vmatprep.mubr.bf16.mxu0 %v8584
      %8729 = vmatmul.mubr.bf16.gmra.mrb[0].mxu0 %v8465
      %v8730 = vpop.f32.mrb[0].mxu0
      %v8731 = vadd.f32 0.0, %v8730
      %v8732 = vpop.f32.mrb[0].mxu0
      %v8733 = vpop.f32.mrb[0].mxu0
      %v8734 = vadd.f32 0.0, %v8733
      %v8735 = vpop.f32.mrb[0].mxu0
      %8736 = vmatprep.mubr.bf16.mxu0 %v8587
      %8737 = vmatmul.mubr.bf16.gmra.mrb[0].mxu0 %v8467
      %v8738 = vpop.f32.mrb[0].mxu0
      %v8739 = vadd.f32 0.0, %v8738
      %v8740 = vpop.f32.mrb[0].mxu0
      %v8741 = vpop.f32.mrb[0].mxu0
      %v8742 = vadd.f32 0.0, %v8741
      %v8743 = vpop.f32.mrb[0].mxu0
      %8744 = vmatprep.mubr.bf16.mxu0 %v8590
      %8745 = vmatmul.mubr.bf16.gmra.mrb[0].mxu0 %v8469
      %v8746 = vpop.f32.mrb[0].mxu0
      %v8747 = vadd.f32 0.0, %v8746
      %v8748 = vpop.f32.mrb[0].mxu0
      %v8749 = vpop.f32.mrb[0].mxu0
      %v8750 = vadd.f32 0.0, %v8749
      %v8751 = vpop.f32.mrb[0].mxu0
      %8752 = vdwg.mxu0
      %v8753 = vadd.f32 %v7991, %v8627
      %v8754 = vadd.f32 %v7992, %v8630
      %v8755 = vadd.f32 %v7993, %v8635
      %v8756 = vadd.f32 %v7994, %v8638
      %v8757 = vadd.f32 %v7995, %v8643
      %v8758 = vadd.f32 %v7996, %v8646
      %v8759 = vadd.f32 %v7997, %v8651
      %v8760 = vadd.f32 %v7998, %v8654
      %v8761 = vadd.f32 %v7999, %v8659
      %v8762 = vadd.f32 %v8000, %v8662
      %v8763 = vadd.f32 %v8001, %v8667
      %v8764 = vadd.f32 %v8002, %v8670
      %v8765 = vadd.f32 %v8003, %v8675
      %v8766 = vadd.f32 %v8004, %v8678
      %v8767 = vadd.f32 %v8005, %v8683
      %v8768 = vadd.f32 %v8006, %v8686
      %v8769 = vadd.f32 %v8007, %v8691
      %v8770 = vadd.f32 %v8008, %v8694
      %v8771 = vadd.f32 %v8009, %v8699
      %v8772 = vadd.f32 %v8010, %v8702
      %v8773 = vadd.f32 %v8011, %v8707
      %v8774 = vadd.f32 %v8012, %v8710
      %v8775 = vadd.f32 %v8013, %v8715
      %v8776 = vadd.f32 %v8014, %v8718
      %v8777 = vadd.f32 %v8015, %v8723
      %v8778 = vadd.f32 %v8016, %v8726
      %v8779 = vadd.f32 %v8017, %v8731
      %v8780 = vadd.f32 %v8018, %v8734
      %v8781 = vadd.f32 %v8019, %v8739
      %v8782 = vadd.f32 %v8020, %v8742
      %v8783 = vadd.f32 %v8021, %v8747
      %v8784 = vadd.f32 %v8022, %v8750
      %v8785 = vld [vmem:[%s7612] sm:$0xfc]
      %v8786 = vld [vmem:[%s7612 + $0x8] sm:$0xfc]
      %v8787 = vld [vmem:[%s7612 + $0x20] sm:$0x3]
      %v8788 = vld [vmem:[%s7612 + $0x28] sm:$0x3]
      %v8789 = vld [vmem:[%s7612 + $0x30] sm:$0xfc]
      %v8790 = vld [vmem:[%s7612 + $0x38] sm:$0xfc]
      %v8791 = vld [vmem:[%s7612 + $0x50] sm:$0x3]
      %v8792 = vld [vmem:[%s7612 + $0x58] sm:$0x3]
      %v8793 = vld [vmem:[%s7612 + $0x60] sm:$0xfc]
      %v8794 = vld [vmem:[%s7612 + $0x68] sm:$0xfc]
      %v8795 = vld [vmem:[%s7612 + $0x80] sm:$0x3]
      %v8796 = vld [vmem:[%s7612 + $0x88] sm:$0x3]
      %v8797 = vld [vmem:[%s7612 + $0x90] sm:$0xfc]
      %v8798 = vld [vmem:[%s7612 + $0x98] sm:$0xfc]
      %v8799 = vld [vmem:[%s7612 + $0xb0] sm:$0x3]
      %v8800 = vld [vmem:[%s7612 + $0xb8] sm:$0x3]
      %v8801 = vld [vmem:[%s7612 + $0xc0] sm:$0xfc]
      %v8802 = vld [vmem:[%s7612 + $0xc8] sm:$0xfc]
      %v8803 = vld [vmem:[%s7612 + $0xe0] sm:$0x3]
      %v8804 = vld [vmem:[%s7612 + $0xe8] sm:$0x3]
      %v8805 = vld [vmem:[%s7612 + $0xf0] sm:$0xfc]
      %v8806 = vld [vmem:[%s7612 + $0xf8] sm:$0xfc]
      %v8807 = vld [vmem:[%s7612 + $0x110] sm:$0x3]
      %v8808 = vld [vmem:[%s7612 + $0x118] sm:$0x3]
      %v8809 = vld [vmem:[%s7612 + $0x120] sm:$0xfc]
      %v8810 = vld [vmem:[%s7612 + $0x128] sm:$0xfc]
      %v8811 = vld [vmem:[%s7612 + $0x140] sm:$0x3]
      %v8812 = vld [vmem:[%s7612 + $0x148] sm:$0x3]
      %v8813 = vld [vmem:[%s7612 + $0x150] sm:$0xfc]
      %v8814 = vld [vmem:[%s7612 + $0x158] sm:$0xfc]
      %v8815 = vld [vmem:[%s7612 + $0x170] sm:$0x3]
      %v8816 = vld [vmem:[%s7612 + $0x178] sm:$0x3]
      %v8817 = vld [vmem:[%s7612 + $0x180] sm:$0xfc]
      %v8818 = vld [vmem:[%s7612 + $0x188] sm:$0xfc]
      %v8819 = vld [vmem:[%s7612 + $0x1a0] sm:$0x3]
      %v8820 = vld [vmem:[%s7612 + $0x1a8] sm:$0x3]
      %v8821 = vld [vmem:[%s7612 + $0x1b0] sm:$0xfc]
      %v8822 = vld [vmem:[%s7612 + $0x1b8] sm:$0xfc]
      %v8823 = vld [vmem:[%s7612 + $0x1d0] sm:$0x3]
      %v8824 = vld [vmem:[%s7612 + $0x1d8] sm:$0x3]
      %v8825 = vld [vmem:[%s7612 + $0x1e0] sm:$0xfc]
      %v8826 = vld [vmem:[%s7612 + $0x1e8] sm:$0xfc]
      %v8827 = vld [vmem:[%s7612 + $0x200] sm:$0x3]
      %v8828 = vld [vmem:[%s7612 + $0x208] sm:$0x3]
      %v8829 = vld [vmem:[%s7612 + $0x210] sm:$0xfc]
      %v8830 = vld [vmem:[%s7612 + $0x218] sm:$0xfc]
      %v8831 = vld [vmem:[%s7612 + $0x230] sm:$0x3]
      %v8832 = vld [vmem:[%s7612 + $0x238] sm:$0x3]
      %v8833 = vld [vmem:[%s7612 + $0x240] sm:$0xfc]
      %v8834 = vld [vmem:[%s7612 + $0x248] sm:$0xfc]
      %v8835 = vld [vmem:[%s7612 + $0x260] sm:$0x3]
      %v8836 = vld [vmem:[%s7612 + $0x268] sm:$0x3]
      %v8837 = vld [vmem:[%s7612 + $0x270] sm:$0xfc]
      %v8838 = vld [vmem:[%s7612 + $0x278] sm:$0xfc]
      %v8839 = vld [vmem:[%s7612 + $0x290] sm:$0x3]
      %v8840 = vld [vmem:[%s7612 + $0x298] sm:$0x3]
      %v8841 = vld [vmem:[%s7612 + $0x2a0] sm:$0xfc]
      %v8842 = vld [vmem:[%s7612 + $0x2a8] sm:$0xfc]
      %v8843 = vld [vmem:[%s7612 + $0x2c0] sm:$0x3]
      %v8844 = vld [vmem:[%s7612 + $0x2c8] sm:$0x3]
      %v8845 = vld [vmem:[%s7612 + $0x2d0] sm:$0xfc]
      %v8846 = vld [vmem:[%s7612 + $0x2d8] sm:$0xfc]
      %v8847 = vld [vmem:[%s7612 + $0x2f0] sm:$0x3]
      %v8848 = vld [vmem:[%s7612 + $0x2f8] sm:$0x3]
      %v8913 = vrot.slane %v8785, 2
      %v8914 = vrot.slane %v8025, 2
      %v8915 = vsel %vm5171, %v8913, %v8914
      %v8916 = vrot.slane %v8786, 2
      %v8917 = vrot.slane %v8026, 2
      %v8918 = vsel %vm5171, %v8916, %v8917
      %v8919 = vrot.slane %v8787, 2
      %v8920 = vsel %vm5171, %v8914, %v8919
      %v8921 = vrot.slane %v8788, 2
      %v8922 = vsel %vm5171, %v8917, %v8921
      %v8923 = vrot.slane %v8789, 2
      %v8924 = vrot.slane %v8031, 2
      %v8925 = vsel %vm5171, %v8923, %v8924
      %v8926 = vrot.slane %v8790, 2
      %v8927 = vrot.slane %v8032, 2
      %v8928 = vsel %vm5171, %v8926, %v8927
      %v8929 = vrot.slane %v8791, 2
      %v8930 = vsel %vm5171, %v8924, %v8929
      %v8931 = vrot.slane %v8792, 2
      %v8932 = vsel %vm5171, %v8927, %v8931
      %v8933 = vrot.slane %v8793, 2
      %v8934 = vrot.slane %v8037, 2
      %v8935 = vsel %vm5171, %v8933, %v8934
      %v8936 = vrot.slane %v8794, 2
      %v8937 = vrot.slane %v8038, 2
      %v8938 = vsel %vm5171, %v8936, %v8937
      %v8939 = vrot.slane %v8795, 2
      %v8940 = vsel %vm5171, %v8934, %v8939
      %v8941 = vrot.slane %v8796, 2
      %v8942 = vsel %vm5171, %v8937, %v8941
      %v8943 = vrot.slane %v8797, 2
      %v8944 = vrot.slane %v8043, 2
      %v8945 = vsel %vm5171, %v8943, %v8944
      %v8946 = vrot.slane %v8798, 2
      %v8947 = vrot.slane %v8044, 2
      %v8948 = vsel %vm5171, %v8946, %v8947
      %v8949 = vrot.slane %v8799, 2
      %v8950 = vsel %vm5171, %v8944, %v8949
      %v8951 = vrot.slane %v8800, 2
      %v8952 = vsel %vm5171, %v8947, %v8951
      %v8953 = vrot.slane %v8801, 2
      %v8954 = vrot.slane %v8049, 2
      %v8955 = vsel %vm5171, %v8953, %v8954
      %v8956 = vrot.slane %v8802, 2
      %v8957 = vrot.slane %v8050, 2
      %v8958 = vsel %vm5171, %v8956, %v8957
      %v8959 = vrot.slane %v8803, 2
      %v8960 = vsel %vm5171, %v8954, %v8959
      %v8961 = vrot.slane %v8804, 2
      %v8962 = vsel %vm5171, %v8957, %v8961
      %v8963 = vrot.slane %v8805, 2
      %v8964 = vrot.slane %v8055, 2
      %v8965 = vsel %vm5171, %v8963, %v8964
      %v8966 = vrot.slane %v8806, 2
      %v8967 = vrot.slane %v8056, 2
      %v8968 = vsel %vm5171, %v8966, %v8967
      %v8969 = vrot.slane %v8807, 2
      %v8970 = vsel %vm5171, %v8964, %v8969
      %v8971 = vrot.slane %v8808, 2
      %v8972 = vsel %vm5171, %v8967, %v8971
      %v8973 = vrot.slane %v8809, 2
      %v8974 = vrot.slane %v8061, 2
      %v8975 = vsel %vm5171, %v8973, %v8974
      %v8976 = vrot.slane %v8810, 2
      %v8977 = vrot.slane %v8062, 2
      %v8978 = vsel %vm5171, %v8976, %v8977
      %v8979 = vrot.slane %v8811, 2
      %v8980 = vsel %vm5171, %v8974, %v8979
      %v8981 = vrot.slane %v8812, 2
      %v8982 = vsel %vm5171, %v8977, %v8981
      %v8983 = vrot.slane %v8813, 2
      %v8984 = vrot.slane %v8067, 2
      %v8985 = vsel %vm5171, %v8983, %v8984
      %v8986 = vrot.slane %v8814, 2
      %v8987 = vrot.slane %v8068, 2
      %v8988 = vsel %vm5171, %v8986, %v8987
      %v8989 = vrot.slane %v8815, 2
      %v8990 = vsel %vm5171, %v8984, %v8989
      %v8991 = vrot.slane %v8816, 2
      %v8992 = vsel %vm5171, %v8987, %v8991
      %v8993 = vrot.slane %v8817, 2
      %v8994 = vrot.slane %v8073, 2
      %v8995 = vsel %vm5171, %v8993, %v8994
      %v8996 = vrot.slane %v8818, 2
      %v8997 = vrot.slane %v8074, 2
      %v8998 = vsel %vm5171, %v8996, %v8997
      %v8999 = vrot.slane %v8819, 2
      %v9000 = vsel %vm5171, %v8994, %v8999
      %v9001 = vrot.slane %v8820, 2
      %v9002 = vsel %vm5171, %v8997, %v9001
      %v9003 = vrot.slane %v8821, 2
      %v9004 = vrot.slane %v8079, 2
      %v9005 = vsel %vm5171, %v9003, %v9004
      %v9006 = vrot.slane %v8822, 2
      %v9007 = vrot.slane %v8080, 2
      %v9008 = vsel %vm5171, %v9006, %v9007
      %v9009 = vrot.slane %v8823, 2
      %v9010 = vsel %vm5171, %v9004, %v9009
      %v9011 = vrot.slane %v8824, 2
      %v9012 = vsel %vm5171, %v9007, %v9011
      %v9013 = vrot.slane %v8825, 2
      %v9014 = vrot.slane %v8085, 2
      %v9015 = vsel %vm5171, %v9013, %v9014
      %v9016 = vrot.slane %v8826, 2
      %v9017 = vrot.slane %v8086, 2
      %v9018 = vsel %vm5171, %v9016, %v9017
      %v9019 = vrot.slane %v8827, 2
      %v9020 = vsel %vm5171, %v9014, %v9019
      %v9021 = vrot.slane %v8828, 2
      %v9022 = vsel %vm5171, %v9017, %v9021
      %v9023 = vrot.slane %v8829, 2
      %v9024 = vrot.slane %v8091, 2
      %v9025 = vsel %vm5171, %v9023, %v9024
      %v9026 = vrot.slane %v8830, 2
      %v9027 = vrot.slane %v8092, 2
      %v9028 = vsel %vm5171, %v9026, %v9027
      %v9029 = vrot.slane %v8831, 2
      %v9030 = vsel %vm5171, %v9024, %v9029
      %v9031 = vrot.slane %v8832, 2
      %v9032 = vsel %vm5171, %v9027, %v9031
      %v9033 = vrot.slane %v8833, 2
      %v9034 = vrot.slane %v8097, 2
      %v9035 = vsel %vm5171, %v9033, %v9034
      %v9036 = vrot.slane %v8834, 2
      %v9037 = vrot.slane %v8098, 2
      %v9038 = vsel %vm5171, %v9036, %v9037
      %v9039 = vrot.slane %v8835, 2
      %v9040 = vsel %vm5171, %v9034, %v9039
      %v9041 = vrot.slane %v8836, 2
      %v9042 = vsel %vm5171, %v9037, %v9041
      %v9043 = vrot.slane %v8837, 2
      %v9044 = vrot.slane %v8103, 2
      %v9045 = vsel %vm5171, %v9043, %v9044
      %v9046 = vrot.slane %v8838, 2
      %v9047 = vrot.slane %v8104, 2
      %v9048 = vsel %vm5171, %v9046, %v9047
      %v9049 = vrot.slane %v8839, 2
      %v9050 = vsel %vm5171, %v9044, %v9049
      %v9051 = vrot.slane %v8840, 2
      %v9052 = vsel %vm5171, %v9047, %v9051
      %v9053 = vrot.slane %v8841, 2
      %v9054 = vrot.slane %v8109, 2
      %v9055 = vsel %vm5171, %v9053, %v9054
      %v9056 = vrot.slane %v8842, 2
      %v9057 = vrot.slane %v8110, 2
      %v9058 = vsel %vm5171, %v9056, %v9057
      %v9059 = vrot.slane %v8843, 2
      %v9060 = vsel %vm5171, %v9054, %v9059
      %v9061 = vrot.slane %v8844, 2
      %v9062 = vsel %vm5171, %v9057, %v9061
      %v9063 = vrot.slane %v8845, 2
      %v9064 = vrot.slane %v8115, 2
      %v9065 = vsel %vm5171, %v9063, %v9064
      %v9066 = vrot.slane %v8846, 2
      %v9067 = vrot.slane %v8116, 2
      %v9068 = vsel %vm5171, %v9066, %v9067
      %v9069 = vrot.slane %v8847, 2
      %v9070 = vsel %vm5171, %v9064, %v9069
      %v9071 = vrot.slane %v8848, 2
      %v9072 = vsel %vm5171, %v9067, %v9071
      %v9137 = vpack.c.bf16 %v8920, %v8915
      %v9138 = vpack.c.bf16 %v8922, %v8918
      %v9139 = vpack.c.bf16 %v8930, %v8925
      %v9140 = vpack.c.bf16 %v8932, %v8928
      %v9141 = vpack.c.bf16 %v8940, %v8935
      %v9142 = vpack.c.bf16 %v8942, %v8938
      %v9143 = vpack.c.bf16 %v8950, %v8945
      %v9144 = vpack.c.bf16 %v8952, %v8948
      %v9145 = vpack.c.bf16 %v8960, %v8955
      %v9146 = vpack.c.bf16 %v8962, %v8958
      %v9147 = vpack.c.bf16 %v8970, %v8965
      %v9148 = vpack.c.bf16 %v8972, %v8968
      %v9149 = vpack.c.bf16 %v8980, %v8975
      %v9150 = vpack.c.bf16 %v8982, %v8978
      %v9151 = vpack.c.bf16 %v8990, %v8985
      %v9152 = vpack.c.bf16 %v8992, %v8988
      %v9153 = vpack.c.bf16 %v9000, %v8995
      %v9154 = vpack.c.bf16 %v9002, %v8998
      %v9155 = vpack.c.bf16 %v9010, %v9005
      %v9156 = vpack.c.bf16 %v9012, %v9008
      %v9157 = vpack.c.bf16 %v9020, %v9015
      %v9158 = vpack.c.bf16 %v9022, %v9018
      %v9159 = vpack.c.bf16 %v9030, %v9025
      %v9160 = vpack.c.bf16 %v9032, %v9028
      %v9161 = vpack.c.bf16 %v9040, %v9035
      %v9162 = vpack.c.bf16 %v9042, %v9038
      %v9163 = vpack.c.bf16 %v9050, %v9045
      %v9164 = vpack.c.bf16 %v9052, %v9048
      %v9165 = vpack.c.bf16 %v9060, %v9055
      %v9166 = vpack.c.bf16 %v9062, %v9058
      %v9167 = vpack.c.bf16 %v9070, %v9065
      %v9168 = vpack.c.bf16 %v9072, %v9068
      %s9169 = scalar_lea.vmem %s2, 576
      %v9170 = vld [vmem:[%s9169] sm:$0xf]
      %v9171 = vld [vmem:[%s9169 + $0x4] sm:$0xf]
      %v9172 = vld [vmem:[%s9169 + $0x8] sm:$0xf]
      %v9173 = vld [vmem:[%s9169 + $0xc] sm:$0xf]
      %v9174 = vld [vmem:[%s9169 + $0x10] sm:$0xf]
      %v9175 = vld [vmem:[%s9169 + $0x14] sm:$0xf]
      %v9176 = vld [vmem:[%s9169 + $0x18] sm:$0xf]
      %v9177 = vld [vmem:[%s9169 + $0x1c] sm:$0xf]
      %v9178 = vld [vmem:[%s9169 + $0x20] sm:$0xf]
      %v9179 = vld [vmem:[%s9169 + $0x24] sm:$0xf]
      %v9180 = vld [vmem:[%s9169 + $0x28] sm:$0xf]
      %v9181 = vld [vmem:[%s9169 + $0x2c] sm:$0xf]
      %v9182 = vld [vmem:[%s9169 + $0x30] sm:$0xf]
      %v9183 = vld [vmem:[%s9169 + $0x34] sm:$0xf]
      %v9184 = vld [vmem:[%s9169 + $0x38] sm:$0xf]
      %v9185 = vld [vmem:[%s9169 + $0x3c] sm:$0xf]
      %v9186 = vld [vmem:[%s9169 + $0x40] sm:$0xf]
      %v9187 = vld [vmem:[%s9169 + $0x44] sm:$0xf]
      %v9206 = vunpack.c.l.b16 %v9170
      %v9207 = vunpack.c.l.b16 %v9171
      %v9208 = vunpack.c.l.b16 %v9172
      %v9209 = vunpack.c.l.b16 %v9173
      %v9210 = vunpack.c.l.b16 %v9174
      %v9211 = vunpack.c.l.b16 %v9175
      %v9212 = vunpack.c.l.b16 %v9176
      %v9213 = vunpack.c.l.b16 %v9177
      %v9214 = vunpack.c.l.b16 %v9178
      %v9215 = vunpack.c.l.b16 %v9179
      %v9216 = vunpack.c.l.b16 %v9180
      %v9217 = vunpack.c.l.b16 %v9181
      %v9218 = vunpack.c.l.b16 %v9182
      %v9219 = vunpack.c.l.b16 %v9183
      %v9220 = vunpack.c.l.b16 %v9184
      %v9221 = vunpack.c.l.b16 %v9185
      %v9222 = vunpack.c.l.b16 %v9186
      %v9223 = vunpack.c.l.b16 %v9187
      %v9224 = vpack.c.b16 %v9207, %v9206
      %v9225 = vpack.c.b16 %v9209, %v9208
      %v9226 = vpack.c.b16 %v9211, %v9210
      %v9227 = vpack.c.b16 %v9213, %v9212
      %v9228 = vpack.c.b16 %v9215, %v9214
      %v9229 = vpack.c.b16 %v9217, %v9216
      %v9230 = vpack.c.b16 %v9219, %v9218
      %v9231 = vpack.c.b16 %v9221, %v9220
      %v9232 = vpack.c.b16 %v9223, %v9222
      %v9243 = vsel %vm3626, %v9138, 0
      %v9246 = vsel %vm3626, %v9140, 0
      %v9249 = vsel %vm3626, %v9142, 0
      %v9252 = vsel %vm3626, %v9144, 0
      %v9255 = vsel %vm3626, %v9146, 0
      %v9258 = vsel %vm3626, %v9148, 0
      %v9261 = vsel %vm3626, %v9150, 0
      %v9264 = vsel %vm3626, %v9152, 0
      %v9267 = vsel %vm3626, %v9154, 0
      %v9270 = vsel %vm3626, %v9156, 0
      %v9273 = vsel %vm3626, %v9158, 0
      %v9276 = vsel %vm3626, %v9160, 0
      %v9279 = vsel %vm3626, %v9162, 0
      %v9282 = vsel %vm3626, %v9164, 0
      %v9285 = vsel %vm3626, %v9166, 0
      %v9288 = vsel %vm3626, %v9168, 0
      %9290 = vmatprep.subr.bf16.mxu0 0
      %9291 = vmatpush1.bf16.msra.mxu0 %v9224
      %9292 = vmatprep.subr.bf16.mxu0 0
      %9293 = vmatpush1.bf16.msra.mxu0 %v9225
      %9294 = vmatprep.subr.bf16.mxu0 0
      %9295 = vmatpush1.bf16.msra.mxu0 %v9226
      %9296 = vmatprep.subr.bf16.mxu0 0
      %9297 = vmatpush1.bf16.msra.mxu0 %v9227
      %9298 = vmatprep.subr.bf16.mxu0 0
      %9299 = vmatpush1.bf16.msra.mxu0 %v9228
      %9300 = vmatprep.subr.bf16.mxu0 0
      %9301 = vmatpush1.bf16.msra.mxu0 %v9229
      %9302 = vmatprep.subr.bf16.mxu0 0
      %9303 = vmatpush1.bf16.msra.mxu0 %v9230
      %9304 = vmatprep.subr.bf16.mxu0 0
      %9305 = vmatpush1.bf16.msra.mxu0 %v9231
      %9306 = vmatprep.subr.bf16.mxu0 0
      %9307 = vmatpush1.bf16.msra.mxu0 %v9232
      %9308 = vmatprep.subr.bf16.mxu0 0
      %9309 = vmatpush1.bf16.msra.mxu0 0
      %9310 = vmatprep.subr.bf16.mxu0 0
      %9311 = vmatpush1.bf16.msra.mxu0 0
      %9312 = vmatprep.subr.bf16.mxu0 0
      %9313 = vmatpush1.bf16.msra.mxu0 0
      %9314 = vmatprep.subr.bf16.mxu0 0
      %9315 = vmatpush1.bf16.msra.mxu0 0
      %9316 = vmatprep.subr.bf16.mxu0 0
      %9317 = vmatpush1.bf16.msra.mxu0 0
      %9318 = vmatprep.subr.bf16.mxu0 0
      %9319 = vmatpush1.bf16.msra.mxu0 0
      %9320 = vmatprep.subr.bf16.mxu0 0
      %9321 = vmatpush1.bf16.msra.mxu0 0
      %9322 = vmatprep.mubr.bf16.mxu0 %v9243
      %9323 = vmatmul.mubr.bf16.gmra.mrb[0].mxu0 %v9137
      %v9324 = vpop.f32.mrb[0].mxu0
      %v9325 = vadd.f32 0.0, %v9324
      %v9326 = vpop.f32.mrb[0].mxu0
      %v9327 = vpop.f32.mrb[0].mxu0
      %v9328 = vadd.f32 0.0, %v9327
      %v9329 = vpop.f32.mrb[0].mxu0
      %9330 = vmatprep.mubr.bf16.mxu0 %v9246
      %9331 = vmatmul.mubr.bf16.gmra.mrb[0].mxu0 %v9139
      %v9332 = vpop.f32.mrb[0].mxu0
      %v9333 = vadd.f32 0.0, %v9332
      %v9334 = vpop.f32.mrb[0].mxu0
      %v9335 = vpop.f32.mrb[0].mxu0
      %v9336 = vadd.f32 0.0, %v9335
      %v9337 = vpop.f32.mrb[0].mxu0
      %9338 = vmatprep.mubr.bf16.mxu0 %v9249
      %9339 = vmatmul.mubr.bf16.gmra.mrb[0].mxu0 %v9141
      %v9340 = vpop.f32.mrb[0].mxu0
      %v9341 = vadd.f32 0.0, %v9340
      %v9342 = vpop.f32.mrb[0].mxu0
      %v9343 = vpop.f32.mrb[0].mxu0
      %v9344 = vadd.f32 0.0, %v9343
      %v9345 = vpop.f32.mrb[0].mxu0
      %9346 = vmatprep.mubr.bf16.mxu0 %v9252
      %9347 = vmatmul.mubr.bf16.gmra.mrb[0].mxu0 %v9143
      %v9348 = vpop.f32.mrb[0].mxu0
      %v9349 = vadd.f32 0.0, %v9348
      %v9350 = vpop.f32.mrb[0].mxu0
      %v9351 = vpop.f32.mrb[0].mxu0
      %v9352 = vadd.f32 0.0, %v9351
      %v9353 = vpop.f32.mrb[0].mxu0
      %9354 = vmatprep.mubr.bf16.mxu0 %v9255
      %9355 = vmatmul.mubr.bf16.gmra.mrb[0].mxu0 %v9145
      %v9356 = vpop.f32.mrb[0].mxu0
      %v9357 = vadd.f32 0.0, %v9356
      %v9358 = vpop.f32.mrb[0].mxu0
      %v9359 = vpop.f32.mrb[0].mxu0
      %v9360 = vadd.f32 0.0, %v9359
      %v9361 = vpop.f32.mrb[0].mxu0
      %9362 = vmatprep.mubr.bf16.mxu0 %v9258
      %9363 = vmatmul.mubr.bf16.gmra.mrb[0].mxu0 %v9147
      %v9364 = vpop.f32.mrb[0].mxu0
      %v9365 = vadd.f32 0.0, %v9364
      %v9366 = vpop.f32.mrb[0].mxu0
      %v9367 = vpop.f32.mrb[0].mxu0
      %v9368 = vadd.f32 0.0, %v9367
      %v9369 = vpop.f32.mrb[0].mxu0
      %9370 = vmatprep.mubr.bf16.mxu0 %v9261
      %9371 = vmatmul.mubr.bf16.gmra.mrb[0].mxu0 %v9149
      %v9372 = vpop.f32.mrb[0].mxu0
      %v9373 = vadd.f32 0.0, %v9372
      %v9374 = vpop.f32.mrb[0].mxu0
      %v9375 = vpop.f32.mrb[0].mxu0
      %v9376 = vadd.f32 0.0, %v9375
      %v9377 = vpop.f32.mrb[0].mxu0
      %9378 = vmatprep.mubr.bf16.mxu0 %v9264
      %9379 = vmatmul.mubr.bf16.gmra.mrb[0].mxu0 %v9151
      %v9380 = vpop.f32.mrb[0].mxu0
      %v9381 = vadd.f32 0.0, %v9380
      %v9382 = vpop.f32.mrb[0].mxu0
      %v9383 = vpop.f32.mrb[0].mxu0
      %v9384 = vadd.f32 0.0, %v9383
      %v9385 = vpop.f32.mrb[0].mxu0
      %9386 = vmatprep.mubr.bf16.mxu0 %v9267
      %9387 = vmatmul.mubr.bf16.gmra.mrb[0].mxu0 %v9153
      %v9388 = vpop.f32.mrb[0].mxu0
      %v9389 = vadd.f32 0.0, %v9388
      %v9390 = vpop.f32.mrb[0].mxu0
      %v9391 = vpop.f32.mrb[0].mxu0
      %v9392 = vadd.f32 0.0, %v9391
      %v9393 = vpop.f32.mrb[0].mxu0
      %9394 = vmatprep.mubr.bf16.mxu0 %v9270
      %9395 = vmatmul.mubr.bf16.gmra.mrb[0].mxu0 %v9155
      %v9396 = vpop.f32.mrb[0].mxu0
      %v9397 = vadd.f32 0.0, %v9396
      %v9398 = vpop.f32.mrb[0].mxu0
      %v9399 = vpop.f32.mrb[0].mxu0
      %v9400 = vadd.f32 0.0, %v9399
      %v9401 = vpop.f32.mrb[0].mxu0
      %9402 = vmatprep.mubr.bf16.mxu0 %v9273
      %9403 = vmatmul.mubr.bf16.gmra.mrb[0].mxu0 %v9157
      %v9404 = vpop.f32.mrb[0].mxu0
      %v9405 = vadd.f32 0.0, %v9404
      %v9406 = vpop.f32.mrb[0].mxu0
      %v9407 = vpop.f32.mrb[0].mxu0
      %v9408 = vadd.f32 0.0, %v9407
      %v9409 = vpop.f32.mrb[0].mxu0
      %9410 = vmatprep.mubr.bf16.mxu0 %v9276
      %9411 = vmatmul.mubr.bf16.gmra.mrb[0].mxu0 %v9159
      %v9412 = vpop.f32.mrb[0].mxu0
      %v9413 = vadd.f32 0.0, %v9412
      %v9414 = vpop.f32.mrb[0].mxu0
      %v9415 = vpop.f32.mrb[0].mxu0
      %v9416 = vadd.f32 0.0, %v9415
      %v9417 = vpop.f32.mrb[0].mxu0
      %9418 = vmatprep.mubr.bf16.mxu0 %v9279
      %9419 = vmatmul.mubr.bf16.gmra.mrb[0].mxu0 %v9161
      %v9420 = vpop.f32.mrb[0].mxu0
      %v9421 = vadd.f32 0.0, %v9420
      %v9422 = vpop.f32.mrb[0].mxu0
      %v9423 = vpop.f32.mrb[0].mxu0
      %v9424 = vadd.f32 0.0, %v9423
      %v9425 = vpop.f32.mrb[0].mxu0
      %9426 = vmatprep.mubr.bf16.mxu0 %v9282
      %9427 = vmatmul.mubr.bf16.gmra.mrb[0].mxu0 %v9163
      %v9428 = vpop.f32.mrb[0].mxu0
      %v9429 = vadd.f32 0.0, %v9428
      %v9430 = vpop.f32.mrb[0].mxu0
      %v9431 = vpop.f32.mrb[0].mxu0
      %v9432 = vadd.f32 0.0, %v9431
      %v9433 = vpop.f32.mrb[0].mxu0
      %9434 = vmatprep.mubr.bf16.mxu0 %v9285
      %9435 = vmatmul.mubr.bf16.gmra.mrb[0].mxu0 %v9165
      %v9436 = vpop.f32.mrb[0].mxu0
      %v9437 = vadd.f32 0.0, %v9436
      %v9438 = vpop.f32.mrb[0].mxu0
      %v9439 = vpop.f32.mrb[0].mxu0
      %v9440 = vadd.f32 0.0, %v9439
      %v9441 = vpop.f32.mrb[0].mxu0
      %9442 = vmatprep.mubr.bf16.mxu0 %v9288
      %9443 = vmatmul.mubr.bf16.gmra.mrb[0].mxu0 %v9167
      %v9444 = vpop.f32.mrb[0].mxu0
      %v9445 = vadd.f32 0.0, %v9444
      %v9446 = vpop.f32.mrb[0].mxu0
      %v9447 = vpop.f32.mrb[0].mxu0
      %v9448 = vadd.f32 0.0, %v9447
      %v9449 = vpop.f32.mrb[0].mxu0
      %9450 = vdwg.mxu0
      %v9451 = vadd.f32 %v8753, %v9325
      %v9452 = vadd.f32 %v8754, %v9328
      %v9453 = vadd.f32 %v8755, %v9333
      %v9454 = vadd.f32 %v8756, %v9336
      %v9455 = vadd.f32 %v8757, %v9341
      %v9456 = vadd.f32 %v8758, %v9344
      %v9457 = vadd.f32 %v8759, %v9349
      %v9458 = vadd.f32 %v8760, %v9352
      %v9459 = vadd.f32 %v8761, %v9357
      %v9460 = vadd.f32 %v8762, %v9360
      %v9461 = vadd.f32 %v8763, %v9365
      %v9462 = vadd.f32 %v8764, %v9368
      %v9463 = vadd.f32 %v8765, %v9373
      %v9464 = vadd.f32 %v8766, %v9376
      %v9465 = vadd.f32 %v8767, %v9381
      %v9466 = vadd.f32 %v8768, %v9384
      %v9467 = vadd.f32 %v8769, %v9389
      %v9468 = vadd.f32 %v8770, %v9392
      %v9469 = vadd.f32 %v8771, %v9397
      %v9470 = vadd.f32 %v8772, %v9400
      %v9471 = vadd.f32 %v8773, %v9405
      %v9472 = vadd.f32 %v8774, %v9408
      %v9473 = vadd.f32 %v8775, %v9413
      %v9474 = vadd.f32 %v8776, %v9416
      %v9475 = vadd.f32 %v8777, %v9421
      %v9476 = vadd.f32 %v8778, %v9424
      %v9477 = vadd.f32 %v8779, %v9429
      %v9478 = vadd.f32 %v8780, %v9432
      %v9479 = vadd.f32 %v8781, %v9437
      %v9480 = vadd.f32 %v8782, %v9440
      %v9481 = vadd.f32 %v8783, %v9445
      %v9482 = vadd.f32 %v8784, %v9448
      %v9483 = vadd.f32 %v9451, %v9452
      %v9484 = vadd.f32 %v9483, %v9453
      %v9485 = vadd.f32 %v9484, %v9454
      %v9486 = vadd.f32 %v9485, %v9455
      %v9487 = vadd.f32 %v9486, %v9456
      %v9488 = vadd.f32 %v9487, %v9457
      %v9489 = vadd.f32 %v9488, %v9458
      %v9490 = vadd.f32 %v9489, %v9459
      %v9491 = vadd.f32 %v9490, %v9460
      %v9492 = vadd.f32 %v9491, %v9461
      %v9493 = vadd.f32 %v9492, %v9462
      %v9494 = vadd.f32 %v9493, %v9463
      %v9495 = vadd.f32 %v9494, %v9464
      %v9496 = vadd.f32 %v9495, %v9465
      %v9497 = vadd.f32 %v9496, %v9466
      %v9498 = vadd.f32 %v9497, %v9467
      %v9499 = vadd.f32 %v9498, %v9468
      %v9500 = vadd.f32 %v9499, %v9469
      %v9501 = vadd.f32 %v9500, %v9470
      %v9502 = vadd.f32 %v9501, %v9471
      %v9503 = vadd.f32 %v9502, %v9472
      %v9504 = vadd.f32 %v9503, %v9473
      %v9505 = vadd.f32 %v9504, %v9474
      %v9506 = vadd.f32 %v9505, %v9475
      %v9507 = vadd.f32 %v9506, %v9476
      %v9508 = vadd.f32 %v9507, %v9477
      %v9509 = vadd.f32 %v9508, %v9478
      %v9510 = vadd.f32 %v9509, %v9479
      %v9511 = vadd.f32 %v9510, %v9480
      %v9512 = vadd.f32 %v9511, %v9481
      %v9513 = vadd.f32 %v9512, %v9482
      %v9514 = vrot.slane %v9513, 4
      %v9515 = vadd.f32 %v9513, %v9514
      %v9516 = vrot.slane %v9515, 2
      %v9517 = vadd.f32 %v9515, %v9516
      %v9518 = vrot.slane %v9517, 1
      %v9519 = vadd.f32 %v9517, %v9518
      %v9520 = vmul.f32 %v9451, %v9451
      %v9521 = vmul.f32 %v9452, %v9452
      %v9522 = vmul.f32 %v9453, %v9453
      %v9523 = vmul.f32 %v9454, %v9454
      %v9524 = vmul.f32 %v9455, %v9455
      %v9525 = vmul.f32 %v9456, %v9456
      %v9526 = vmul.f32 %v9457, %v9457
      %v9527 = vmul.f32 %v9458, %v9458
      %v9528 = vmul.f32 %v9459, %v9459
      %v9529 = vmul.f32 %v9460, %v9460
      %v9530 = vmul.f32 %v9461, %v9461
      %v9531 = vmul.f32 %v9462, %v9462
      %v9532 = vmul.f32 %v9463, %v9463
      %v9533 = vmul.f32 %v9464, %v9464
      %v9534 = vmul.f32 %v9465, %v9465
      %v9535 = vmul.f32 %v9466, %v9466
      %v9536 = vmul.f32 %v9467, %v9467
      %v9537 = vmul.f32 %v9468, %v9468
      %v9538 = vmul.f32 %v9469, %v9469
      %v9539 = vmul.f32 %v9470, %v9470
      %v9540 = vmul.f32 %v9471, %v9471
      %v9541 = vmul.f32 %v9472, %v9472
      %v9542 = vmul.f32 %v9473, %v9473
      %v9543 = vmul.f32 %v9474, %v9474
      %v9544 = vmul.f32 %v9475, %v9475
      %v9545 = vmul.f32 %v9476, %v9476
      %v9546 = vmul.f32 %v9477, %v9477
      %v9547 = vmul.f32 %v9478, %v9478
      %v9548 = vmul.f32 %v9479, %v9479
      %v9549 = vmul.f32 %v9480, %v9480
      %v9550 = vmul.f32 %v9481, %v9481
      %v9551 = vmul.f32 %v9482, %v9482
      %v9552 = vadd.f32 %v9520, %v9521
      %v9553 = vadd.f32 %v9552, %v9522
      %v9554 = vadd.f32 %v9553, %v9523
      %v9555 = vadd.f32 %v9554, %v9524
      %v9556 = vadd.f32 %v9555, %v9525
      %v9557 = vadd.f32 %v9556, %v9526
      %v9558 = vadd.f32 %v9557, %v9527
      %v9559 = vadd.f32 %v9558, %v9528
      %v9560 = vadd.f32 %v9559, %v9529
      %v9561 = vadd.f32 %v9560, %v9530
      %v9562 = vadd.f32 %v9561, %v9531
      %v9563 = vadd.f32 %v9562, %v9532
      %v9564 = vadd.f32 %v9563, %v9533
      %v9565 = vadd.f32 %v9564, %v9534
      %v9566 = vadd.f32 %v9565, %v9535
      %v9567 = vadd.f32 %v9566, %v9536
      %v9568 = vadd.f32 %v9567, %v9537
      %v9569 = vadd.f32 %v9568, %v9538
      %v9570 = vadd.f32 %v9569, %v9539
      %v9571 = vadd.f32 %v9570, %v9540
      %v9572 = vadd.f32 %v9571, %v9541
      %v9573 = vadd.f32 %v9572, %v9542
      %v9574 = vadd.f32 %v9573, %v9543
      %v9575 = vadd.f32 %v9574, %v9544
      %v9576 = vadd.f32 %v9575, %v9545
      %v9577 = vadd.f32 %v9576, %v9546
      %v9578 = vadd.f32 %v9577, %v9547
      %v9579 = vadd.f32 %v9578, %v9548
      %v9580 = vadd.f32 %v9579, %v9549
      %v9581 = vadd.f32 %v9580, %v9550
      %v9582 = vadd.f32 %v9581, %v9551
      %v9583 = vrot.slane %v9582, 4
      %v9584 = vadd.f32 %v9582, %v9583
      %v9585 = vrot.slane %v9584, 2
      %v9586 = vadd.f32 %v9584, %v9585
      %v9587 = vrot.slane %v9586, 1
      %v9588 = vadd.f32 %v9586, %v9587
      %v9589 = vld [vmem:[%s4] sm:$0xff]
      %v9590 = vld [vmem:[%s4 + $0x8] sm:$0xff]
      %v9591 = vld [vmem:[%s4 + $0x10] sm:$0xff]
      %v9592 = vld [vmem:[%s4 + $0x18] sm:$0xff]
      %v9593 = vld [vmem:[%s4 + $0x20] sm:$0xff]
      %v9594 = vld [vmem:[%s4 + $0x28] sm:$0xff]
      %v9595 = vld [vmem:[%s4 + $0x30] sm:$0xff]
      %v9596 = vld [vmem:[%s4 + $0x38] sm:$0xff]
      %v9597 = vld [vmem:[%s4 + $0x40] sm:$0xff]
      %v9598 = vld [vmem:[%s4 + $0x48] sm:$0xff]
      %v9599 = vld [vmem:[%s4 + $0x50] sm:$0xff]
      %v9600 = vld [vmem:[%s4 + $0x58] sm:$0xff]
      %v9601 = vld [vmem:[%s4 + $0x60] sm:$0xff]
      %v9602 = vld [vmem:[%s4 + $0x68] sm:$0xff]
      %v9603 = vld [vmem:[%s4 + $0x70] sm:$0xff]
      %v9604 = vld [vmem:[%s4 + $0x78] sm:$0xff]
      %9605 = vmatprep.subr.mxu0 0.0
      %9606 = vmatpush1.msra.mxu0 %v9589
      %9607 = vmatprep.subr.mxu0 0.0
      %9608 = vmatpush1.msra.mxu0 %v9590
      %9609 = vmatprep.subr.mxu0 0.0
      %9610 = vmatpush1.msra.mxu0 %v9591
      %9611 = vmatprep.subr.mxu0 0.0
      %9612 = vmatpush1.msra.mxu0 %v9592
      %9613 = vmatprep.subr.mxu0 0.0
      %9614 = vmatpush1.msra.mxu0 %v9593
      %9615 = vmatprep.subr.mxu0 0.0
      %9616 = vmatpush1.msra.mxu0 %v9594
      %9617 = vmatprep.subr.mxu0 0.0
      %9618 = vmatpush1.msra.mxu0 %v9595
      %9619 = vmatprep.subr.mxu0 0.0
      %9620 = vmatpush1.msra.mxu0 %v9596
      %9621 = vmatprep.subr.mxu0 0.0
      %9622 = vmatpush1.msra.mxu0 %v9597
      %9623 = vmatprep.subr.mxu0 0.0
      %9624 = vmatpush1.msra.mxu0 %v9598
      %9625 = vmatprep.subr.mxu0 0.0
      %9626 = vmatpush1.msra.mxu0 %v9599
      %9627 = vmatprep.subr.mxu0 0.0
      %9628 = vmatpush1.msra.mxu0 %v9600
      %9629 = vmatprep.subr.mxu0 0.0
      %9630 = vmatpush1.msra.mxu0 %v9601
      %9631 = vmatprep.subr.mxu0 0.0
      %9632 = vmatpush1.msra.mxu0 %v9602
      %9633 = vmatprep.subr.mxu0 0.0
      %9634 = vmatpush1.msra.mxu0 %v9603
      %9635 = vmatprep.subr.mxu0 0.0
      %9636 = vmatpush1.msra.mxu0 %v9604
      %9637 = vmatprep.subr.mxu0 0.0
      %9638 = vmatpush1.msra.mxu0 0.0
      %9639 = vmatprep.subr.mxu0 0.0
      %9640 = vmatpush1.msra.mxu0 0.0
      %9641 = vmatprep.subr.mxu0 0.0
      %9642 = vmatpush1.msra.mxu0 0.0
      %9643 = vmatprep.subr.mxu0 0.0
      %9644 = vmatpush1.msra.mxu0 0.0
      %9645 = vmatprep.subr.mxu0 0.0
      %9646 = vmatpush1.msra.mxu0 0.0
      %9647 = vmatprep.subr.mxu0 0.0
      %9648 = vmatpush1.msra.mxu0 0.0
      %9649 = vmatprep.subr.mxu0 0.0
      %9650 = vmatpush1.msra.mxu0 0.0
      %9651 = vmatprep.subr.mxu0 0.0
      %9652 = vmatpush1.msra.mxu0 0.0
      %9653 = vmatprep.subr.mxu0 0.0
      %9654 = vmatpush1.msra.mxu0 0.0
      %9655 = vmatprep.subr.mxu0 0.0
      %9656 = vmatpush1.msra.mxu0 0.0
      %9657 = vmatprep.subr.mxu0 0.0
      %9658 = vmatpush1.msra.mxu0 0.0
      %9659 = vmatprep.subr.mxu0 0.0
      %9660 = vmatpush1.msra.mxu0 0.0
      %9661 = vmatprep.subr.mxu0 0.0
      %9662 = vmatpush1.msra.mxu0 0.0
      %9663 = vmatprep.subr.mxu0 0.0
      %9664 = vmatpush1.msra.mxu0 0.0
      %9665 = vmatprep.subr.mxu0 0.0
      %9666 = vmatpush1.msra.mxu0 0.0
      %9667 = vmatprep.subr.mxu0 0.0
      %9668 = vmatpush1.msra.mxu0 0.0
      %9669 = vmatprep.mubr.f32.mxu0 0.0
      %9670 = vmatmul.mubr.f32.gmra.mrb[0].mxu0 %v9519
      %v9671 = vpop.f32.mrb[0].mxu0
      %v9672 = vadd.f32 0.0, %v9671
      %v9673 = vpop.f32.mrb[0].mxu0
      %9674 = vdwg.mxu0
      %9675 = vmatprep.subr.mxu0 0.0
      %9676 = vmatpush1.msra.mxu0 %v9589
      %9677 = vmatprep.subr.mxu0 0.0
      %9678 = vmatpush1.msra.mxu0 %v9590
      %9679 = vmatprep.subr.mxu0 0.0
      %9680 = vmatpush1.msra.mxu0 %v9591
      %9681 = vmatprep.subr.mxu0 0.0
      %9682 = vmatpush1.msra.mxu0 %v9592
      %9683 = vmatprep.subr.mxu0 0.0
      %9684 = vmatpush1.msra.mxu0 %v9593
      %9685 = vmatprep.subr.mxu0 0.0
      %9686 = vmatpush1.msra.mxu0 %v9594
      %9687 = vmatprep.subr.mxu0 0.0
      %9688 = vmatpush1.msra.mxu0 %v9595
      %9689 = vmatprep.subr.mxu0 0.0
      %9690 = vmatpush1.msra.mxu0 %v9596
      %9691 = vmatprep.subr.mxu0 0.0
      %9692 = vmatpush1.msra.mxu0 %v9597
      %9693 = vmatprep.subr.mxu0 0.0
      %9694 = vmatpush1.msra.mxu0 %v9598
      %9695 = vmatprep.subr.mxu0 0.0
      %9696 = vmatpush1.msra.mxu0 %v9599
      %9697 = vmatprep.subr.mxu0 0.0
      %9698 = vmatpush1.msra.mxu0 %v9600
      %9699 = vmatprep.subr.mxu0 0.0
      %9700 = vmatpush1.msra.mxu0 %v9601
      %9701 = vmatprep.subr.mxu0 0.0
      %9702 = vmatpush1.msra.mxu0 %v9602
      %9703 = vmatprep.subr.mxu0 0.0
      %9704 = vmatpush1.msra.mxu0 %v9603
      %9705 = vmatprep.subr.mxu0 0.0
      %9706 = vmatpush1.msra.mxu0 %v9604
      %9707 = vmatprep.subr.mxu0 0.0
      %9708 = vmatpush1.msra.mxu0 0.0
      %9709 = vmatprep.subr.mxu0 0.0
      %9710 = vmatpush1.msra.mxu0 0.0
      %9711 = vmatprep.subr.mxu0 0.0
      %9712 = vmatpush1.msra.mxu0 0.0
      %9713 = vmatprep.subr.mxu0 0.0
      %9714 = vmatpush1.msra.mxu0 0.0
      %9715 = vmatprep.subr.mxu0 0.0
      %9716 = vmatpush1.msra.mxu0 0.0
      %9717 = vmatprep.subr.mxu0 0.0
      %9718 = vmatpush1.msra.mxu0 0.0
      %9719 = vmatprep.subr.mxu0 0.0
      %9720 = vmatpush1.msra.mxu0 0.0
      %9721 = vmatprep.subr.mxu0 0.0
      %9722 = vmatpush1.msra.mxu0 0.0
      %9723 = vmatprep.subr.mxu0 0.0
      %9724 = vmatpush1.msra.mxu0 0.0
      %9725 = vmatprep.subr.mxu0 0.0
      %9726 = vmatpush1.msra.mxu0 0.0
      %9727 = vmatprep.subr.mxu0 0.0
      %9728 = vmatpush1.msra.mxu0 0.0
      %9729 = vmatprep.subr.mxu0 0.0
      %9730 = vmatpush1.msra.mxu0 0.0
      %9731 = vmatprep.subr.mxu0 0.0
      %9732 = vmatpush1.msra.mxu0 0.0
      %9733 = vmatprep.subr.mxu0 0.0
      %9734 = vmatpush1.msra.mxu0 0.0
      %9735 = vmatprep.subr.mxu0 0.0
      %9736 = vmatpush1.msra.mxu0 0.0
      %9737 = vmatprep.subr.mxu0 0.0
      %9738 = vmatpush1.msra.mxu0 0.0
      %9739 = vmatprep.mubr.f32.mxu0 0.0
      %9740 = vmatmul.mubr.f32.gmra.mrb[0].mxu0 %v9588
      %v9741 = vpop.f32.mrb[0].mxu0
      %v9742 = vadd.f32 0.0, %v9741
      %v9743 = vpop.f32.mrb[0].mxu0
      %9744 = vdwg.mxu0
      %v9745 = vmul.f32 %v9672, %v9672
      %v9746 = vsub.f32 %v9742, %v9745
      %v9747 = vmax.f32 %v9746, 0.0
      %v9748 = vlaneseq
      %v9749 = vshrl.u32 %v9748, 7
      %v9750 = vsub.s32 0, %v9749
      %v9751 = vrot.slane %v9672, %v9750
      %v9752 = vsub.f32 %v9451, %v9751
      %v9753 = vsub.f32 %v9452, %v9751
      %v9754 = vsub.f32 %v9453, %v9751
      %v9755 = vsub.f32 %v9454, %v9751
      %v9756 = vsub.f32 %v9455, %v9751
      %v9757 = vsub.f32 %v9456, %v9751
      %v9758 = vsub.f32 %v9457, %v9751
      %v9759 = vsub.f32 %v9458, %v9751
      %v9760 = vsub.f32 %v9459, %v9751
      %v9761 = vsub.f32 %v9460, %v9751
      %v9762 = vsub.f32 %v9461, %v9751
      %v9763 = vsub.f32 %v9462, %v9751
      %v9764 = vsub.f32 %v9463, %v9751
      %v9765 = vsub.f32 %v9464, %v9751
      %v9766 = vsub.f32 %v9465, %v9751
      %v9767 = vsub.f32 %v9466, %v9751
      %v9768 = vsub.f32 %v9467, %v9751
      %v9769 = vsub.f32 %v9468, %v9751
      %v9770 = vsub.f32 %v9469, %v9751
      %v9771 = vsub.f32 %v9470, %v9751
      %v9772 = vsub.f32 %v9471, %v9751
      %v9773 = vsub.f32 %v9472, %v9751
      %v9774 = vsub.f32 %v9473, %v9751
      %v9775 = vsub.f32 %v9474, %v9751
      %v9776 = vsub.f32 %v9475, %v9751
      %v9777 = vsub.f32 %v9476, %v9751
      %v9778 = vsub.f32 %v9477, %v9751
      %v9779 = vsub.f32 %v9478, %v9751
      %v9780 = vsub.f32 %v9479, %v9751
      %v9781 = vsub.f32 %v9480, %v9751
      %v9782 = vsub.f32 %v9481, %v9751
      %v9783 = vsub.f32 %v9482, %v9751
      %v9784 = vadd.f32 %v9747, 1e-05
      %v9785 = vrsqrt.pop %v9784
      %v9786 = vlaneseq
      %v9787 = vshrl.u32 %v9786, 7
      %v9788 = vsub.s32 0, %v9787
      %v9789 = vrot.slane %v9785, %v9788
      %v9790 = vmul.f32 %v9752, %v9789
      %v9791 = vmul.f32 %v9753, %v9789
      %v9792 = vmul.f32 %v9754, %v9789
      %v9793 = vmul.f32 %v9755, %v9789
      %v9794 = vmul.f32 %v9756, %v9789
      %v9795 = vmul.f32 %v9757, %v9789
      %v9796 = vmul.f32 %v9758, %v9789
      %v9797 = vmul.f32 %v9759, %v9789
      %v9798 = vmul.f32 %v9760, %v9789
      %v9799 = vmul.f32 %v9761, %v9789
      %v9800 = vmul.f32 %v9762, %v9789
      %v9801 = vmul.f32 %v9763, %v9789
      %v9802 = vmul.f32 %v9764, %v9789
      %v9803 = vmul.f32 %v9765, %v9789
      %v9804 = vmul.f32 %v9766, %v9789
      %v9805 = vmul.f32 %v9767, %v9789
      %v9806 = vmul.f32 %v9768, %v9789
      %v9807 = vmul.f32 %v9769, %v9789
      %v9808 = vmul.f32 %v9770, %v9789
      %v9809 = vmul.f32 %v9771, %v9789
      %v9810 = vmul.f32 %v9772, %v9789
      %v9811 = vmul.f32 %v9773, %v9789
      %v9812 = vmul.f32 %v9774, %v9789
      %v9813 = vmul.f32 %v9775, %v9789
      %v9814 = vmul.f32 %v9776, %v9789
      %v9815 = vmul.f32 %v9777, %v9789
      %v9816 = vmul.f32 %v9778, %v9789
      %v9817 = vmul.f32 %v9779, %v9789
      %v9818 = vmul.f32 %v9780, %v9789
      %v9819 = vmul.f32 %v9781, %v9789
      %v9820 = vmul.f32 %v9782, %v9789
      %v9821 = vmul.f32 %v9783, %v9789
      %v9822 = vmul.f32 %v9790, 0.5
      %v9823 = vmul.f32 %v9791, 0.5
      %v9824 = vmul.f32 %v9792, 0.5
      %v9825 = vmul.f32 %v9793, 0.5
      %v9826 = vmul.f32 %v9794, 0.5
      %v9827 = vmul.f32 %v9795, 0.5
      %v9828 = vmul.f32 %v9796, 0.5
      %v9829 = vmul.f32 %v9797, 0.5
      %v9830 = vmul.f32 %v9798, 0.5
      %v9831 = vmul.f32 %v9799, 0.5
      %v9832 = vmul.f32 %v9800, 0.5
      %v9833 = vmul.f32 %v9801, 0.5
      %v9834 = vmul.f32 %v9802, 0.5
      %v9835 = vmul.f32 %v9803, 0.5
      %v9836 = vmul.f32 %v9804, 0.5
      %v9837 = vmul.f32 %v9805, 0.5
      %v9838 = vmul.f32 %v9806, 0.5
      %v9839 = vmul.f32 %v9807, 0.5
      %v9840 = vmul.f32 %v9808, 0.5
      %v9841 = vmul.f32 %v9809, 0.5
      %v9842 = vmul.f32 %v9810, 0.5
      %v9843 = vmul.f32 %v9811, 0.5
      %v9844 = vmul.f32 %v9812, 0.5
      %v9845 = vmul.f32 %v9813, 0.5
      %v9846 = vmul.f32 %v9814, 0.5
      %v9847 = vmul.f32 %v9815, 0.5
      %v9848 = vmul.f32 %v9816, 0.5
      %v9849 = vmul.f32 %v9817, 0.5
      %v9850 = vmul.f32 %v9818, 0.5
      %v9851 = vmul.f32 %v9819, 0.5
      %v9852 = vmul.f32 %v9820, 0.5
      %v9853 = vmul.f32 %v9821, 0.5
      %v9854 = vmul.f32 %v9790, 0.70710677
      %v9855 = vmul.f32 %v9791, 0.70710677
      %v9856 = vmul.f32 %v9792, 0.70710677
      %v9857 = vmul.f32 %v9793, 0.70710677
      %v9858 = vmul.f32 %v9794, 0.70710677
      %v9859 = vmul.f32 %v9795, 0.70710677
      %v9860 = vmul.f32 %v9796, 0.70710677
      %v9861 = vmul.f32 %v9797, 0.70710677
      %v9862 = vmul.f32 %v9798, 0.70710677
      %v9863 = vmul.f32 %v9799, 0.70710677
      %v9864 = vmul.f32 %v9800, 0.70710677
      %v9865 = vmul.f32 %v9801, 0.70710677
      %v9866 = vmul.f32 %v9802, 0.70710677
      %v9867 = vmul.f32 %v9803, 0.70710677
      %v9868 = vmul.f32 %v9804, 0.70710677
      %v9869 = vmul.f32 %v9805, 0.70710677
      %v9870 = vmul.f32 %v9806, 0.70710677
      %v9871 = vmul.f32 %v9807, 0.70710677
      %v9872 = vmul.f32 %v9808, 0.70710677
      %v9873 = vmul.f32 %v9809, 0.70710677
      %v9874 = vmul.f32 %v9810, 0.70710677
      %v9875 = vmul.f32 %v9811, 0.70710677
      %v9876 = vmul.f32 %v9812, 0.70710677
      %v9877 = vmul.f32 %v9813, 0.70710677
      %v9878 = vmul.f32 %v9814, 0.70710677
      %v9879 = vmul.f32 %v9815, 0.70710677
      %v9880 = vmul.f32 %v9816, 0.70710677
      %v9881 = vmul.f32 %v9817, 0.70710677
      %v9882 = vmul.f32 %v9818, 0.70710677
      %v9883 = vmul.f32 %v9819, 0.70710677
      %v9884 = vmul.f32 %v9820, 0.70710677
      %v9885 = vmul.f32 %v9821, 0.70710677
      %v9886 = verf.f32.pop %v9854
      %v9887 = verf.f32.pop %v9855
      %v9888 = verf.f32.pop %v9856
      %v9889 = verf.f32.pop %v9857
      %v9890 = verf.f32.pop %v9858
      %v9891 = verf.f32.pop %v9859
      %v9892 = verf.f32.pop %v9860
      %v9893 = verf.f32.pop %v9861
      %v9894 = verf.f32.pop %v9862
      %v9895 = verf.f32.pop %v9863
      %v9896 = verf.f32.pop %v9864
      %v9897 = verf.f32.pop %v9865
      %v9898 = verf.f32.pop %v9866
      %v9899 = verf.f32.pop %v9867
      %v9900 = verf.f32.pop %v9868
      %v9901 = verf.f32.pop %v9869
      %v9902 = verf.f32.pop %v9870
      %v9903 = verf.f32.pop %v9871
      %v9904 = verf.f32.pop %v9872
      %v9905 = verf.f32.pop %v9873
      %v9906 = verf.f32.pop %v9874
      %v9907 = verf.f32.pop %v9875
      %v9908 = verf.f32.pop %v9876
      %v9909 = verf.f32.pop %v9877
      %v9910 = verf.f32.pop %v9878
      %v9911 = verf.f32.pop %v9879
      %v9912 = verf.f32.pop %v9880
      %v9913 = verf.f32.pop %v9881
      %v9914 = verf.f32.pop %v9882
      %v9915 = verf.f32.pop %v9883
      %v9916 = verf.f32.pop %v9884
      %v9917 = verf.f32.pop %v9885
      %v9918 = vadd.f32 %v9886, 1.0
      %v9919 = vadd.f32 %v9887, 1.0
      %v9920 = vadd.f32 %v9888, 1.0
      %v9921 = vadd.f32 %v9889, 1.0
      %v9922 = vadd.f32 %v9890, 1.0
      %v9923 = vadd.f32 %v9891, 1.0
      %v9924 = vadd.f32 %v9892, 1.0
      %v9925 = vadd.f32 %v9893, 1.0
      %v9926 = vadd.f32 %v9894, 1.0
      %v9927 = vadd.f32 %v9895, 1.0
      %v9928 = vadd.f32 %v9896, 1.0
      %v9929 = vadd.f32 %v9897, 1.0
      %v9930 = vadd.f32 %v9898, 1.0
      %v9931 = vadd.f32 %v9899, 1.0
      %v9932 = vadd.f32 %v9900, 1.0
      %v9933 = vadd.f32 %v9901, 1.0
      %v9934 = vadd.f32 %v9902, 1.0
      %v9935 = vadd.f32 %v9903, 1.0
      %v9936 = vadd.f32 %v9904, 1.0
      %v9937 = vadd.f32 %v9905, 1.0
      %v9938 = vadd.f32 %v9906, 1.0
      %v9939 = vadd.f32 %v9907, 1.0
      %v9940 = vadd.f32 %v9908, 1.0
      %v9941 = vadd.f32 %v9909, 1.0
      %v9942 = vadd.f32 %v9910, 1.0
      %v9943 = vadd.f32 %v9911, 1.0
      %v9944 = vadd.f32 %v9912, 1.0
      %v9945 = vadd.f32 %v9913, 1.0
      %v9946 = vadd.f32 %v9914, 1.0
      %v9947 = vadd.f32 %v9915, 1.0
      %v9948 = vadd.f32 %v9916, 1.0
      %v9949 = vadd.f32 %v9917, 1.0
      %v9950 = vmul.f32 %v9822, %v9918
      %v9951 = vmul.f32 %v9823, %v9919
      %v9952 = vmul.f32 %v9824, %v9920
      %v9953 = vmul.f32 %v9825, %v9921
      %v9954 = vmul.f32 %v9826, %v9922
      %v9955 = vmul.f32 %v9827, %v9923
      %v9956 = vmul.f32 %v9828, %v9924
      %v9957 = vmul.f32 %v9829, %v9925
      %v9958 = vmul.f32 %v9830, %v9926
      %v9959 = vmul.f32 %v9831, %v9927
      %v9960 = vmul.f32 %v9832, %v9928
      %v9961 = vmul.f32 %v9833, %v9929
      %v9962 = vmul.f32 %v9834, %v9930
      %v9963 = vmul.f32 %v9835, %v9931
      %v9964 = vmul.f32 %v9836, %v9932
      %v9965 = vmul.f32 %v9837, %v9933
      %v9966 = vmul.f32 %v9838, %v9934
      %v9967 = vmul.f32 %v9839, %v9935
      %v9968 = vmul.f32 %v9840, %v9936
      %v9969 = vmul.f32 %v9841, %v9937
      %v9970 = vmul.f32 %v9842, %v9938
      %v9971 = vmul.f32 %v9843, %v9939
      %v9972 = vmul.f32 %v9844, %v9940
      %v9973 = vmul.f32 %v9845, %v9941
      %v9974 = vmul.f32 %v9846, %v9942
      %v9975 = vmul.f32 %v9847, %v9943
      %v9976 = vmul.f32 %v9848, %v9944
      %v9977 = vmul.f32 %v9849, %v9945
      %v9978 = vmul.f32 %v9850, %v9946
      %v9979 = vmul.f32 %v9851, %v9947
      %v9980 = vmul.f32 %v9852, %v9948
      %v9981 = vmul.f32 %v9853, %v9949
      %9982 = vst [vmem:[%s224] sm:$0xff] %v9950
      %9983 = vst [vmem:[%s224 + $0x8] sm:$0xff] %v9951
      %9984 = vst [vmem:[%s224 + $0x10] sm:$0xff] %v9952
      %9985 = vst [vmem:[%s224 + $0x18] sm:$0xff] %v9953
      %9986 = vst [vmem:[%s224 + $0x20] sm:$0xff] %v9954
      %9987 = vst [vmem:[%s224 + $0x28] sm:$0xff] %v9955
      %9988 = vst [vmem:[%s224 + $0x30] sm:$0xff] %v9956
      %9989 = vst [vmem:[%s224 + $0x38] sm:$0xff] %v9957
      %9990 = vst [vmem:[%s224 + $0x40] sm:$0xff] %v9958
      %9991 = vst [vmem:[%s224 + $0x48] sm:$0xff] %v9959
      %9992 = vst [vmem:[%s224 + $0x50] sm:$0xff] %v9960
      %9993 = vst [vmem:[%s224 + $0x58] sm:$0xff] %v9961
      %9994 = vst [vmem:[%s224 + $0x60] sm:$0xff] %v9962
      %9995 = vst [vmem:[%s224 + $0x68] sm:$0xff] %v9963
      %9996 = vst [vmem:[%s224 + $0x70] sm:$0xff] %v9964
      %9997 = vst [vmem:[%s224 + $0x78] sm:$0xff] %v9965
      %9998 = vst [vmem:[%s224 + $0x80] sm:$0xff] %v9966
      %9999 = vst [vmem:[%s224 + $0x88] sm:$0xff] %v9967
      %10000 = vst [vmem:[%s224 + $0x90] sm:$0xff] %v9968
      %10001 = vst [vmem:[%s224 + $0x98] sm:$0xff] %v9969
      %10002 = vst [vmem:[%s224 + $0xa0] sm:$0xff] %v9970
      %10003 = vst [vmem:[%s224 + $0xa8] sm:$0xff] %v9971
      %10004 = vst [vmem:[%s224 + $0xb0] sm:$0xff] %v9972
      %10005 = vst [vmem:[%s224 + $0xb8] sm:$0xff] %v9973
      %10006 = vst [vmem:[%s224 + $0xc0] sm:$0xff] %v9974
      %10007 = vst [vmem:[%s224 + $0xc8] sm:$0xff] %v9975
      %10008 = vst [vmem:[%s224 + $0xd0] sm:$0xff] %v9976
      %10009 = vst [vmem:[%s224 + $0xd8] sm:$0xff] %v9977
      %10010 = vst [vmem:[%s224 + $0xe0] sm:$0xff] %v9978
      %10011 = vst [vmem:[%s224 + $0xe8] sm:$0xff] %v9979
      %10012 = vst [vmem:[%s224 + $0xf0] sm:$0xff] %v9980
      %10013 = vst [vmem:[%s224 + $0xf8] sm:$0xff] %v9981
      %p10014 = scmp.lt.s32.totalorder %s16, 1
      %s10015 = scalar_select %p10014, %s16, 1
      %s10016 = smul.addr %s10015, 32
      %s10017 = smul.addr %s10016, 8
      %s10018 = scalar_lea.vmem %s5, %s10017
      // Predicated region
      $region41: #{double_conv_forward.1} parent=39 // pred_check
        %p10019 = pneg %p144
      $region42: #{double_conv_forward.1} parent=39 // pred_check_branch
        %10021 = sbr.rel (%p10019) target = $region44
      $region43: #{double_conv_forward.1} parent=39 // pred_region
        _
      $region44: #{double_conv_forward.1} parent=39 // pred_fallthru
        _
    $region40: #{double_conv_forward.1} parent=5 // pred_fallthru
      _
    %p10022 = scmp.le.s32.totalorder 2, %s11
    // Predicated region
    $region45: #{double_conv_forward.1} parent=5 // pred_check
      %p10023 = pneg %p10022
    $region46: #{double_conv_forward.1} parent=5 // pred_check_branch
      %10025 = sbr.rel (%p10023) target = $region48
    $region47: #{double_conv_forward.1} parent=5 // pred_region
      %s10026 = ssub.s32 %s11, 2
      // Predicated region
      $region49: #{double_conv_forward.1} parent=47 // pred_check
        %p10027 = pneg %p150
      $region50: #{double_conv_forward.1} parent=47 // pred_check_branch
        %10029 = sbr.rel (%p10027) target = $region52
      $region51: #{double_conv_forward.1} parent=47 // pred_region
        %p10030 = scmp.lt.s32.totalorder %s17, 1
        %s10031 = scalar_select %p10030, %s17, 1
        %s10032 = smul.addr %s10031, 32
        %s10033 = smul.addr %s10032, 8
        %s10034 = scalar_lea.vmem %s5, %s10033
      $region52: #{double_conv_forward.1} parent=47 // pred_fallthru
        _
    $region48: #{double_conv_forward.1} parent=5 // pred_fallthru
      _
  $region6: #{double_conv_forward.1} parent=0 // loop_footer
    %s15 = sadd.s32 1, %s11
  $region7: #{double_conv_forward.1} parent=0 // loop_footer_branch
    %10 = sbr.rel target = $region3
  $region8: #{double_conv_forward.1} parent=0 // loop_exit
    _

</llo_original>
